<compile_context>
chip_gen: v7x
topology: tpu7x:2x2x1
jax: 0.10.0
libtpu: 0.0.40
codegen_flags: <defaults>
</compile_context>

<pallas_src>
import functools
import numpy as np
import jax
import jax.numpy as jnp
from jax.experimental import pallas as pl
from jax.experimental.pallas import tpu as pltpu


# ----------------------------------------------------------------------------
# glue: window partition / reverse (pure index shuffles)
# ----------------------------------------------------------------------------
def window_partition(x, ws):
    B, H, W, C = x.shape
    x = x.reshape(B, H // ws, ws, W // ws, ws, C)
    return jnp.transpose(x, (0, 1, 3, 2, 4, 5)).reshape(-1, ws, ws, C)


def window_reverse(windows, ws, H, W):
    B = windows.shape[0] // ((H * W) // ws // ws)
    x = windows.reshape(B, H // ws, W // ws, ws, ws, -1)
    return jnp.transpose(x, (0, 1, 3, 2, 4, 5)).reshape(B, H, W, -1)


def make_rel_pos_index(ws):
    coords = np.stack(np.meshgrid(np.arange(ws), np.arange(ws), indexing="ij"))
    cf = coords.reshape(2, -1)
    rel = cf[:, :, None] - cf[:, None, :]
    rel = rel.transpose(1, 2, 0).astype(np.int32)
    rel[:, :, 0] += ws - 1
    rel[:, :, 1] += ws - 1
    rel[:, :, 0] *= 2 * ws - 1
    return rel.sum(-1)  # (N, N) int32


def make_attn_mask(H, W, ws, shift):
    img = np.zeros((1, H, W, 1), np.float32)
    slices = (slice(0, -ws), slice(-ws, -shift), slice(-shift, None))
    cnt = 0
    for hs in slices:
        for wsl in slices:
            img[:, hs, wsl, :] = cnt
            cnt += 1
    mw = img.reshape(1, H // ws, ws, W // ws, ws, 1)
    mw = mw.transpose(0, 1, 3, 2, 4, 5).reshape(-1, ws * ws)
    am = mw[:, None, :] - mw[:, :, None]               # (nW, N, N)
    am = np.where(am != 0, -100.0, 0.0).astype(np.float32)
    return jnp.asarray(am)


# ----------------------------------------------------------------------------
# budgets / tiling helpers
# ----------------------------------------------------------------------------
def _vmem_limit_bytes():
    """Per-generation VMEM budget: ~3/4 of physical, capped at 96 MiB
    (v5e/v6e: 128 MiB physical -> 96 MiB; v7x: 64 MiB -> 48 MiB)."""
    try:
        cap = int(getattr(pltpu.get_tpu_info(), "vmem_capacity_bytes", 0))
    except Exception:
        cap = 0
    if cap <= 0:
        return 48 * 1024 * 1024        # conservative default, safe on v7x
    return int(min(cap * 3 // 4, 96 * 1024 * 1024))


def _choose_group(B, rows_per_image, target_rows, max_rows):
    """Largest divisor G of B under the row budget.  G is capped at B//2 so the
    attention grid never collapses to one step (v7x has 2 TensorCores)."""
    g_cap = max(1, B // 2)
    g = 1
    for cand in range(1, g_cap + 1):
        if B % cand != 0:
            continue
        if cand * rows_per_image > max_rows:
            break
        g = cand
        if cand * rows_per_image >= target_rows:
            break
    return g


def _choose_tm(R, cap):
    """Largest sublane-friendly row tile dividing R that (when possible) gives
    >= 2 grid steps so v7x can use both TensorCores."""
    cap = min(cap, R)
    best = None
    for tm in range(cap, 0, -1):
        if R % tm != 0:
            continue
        if tm != R and tm % 8 != 0:
            continue
        if best is None:
            best = tm
        if R // tm >= 2:
            return tm
    return best if best is not None else R


def _const2(shape):
    # constant-index-map operand: keep it single-buffered (it is resident
    # across the whole grid; double-buffering would only waste VMEM).
    return pl.BlockSpec(shape, lambda i: (0, 0), pipeline_mode=pl.Buffered(1))


def _const3(shape):
    return pl.BlockSpec(shape, lambda i: (0, 0, 0), pipeline_mode=pl.Buffered(1))


# ----------------------------------------------------------------------------
# Pallas kernel 1: fused window attention (WB = G*nW windows per grid step)
# ----------------------------------------------------------------------------
def _attn_body(x_ref, rpb_ref, mask_ref, a_ref, b_ref, g1_ref, b1_ref,
               qkvw_ref, qkvb_ref, projw_ref, projb_ref, o_ref, heads_ref,
               *, num_heads, head_dim, scale, eps):
    WB, N, C = x_ref.shape
    R = WB * N                                          # token rows in this slab

    x = x_ref[...].reshape(R, C)                        # free merge of leading dims

    # LayerNorm1 (f32 statistics)
    mu = jnp.mean(x, axis=-1, keepdims=True)
    var = jnp.mean((x - mu) ** 2, axis=-1, keepdims=True)
    xn = (x - mu) * jax.lax.rsqrt(var + eps)
    xn = xn * g1_ref[0] + b1_ref[0]

    # qkv projection once on the whole slab (bf16 MXU, f32 accumulate): (R, 3C)
    qkv = jnp.dot(xn.astype(jnp.bfloat16), qkvw_ref[...],
                  preferred_element_type=jnp.float32) + qkvb_ref[0]

    # hoisted loads (the head loop below is unrolled)
    rpb = rpb_ref[...]                                  # (nh, N, N), resident
    if mask_ref is not None:
        nW = mask_ref.shape[0]
        G = WB // nW
        mask = mask_ref[...].reshape(1, nW, N, N)       # broadcast over images

    for h in range(num_heads):
        lo = h * head_dim
        hi = lo + head_dim
        # per-head q/k/v, batched over all WB windows
        qh = (qkv[:, lo:hi] * scale).reshape(WB, N, head_dim)
        kh = qkv[:, C + lo:C + hi].reshape(WB, N, head_dim)
        vh = qkv[:, 2 * C + lo:2 * C + hi].reshape(WB, N, head_dim)

        # scores: (WB, N, N)  ('bnd,bmd->bnm')
        s = jax.lax.dot_general(qh, kh, (((2,), (2,)), ((0,), (0,))),
                                preferred_element_type=jnp.float32)
        s = s + rpb[h]                                  # rel-pos bias (N, N)
        if mask_ref is not None:
            # (WB,N,N) -> (G,nW,N,N): free leading-dim reshape, broadcast-add
            s = (s.reshape(G, nW, N, N) + mask).reshape(WB, N, N)

        # softmax (stable) with EUP reciprocal (approx ~1e-3 rel err, inside tol)
        s = s - jnp.max(s, axis=-1, keepdims=True)
        e = jnp.exp(s)
        p = e * pl.reciprocal(jnp.sum(e, axis=-1, keepdims=True), approx=True)

        # attn-scale re-centering with pre-folded constants:
        #   p' = 1/N + (p - 1/N)*(1 + lamb_h) = p*(1 + lamb_h) - lamb_h/N
        p = p * a_ref[h] - b_ref[h]

        # (WB, N, hd)  ('bnm,bmd->bnd')
        oh = jax.lax.dot_general(p, vh, (((2,), (1,)), ((0,), (0,))),
                                 preferred_element_type=jnp.float32)

        # write this head into its lane slice of the (R, C) bf16 scratch
        # (the "concat" is just disjoint lane-range writes)
        heads_ref[:, lo:hi] = oh.reshape(R, head_dim).astype(jnp.bfloat16)

    # single C-deep output projection (fills the MXU instead of nh hd-deep ones)
    y = jnp.dot(heads_ref[...], projw_ref[...],
                preferred_element_type=jnp.float32) + projb_ref[0]
    o_ref[...] = y.reshape(WB, N, C).astype(o_ref.dtype)


def window_attention_pallas(x_windows, p, attn_mask, num_heads, G, nW, vmem_limit):
    B_, N, C = x_windows.shape
    nh = num_heads
    hd = C // nh
    scale = hd ** (-0.5)
    WB = G * nW
    assert B_ % WB == 0
    grid = (B_ // WB,)

    body = functools.partial(_attn_body, num_heads=nh, head_dim=hd,
                             scale=scale, eps=1e-5)

    common_specs = [
        _const3((nh, N, N)),                                    # rel-pos bias
        pl.BlockSpec(memory_space=pltpu.MemorySpace.SMEM),      # 1 + lamb
        pl.BlockSpec(memory_space=pltpu.MemorySpace.SMEM),      # lamb / N
        _const2((1, C)),                                        # norm1 gamma
        _const2((1, C)),                                        # norm1 beta
        _const2((C, 3 * C)),                                    # qkv weight (bf16)
        _const2((1, 3 * C)),                                    # qkv bias
        _const2((C, C)),                                        # proj weight (bf16)
        _const2((1, C)),                                        # proj bias
    ]
    common_args = (p["rpb"], p["lamb_a"], p["lamb_b"],
                   p["g1_2d"], p["b1_2d"],
                   p["qkv_w_bf16"], p["qkv_b_2d"],
                   p["proj_w_bf16"], p["proj_b_2d"])

    if attn_mask is not None:
        kernel = lambda x, rp, m, a, b, g1, b1, qw, qb, pw, pb, o, hs: \
            body(x, rp, m, a, b, g1, b1, qw, qb, pw, pb, o, hs)
        in_specs = ([pl.BlockSpec((WB, N, C), lambda i: (i, 0, 0)),
                     common_specs[0],
                     _const3((nW, N, N))]                        # un-tiled shift mask
                    + common_specs[1:])
        args = (x_windows, p["rpb"], attn_mask) + common_args[1:]
    else:
        kernel = lambda x, rp, a, b, g1, b1, qw, qb, pw, pb, o, hs: \
            body(x, rp, None, a, b, g1, b1, qw, qb, pw, pb, o, hs)
        in_specs = [pl.BlockSpec((WB, N, C), lambda i: (i, 0, 0))] + common_specs
        args = (x_windows,) + common_args

    return pl.pallas_call(
        kernel,
        # bf16 intermediate: halves the HBM round trip through window_reverse/roll
        out_shape=jax.ShapeDtypeStruct((B_, N, C), jnp.bfloat16),
        grid=grid,
        in_specs=in_specs,
        out_specs=pl.BlockSpec((WB, N, C), lambda i: (i, 0, 0)),
        scratch_shapes=[pltpu.VMEM((WB * N, C), jnp.bfloat16)],  # concatenated heads
        compiler_params=pltpu.CompilerParams(
            dimension_semantics=("parallel",),
            vmem_limit_bytes=vmem_limit),
    )(*args)


# ----------------------------------------------------------------------------
# Pallas kernel 2: residual1 + LayerNorm2 + MLP + residual2 (token-row tiles)
# ----------------------------------------------------------------------------
def _mlp_kernel(short_ref, attn_ref, g_ref, bta_ref, w1_ref, b1_ref,
                w2_ref, b2_ref, o_ref, *, eps):
    # first residual fused here; attention branch arrives in bf16
    x = short_ref[...] + attn_ref[...].astype(jnp.float32)

    mu = jnp.mean(x, axis=-1, keepdims=True)
    var = jnp.mean((x - mu) ** 2, axis=-1, keepdims=True)
    xn = (x - mu) * jax.lax.rsqrt(var + eps)
    xn = xn * g_ref[0] + bta_ref[0]

    h = jnp.dot(xn.astype(jnp.bfloat16), w1_ref[...],
                preferred_element_type=jnp.float32) + b1_ref[0]
    # exact erf GELU (matches torch.nn.GELU default; kept exact for parity)
    h = 0.5 * h * (1.0 + jax.lax.erf(h * np.float32(1.0 / np.sqrt(2.0))))
    y = jnp.dot(h.astype(jnp.bfloat16), w2_ref[...],
                preferred_element_type=jnp.float32) + b2_ref[0]
    o_ref[...] = x + y                                   # second residual


def mlp_pallas(shortcut2d, attn2d, p, vmem_limit):
    R, C = shortcut2d.shape
    hidden = p["fc1_w"].shape[1]
    # row-tile budget: bigger tiles on 128-MiB parts (v5e/v6e), 512 cap on v7x
    tm_cap = 1024 if vmem_limit >= 64 * 1024 * 1024 else 512
    bytes_per_row = 4 * 3 * C + 2 * C + 8 * hidden       # x/out f32, attn bf16, h f32+bf16
    tm_cap = max(8, min(tm_cap, (vmem_limit // 2) // max(bytes_per_row, 1)))
    TM = _choose_tm(R, tm_cap)
    grid = (R // TM,)
    kernel = functools.partial(_mlp_kernel, eps=1e-5)
    return pl.pallas_call(
        kernel,
        out_shape=jax.ShapeDtypeStruct((R, C), jnp.float32),
        grid=grid,
        in_specs=[
            pl.BlockSpec((TM, C), lambda i: (i, 0)),             # shortcut rows (f32)
            pl.BlockSpec((TM, C), lambda i: (i, 0)),             # attention rows (bf16)
            _const2((1, C)),                                     # norm2 gamma
            _const2((1, C)),                                     # norm2 beta
            _const2((C, hidden)),                                # fc1 weight (bf16)
            _const2((1, hidden)),                                # fc1 bias
            _const2((hidden, C)),                                # fc2 weight (bf16)
            _const2((1, C)),                                     # fc2 bias
        ],
        out_specs=pl.BlockSpec((TM, C), lambda i: (i, 0)),
        compiler_params=pltpu.CompilerParams(
            dimension_semantics=("parallel",),
            vmem_limit_bytes=vmem_limit),
    )(shortcut2d, attn2d,
      p["g2_2d"], p["b2_2d"],
      p["fc1_w_bf16"], p["fc1_b_2d"],
      p["fc2_w_bf16"], p["fc2_b_2d"])


# ----------------------------------------------------------------------------
# SwinTransformerBlock / BasicLayer forward (JAX glue around the kernels)
# ----------------------------------------------------------------------------
def swin_block_forward(x, p, H, W, ws, shift, num_heads, vmem_limit):
    B, L, C = x.shape
    assert L == H * W
    N = ws * ws
    nW = (H // ws) * (W // ws)

    xs = x.reshape(B, H, W, C)
    if shift > 0:
        xs = jnp.roll(xs, shift=(-shift, -shift), axis=(1, 2))
    win = window_partition(xs, ws).reshape(-1, N, C)     # (B*nW, N, C)

    # attention slab sizing: rows per step bounded by the VMEM budget
    bytes_per_row = 4 * 3 * C + 4 * C + 2 * C + 2 * C + 4 * N   # qkv,x,heads,out,scores
    max_rows = min(8192, max(nW * N, (vmem_limit // 2) // max(bytes_per_row, 1)))
    target_rows = 1024 if vmem_limit >= 64 * 1024 * 1024 else 512
    G = _choose_group(B, nW * N, target_rows, max_rows)  # images per grid step

    mask = p.get("attn_mask") if shift > 0 else None
    attn_win = window_attention_pallas(win, p, mask, num_heads, G, nW, vmem_limit)

    attn_win = attn_win.reshape(-1, ws, ws, C)
    xs = window_reverse(attn_win, ws, H, W)              # stays bf16
    if shift > 0:
        xs = jnp.roll(xs, shift=(shift, shift), axis=(1, 2))
    # TODO(synk): roll/window_partition/window_reverse stay as XLA shuffles; they
    # could be folded into the attention kernel's index_map (scalar-prefetched
    # per-window row offsets via PrefetchScalarGridSpec) to remove these extra
    # HBM round trips.
    attn_out = xs.reshape(B * L, C)                       # bf16 branch

    # residual1 + LN2 + MLP + residual2 fused in the second kernel
    return mlp_pallas(x.reshape(B * L, C), attn_out, p, vmem_limit).reshape(B, L, C)


def basic_layer_forward(x, blocks_params, input_resolution, window_size, num_heads):
    H, W = input_resolution
    vmem_limit = _vmem_limit_bytes()
    for i, p in enumerate(blocks_params):
        shift = 0 if i % 2 == 0 else window_size // 2
        x = swin_block_forward(x, p, H, W, window_size, shift, num_heads, vmem_limit)
    # TODO(synk): downsample=None in this configuration (PatchMerging not instantiated).
    return x


# ----------------------------------------------------------------------------
# Pure-JAX reference (for verification only)
# ----------------------------------------------------------------------------
def _ref_block(x, p, H, W, ws, shift, num_heads):
    B, L, C = x.shape
    N = ws * ws
    hd = C // num_heads
    scale = hd ** (-0.5)

    def ln(v, g, b):
        mu = v.mean(-1, keepdims=True)
        var = ((v - mu) ** 2).mean(-1, keepdims=True)
        return (v - mu) / jnp.sqrt(var + 1e-5) * g + b

    shortcut = x
    xs = ln(x, p["g1"], p["b1"]).reshape(B, H, W, C)
    if shift > 0:
        xs = jnp.roll(xs, shift=(-shift, -shift), axis=(1, 2))
    win = window_partition(xs, ws).reshape(-1, N, C)
    B_ = win.shape[0]
    qkv = win @ p["qkv_w"] + p["qkv_b"]
    qkv = qkv.reshape(B_, N, 3, num_heads, hd).transpose(2, 0, 3, 1, 4)
    q, k, v = qkv[0] * scale, qkv[1], qkv[2]
    attn = jnp.einsum("bhnd,bhmd->bhnm", q, k)
    rpb = p["rel_table"][p["rel_idx"].reshape(-1)].reshape(N, N, num_heads)
    attn = attn + jnp.transpose(rpb, (2, 0, 1))[None]
    if shift > 0:
        nW = p["attn_mask"].shape[0]
        attn = attn.reshape(B_ // nW, nW, num_heads, N, N) + p["attn_mask"][None, :, None]
        attn = attn.reshape(-1, num_heads, N, N)
    attn = jax.nn.softmax(attn, axis=-1)
    attn_d = 1.0 / N
    attn = attn_d + (attn - attn_d) * (1.0 + p["lamb"][None, :, None, None])
    o = jnp.einsum("bhnm,bhmd->bhnd", attn, v).transpose(0, 2, 1, 3).reshape(B_, N, C)
    o = o @ p["proj_w"] + p["proj_b"]
    o = window_reverse(o.reshape(-1, ws, ws, C), ws, H, W)
    if shift > 0:
        o = jnp.roll(o, shift=(shift, shift), axis=(1, 2))
    x = shortcut + o.reshape(B, L, C)
    h = ln(x, p["g2"], p["b2"]) @ p["fc1_w"] + p["fc1_b"]
    h = 0.5 * h * (1.0 + jax.lax.erf(h / np.sqrt(2.0)))
    x = x + (h @ p["fc2_w"] + p["fc2_b"])
    return x


def _ref_layer(x, blocks_params, input_resolution, window_size, num_heads):
    H, W = input_resolution
    for i, p in enumerate(blocks_params):
        shift = 0 if i % 2 == 0 else window_size // 2
        x = _ref_block(x, p, H, W, window_size, shift, num_heads)
    return x


# ----------------------------------------------------------------------------
# deterministic parameter init + one-time kernel-side prep (done outside jit)
# ----------------------------------------------------------------------------
def init_block_params(key, dim, num_heads, ws, mlp_ratio, H, W, shift):
    hidden = int(dim * mlp_ratio)
    ks = jax.random.split(key, 6)
    f32 = jnp.float32
    p = {
        "g1": jnp.ones((dim,), f32), "b1": jnp.zeros((dim,), f32),
        "qkv_w": (0.02 * jax.random.normal(ks[0], (dim, 3 * dim))).astype(f32),
        "qkv_b": jnp.zeros((3 * dim,), f32),
        "rel_table": (0.02 * jax.random.truncated_normal(
            ks[1], -2.0, 2.0, ((2 * ws - 1) ** 2, num_heads))).astype(f32),
        "lamb": (0.1 * jax.random.normal(ks[2], (num_heads,))).astype(f32),
        "proj_w": (0.02 * jax.random.normal(ks[3], (dim, dim))).astype(f32),
        "proj_b": jnp.zeros((dim,), f32),
        "g2": jnp.ones((dim,), f32), "b2": jnp.zeros((dim,), f32),
        "fc1_w": (0.02 * jax.random.normal(ks[4], (dim, hidden))).astype(f32),
        "fc1_b": jnp.zeros((hidden,), f32),
        "fc2_w": (0.02 * jax.random.normal(ks[5], (hidden, dim))).astype(f32),
        "fc2_b": jnp.zeros((dim,), f32),
        "rel_idx": jnp.asarray(make_rel_pos_index(ws), dtype=jnp.int32),
    }
    if shift > 0:
        p["attn_mask"] = make_attn_mask(H, W, ws, shift)
    return p


def prepare_block_params(p, ws, num_heads):
    """Hoist bf16 casts, proj reshape, rel-pos-bias gather and lamb folding out
    of the per-forward wrapper (done once, outside jit)."""
    C = p["qkv_w"].shape[0]
    hidden = p["fc1_w"].shape[1]
    N = ws * ws
    q = dict(p)
    rpb = p["rel_table"][p["rel_idx"].reshape(-1)].reshape(N, N, num_heads)
    q["rpb"] = jnp.transpose(rpb, (2, 0, 1)).astype(jnp.float32)   # (nh, N, N)
    q["lamb_a"] = (1.0 + p["lamb"]).astype(jnp.float32)            # 1 + lamb
    q["lamb_b"] = (p["lamb"] / float(N)).astype(jnp.float32)       # lamb / N
    q["qkv_w_bf16"] = p["qkv_w"].astype(jnp.bfloat16)
    q["proj_w_bf16"] = p["proj_w"].astype(jnp.bfloat16)
    q["fc1_w_bf16"] = p["fc1_w"].astype(jnp.bfloat16)
    q["fc2_w_bf16"] = p["fc2_w"].astype(jnp.bfloat16)
    q["g1_2d"] = p["g1"].reshape(1, C)
    q["b1_2d"] = p["b1"].reshape(1, C)
    q["qkv_b_2d"] = p["qkv_b"].reshape(1, 3 * C)
    q["proj_b_2d"] = p["proj_b"].reshape(1, C)
    q["g2_2d"] = p["g2"].reshape(1, C)
    q["b2_2d"] = p["b2"].reshape(1, C)
    q["fc1_b_2d"] = p["fc1_b"].reshape(1, hidden)
    q["fc2_b_2d"] = p["fc2_b"].reshape(1, C)
    return q


# ----------------------------------------------------------------------------
if __name__ == "__main__":
    # small config consistent with the module
    B, H, W = 2, 8, 8
    dim = 32
    depth = 2
    num_heads = 4
    window_size = 4
    mlp_ratio = 4.0

    key = jax.random.PRNGKey(0)
    kx, kp = jax.random.split(key)
    x = jax.random.normal(kx, (B, H * W, dim), dtype=jnp.float32)

    block_keys = jax.random.split(kp, depth)
    blocks_params = [
        prepare_block_params(
            init_block_params(block_keys[i], dim, num_heads, window_size,
                              mlp_ratio, H, W,
                              0 if i % 2 == 0 else window_size // 2),
            window_size, num_heads)
        for i in range(depth)
    ]

    fwd = jax.jit(lambda xx, pp: basic_layer_forward(
        xx, pp, (H, W), window_size, num_heads))
    out = jax.block_until_ready(fwd(x, blocks_params))

    ref = jax.block_until_ready(
        _ref_layer(x, blocks_params, (H, W), window_size, num_heads))

    assert out.shape == (B, H * W, dim)
    np.testing.assert_allclose(np.asarray(out), np.asarray(ref), rtol=2e-2, atol=2e-2)
    print("KERNEL_OK")
</pallas_src>

<mosaic_0001>
module attributes {stable_mosaic.version = 11 : i64} {
  func.func @_lambda_(%arg0: i32, %arg1: memref<4x16x32xf32, #tpu.memory_space<vmem>>, %arg2: memref<4x16x16xf32, #tpu.memory_space<vmem>>, %arg3: memref<4xf32, #tpu.memory_space<smem>>, %arg4: memref<4xf32, #tpu.memory_space<smem>>, %arg5: memref<1x32xf32, #tpu.memory_space<vmem>>, %arg6: memref<1x32xf32, #tpu.memory_space<vmem>>, %arg7: memref<32x96xbf16, #tpu.memory_space<vmem>>, %arg8: memref<1x96xf32, #tpu.memory_space<vmem>>, %arg9: memref<32x32xbf16, #tpu.memory_space<vmem>>, %arg10: memref<1x32xf32, #tpu.memory_space<vmem>>, %arg11: memref<4x16x32xbf16, #tpu.memory_space<vmem>>, %arg12: memref<64x32xbf16, #tpu.memory_space<vmem>>) attributes {dimension_semantics = [#tpu.dimension_semantics<parallel>], iteration_bounds = array<i64: 2>, scalar_prefetch = 0 : i64, scratch_operands = 1 : i64, tpu.core_type = #tpu.core_type<tc>, window_params = [{transform_indices = @transform_0, window_bounds = array<i64: 4, 16, 32>}, {pipeline_mode = #tpu.pipeline_mode<synchronous>, transform_indices = @transform_1, window_bounds = array<i64: 4, 16, 16>}, {transform_indices = @transform_2, window_bounds = array<i64: 4>}, {transform_indices = @transform_3, window_bounds = array<i64: 4>}, {pipeline_mode = #tpu.pipeline_mode<synchronous>, transform_indices = @transform_4, window_bounds = array<i64: 1, 32>}, {pipeline_mode = #tpu.pipeline_mode<synchronous>, transform_indices = @transform_5, window_bounds = array<i64: 1, 32>}, {pipeline_mode = #tpu.pipeline_mode<synchronous>, transform_indices = @transform_6, window_bounds = array<i64: 32, 96>}, {pipeline_mode = #tpu.pipeline_mode<synchronous>, transform_indices = @transform_7, window_bounds = array<i64: 1, 96>}, {pipeline_mode = #tpu.pipeline_mode<synchronous>, transform_indices = @transform_8, window_bounds = array<i64: 32, 32>}, {pipeline_mode = #tpu.pipeline_mode<synchronous>, transform_indices = @transform_9, window_bounds = array<i64: 1, 32>}, {transform_indices = @transform_10, window_bounds = array<i64: 4, 16, 32>}]} {
    %c0 = arith.constant 0 : index
    %c0_0 = arith.constant 0 : index
    %c0_1 = arith.constant 0 : index
    %0 = vector.load %arg1[%c0, %c0_0, %c0_1] : memref<4x16x32xf32, #tpu.memory_space<vmem>>, vector<4x16x32xf32>
    %1 = vector.shape_cast %0 : vector<4x16x32xf32> to vector<64x32xf32>
    %cst = arith.constant dense<0.000000e+00> : vector<64xf32>
    %2 = vector.multi_reduction <add>, %1, %cst [1] : vector<64x32xf32> to vector<64xf32>
    %3 = vector.shape_cast %2 : vector<64xf32> to vector<64x1xf32>
    %cst_2 = arith.constant 3.200000e+01 : f32
    %4 = vector.broadcast %cst_2 : f32 to vector<64x1xf32>
    %5 = arith.divf %3, %4 : vector<64x1xf32>
    %6 = vector.broadcast %5 : vector<64x1xf32> to vector<64x32xf32>
    %7 = arith.subf %1, %6 : vector<64x32xf32>
    %8 = arith.mulf %7, %7 : vector<64x32xf32>
    %cst_3 = arith.constant dense<0.000000e+00> : vector<64xf32>
    %9 = vector.multi_reduction <add>, %8, %cst_3 [1] : vector<64x32xf32> to vector<64xf32>
    %10 = vector.shape_cast %9 : vector<64xf32> to vector<64x1xf32>
    %cst_4 = arith.constant 3.200000e+01 : f32
    %11 = vector.broadcast %cst_4 : f32 to vector<64x1xf32>
    %12 = arith.divf %10, %11 : vector<64x1xf32>
    %13 = vector.broadcast %5 : vector<64x1xf32> to vector<64x32xf32>
    %14 = arith.subf %1, %13 : vector<64x32xf32>
    %cst_5 = arith.constant 9.99999974E-6 : f32
    %15 = vector.broadcast %cst_5 : f32 to vector<64x1xf32>
    %16 = arith.addf %12, %15 : vector<64x1xf32>
    %17 = math.rsqrt %16 : vector<64x1xf32>
    %18 = vector.broadcast %17 : vector<64x1xf32> to vector<64x32xf32>
    %19 = arith.mulf %14, %18 : vector<64x32xf32>
    %c0_6 = arith.constant 0 : index
    %c0_7 = arith.constant 0 : index
    %20 = vector.load %arg5[%c0_6, %c0_7] : memref<1x32xf32, #tpu.memory_space<vmem>>, vector<1x32xf32>
    %21 = vector.shape_cast %20 : vector<1x32xf32> to vector<32xf32>
    %22 = vector.shape_cast %21 : vector<32xf32> to vector<1x32xf32>
    %23 = vector.broadcast %22 : vector<1x32xf32> to vector<64x32xf32>
    %24 = arith.mulf %19, %23 : vector<64x32xf32>
    %c0_8 = arith.constant 0 : index
    %c0_9 = arith.constant 0 : index
    %25 = vector.load %arg6[%c0_8, %c0_9] : memref<1x32xf32, #tpu.memory_space<vmem>>, vector<1x32xf32>
    %26 = vector.shape_cast %25 : vector<1x32xf32> to vector<32xf32>
    %27 = vector.shape_cast %26 : vector<32xf32> to vector<1x32xf32>
    %28 = vector.broadcast %27 : vector<1x32xf32> to vector<64x32xf32>
    %29 = arith.addf %24, %28 : vector<64x32xf32>
    %30 = arith.truncf %29 : vector<64x32xf32> to vector<64x32xbf16>
    %c0_10 = arith.constant 0 : index
    %c0_11 = arith.constant 0 : index
    %31 = vector.load %arg7[%c0_10, %c0_11] : memref<32x96xbf16, #tpu.memory_space<vmem>>, vector<32x96xbf16>
    %cst_12 = arith.constant dense<0.000000e+00> : vector<64x96xf32>
    %32 = tpu.matmul %30, %31, %cst_12 {dimension_numbers = #tpu.dot_dimension_numbers<[1], [0], [0], [1], [0, 0, 1, 1], [], []>} : vector<64x32xbf16>, vector<32x96xbf16>, vector<64x96xf32> -> vector<64x96xf32>
    %c0_13 = arith.constant 0 : index
    %c0_14 = arith.constant 0 : index
    %33 = vector.load %arg8[%c0_13, %c0_14] : memref<1x96xf32, #tpu.memory_space<vmem>>, vector<1x96xf32>
    %34 = vector.shape_cast %33 : vector<1x96xf32> to vector<96xf32>
    %35 = vector.shape_cast %34 : vector<96xf32> to vector<1x96xf32>
    %36 = vector.broadcast %35 : vector<1x96xf32> to vector<64x96xf32>
    %37 = arith.addf %32, %36 : vector<64x96xf32>
    %c0_15 = arith.constant 0 : index
    %c0_16 = arith.constant 0 : index
    %c0_17 = arith.constant 0 : index
    %38 = vector.load %arg2[%c0_15, %c0_16, %c0_17] : memref<4x16x16xf32, #tpu.memory_space<vmem>>, vector<4x16x16xf32>
    %39 = vector.extract_strided_slice %37 {offsets = [0, 0], sizes = [64, 8], strides = [1, 1]} : vector<64x96xf32> to vector<64x8xf32>
    %cst_18 = arith.constant 0.353553385 : f32
    %40 = vector.broadcast %cst_18 : f32 to vector<64x8xf32>
    %41 = arith.mulf %39, %40 : vector<64x8xf32>
    %42 = vector.shape_cast %41 : vector<64x8xf32> to vector<4x16x8xf32>
    %43 = vector.extract_strided_slice %37 {offsets = [0, 32], sizes = [64, 8], strides = [1, 1]} : vector<64x96xf32> to vector<64x8xf32>
    %44 = vector.shape_cast %43 : vector<64x8xf32> to vector<4x16x8xf32>
    %45 = vector.extract_strided_slice %37 {offsets = [0, 64], sizes = [64, 8], strides = [1, 1]} : vector<64x96xf32> to vector<64x8xf32>
    %46 = vector.shape_cast %45 : vector<64x8xf32> to vector<4x16x8xf32>
    %cst_19 = arith.constant dense<0.000000e+00> : vector<4x16x16xf32>
    %47 = tpu.matmul %42, %44, %cst_19 {dimension_numbers = #tpu.dot_dimension_numbers<[2], [2], [1], [1], [0, 0, 0, 1, 1, 1], [0], [0]>} : vector<4x16x8xf32>, vector<4x16x8xf32>, vector<4x16x16xf32> -> vector<4x16x16xf32>
    %48 = vector.extract_strided_slice %38 {offsets = [0, 0, 0], sizes = [1, 16, 16], strides = [1, 1, 1]} : vector<4x16x16xf32> to vector<1x16x16xf32>
    %49 = vector.shape_cast %48 : vector<1x16x16xf32> to vector<16x16xf32>
    %50 = vector.shape_cast %49 : vector<16x16xf32> to vector<1x16x16xf32>
    %51 = vector.broadcast %50 : vector<1x16x16xf32> to vector<4x16x16xf32>
    %52 = arith.addf %47, %51 : vector<4x16x16xf32>
    %cst_20 = arith.constant dense<0xFF800000> : vector<4x16xf32>
    %53 = vector.multi_reduction <maximumf>, %52, %cst_20 [2] : vector<4x16x16xf32> to vector<4x16xf32>
    %54 = vector.shape_cast %53 : vector<4x16xf32> to vector<4x16x1xf32>
    %55 = vector.broadcast %54 : vector<4x16x1xf32> to vector<4x16x16xf32>
    %56 = arith.subf %52, %55 : vector<4x16x16xf32>
    %57 = math.exp %56 : vector<4x16x16xf32>
    %cst_21 = arith.constant dense<0.000000e+00> : vector<4x16xf32>
    %58 = vector.multi_reduction <add>, %57, %cst_21 [2] : vector<4x16x16xf32> to vector<4x16xf32>
    %59 = vector.shape_cast %58 : vector<4x16xf32> to vector<4x16x1xf32>
    %60 = tpu.reciprocal %59 {approx = true} : vector<4x16x1xf32> -> vector<4x16x1xf32>
    %61 = vector.broadcast %60 : vector<4x16x1xf32> to vector<4x16x16xf32>
    %62 = arith.mulf %57, %61 : vector<4x16x16xf32>
    %c0_22 = arith.constant 0 : index
    %63 = memref.load %arg3[%c0_22] : memref<4xf32, #tpu.memory_space<smem>>
    %64 = vector.broadcast %63 : f32 to vector<4x16x16xf32>
    %65 = arith.mulf %62, %64 : vector<4x16x16xf32>
    %c0_23 = arith.constant 0 : index
    %66 = memref.load %arg4[%c0_23] : memref<4xf32, #tpu.memory_space<smem>>
    %67 = vector.broadcast %66 : f32 to vector<4x16x16xf32>
    %68 = arith.subf %65, %67 : vector<4x16x16xf32>
    %cst_24 = arith.constant dense<0.000000e+00> : vector<4x16x8xf32>
    %69 = tpu.matmul %68, %46, %cst_24 {dimension_numbers = #tpu.dot_dimension_numbers<[2], [1], [1], [2], [0, 0, 0, 1, 1, 2], [0], [0]>} : vector<4x16x16xf32>, vector<4x16x8xf32>, vector<4x16x8xf32> -> vector<4x16x8xf32>
    %70 = vector.shape_cast %69 : vector<4x16x8xf32> to vector<64x8xf32>
    %71 = arith.truncf %70 : vector<64x8xf32> to vector<64x8xbf16>
    %c0_25 = arith.constant 0 : index
    %c0_26 = arith.constant 0 : index
    %72 = vector.load %arg12[%c0_25, %c0_26] : memref<64x32xbf16, #tpu.memory_space<vmem>>, vector<64x8xbf16>
    tpu.vector_store %arg12[%c0_25, %c0_26], %71 {strides = array<i32>} : memref<64x32xbf16, #tpu.memory_space<vmem>>, vector<64x8xbf16>,
    %73 = vector.extract_strided_slice %37 {offsets = [0, 8], sizes = [64, 8], strides = [1, 1]} : vector<64x96xf32> to vector<64x8xf32>
    %cst_27 = arith.constant 0.353553385 : f32
    %74 = vector.broadcast %cst_27 : f32 to vector<64x8xf32>
    %75 = arith.mulf %73, %74 : vector<64x8xf32>
    %76 = vector.shape_cast %75 : vector<64x8xf32> to vector<4x16x8xf32>
    %77 = vector.extract_strided_slice %37 {offsets = [0, 40], sizes = [64, 8], strides = [1, 1]} : vector<64x96xf32> to vector<64x8xf32>
    %78 = vector.shape_cast %77 : vector<64x8xf32> to vector<4x16x8xf32>
    %79 = vector.extract_strided_slice %37 {offsets = [0, 72], sizes = [64, 8], strides = [1, 1]} : vector<64x96xf32> to vector<64x8xf32>
    %80 = vector.shape_cast %79 : vector<64x8xf32> to vector<4x16x8xf32>
    %cst_28 = arith.constant dense<0.000000e+00> : vector<4x16x16xf32>
    %81 = tpu.matmul %76, %78, %cst_28 {dimension_numbers = #tpu.dot_dimension_numbers<[2], [2], [1], [1], [0, 0, 0, 1, 1, 1], [0], [0]>} : vector<4x16x8xf32>, vector<4x16x8xf32>, vector<4x16x16xf32> -> vector<4x16x16xf32>
    %82 = vector.extract_strided_slice %38 {offsets = [1, 0, 0], sizes = [1, 16, 16], strides = [1, 1, 1]} : vector<4x16x16xf32> to vector<1x16x16xf32>
    %83 = vector.shape_cast %82 : vector<1x16x16xf32> to vector<16x16xf32>
    %84 = vector.shape_cast %83 : vector<16x16xf32> to vector<1x16x16xf32>
    %85 = vector.broadcast %84 : vector<1x16x16xf32> to vector<4x16x16xf32>
    %86 = arith.addf %81, %85 : vector<4x16x16xf32>
    %cst_29 = arith.constant dense<0xFF800000> : vector<4x16xf32>
    %87 = vector.multi_reduction <maximumf>, %86, %cst_29 [2] : vector<4x16x16xf32> to vector<4x16xf32>
    %88 = vector.shape_cast %87 : vector<4x16xf32> to vector<4x16x1xf32>
    %89 = vector.broadcast %88 : vector<4x16x1xf32> to vector<4x16x16xf32>
    %90 = arith.subf %86, %89 : vector<4x16x16xf32>
    %91 = math.exp %90 : vector<4x16x16xf32>
    %cst_30 = arith.constant dense<0.000000e+00> : vector<4x16xf32>
    %92 = vector.multi_reduction <add>, %91, %cst_30 [2] : vector<4x16x16xf32> to vector<4x16xf32>
    %93 = vector.shape_cast %92 : vector<4x16xf32> to vector<4x16x1xf32>
    %94 = tpu.reciprocal %93 {approx = true} : vector<4x16x1xf32> -> vector<4x16x1xf32>
    %95 = vector.broadcast %94 : vector<4x16x1xf32> to vector<4x16x16xf32>
    %96 = arith.mulf %91, %95 : vector<4x16x16xf32>
    %c1 = arith.constant 1 : index
    %97 = memref.load %arg3[%c1] : memref<4xf32, #tpu.memory_space<smem>>
    %98 = vector.broadcast %97 : f32 to vector<4x16x16xf32>
    %99 = arith.mulf %96, %98 : vector<4x16x16xf32>
    %c1_31 = arith.constant 1 : index
    %100 = memref.load %arg4[%c1_31] : memref<4xf32, #tpu.memory_space<smem>>
    %101 = vector.broadcast %100 : f32 to vector<4x16x16xf32>
    %102 = arith.subf %99, %101 : vector<4x16x16xf32>
    %cst_32 = arith.constant dense<0.000000e+00> : vector<4x16x8xf32>
    %103 = tpu.matmul %102, %80, %cst_32 {dimension_numbers = #tpu.dot_dimension_numbers<[2], [1], [1], [2], [0, 0, 0, 1, 1, 2], [0], [0]>} : vector<4x16x16xf32>, vector<4x16x8xf32>, vector<4x16x8xf32> -> vector<4x16x8xf32>
    %104 = vector.shape_cast %103 : vector<4x16x8xf32> to vector<64x8xf32>
    %105 = arith.truncf %104 : vector<64x8xf32> to vector<64x8xbf16>
    %c0_33 = arith.constant 0 : index
    %c8 = arith.constant 8 : index
    %106 = vector.load %arg12[%c0_33, %c8] : memref<64x32xbf16, #tpu.memory_space<vmem>>, vector<64x8xbf16>
    tpu.vector_store %arg12[%c0_33, %c8], %105 {strides = array<i32>} : memref<64x32xbf16, #tpu.memory_space<vmem>>, vector<64x8xbf16>,
    %107 = vector.extract_strided_slice %37 {offsets = [0, 16], sizes = [64, 8], strides = [1, 1]} : vector<64x96xf32> to vector<64x8xf32>
    %cst_34 = arith.constant 0.353553385 : f32
    %108 = vector.broadcast %cst_34 : f32 to vector<64x8xf32>
    %109 = arith.mulf %107, %108 : vector<64x8xf32>
    %110 = vector.shape_cast %109 : vector<64x8xf32> to vector<4x16x8xf32>
    %111 = vector.extract_strided_slice %37 {offsets = [0, 48], sizes = [64, 8], strides = [1, 1]} : vector<64x96xf32> to vector<64x8xf32>
    %112 = vector.shape_cast %111 : vector<64x8xf32> to vector<4x16x8xf32>
    %113 = vector.extract_strided_slice %37 {offsets = [0, 80], sizes = [64, 8], strides = [1, 1]} : vector<64x96xf32> to vector<64x8xf32>
    %114 = vector.shape_cast %113 : vector<64x8xf32> to vector<4x16x8xf32>
    %cst_35 = arith.constant dense<0.000000e+00> : vector<4x16x16xf32>
    %115 = tpu.matmul %110, %112, %cst_35 {dimension_numbers = #tpu.dot_dimension_numbers<[2], [2], [1], [1], [0, 0, 0, 1, 1, 1], [0], [0]>} : vector<4x16x8xf32>, vector<4x16x8xf32>, vector<4x16x16xf32> -> vector<4x16x16xf32>
    %116 = vector.extract_strided_slice %38 {offsets = [2, 0, 0], sizes = [1, 16, 16], strides = [1, 1, 1]} : vector<4x16x16xf32> to vector<1x16x16xf32>
    %117 = vector.shape_cast %116 : vector<1x16x16xf32> to vector<16x16xf32>
    %118 = vector.shape_cast %117 : vector<16x16xf32> to vector<1x16x16xf32>
    %119 = vector.broadcast %118 : vector<1x16x16xf32> to vector<4x16x16xf32>
    %120 = arith.addf %115, %119 : vector<4x16x16xf32>
    %cst_36 = arith.constant dense<0xFF800000> : vector<4x16xf32>
    %121 = vector.multi_reduction <maximumf>, %120, %cst_36 [2] : vector<4x16x16xf32> to vector<4x16xf32>
    %122 = vector.shape_cast %121 : vector<4x16xf32> to vector<4x16x1xf32>
    %123 = vector.broadcast %122 : vector<4x16x1xf32> to vector<4x16x16xf32>
    %124 = arith.subf %120, %123 : vector<4x16x16xf32>
    %125 = math.exp %124 : vector<4x16x16xf32>
    %cst_37 = arith.constant dense<0.000000e+00> : vector<4x16xf32>
    %126 = vector.multi_reduction <add>, %125, %cst_37 [2] : vector<4x16x16xf32> to vector<4x16xf32>
    %127 = vector.shape_cast %126 : vector<4x16xf32> to vector<4x16x1xf32>
    %128 = tpu.reciprocal %127 {approx = true} : vector<4x16x1xf32> -> vector<4x16x1xf32>
    %129 = vector.broadcast %128 : vector<4x16x1xf32> to vector<4x16x16xf32>
    %130 = arith.mulf %125, %129 : vector<4x16x16xf32>
    %c2 = arith.constant 2 : index
    %131 = memref.load %arg3[%c2] : memref<4xf32, #tpu.memory_space<smem>>
    %132 = vector.broadcast %131 : f32 to vector<4x16x16xf32>
    %133 = arith.mulf %130, %132 : vector<4x16x16xf32>
    %c2_38 = arith.constant 2 : index
    %134 = memref.load %arg4[%c2_38] : memref<4xf32, #tpu.memory_space<smem>>
    %135 = vector.broadcast %134 : f32 to vector<4x16x16xf32>
    %136 = arith.subf %133, %135 : vector<4x16x16xf32>
    %cst_39 = arith.constant dense<0.000000e+00> : vector<4x16x8xf32>
    %137 = tpu.matmul %136, %114, %cst_39 {dimension_numbers = #tpu.dot_dimension_numbers<[2], [1], [1], [2], [0, 0, 0, 1, 1, 2], [0], [0]>} : vector<4x16x16xf32>, vector<4x16x8xf32>, vector<4x16x8xf32> -> vector<4x16x8xf32>
    %138 = vector.shape_cast %137 : vector<4x16x8xf32> to vector<64x8xf32>
    %139 = arith.truncf %138 : vector<64x8xf32> to vector<64x8xbf16>
    %c0_40 = arith.constant 0 : index
    %c16 = arith.constant 16 : index
    %140 = vector.load %arg12[%c0_40, %c16] : memref<64x32xbf16, #tpu.memory_space<vmem>>, vector<64x8xbf16>
    tpu.vector_store %arg12[%c0_40, %c16], %139 {strides = array<i32>} : memref<64x32xbf16, #tpu.memory_space<vmem>>, vector<64x8xbf16>,
    %141 = vector.extract_strided_slice %37 {offsets = [0, 24], sizes = [64, 8], strides = [1, 1]} : vector<64x96xf32> to vector<64x8xf32>
    %cst_41 = arith.constant 0.353553385 : f32
    %142 = vector.broadcast %cst_41 : f32 to vector<64x8xf32>
    %143 = arith.mulf %141, %142 : vector<64x8xf32>
    %144 = vector.shape_cast %143 : vector<64x8xf32> to vector<4x16x8xf32>
    %145 = vector.extract_strided_slice %37 {offsets = [0, 56], sizes = [64, 8], strides = [1, 1]} : vector<64x96xf32> to vector<64x8xf32>
    %146 = vector.shape_cast %145 : vector<64x8xf32> to vector<4x16x8xf32>
    %147 = vector.extract_strided_slice %37 {offsets = [0, 88], sizes = [64, 8], strides = [1, 1]} : vector<64x96xf32> to vector<64x8xf32>
    %148 = vector.shape_cast %147 : vector<64x8xf32> to vector<4x16x8xf32>
    %cst_42 = arith.constant dense<0.000000e+00> : vector<4x16x16xf32>
    %149 = tpu.matmul %144, %146, %cst_42 {dimension_numbers = #tpu.dot_dimension_numbers<[2], [2], [1], [1], [0, 0, 0, 1, 1, 1], [0], [0]>} : vector<4x16x8xf32>, vector<4x16x8xf32>, vector<4x16x16xf32> -> vector<4x16x16xf32>
    %150 = vector.extract_strided_slice %38 {offsets = [3, 0, 0], sizes = [1, 16, 16], strides = [1, 1, 1]} : vector<4x16x16xf32> to vector<1x16x16xf32>
    %151 = vector.shape_cast %150 : vector<1x16x16xf32> to vector<16x16xf32>
    %152 = vector.shape_cast %151 : vector<16x16xf32> to vector<1x16x16xf32>
    %153 = vector.broadcast %152 : vector<1x16x16xf32> to vector<4x16x16xf32>
    %154 = arith.addf %149, %153 : vector<4x16x16xf32>
    %cst_43 = arith.constant dense<0xFF800000> : vector<4x16xf32>
    %155 = vector.multi_reduction <maximumf>, %154, %cst_43 [2] : vector<4x16x16xf32> to vector<4x16xf32>
    %156 = vector.shape_cast %155 : vector<4x16xf32> to vector<4x16x1xf32>
    %157 = vector.broadcast %156 : vector<4x16x1xf32> to vector<4x16x16xf32>
    %158 = arith.subf %154, %157 : vector<4x16x16xf32>
    %159 = math.exp %158 : vector<4x16x16xf32>
    %cst_44 = arith.constant dense<0.000000e+00> : vector<4x16xf32>
    %160 = vector.multi_reduction <add>, %159, %cst_44 [2] : vector<4x16x16xf32> to vector<4x16xf32>
    %161 = vector.shape_cast %160 : vector<4x16xf32> to vector<4x16x1xf32>
    %162 = tpu.reciprocal %161 {approx = true} : vector<4x16x1xf32> -> vector<4x16x1xf32>
    %163 = vector.broadcast %162 : vector<4x16x1xf32> to vector<4x16x16xf32>
    %164 = arith.mulf %159, %163 : vector<4x16x16xf32>
    %c3 = arith.constant 3 : index
    %165 = memref.load %arg3[%c3] : memref<4xf32, #tpu.memory_space<smem>>
    %166 = vector.broadcast %165 : f32 to vector<4x16x16xf32>
    %167 = arith.mulf %164, %166 : vector<4x16x16xf32>
    %c3_45 = arith.constant 3 : index
    %168 = memref.load %arg4[%c3_45] : memref<4xf32, #tpu.memory_space<smem>>
    %169 = vector.broadcast %168 : f32 to vector<4x16x16xf32>
    %170 = arith.subf %167, %169 : vector<4x16x16xf32>
    %cst_46 = arith.constant dense<0.000000e+00> : vector<4x16x8xf32>
    %171 = tpu.matmul %170, %148, %cst_46 {dimension_numbers = #tpu.dot_dimension_numbers<[2], [1], [1], [2], [0, 0, 0, 1, 1, 2], [0], [0]>} : vector<4x16x16xf32>, vector<4x16x8xf32>, vector<4x16x8xf32> -> vector<4x16x8xf32>
    %172 = vector.shape_cast %171 : vector<4x16x8xf32> to vector<64x8xf32>
    %173 = arith.truncf %172 : vector<64x8xf32> to vector<64x8xbf16>
    %c0_47 = arith.constant 0 : index
    %c24 = arith.constant 24 : index
    %174 = vector.load %arg12[%c0_47, %c24] : memref<64x32xbf16, #tpu.memory_space<vmem>>, vector<64x8xbf16>
    tpu.vector_store %arg12[%c0_47, %c24], %173 {strides = array<i32>} : memref<64x32xbf16, #tpu.memory_space<vmem>>, vector<64x8xbf16>,
    %c0_48 = arith.constant 0 : index
    %c0_49 = arith.constant 0 : index
    %175 = vector.load %arg12[%c0_48, %c0_49] : memref<64x32xbf16, #tpu.memory_space<vmem>>, vector<64x32xbf16>
    %c0_50 = arith.constant 0 : index
    %c0_51 = arith.constant 0 : index
    %176 = vector.load %arg9[%c0_50, %c0_51] : memref<32x32xbf16, #tpu.memory_space<vmem>>, vector<32x32xbf16>
    %cst_52 = arith.constant dense<0.000000e+00> : vector<64x32xf32>
    %177 = tpu.matmul %175, %176, %cst_52 {dimension_numbers = #tpu.dot_dimension_numbers<[1], [0], [0], [1], [0, 0, 1, 1], [], []>} : vector<64x32xbf16>, vector<32x32xbf16>, vector<64x32xf32> -> vector<64x32xf32>
    %c0_53 = arith.constant 0 : index
    %c0_54 = arith.constant 0 : index
    %178 = vector.load %arg10[%c0_53, %c0_54] : memref<1x32xf32, #tpu.memory_space<vmem>>, vector<1x32xf32>
    %179 = vector.shape_cast %178 : vector<1x32xf32> to vector<32xf32>
    %180 = vector.shape_cast %179 : vector<32xf32> to vector<1x32xf32>
    %181 = vector.broadcast %180 : vector<1x32xf32> to vector<64x32xf32>
    %182 = arith.addf %177, %181 : vector<64x32xf32>
    %183 = vector.shape_cast %182 : vector<64x32xf32> to vector<4x16x32xf32>
    %184 = arith.truncf %183 : vector<4x16x32xf32> to vector<4x16x32xbf16>
    %c0_55 = arith.constant 0 : index
    %c0_56 = arith.constant 0 : index
    %c0_57 = arith.constant 0 : index
    %185 = vector.load %arg11[%c0_55, %c0_56, %c0_57] : memref<4x16x32xbf16, #tpu.memory_space<vmem>>, vector<4x16x32xbf16>
    tpu.vector_store %arg11[%c0_55, %c0_56, %c0_57], %184 {strides = array<i32>} : memref<4x16x32xbf16, #tpu.memory_space<vmem>>, vector<4x16x32xbf16>,
    return
  }
  func.func @transform_0(%arg0: i32) -> (i32, i32, i32) {
    %c0_i32 = arith.constant 0 : i32
    %c0_i32_0 = arith.constant 0 : i32
    %c0_i32_1 = arith.constant 0 : i32
    return %arg0, %c0_i32, %c0_i32_0 : i32, i32, i32
  }
  func.func @transform_1(%arg0: i32) -> (i32, i32, i32) {
    %c0_i32 = arith.constant 0 : i32
    %c0_i32_0 = arith.constant 0 : i32
    %c0_i32_1 = arith.constant 0 : i32
    %c0_i32_2 = arith.constant 0 : i32
    return %c0_i32, %c0_i32_0, %c0_i32_1 : i32, i32, i32
  }
  func.func @transform_2(%arg0: i32) -> i32 {
    %c0_i32 = arith.constant 0 : i32
    %c0_i32_0 = arith.constant 0 : i32
    return %c0_i32 : i32
  }
  func.func @transform_3(%arg0: i32) -> i32 {
    %c0_i32 = arith.constant 0 : i32
    %c0_i32_0 = arith.constant 0 : i32
    return %c0_i32 : i32
  }
  func.func @transform_4(%arg0: i32) -> (i32, i32) {
    %c0_i32 = arith.constant 0 : i32
    %c0_i32_0 = arith.constant 0 : i32
    %c0_i32_1 = arith.constant 0 : i32
    return %c0_i32, %c0_i32_0 : i32, i32
  }
  func.func @transform_5(%arg0: i32) -> (i32, i32) {
    %c0_i32 = arith.constant 0 : i32
    %c0_i32_0 = arith.constant 0 : i32
    %c0_i32_1 = arith.constant 0 : i32
    return %c0_i32, %c0_i32_0 : i32, i32
  }
  func.func @transform_6(%arg0: i32) -> (i32, i32) {
    %c0_i32 = arith.constant 0 : i32
    %c0_i32_0 = arith.constant 0 : i32
    %c0_i32_1 = arith.constant 0 : i32
    return %c0_i32, %c0_i32_0 : i32, i32
  }
  func.func @transform_7(%arg0: i32) -> (i32, i32) {
    %c0_i32 = arith.constant 0 : i32
    %c0_i32_0 = arith.constant 0 : i32
    %c0_i32_1 = arith.constant 0 : i32
    return %c0_i32, %c0_i32_0 : i32, i32
  }
  func.func @transform_8(%arg0: i32) -> (i32, i32) {
    %c0_i32 = arith.constant 0 : i32
    %c0_i32_0 = arith.constant 0 : i32
    %c0_i32_1 = arith.constant 0 : i32
    return %c0_i32, %c0_i32_0 : i32, i32
  }
  func.func @transform_9(%arg0: i32) -> (i32, i32) {
    %c0_i32 = arith.constant 0 : i32
    %c0_i32_0 = arith.constant 0 : i32
    %c0_i32_1 = arith.constant 0 : i32
    return %c0_i32, %c0_i32_0 : i32, i32
  }
  func.func @transform_10(%arg0: i32) -> (i32, i32, i32) {
    %c0_i32 = arith.constant 0 : i32
    %c0_i32_0 = arith.constant 0 : i32
    %c0_i32_1 = arith.constant 0 : i32
    return %arg0, %c0_i32, %c0_i32_0 : i32, i32, i32
  }
}

module attributes {stable_mosaic.version = 11 : i64} {
  func.func @_mlp_kernel(%arg0: i32, %arg1: memref<64x32xf32, #tpu.memory_space<vmem>>, %arg2: memref<64x32xbf16, #tpu.memory_space<vmem>>, %arg3: memref<1x32xf32, #tpu.memory_space<vmem>>, %arg4: memref<1x32xf32, #tpu.memory_space<vmem>>, %arg5: memref<32x128xbf16, #tpu.memory_space<vmem>>, %arg6: memref<1x128xf32, #tpu.memory_space<vmem>>, %arg7: memref<128x32xbf16, #tpu.memory_space<vmem>>, %arg8: memref<1x32xf32, #tpu.memory_space<vmem>>, %arg9: memref<64x32xf32, #tpu.memory_space<vmem>>) attributes {dimension_semantics = [#tpu.dimension_semantics<parallel>], iteration_bounds = array<i64: 2>, scalar_prefetch = 0 : i64, scratch_operands = 0 : i64, tpu.core_type = #tpu.core_type<tc>, window_params = [{transform_indices = @transform_0, window_bounds = array<i64: 64, 32>}, {transform_indices = @transform_1, window_bounds = array<i64: 64, 32>}, {pipeline_mode = #tpu.pipeline_mode<synchronous>, transform_indices = @transform_2, window_bounds = array<i64: 1, 32>}, {pipeline_mode = #tpu.pipeline_mode<synchronous>, transform_indices = @transform_3, window_bounds = array<i64: 1, 32>}, {pipeline_mode = #tpu.pipeline_mode<synchronous>, transform_indices = @transform_4, window_bounds = array<i64: 32, 128>}, {pipeline_mode = #tpu.pipeline_mode<synchronous>, transform_indices = @transform_5, window_bounds = array<i64: 1, 128>}, {pipeline_mode = #tpu.pipeline_mode<synchronous>, transform_indices = @transform_6, window_bounds = array<i64: 128, 32>}, {pipeline_mode = #tpu.pipeline_mode<synchronous>, transform_indices = @transform_7, window_bounds = array<i64: 1, 32>}, {transform_indices = @transform_8, window_bounds = array<i64: 64, 32>}]} {
    %c0 = arith.constant 0 : index
    %c0_0 = arith.constant 0 : index
    %0 = vector.load %arg1[%c0, %c0_0] : memref<64x32xf32, #tpu.memory_space<vmem>>, vector<64x32xf32>
    %c0_1 = arith.constant 0 : index
    %c0_2 = arith.constant 0 : index
    %1 = vector.load %arg2[%c0_1, %c0_2] : memref<64x32xbf16, #tpu.memory_space<vmem>>, vector<64x32xbf16>
    %2 = arith.extf %1 : vector<64x32xbf16> to vector<64x32xf32>
    %3 = arith.addf %0, %2 : vector<64x32xf32>
    %cst = arith.constant dense<0.000000e+00> : vector<64xf32>
    %4 = vector.multi_reduction <add>, %3, %cst [1] : vector<64x32xf32> to vector<64xf32>
    %5 = vector.shape_cast %4 : vector<64xf32> to vector<64x1xf32>
    %cst_3 = arith.constant 3.200000e+01 : f32
    %6 = vector.broadcast %cst_3 : f32 to vector<64x1xf32>
    %7 = arith.divf %5, %6 : vector<64x1xf32>
    %8 = vector.broadcast %7 : vector<64x1xf32> to vector<64x32xf32>
    %9 = arith.subf %3, %8 : vector<64x32xf32>
    %10 = arith.mulf %9, %9 : vector<64x32xf32>
    %cst_4 = arith.constant dense<0.000000e+00> : vector<64xf32>
    %11 = vector.multi_reduction <add>, %10, %cst_4 [1] : vector<64x32xf32> to vector<64xf32>
    %12 = vector.shape_cast %11 : vector<64xf32> to vector<64x1xf32>
    %cst_5 = arith.constant 3.200000e+01 : f32
    %13 = vector.broadcast %cst_5 : f32 to vector<64x1xf32>
    %14 = arith.divf %12, %13 : vector<64x1xf32>
    %15 = vector.broadcast %7 : vector<64x1xf32> to vector<64x32xf32>
    %16 = arith.subf %3, %15 : vector<64x32xf32>
    %cst_6 = arith.constant 9.99999974E-6 : f32
    %17 = vector.broadcast %cst_6 : f32 to vector<64x1xf32>
    %18 = arith.addf %14, %17 : vector<64x1xf32>
    %19 = math.rsqrt %18 : vector<64x1xf32>
    %20 = vector.broadcast %19 : vector<64x1xf32> to vector<64x32xf32>
    %21 = arith.mulf %16, %20 : vector<64x32xf32>
    %c0_7 = arith.constant 0 : index
    %c0_8 = arith.constant 0 : index
    %22 = vector.load %arg3[%c0_7, %c0_8] : memref<1x32xf32, #tpu.memory_space<vmem>>, vector<1x32xf32>
    %23 = vector.shape_cast %22 : vector<1x32xf32> to vector<32xf32>
    %24 = vector.shape_cast %23 : vector<32xf32> to vector<1x32xf32>
    %25 = vector.broadcast %24 : vector<1x32xf32> to vector<64x32xf32>
    %26 = arith.mulf %21, %25 : vector<64x32xf32>
    %c0_9 = arith.constant 0 : index
    %c0_10 = arith.constant 0 : index
    %27 = vector.load %arg4[%c0_9, %c0_10] : memref<1x32xf32, #tpu.memory_space<vmem>>, vector<1x32xf32>
    %28 = vector.shape_cast %27 : vector<1x32xf32> to vector<32xf32>
    %29 = vector.shape_cast %28 : vector<32xf32> to vector<1x32xf32>
    %30 = vector.broadcast %29 : vector<1x32xf32> to vector<64x32xf32>
    %31 = arith.addf %26, %30 : vector<64x32xf32>
    %32 = arith.truncf %31 : vector<64x32xf32> to vector<64x32xbf16>
    %c0_11 = arith.constant 0 : index
    %c0_12 = arith.constant 0 : index
    %33 = vector.load %arg5[%c0_11, %c0_12] : memref<32x128xbf16, #tpu.memory_space<vmem>>, vector<32x128xbf16>
    %cst_13 = arith.constant dense<0.000000e+00> : vector<64x128xf32>
    %34 = tpu.matmul %32, %33, %cst_13 {dimension_numbers = #tpu.dot_dimension_numbers<[1], [0], [0], [1], [0, 0, 1, 1], [], []>} : vector<64x32xbf16>, vector<32x128xbf16>, vector<64x128xf32> -> vector<64x128xf32>
    %c0_14 = arith.constant 0 : index
    %c0_15 = arith.constant 0 : index
    %35 = vector.load %arg6[%c0_14, %c0_15] : memref<1x128xf32, #tpu.memory_space<vmem>>, vector<1x128xf32>
    %36 = vector.shape_cast %35 : vector<1x128xf32> to vector<128xf32>
    %37 = vector.shape_cast %36 : vector<128xf32> to vector<1x128xf32>
    %38 = vector.broadcast %37 : vector<1x128xf32> to vector<64x128xf32>
    %39 = arith.addf %34, %38 : vector<64x128xf32>
    %cst_16 = arith.constant 5.000000e-01 : f32
    %40 = vector.broadcast %cst_16 : f32 to vector<64x128xf32>
    %41 = arith.mulf %40, %39 : vector<64x128xf32>
    %cst_17 = arith.constant 0.707106769 : f32
    %42 = vector.broadcast %cst_17 : f32 to vector<64x128xf32>
    %43 = arith.mulf %39, %42 : vector<64x128xf32>
    %44 = math.erf %43 : vector<64x128xf32>
    %cst_18 = arith.constant 1.000000e+00 : f32
    %45 = vector.broadcast %cst_18 : f32 to vector<64x128xf32>
    %46 = arith.addf %45, %44 : vector<64x128xf32>
    %47 = arith.mulf %41, %46 : vector<64x128xf32>
    %48 = arith.truncf %47 : vector<64x128xf32> to vector<64x128xbf16>
    %c0_19 = arith.constant 0 : index
    %c0_20 = arith.constant 0 : index
    %49 = vector.load %arg7[%c0_19, %c0_20] : memref<128x32xbf16, #tpu.memory_space<vmem>>, vector<128x32xbf16>
    %cst_21 = arith.constant dense<0.000000e+00> : vector<64x32xf32>
    %50 = tpu.matmul %48, %49, %cst_21 {dimension_numbers = #tpu.dot_dimension_numbers<[1], [0], [0], [1], [0, 0, 1, 1], [], []>} : vector<64x128xbf16>, vector<128x32xbf16>, vector<64x32xf32> -> vector<64x32xf32>
    %c0_22 = arith.constant 0 : index
    %c0_23 = arith.constant 0 : index
    %51 = vector.load %arg8[%c0_22, %c0_23] : memref<1x32xf32, #tpu.memory_space<vmem>>, vector<1x32xf32>
    %52 = vector.shape_cast %51 : vector<1x32xf32> to vector<32xf32>
    %53 = vector.shape_cast %52 : vector<32xf32> to vector<1x32xf32>
    %54 = vector.broadcast %53 : vector<1x32xf32> to vector<64x32xf32>
    %55 = arith.addf %50, %54 : vector<64x32xf32>
    %56 = arith.addf %3, %55 : vector<64x32xf32>
    %c0_24 = arith.constant 0 : index
    %c0_25 = arith.constant 0 : index
    %57 = vector.load %arg9[%c0_24, %c0_25] : memref<64x32xf32, #tpu.memory_space<vmem>>, vector<64x32xf32>
    tpu.vector_store %arg9[%c0_24, %c0_25], %56 {strides = array<i32>} : memref<64x32xf32, #tpu.memory_space<vmem>>, vector<64x32xf32>,
    return
  }
  func.func @transform_0(%arg0: i32) -> (i32, i32) {
    %c0_i32 = arith.constant 0 : i32
    %c0_i32_0 = arith.constant 0 : i32
    return %arg0, %c0_i32 : i32, i32
  }
  func.func @transform_1(%arg0: i32) -> (i32, i32) {
    %c0_i32 = arith.constant 0 : i32
    %c0_i32_0 = arith.constant 0 : i32
    return %arg0, %c0_i32 : i32, i32
  }
  func.func @transform_2(%arg0: i32) -> (i32, i32) {
    %c0_i32 = arith.constant 0 : i32
    %c0_i32_0 = arith.constant 0 : i32
    %c0_i32_1 = arith.constant 0 : i32
    return %c0_i32, %c0_i32_0 : i32, i32
  }
  func.func @transform_3(%arg0: i32) -> (i32, i32) {
    %c0_i32 = arith.constant 0 : i32
    %c0_i32_0 = arith.constant 0 : i32
    %c0_i32_1 = arith.constant 0 : i32
    return %c0_i32, %c0_i32_0 : i32, i32
  }
  func.func @transform_4(%arg0: i32) -> (i32, i32) {
    %c0_i32 = arith.constant 0 : i32
    %c0_i32_0 = arith.constant 0 : i32
    %c0_i32_1 = arith.constant 0 : i32
    return %c0_i32, %c0_i32_0 : i32, i32
  }
  func.func @transform_5(%arg0: i32) -> (i32, i32) {
    %c0_i32 = arith.constant 0 : i32
    %c0_i32_0 = arith.constant 0 : i32
    %c0_i32_1 = arith.constant 0 : i32
    return %c0_i32, %c0_i32_0 : i32, i32
  }
  func.func @transform_6(%arg0: i32) -> (i32, i32) {
    %c0_i32 = arith.constant 0 : i32
    %c0_i32_0 = arith.constant 0 : i32
    %c0_i32_1 = arith.constant 0 : i32
    return %c0_i32, %c0_i32_0 : i32, i32
  }
  func.func @transform_7(%arg0: i32) -> (i32, i32) {
    %c0_i32 = arith.constant 0 : i32
    %c0_i32_0 = arith.constant 0 : i32
    %c0_i32_1 = arith.constant 0 : i32
    return %c0_i32, %c0_i32_0 : i32, i32
  }
  func.func @transform_8(%arg0: i32) -> (i32, i32) {
    %c0_i32 = arith.constant 0 : i32
    %c0_i32_0 = arith.constant 0 : i32
    return %arg0, %c0_i32 : i32, i32
  }
}

module attributes {stable_mosaic.version = 11 : i64} {
  func.func @_lambda_(%arg0: i32, %arg1: memref<4x16x32xf32, #tpu.memory_space<vmem>>, %arg2: memref<4x16x16xf32, #tpu.memory_space<vmem>>, %arg3: memref<4x16x16xf32, #tpu.memory_space<vmem>>, %arg4: memref<4xf32, #tpu.memory_space<smem>>, %arg5: memref<4xf32, #tpu.memory_space<smem>>, %arg6: memref<1x32xf32, #tpu.memory_space<vmem>>, %arg7: memref<1x32xf32, #tpu.memory_space<vmem>>, %arg8: memref<32x96xbf16, #tpu.memory_space<vmem>>, %arg9: memref<1x96xf32, #tpu.memory_space<vmem>>, %arg10: memref<32x32xbf16, #tpu.memory_space<vmem>>, %arg11: memref<1x32xf32, #tpu.memory_space<vmem>>, %arg12: memref<4x16x32xbf16, #tpu.memory_space<vmem>>, %arg13: memref<64x32xbf16, #tpu.memory_space<vmem>>) attributes {dimension_semantics = [#tpu.dimension_semantics<parallel>], iteration_bounds = array<i64: 2>, scalar_prefetch = 0 : i64, scratch_operands = 1 : i64, tpu.core_type = #tpu.core_type<tc>, window_params = [{transform_indices = @transform_0, window_bounds = array<i64: 4, 16, 32>}, {pipeline_mode = #tpu.pipeline_mode<synchronous>, transform_indices = @transform_1, window_bounds = array<i64: 4, 16, 16>}, {pipeline_mode = #tpu.pipeline_mode<synchronous>, transform_indices = @transform_2, window_bounds = array<i64: 4, 16, 16>}, {transform_indices = @transform_3, window_bounds = array<i64: 4>}, {transform_indices = @transform_4, window_bounds = array<i64: 4>}, {pipeline_mode = #tpu.pipeline_mode<synchronous>, transform_indices = @transform_5, window_bounds = array<i64: 1, 32>}, {pipeline_mode = #tpu.pipeline_mode<synchronous>, transform_indices = @transform_6, window_bounds = array<i64: 1, 32>}, {pipeline_mode = #tpu.pipeline_mode<synchronous>, transform_indices = @transform_7, window_bounds = array<i64: 32, 96>}, {pipeline_mode = #tpu.pipeline_mode<synchronous>, transform_indices = @transform_8, window_bounds = array<i64: 1, 96>}, {pipeline_mode = #tpu.pipeline_mode<synchronous>, transform_indices = @transform_9, window_bounds = array<i64: 32, 32>}, {pipeline_mode = #tpu.pipeline_mode<synchronous>, transform_indices = @transform_10, window_bounds = array<i64: 1, 32>}, {transform_indices = @transform_11, window_bounds = array<i64: 4, 16, 32>}]} {
    %c0 = arith.constant 0 : index
    %c0_0 = arith.constant 0 : index
    %c0_1 = arith.constant 0 : index
    %0 = vector.load %arg1[%c0, %c0_0, %c0_1] : memref<4x16x32xf32, #tpu.memory_space<vmem>>, vector<4x16x32xf32>
    %1 = vector.shape_cast %0 : vector<4x16x32xf32> to vector<64x32xf32>
    %cst = arith.constant dense<0.000000e+00> : vector<64xf32>
    %2 = vector.multi_reduction <add>, %1, %cst [1] : vector<64x32xf32> to vector<64xf32>
    %3 = vector.shape_cast %2 : vector<64xf32> to vector<64x1xf32>
    %cst_2 = arith.constant 3.200000e+01 : f32
    %4 = vector.broadcast %cst_2 : f32 to vector<64x1xf32>
    %5 = arith.divf %3, %4 : vector<64x1xf32>
    %6 = vector.broadcast %5 : vector<64x1xf32> to vector<64x32xf32>
    %7 = arith.subf %1, %6 : vector<64x32xf32>
    %8 = arith.mulf %7, %7 : vector<64x32xf32>
    %cst_3 = arith.constant dense<0.000000e+00> : vector<64xf32>
    %9 = vector.multi_reduction <add>, %8, %cst_3 [1] : vector<64x32xf32> to vector<64xf32>
    %10 = vector.shape_cast %9 : vector<64xf32> to vector<64x1xf32>
    %cst_4 = arith.constant 3.200000e+01 : f32
    %11 = vector.broadcast %cst_4 : f32 to vector<64x1xf32>
    %12 = arith.divf %10, %11 : vector<64x1xf32>
    %13 = vector.broadcast %5 : vector<64x1xf32> to vector<64x32xf32>
    %14 = arith.subf %1, %13 : vector<64x32xf32>
    %cst_5 = arith.constant 9.99999974E-6 : f32
    %15 = vector.broadcast %cst_5 : f32 to vector<64x1xf32>
    %16 = arith.addf %12, %15 : vector<64x1xf32>
    %17 = math.rsqrt %16 : vector<64x1xf32>
    %18 = vector.broadcast %17 : vector<64x1xf32> to vector<64x32xf32>
    %19 = arith.mulf %14, %18 : vector<64x32xf32>
    %c0_6 = arith.constant 0 : index
    %c0_7 = arith.constant 0 : index
    %20 = vector.load %arg6[%c0_6, %c0_7] : memref<1x32xf32, #tpu.memory_space<vmem>>, vector<1x32xf32>
    %21 = vector.shape_cast %20 : vector<1x32xf32> to vector<32xf32>
    %22 = vector.shape_cast %21 : vector<32xf32> to vector<1x32xf32>
    %23 = vector.broadcast %22 : vector<1x32xf32> to vector<64x32xf32>
    %24 = arith.mulf %19, %23 : vector<64x32xf32>
    %c0_8 = arith.constant 0 : index
    %c0_9 = arith.constant 0 : index
    %25 = vector.load %arg7[%c0_8, %c0_9] : memref<1x32xf32, #tpu.memory_space<vmem>>, vector<1x32xf32>
    %26 = vector.shape_cast %25 : vector<1x32xf32> to vector<32xf32>
    %27 = vector.shape_cast %26 : vector<32xf32> to vector<1x32xf32>
    %28 = vector.broadcast %27 : vector<1x32xf32> to vector<64x32xf32>
    %29 = arith.addf %24, %28 : vector<64x32xf32>
    %30 = arith.truncf %29 : vector<64x32xf32> to vector<64x32xbf16>
    %c0_10 = arith.constant 0 : index
    %c0_11 = arith.constant 0 : index
    %31 = vector.load %arg8[%c0_10, %c0_11] : memref<32x96xbf16, #tpu.memory_space<vmem>>, vector<32x96xbf16>
    %cst_12 = arith.constant dense<0.000000e+00> : vector<64x96xf32>
    %32 = tpu.matmul %30, %31, %cst_12 {dimension_numbers = #tpu.dot_dimension_numbers<[1], [0], [0], [1], [0, 0, 1, 1], [], []>} : vector<64x32xbf16>, vector<32x96xbf16>, vector<64x96xf32> -> vector<64x96xf32>
    %c0_13 = arith.constant 0 : index
    %c0_14 = arith.constant 0 : index
    %33 = vector.load %arg9[%c0_13, %c0_14] : memref<1x96xf32, #tpu.memory_space<vmem>>, vector<1x96xf32>
    %34 = vector.shape_cast %33 : vector<1x96xf32> to vector<96xf32>
    %35 = vector.shape_cast %34 : vector<96xf32> to vector<1x96xf32>
    %36 = vector.broadcast %35 : vector<1x96xf32> to vector<64x96xf32>
    %37 = arith.addf %32, %36 : vector<64x96xf32>
    %c0_15 = arith.constant 0 : index
    %c0_16 = arith.constant 0 : index
    %c0_17 = arith.constant 0 : index
    %38 = vector.load %arg2[%c0_15, %c0_16, %c0_17] : memref<4x16x16xf32, #tpu.memory_space<vmem>>, vector<4x16x16xf32>
    %c0_18 = arith.constant 0 : index
    %c0_19 = arith.constant 0 : index
    %c0_20 = arith.constant 0 : index
    %39 = vector.load %arg3[%c0_18, %c0_19, %c0_20] : memref<4x16x16xf32, #tpu.memory_space<vmem>>, vector<4x16x16xf32>
    %40 = vector.shape_cast %39 : vector<4x16x16xf32> to vector<1x4x16x16xf32>
    %41 = vector.extract_strided_slice %37 {offsets = [0, 0], sizes = [64, 8], strides = [1, 1]} : vector<64x96xf32> to vector<64x8xf32>
    %cst_21 = arith.constant 0.353553385 : f32
    %42 = vector.broadcast %cst_21 : f32 to vector<64x8xf32>
    %43 = arith.mulf %41, %42 : vector<64x8xf32>
    %44 = vector.shape_cast %43 : vector<64x8xf32> to vector<4x16x8xf32>
    %45 = vector.extract_strided_slice %37 {offsets = [0, 32], sizes = [64, 8], strides = [1, 1]} : vector<64x96xf32> to vector<64x8xf32>
    %46 = vector.shape_cast %45 : vector<64x8xf32> to vector<4x16x8xf32>
    %47 = vector.extract_strided_slice %37 {offsets = [0, 64], sizes = [64, 8], strides = [1, 1]} : vector<64x96xf32> to vector<64x8xf32>
    %48 = vector.shape_cast %47 : vector<64x8xf32> to vector<4x16x8xf32>
    %cst_22 = arith.constant dense<0.000000e+00> : vector<4x16x16xf32>
    %49 = tpu.matmul %44, %46, %cst_22 {dimension_numbers = #tpu.dot_dimension_numbers<[2], [2], [1], [1], [0, 0, 0, 1, 1, 1], [0], [0]>} : vector<4x16x8xf32>, vector<4x16x8xf32>, vector<4x16x16xf32> -> vector<4x16x16xf32>
    %50 = vector.extract_strided_slice %38 {offsets = [0, 0, 0], sizes = [1, 16, 16], strides = [1, 1, 1]} : vector<4x16x16xf32> to vector<1x16x16xf32>
    %51 = vector.shape_cast %50 : vector<1x16x16xf32> to vector<16x16xf32>
    %52 = vector.shape_cast %51 : vector<16x16xf32> to vector<1x16x16xf32>
    %53 = vector.broadcast %52 : vector<1x16x16xf32> to vector<4x16x16xf32>
    %54 = arith.addf %49, %53 : vector<4x16x16xf32>
    %55 = vector.shape_cast %54 : vector<4x16x16xf32> to vector<1x4x16x16xf32>
    %56 = arith.addf %55, %40 : vector<1x4x16x16xf32>
    %57 = vector.shape_cast %56 : vector<1x4x16x16xf32> to vector<4x16x16xf32>
    %cst_23 = arith.constant dense<0xFF800000> : vector<4x16xf32>
    %58 = vector.multi_reduction <maximumf>, %57, %cst_23 [2] : vector<4x16x16xf32> to vector<4x16xf32>
    %59 = vector.shape_cast %58 : vector<4x16xf32> to vector<4x16x1xf32>
    %60 = vector.broadcast %59 : vector<4x16x1xf32> to vector<4x16x16xf32>
    %61 = arith.subf %57, %60 : vector<4x16x16xf32>
    %62 = math.exp %61 : vector<4x16x16xf32>
    %cst_24 = arith.constant dense<0.000000e+00> : vector<4x16xf32>
    %63 = vector.multi_reduction <add>, %62, %cst_24 [2] : vector<4x16x16xf32> to vector<4x16xf32>
    %64 = vector.shape_cast %63 : vector<4x16xf32> to vector<4x16x1xf32>
    %65 = tpu.reciprocal %64 {approx = true} : vector<4x16x1xf32> -> vector<4x16x1xf32>
    %66 = vector.broadcast %65 : vector<4x16x1xf32> to vector<4x16x16xf32>
    %67 = arith.mulf %62, %66 : vector<4x16x16xf32>
    %c0_25 = arith.constant 0 : index
    %68 = memref.load %arg4[%c0_25] : memref<4xf32, #tpu.memory_space<smem>>
    %69 = vector.broadcast %68 : f32 to vector<4x16x16xf32>
    %70 = arith.mulf %67, %69 : vector<4x16x16xf32>
    %c0_26 = arith.constant 0 : index
    %71 = memref.load %arg5[%c0_26] : memref<4xf32, #tpu.memory_space<smem>>
    %72 = vector.broadcast %71 : f32 to vector<4x16x16xf32>
    %73 = arith.subf %70, %72 : vector<4x16x16xf32>
    %cst_27 = arith.constant dense<0.000000e+00> : vector<4x16x8xf32>
    %74 = tpu.matmul %73, %48, %cst_27 {dimension_numbers = #tpu.dot_dimension_numbers<[2], [1], [1], [2], [0, 0, 0, 1, 1, 2], [0], [0]>} : vector<4x16x16xf32>, vector<4x16x8xf32>, vector<4x16x8xf32> -> vector<4x16x8xf32>
    %75 = vector.shape_cast %74 : vector<4x16x8xf32> to vector<64x8xf32>
    %76 = arith.truncf %75 : vector<64x8xf32> to vector<64x8xbf16>
    %c0_28 = arith.constant 0 : index
    %c0_29 = arith.constant 0 : index
    %77 = vector.load %arg13[%c0_28, %c0_29] : memref<64x32xbf16, #tpu.memory_space<vmem>>, vector<64x8xbf16>
    tpu.vector_store %arg13[%c0_28, %c0_29], %76 {strides = array<i32>} : memref<64x32xbf16, #tpu.memory_space<vmem>>, vector<64x8xbf16>,
    %78 = vector.extract_strided_slice %37 {offsets = [0, 8], sizes = [64, 8], strides = [1, 1]} : vector<64x96xf32> to vector<64x8xf32>
    %cst_30 = arith.constant 0.353553385 : f32
    %79 = vector.broadcast %cst_30 : f32 to vector<64x8xf32>
    %80 = arith.mulf %78, %79 : vector<64x8xf32>
    %81 = vector.shape_cast %80 : vector<64x8xf32> to vector<4x16x8xf32>
    %82 = vector.extract_strided_slice %37 {offsets = [0, 40], sizes = [64, 8], strides = [1, 1]} : vector<64x96xf32> to vector<64x8xf32>
    %83 = vector.shape_cast %82 : vector<64x8xf32> to vector<4x16x8xf32>
    %84 = vector.extract_strided_slice %37 {offsets = [0, 72], sizes = [64, 8], strides = [1, 1]} : vector<64x96xf32> to vector<64x8xf32>
    %85 = vector.shape_cast %84 : vector<64x8xf32> to vector<4x16x8xf32>
    %cst_31 = arith.constant dense<0.000000e+00> : vector<4x16x16xf32>
    %86 = tpu.matmul %81, %83, %cst_31 {dimension_numbers = #tpu.dot_dimension_numbers<[2], [2], [1], [1], [0, 0, 0, 1, 1, 1], [0], [0]>} : vector<4x16x8xf32>, vector<4x16x8xf32>, vector<4x16x16xf32> -> vector<4x16x16xf32>
    %87 = vector.extract_strided_slice %38 {offsets = [1, 0, 0], sizes = [1, 16, 16], strides = [1, 1, 1]} : vector<4x16x16xf32> to vector<1x16x16xf32>
    %88 = vector.shape_cast %87 : vector<1x16x16xf32> to vector<16x16xf32>
    %89 = vector.shape_cast %88 : vector<16x16xf32> to vector<1x16x16xf32>
    %90 = vector.broadcast %89 : vector<1x16x16xf32> to vector<4x16x16xf32>
    %91 = arith.addf %86, %90 : vector<4x16x16xf32>
    %92 = vector.shape_cast %91 : vector<4x16x16xf32> to vector<1x4x16x16xf32>
    %93 = arith.addf %92, %40 : vector<1x4x16x16xf32>
    %94 = vector.shape_cast %93 : vector<1x4x16x16xf32> to vector<4x16x16xf32>
    %cst_32 = arith.constant dense<0xFF800000> : vector<4x16xf32>
    %95 = vector.multi_reduction <maximumf>, %94, %cst_32 [2] : vector<4x16x16xf32> to vector<4x16xf32>
    %96 = vector.shape_cast %95 : vector<4x16xf32> to vector<4x16x1xf32>
    %97 = vector.broadcast %96 : vector<4x16x1xf32> to vector<4x16x16xf32>
    %98 = arith.subf %94, %97 : vector<4x16x16xf32>
    %99 = math.exp %98 : vector<4x16x16xf32>
    %cst_33 = arith.constant dense<0.000000e+00> : vector<4x16xf32>
    %100 = vector.multi_reduction <add>, %99, %cst_33 [2] : vector<4x16x16xf32> to vector<4x16xf32>
    %101 = vector.shape_cast %100 : vector<4x16xf32> to vector<4x16x1xf32>
    %102 = tpu.reciprocal %101 {approx = true} : vector<4x16x1xf32> -> vector<4x16x1xf32>
    %103 = vector.broadcast %102 : vector<4x16x1xf32> to vector<4x16x16xf32>
    %104 = arith.mulf %99, %103 : vector<4x16x16xf32>
    %c1 = arith.constant 1 : index
    %105 = memref.load %arg4[%c1] : memref<4xf32, #tpu.memory_space<smem>>
    %106 = vector.broadcast %105 : f32 to vector<4x16x16xf32>
    %107 = arith.mulf %104, %106 : vector<4x16x16xf32>
    %c1_34 = arith.constant 1 : index
    %108 = memref.load %arg5[%c1_34] : memref<4xf32, #tpu.memory_space<smem>>
    %109 = vector.broadcast %108 : f32 to vector<4x16x16xf32>
    %110 = arith.subf %107, %109 : vector<4x16x16xf32>
    %cst_35 = arith.constant dense<0.000000e+00> : vector<4x16x8xf32>
    %111 = tpu.matmul %110, %85, %cst_35 {dimension_numbers = #tpu.dot_dimension_numbers<[2], [1], [1], [2], [0, 0, 0, 1, 1, 2], [0], [0]>} : vector<4x16x16xf32>, vector<4x16x8xf32>, vector<4x16x8xf32> -> vector<4x16x8xf32>
    %112 = vector.shape_cast %111 : vector<4x16x8xf32> to vector<64x8xf32>
    %113 = arith.truncf %112 : vector<64x8xf32> to vector<64x8xbf16>
    %c0_36 = arith.constant 0 : index
    %c8 = arith.constant 8 : index
    %114 = vector.load %arg13[%c0_36, %c8] : memref<64x32xbf16, #tpu.memory_space<vmem>>, vector<64x8xbf16>
    tpu.vector_store %arg13[%c0_36, %c8], %113 {strides = array<i32>} : memref<64x32xbf16, #tpu.memory_space<vmem>>, vector<64x8xbf16>,
    %115 = vector.extract_strided_slice %37 {offsets = [0, 16], sizes = [64, 8], strides = [1, 1]} : vector<64x96xf32> to vector<64x8xf32>
    %cst_37 = arith.constant 0.353553385 : f32
    %116 = vector.broadcast %cst_37 : f32 to vector<64x8xf32>
    %117 = arith.mulf %115, %116 : vector<64x8xf32>
    %118 = vector.shape_cast %117 : vector<64x8xf32> to vector<4x16x8xf32>
    %119 = vector.extract_strided_slice %37 {offsets = [0, 48], sizes = [64, 8], strides = [1, 1]} : vector<64x96xf32> to vector<64x8xf32>
    %120 = vector.shape_cast %119 : vector<64x8xf32> to vector<4x16x8xf32>
    %121 = vector.extract_strided_slice %37 {offsets = [0, 80], sizes = [64, 8], strides = [1, 1]} : vector<64x96xf32> to vector<64x8xf32>
    %122 = vector.shape_cast %121 : vector<64x8xf32> to vector<4x16x8xf32>
    %cst_38 = arith.constant dense<0.000000e+00> : vector<4x16x16xf32>
    %123 = tpu.matmul %118, %120, %cst_38 {dimension_numbers = #tpu.dot_dimension_numbers<[2], [2], [1], [1], [0, 0, 0, 1, 1, 1], [0], [0]>} : vector<4x16x8xf32>, vector<4x16x8xf32>, vector<4x16x16xf32> -> vector<4x16x16xf32>
    %124 = vector.extract_strided_slice %38 {offsets = [2, 0, 0], sizes = [1, 16, 16], strides = [1, 1, 1]} : vector<4x16x16xf32> to vector<1x16x16xf32>
    %125 = vector.shape_cast %124 : vector<1x16x16xf32> to vector<16x16xf32>
    %126 = vector.shape_cast %125 : vector<16x16xf32> to vector<1x16x16xf32>
    %127 = vector.broadcast %126 : vector<1x16x16xf32> to vector<4x16x16xf32>
    %128 = arith.addf %123, %127 : vector<4x16x16xf32>
    %129 = vector.shape_cast %128 : vector<4x16x16xf32> to vector<1x4x16x16xf32>
    %130 = arith.addf %129, %40 : vector<1x4x16x16xf32>
    %131 = vector.shape_cast %130 : vector<1x4x16x16xf32> to vector<4x16x16xf32>
    %cst_39 = arith.constant dense<0xFF800000> : vector<4x16xf32>
    %132 = vector.multi_reduction <maximumf>, %131, %cst_39 [2] : vector<4x16x16xf32> to vector<4x16xf32>
    %133 = vector.shape_cast %132 : vector<4x16xf32> to vector<4x16x1xf32>
    %134 = vector.broadcast %133 : vector<4x16x1xf32> to vector<4x16x16xf32>
    %135 = arith.subf %131, %134 : vector<4x16x16xf32>
    %136 = math.exp %135 : vector<4x16x16xf32>
    %cst_40 = arith.constant dense<0.000000e+00> : vector<4x16xf32>
    %137 = vector.multi_reduction <add>, %136, %cst_40 [2] : vector<4x16x16xf32> to vector<4x16xf32>
    %138 = vector.shape_cast %137 : vector<4x16xf32> to vector<4x16x1xf32>
    %139 = tpu.reciprocal %138 {approx = true} : vector<4x16x1xf32> -> vector<4x16x1xf32>
    %140 = vector.broadcast %139 : vector<4x16x1xf32> to vector<4x16x16xf32>
    %141 = arith.mulf %136, %140 : vector<4x16x16xf32>
    %c2 = arith.constant 2 : index
    %142 = memref.load %arg4[%c2] : memref<4xf32, #tpu.memory_space<smem>>
    %143 = vector.broadcast %142 : f32 to vector<4x16x16xf32>
    %144 = arith.mulf %141, %143 : vector<4x16x16xf32>
    %c2_41 = arith.constant 2 : index
    %145 = memref.load %arg5[%c2_41] : memref<4xf32, #tpu.memory_space<smem>>
    %146 = vector.broadcast %145 : f32 to vector<4x16x16xf32>
    %147 = arith.subf %144, %146 : vector<4x16x16xf32>
    %cst_42 = arith.constant dense<0.000000e+00> : vector<4x16x8xf32>
    %148 = tpu.matmul %147, %122, %cst_42 {dimension_numbers = #tpu.dot_dimension_numbers<[2], [1], [1], [2], [0, 0, 0, 1, 1, 2], [0], [0]>} : vector<4x16x16xf32>, vector<4x16x8xf32>, vector<4x16x8xf32> -> vector<4x16x8xf32>
    %149 = vector.shape_cast %148 : vector<4x16x8xf32> to vector<64x8xf32>
    %150 = arith.truncf %149 : vector<64x8xf32> to vector<64x8xbf16>
    %c0_43 = arith.constant 0 : index
    %c16 = arith.constant 16 : index
    %151 = vector.load %arg13[%c0_43, %c16] : memref<64x32xbf16, #tpu.memory_space<vmem>>, vector<64x8xbf16>
    tpu.vector_store %arg13[%c0_43, %c16], %150 {strides = array<i32>} : memref<64x32xbf16, #tpu.memory_space<vmem>>, vector<64x8xbf16>,
    %152 = vector.extract_strided_slice %37 {offsets = [0, 24], sizes = [64, 8], strides = [1, 1]} : vector<64x96xf32> to vector<64x8xf32>
    %cst_44 = arith.constant 0.353553385 : f32
    %153 = vector.broadcast %cst_44 : f32 to vector<64x8xf32>
    %154 = arith.mulf %152, %153 : vector<64x8xf32>
    %155 = vector.shape_cast %154 : vector<64x8xf32> to vector<4x16x8xf32>
    %156 = vector.extract_strided_slice %37 {offsets = [0, 56], sizes = [64, 8], strides = [1, 1]} : vector<64x96xf32> to vector<64x8xf32>
    %157 = vector.shape_cast %156 : vector<64x8xf32> to vector<4x16x8xf32>
    %158 = vector.extract_strided_slice %37 {offsets = [0, 88], sizes = [64, 8], strides = [1, 1]} : vector<64x96xf32> to vector<64x8xf32>
    %159 = vector.shape_cast %158 : vector<64x8xf32> to vector<4x16x8xf32>
    %cst_45 = arith.constant dense<0.000000e+00> : vector<4x16x16xf32>
    %160 = tpu.matmul %155, %157, %cst_45 {dimension_numbers = #tpu.dot_dimension_numbers<[2], [2], [1], [1], [0, 0, 0, 1, 1, 1], [0], [0]>} : vector<4x16x8xf32>, vector<4x16x8xf32>, vector<4x16x16xf32> -> vector<4x16x16xf32>
    %161 = vector.extract_strided_slice %38 {offsets = [3, 0, 0], sizes = [1, 16, 16], strides = [1, 1, 1]} : vector<4x16x16xf32> to vector<1x16x16xf32>
    %162 = vector.shape_cast %161 : vector<1x16x16xf32> to vector<16x16xf32>
    %163 = vector.shape_cast %162 : vector<16x16xf32> to vector<1x16x16xf32>
    %164 = vector.broadcast %163 : vector<1x16x16xf32> to vector<4x16x16xf32>
    %165 = arith.addf %160, %164 : vector<4x16x16xf32>
    %166 = vector.shape_cast %165 : vector<4x16x16xf32> to vector<1x4x16x16xf32>
    %167 = arith.addf %166, %40 : vector<1x4x16x16xf32>
    %168 = vector.shape_cast %167 : vector<1x4x16x16xf32> to vector<4x16x16xf32>
    %cst_46 = arith.constant dense<0xFF800000> : vector<4x16xf32>
    %169 = vector.multi_reduction <maximumf>, %168, %cst_46 [2] : vector<4x16x16xf32> to vector<4x16xf32>
    %170 = vector.shape_cast %169 : vector<4x16xf32> to vector<4x16x1xf32>
    %171 = vector.broadcast %170 : vector<4x16x1xf32> to vector<4x16x16xf32>
    %172 = arith.subf %168, %171 : vector<4x16x16xf32>
    %173 = math.exp %172 : vector<4x16x16xf32>
    %cst_47 = arith.constant dense<0.000000e+00> : vector<4x16xf32>
    %174 = vector.multi_reduction <add>, %173, %cst_47 [2] : vector<4x16x16xf32> to vector<4x16xf32>
    %175 = vector.shape_cast %174 : vector<4x16xf32> to vector<4x16x1xf32>
    %176 = tpu.reciprocal %175 {approx = true} : vector<4x16x1xf32> -> vector<4x16x1xf32>
    %177 = vector.broadcast %176 : vector<4x16x1xf32> to vector<4x16x16xf32>
    %178 = arith.mulf %173, %177 : vector<4x16x16xf32>
    %c3 = arith.constant 3 : index
    %179 = memref.load %arg4[%c3] : memref<4xf32, #tpu.memory_space<smem>>
    %180 = vector.broadcast %179 : f32 to vector<4x16x16xf32>
    %181 = arith.mulf %178, %180 : vector<4x16x16xf32>
    %c3_48 = arith.constant 3 : index
    %182 = memref.load %arg5[%c3_48] : memref<4xf32, #tpu.memory_space<smem>>
    %183 = vector.broadcast %182 : f32 to vector<4x16x16xf32>
    %184 = arith.subf %181, %183 : vector<4x16x16xf32>
    %cst_49 = arith.constant dense<0.000000e+00> : vector<4x16x8xf32>
    %185 = tpu.matmul %184, %159, %cst_49 {dimension_numbers = #tpu.dot_dimension_numbers<[2], [1], [1], [2], [0, 0, 0, 1, 1, 2], [0], [0]>} : vector<4x16x16xf32>, vector<4x16x8xf32>, vector<4x16x8xf32> -> vector<4x16x8xf32>
    %186 = vector.shape_cast %185 : vector<4x16x8xf32> to vector<64x8xf32>
    %187 = arith.truncf %186 : vector<64x8xf32> to vector<64x8xbf16>
    %c0_50 = arith.constant 0 : index
    %c24 = arith.constant 24 : index
    %188 = vector.load %arg13[%c0_50, %c24] : memref<64x32xbf16, #tpu.memory_space<vmem>>, vector<64x8xbf16>
    tpu.vector_store %arg13[%c0_50, %c24], %187 {strides = array<i32>} : memref<64x32xbf16, #tpu.memory_space<vmem>>, vector<64x8xbf16>,
    %c0_51 = arith.constant 0 : index
    %c0_52 = arith.constant 0 : index
    %189 = vector.load %arg13[%c0_51, %c0_52] : memref<64x32xbf16, #tpu.memory_space<vmem>>, vector<64x32xbf16>
    %c0_53 = arith.constant 0 : index
    %c0_54 = arith.constant 0 : index
    %190 = vector.load %arg10[%c0_53, %c0_54] : memref<32x32xbf16, #tpu.memory_space<vmem>>, vector<32x32xbf16>
    %cst_55 = arith.constant dense<0.000000e+00> : vector<64x32xf32>
    %191 = tpu.matmul %189, %190, %cst_55 {dimension_numbers = #tpu.dot_dimension_numbers<[1], [0], [0], [1], [0, 0, 1, 1], [], []>} : vector<64x32xbf16>, vector<32x32xbf16>, vector<64x32xf32> -> vector<64x32xf32>
    %c0_56 = arith.constant 0 : index
    %c0_57 = arith.constant 0 : index
    %192 = vector.load %arg11[%c0_56, %c0_57] : memref<1x32xf32, #tpu.memory_space<vmem>>, vector<1x32xf32>
    %193 = vector.shape_cast %192 : vector<1x32xf32> to vector<32xf32>
    %194 = vector.shape_cast %193 : vector<32xf32> to vector<1x32xf32>
    %195 = vector.broadcast %194 : vector<1x32xf32> to vector<64x32xf32>
    %196 = arith.addf %191, %195 : vector<64x32xf32>
    %197 = vector.shape_cast %196 : vector<64x32xf32> to vector<4x16x32xf32>
    %198 = arith.truncf %197 : vector<4x16x32xf32> to vector<4x16x32xbf16>
    %c0_58 = arith.constant 0 : index
    %c0_59 = arith.constant 0 : index
    %c0_60 = arith.constant 0 : index
    %199 = vector.load %arg12[%c0_58, %c0_59, %c0_60] : memref<4x16x32xbf16, #tpu.memory_space<vmem>>, vector<4x16x32xbf16>
    tpu.vector_store %arg12[%c0_58, %c0_59, %c0_60], %198 {strides = array<i32>} : memref<4x16x32xbf16, #tpu.memory_space<vmem>>, vector<4x16x32xbf16>,
    return
  }
  func.func @transform_0(%arg0: i32) -> (i32, i32, i32) {
    %c0_i32 = arith.constant 0 : i32
    %c0_i32_0 = arith.constant 0 : i32
    %c0_i32_1 = arith.constant 0 : i32
    return %arg0, %c0_i32, %c0_i32_0 : i32, i32, i32
  }
  func.func @transform_1(%arg0: i32) -> (i32, i32, i32) {
    %c0_i32 = arith.constant 0 : i32
    %c0_i32_0 = arith.constant 0 : i32
    %c0_i32_1 = arith.constant 0 : i32
    %c0_i32_2 = arith.constant 0 : i32
    return %c0_i32, %c0_i32_0, %c0_i32_1 : i32, i32, i32
  }
  func.func @transform_2(%arg0: i32) -> (i32, i32, i32) {
    %c0_i32 = arith.constant 0 : i32
    %c0_i32_0 = arith.constant 0 : i32
    %c0_i32_1 = arith.constant 0 : i32
    %c0_i32_2 = arith.constant 0 : i32
    return %c0_i32, %c0_i32_0, %c0_i32_1 : i32, i32, i32
  }
  func.func @transform_3(%arg0: i32) -> i32 {
    %c0_i32 = arith.constant 0 : i32
    %c0_i32_0 = arith.constant 0 : i32
    return %c0_i32 : i32
  }
  func.func @transform_4(%arg0: i32) -> i32 {
    %c0_i32 = arith.constant 0 : i32
    %c0_i32_0 = arith.constant 0 : i32
    return %c0_i32 : i32
  }
  func.func @transform_5(%arg0: i32) -> (i32, i32) {
    %c0_i32 = arith.constant 0 : i32
    %c0_i32_0 = arith.constant 0 : i32
    %c0_i32_1 = arith.constant 0 : i32
    return %c0_i32, %c0_i32_0 : i32, i32
  }
  func.func @transform_6(%arg0: i32) -> (i32, i32) {
    %c0_i32 = arith.constant 0 : i32
    %c0_i32_0 = arith.constant 0 : i32
    %c0_i32_1 = arith.constant 0 : i32
    return %c0_i32, %c0_i32_0 : i32, i32
  }
  func.func @transform_7(%arg0: i32) -> (i32, i32) {
    %c0_i32 = arith.constant 0 : i32
    %c0_i32_0 = arith.constant 0 : i32
    %c0_i32_1 = arith.constant 0 : i32
    return %c0_i32, %c0_i32_0 : i32, i32
  }
  func.func @transform_8(%arg0: i32) -> (i32, i32) {
    %c0_i32 = arith.constant 0 : i32
    %c0_i32_0 = arith.constant 0 : i32
    %c0_i32_1 = arith.constant 0 : i32
    return %c0_i32, %c0_i32_0 : i32, i32
  }
  func.func @transform_9(%arg0: i32) -> (i32, i32) {
    %c0_i32 = arith.constant 0 : i32
    %c0_i32_0 = arith.constant 0 : i32
    %c0_i32_1 = arith.constant 0 : i32
    return %c0_i32, %c0_i32_0 : i32, i32
  }
  func.func @transform_10(%arg0: i32) -> (i32, i32) {
    %c0_i32 = arith.constant 0 : i32
    %c0_i32_0 = arith.constant 0 : i32
    %c0_i32_1 = arith.constant 0 : i32
    return %c0_i32, %c0_i32_0 : i32, i32
  }
  func.func @transform_11(%arg0: i32) -> (i32, i32, i32) {
    %c0_i32 = arith.constant 0 : i32
    %c0_i32_0 = arith.constant 0 : i32
    %c0_i32_1 = arith.constant 0 : i32
    return %arg0, %c0_i32, %c0_i32_0 : i32, i32, i32
  }
}

</mosaic_0001>

<llo_original>
// kernel: _lambda_.5
$region0: #{_lambda_.5}
  #allocation0 [shape = 'u32[]', space=smem, size = 0x4, offset = 0x4, fixed_abs, tag = 'smem constant byte address 0x4 - core index']
  #allocation1 [shape = 'u32[144,128]{1,0:T(1,128)}', space=vmem, size = 0x12000, scoped, tag = 'internal scratch']
  %s0 = inlined_call_operand.vmem [shape: f32[128,32], index: 0, kind: input, shape index: {}]
  %s1 = inlined_call_operand.vmem [shape: bf16[128,32], index: 1, kind: input, shape index: {}]
  %s2 = inlined_call_operand.vmem [shape: f32[1,32], index: 2, kind: input, shape index: {}]
  %s3 = inlined_call_operand.vmem [shape: f32[1,32], index: 3, kind: input, shape index: {}]
  %s4 = inlined_call_operand.vmem [shape: bf16[32,128], index: 4, kind: input, shape index: {}]
  %s5 = inlined_call_operand.vmem [shape: f32[1,128], index: 5, kind: input, shape index: {}]
  %s6 = inlined_call_operand.vmem [shape: bf16[128,32], index: 6, kind: input, shape index: {}]
  %s7 = inlined_call_operand.vmem [shape: f32[1,32], index: 7, kind: input, shape index: {}]
  %s8 = inlined_call_operand.vmem [shape: f32[128,32], index: 8, kind: output, shape index: {}]
  %s9 = sld [smem:[#allocation0]]
  $region65: #{_lambda_.5} parent=0
    _
  %s11 = ssub.s32 1, %s9
  %s12 = scalar_select 0, %s11, %s9
  loop: start=0, step=1, limit=4
  $region2: #{_lambda_.5} parent=0 // loop_pre_header
    _
  $region3: #{_lambda_.5} parent=0 // loop_header
    %s14 = sphi 0, %s18
    %p15 = scmp.ge.s32.totalorder %s14, 4
    %s24 = sphi 0, %s26
    %s27 = sphi 0, %s24
    %s28 = sphi 0, %s27
    %s44 = sphi 0, %s28
    %s50 = sphi 0, %s52
    %s53 = sphi 0, %s50
    %s54 = sphi 0, %s53
    %s70 = sphi 0, %s54
    %s74 = sphi 0, %s74
    %s76 = sphi 0, %s74
    %s77 = sphi 0, %s76
    %s91 = sphi 0, %s77
    %s95 = sphi 0, %s95
    %s97 = sphi 0, %s95
    %s98 = sphi 0, %s97
    %s112 = sphi 0, %s98
    %s116 = sphi 0, %s116
    %s118 = sphi 0, %s116
    %s119 = sphi 0, %s118
    %s133 = sphi 0, %s119
    %s137 = sphi 0, %s137
    %s139 = sphi 0, %s137
    %s140 = sphi 0, %s139
    %s154 = sphi 0, %s140
    %s158 = sphi 0, %s158
    %s160 = sphi 0, %s158
    %s161 = sphi 0, %s160
    %s175 = sphi 0, %s161
    %s179 = sphi 0, %s179
    %s181 = sphi 0, %s179
    %s182 = sphi 0, %s181
    %s196 = sphi 0, %s182
    %s202 = sphi 0, %s204
    %s205 = sphi 0, %s202
    %s206 = sphi 0, %s205
    %s222 = sphi 0, %s206
  $region4: #{_lambda_.5} parent=0 // loop_header_branch
    %17 = sbr.rel (%p15) target = $region8
  $region5: #{_lambda_.5} parent=0 // loop_body
    %s19 = ssub.s32 %s14, 1
    %s20 = ssub.s32 %s14, 2
    %s21 = sadd.s32 %s14, 1
    %s22 = ssub.s32 %s14, %s21
    %p23 = scmp.eq.s32.totalorder %s22, 0
    %s25 = sadd.s32 %s24, 1
    %s26 = scalar_select %p23, %s24, %s25
    %p29 = pneg %p23
    %p30 = scmp.eq.s32.totalorder %s14, 1
    %p31 = por %p29, %p30
    %p32 = scmp.ne.s32.totalorder %s24, %s27
    %p33 = scmp.eq.s32.totalorder %s14, 0
    %p34 = por %p32, %p33
    %p35 = scmp.ne.s32.totalorder %s24, %s27
    %p36 = scmp.eq.s32.totalorder %s19, 1
    %p37 = por %p35, %p36
    %p38 = scmp.ne.s32.totalorder %s27, %s28
    %p39 = scmp.eq.s32.totalorder %s19, 0
    %p40 = por %p38, %p39
    %p41 = scmp.ne.s32.totalorder %s27, %s28
    %p42 = scmp.eq.s32.totalorder %s20, 1
    %p43 = por %p41, %p42
    %p45 = scmp.ne.s32.totalorder %s28, %s44
    %p46 = scmp.eq.s32.totalorder %s20, 0
    %p47 = por %p45, %p46
    %s48 = ssub.s32 %s14, %s21
    %p49 = scmp.eq.s32.totalorder %s48, 0
    %s51 = sadd.s32 %s50, 1
    %s52 = scalar_select %p49, %s50, %s51
    %p55 = pneg %p49
    %p56 = scmp.eq.s32.totalorder %s14, 1
    %p57 = por %p55, %p56
    %p58 = scmp.ne.s32.totalorder %s50, %s53
    %p59 = scmp.eq.s32.totalorder %s14, 0
    %p60 = por %p58, %p59
    %p61 = scmp.ne.s32.totalorder %s50, %s53
    %p62 = scmp.eq.s32.totalorder %s19, 1
    %p63 = por %p61, %p62
    %p64 = scmp.ne.s32.totalorder %s53, %s54
    %p65 = scmp.eq.s32.totalorder %s19, 0
    %p66 = por %p64, %p65
    %p67 = scmp.ne.s32.totalorder %s53, %s54
    %p68 = scmp.eq.s32.totalorder %s20, 1
    %p69 = por %p67, %p68
    %p71 = scmp.ne.s32.totalorder %s54, %s70
    %p72 = scmp.eq.s32.totalorder %s20, 0
    %p73 = por %p71, %p72
    %s75 = sadd.s32 %s74, 1
    %p78 = scmp.eq.s32.totalorder %s14, 1
    %p79 = scmp.ne.s32.totalorder %s74, %s76
    %p80 = scmp.eq.s32.totalorder %s14, 0
    %p81 = por %p79, %p80
    %p82 = scmp.ne.s32.totalorder %s74, %s76
    %p83 = scmp.eq.s32.totalorder %s19, 1
    %p84 = por %p82, %p83
    %p85 = scmp.ne.s32.totalorder %s76, %s77
    %p86 = scmp.eq.s32.totalorder %s19, 0
    %p87 = por %p85, %p86
    %p88 = scmp.ne.s32.totalorder %s76, %s77
    %p89 = scmp.eq.s32.totalorder %s20, 1
    %p90 = por %p88, %p89
    %p92 = scmp.ne.s32.totalorder %s77, %s91
    %p93 = scmp.eq.s32.totalorder %s20, 0
    %p94 = por %p92, %p93
    %s96 = sadd.s32 %s95, 1
    %p99 = scmp.eq.s32.totalorder %s14, 1
    %p100 = scmp.ne.s32.totalorder %s95, %s97
    %p101 = scmp.eq.s32.totalorder %s14, 0
    %p102 = por %p100, %p101
    %p103 = scmp.ne.s32.totalorder %s95, %s97
    %p104 = scmp.eq.s32.totalorder %s19, 1
    %p105 = por %p103, %p104
    %p106 = scmp.ne.s32.totalorder %s97, %s98
    %p107 = scmp.eq.s32.totalorder %s19, 0
    %p108 = por %p106, %p107
    %p109 = scmp.ne.s32.totalorder %s97, %s98
    %p110 = scmp.eq.s32.totalorder %s20, 1
    %p111 = por %p109, %p110
    %p113 = scmp.ne.s32.totalorder %s98, %s112
    %p114 = scmp.eq.s32.totalorder %s20, 0
    %p115 = por %p113, %p114
    %s117 = sadd.s32 %s116, 1
    %p120 = scmp.eq.s32.totalorder %s14, 1
    %p121 = scmp.ne.s32.totalorder %s116, %s118
    %p122 = scmp.eq.s32.totalorder %s14, 0
    %p123 = por %p121, %p122
    %p124 = scmp.ne.s32.totalorder %s116, %s118
    %p125 = scmp.eq.s32.totalorder %s19, 1
    %p126 = por %p124, %p125
    %p127 = scmp.ne.s32.totalorder %s118, %s119
    %p128 = scmp.eq.s32.totalorder %s19, 0
    %p129 = por %p127, %p128
    %p130 = scmp.ne.s32.totalorder %s118, %s119
    %p131 = scmp.eq.s32.totalorder %s20, 1
    %p132 = por %p130, %p131
    %p134 = scmp.ne.s32.totalorder %s119, %s133
    %p135 = scmp.eq.s32.totalorder %s20, 0
    %p136 = por %p134, %p135
    %s138 = sadd.s32 %s137, 1
    %p141 = scmp.eq.s32.totalorder %s14, 1
    %p142 = scmp.ne.s32.totalorder %s137, %s139
    %p143 = scmp.eq.s32.totalorder %s14, 0
    %p144 = por %p142, %p143
    %p145 = scmp.ne.s32.totalorder %s137, %s139
    %p146 = scmp.eq.s32.totalorder %s19, 1
    %p147 = por %p145, %p146
    %p148 = scmp.ne.s32.totalorder %s139, %s140
    %p149 = scmp.eq.s32.totalorder %s19, 0
    %p150 = por %p148, %p149
    %p151 = scmp.ne.s32.totalorder %s139, %s140
    %p152 = scmp.eq.s32.totalorder %s20, 1
    %p153 = por %p151, %p152
    %p155 = scmp.ne.s32.totalorder %s140, %s154
    %p156 = scmp.eq.s32.totalorder %s20, 0
    %p157 = por %p155, %p156
    %s159 = sadd.s32 %s158, 1
    %p162 = scmp.eq.s32.totalorder %s14, 1
    %p163 = scmp.ne.s32.totalorder %s158, %s160
    %p164 = scmp.eq.s32.totalorder %s14, 0
    %p165 = por %p163, %p164
    %p166 = scmp.ne.s32.totalorder %s158, %s160
    %p167 = scmp.eq.s32.totalorder %s19, 1
    %p168 = por %p166, %p167
    %p169 = scmp.ne.s32.totalorder %s160, %s161
    %p170 = scmp.eq.s32.totalorder %s19, 0
    %p171 = por %p169, %p170
    %p172 = scmp.ne.s32.totalorder %s160, %s161
    %p173 = scmp.eq.s32.totalorder %s20, 1
    %p174 = por %p172, %p173
    %p176 = scmp.ne.s32.totalorder %s161, %s175
    %p177 = scmp.eq.s32.totalorder %s20, 0
    %p178 = por %p176, %p177
    %s180 = sadd.s32 %s179, 1
    %p183 = scmp.eq.s32.totalorder %s14, 1
    %p184 = scmp.ne.s32.totalorder %s179, %s181
    %p185 = scmp.eq.s32.totalorder %s14, 0
    %p186 = por %p184, %p185
    %p187 = scmp.ne.s32.totalorder %s179, %s181
    %p188 = scmp.eq.s32.totalorder %s19, 1
    %p189 = por %p187, %p188
    %p190 = scmp.ne.s32.totalorder %s181, %s182
    %p191 = scmp.eq.s32.totalorder %s19, 0
    %p192 = por %p190, %p191
    %p193 = scmp.ne.s32.totalorder %s181, %s182
    %p194 = scmp.eq.s32.totalorder %s20, 1
    %p195 = por %p193, %p194
    %p197 = scmp.ne.s32.totalorder %s182, %s196
    %p198 = scmp.eq.s32.totalorder %s20, 0
    %p199 = por %p197, %p198
    %s200 = ssub.s32 %s14, %s21
    %p201 = scmp.eq.s32.totalorder %s200, 0
    %s203 = sadd.s32 %s202, 1
    %s204 = scalar_select %p201, %s202, %s203
    %p207 = pneg %p201
    %p208 = scmp.eq.s32.totalorder %s14, 1
    %p209 = por %p207, %p208
    %p210 = scmp.ne.s32.totalorder %s202, %s205
    %p211 = scmp.eq.s32.totalorder %s14, 0
    %p212 = por %p210, %p211
    %p213 = scmp.ne.s32.totalorder %s202, %s205
    %p214 = scmp.eq.s32.totalorder %s19, 1
    %p215 = por %p213, %p214
    %p216 = scmp.ne.s32.totalorder %s205, %s206
    %p217 = scmp.eq.s32.totalorder %s19, 0
    %p218 = por %p216, %p217
    %p219 = scmp.ne.s32.totalorder %s205, %s206
    %p220 = scmp.eq.s32.totalorder %s20, 1
    %p221 = por %p219, %p220
    %p223 = scmp.ne.s32.totalorder %s206, %s222
    %p224 = scmp.eq.s32.totalorder %s20, 0
    %p225 = por %p223, %p224
    %p226 = scmp.le.s32.totalorder 1, %s14
    %p227 = scmp.lt.s32.totalorder %s14, 3
    %p228 = pnand %p226, %p227
    %p229 = pneg %p228
    // Predicated region
    $region9: #{_lambda_.5} parent=5 // pred_check
      _
    $region10: #{_lambda_.5} parent=5 // pred_check_branch
      %231 = sbr.rel (%p228) target = $region12
    $region11: #{_lambda_.5} parent=5 // pred_region
      %s232 = ssub.s32 %s14, 1
      // Predicated region
      $region13: #{_lambda_.5} parent=11 // pred_check
        %p233 = pneg %p87
      $region14: #{_lambda_.5} parent=11 // pred_check_branch
        %235 = sbr.rel (%p233) target = $region16
      $region15: #{_lambda_.5} parent=11 // pred_region
        _
      $region16: #{_lambda_.5} parent=11 // pred_fallthru
        _
      // Predicated region
      $region17: #{_lambda_.5} parent=11 // pred_check
        %p236 = pneg %p108
      $region18: #{_lambda_.5} parent=11 // pred_check_branch
        %238 = sbr.rel (%p236) target = $region20
      $region19: #{_lambda_.5} parent=11 // pred_region
        _
      $region20: #{_lambda_.5} parent=11 // pred_fallthru
        _
      // Predicated region
      $region21: #{_lambda_.5} parent=11 // pred_check
        %p239 = pneg %p129
      $region22: #{_lambda_.5} parent=11 // pred_check_branch
        %241 = sbr.rel (%p239) target = $region24
      $region23: #{_lambda_.5} parent=11 // pred_region
        _
      $region24: #{_lambda_.5} parent=11 // pred_fallthru
        _
      // Predicated region
      $region25: #{_lambda_.5} parent=11 // pred_check
        %p242 = pneg %p150
      $region26: #{_lambda_.5} parent=11 // pred_check_branch
        %244 = sbr.rel (%p242) target = $region28
      $region27: #{_lambda_.5} parent=11 // pred_region
        _
      $region28: #{_lambda_.5} parent=11 // pred_fallthru
        _
      // Predicated region
      $region29: #{_lambda_.5} parent=11 // pred_check
        %p245 = pneg %p171
      $region30: #{_lambda_.5} parent=11 // pred_check_branch
        %247 = sbr.rel (%p245) target = $region32
      $region31: #{_lambda_.5} parent=11 // pred_region
        _
      $region32: #{_lambda_.5} parent=11 // pred_fallthru
        _
      // Predicated region
      $region33: #{_lambda_.5} parent=11 // pred_check
        %p248 = pneg %p192
      $region34: #{_lambda_.5} parent=11 // pred_check_branch
        %250 = sbr.rel (%p248) target = $region36
      $region35: #{_lambda_.5} parent=11 // pred_region
        _
      $region36: #{_lambda_.5} parent=11 // pred_fallthru
        _
    $region12: #{_lambda_.5} parent=5 // pred_fallthru
      _
    %p251 = scmp.lt.s32.totalorder %s14, 2
    // Predicated region
    $region37: #{_lambda_.5} parent=5 // pred_check
      %p252 = pneg %p251
    $region38: #{_lambda_.5} parent=5 // pred_check_branch
      %254 = sbr.rel (%p252) target = $region40
    $region39: #{_lambda_.5} parent=5 // pred_region
      // Predicated region
      $region41: #{_lambda_.5} parent=39 // pred_check
        %p255 = pneg %p34
      $region42: #{_lambda_.5} parent=39 // pred_check_branch
        %257 = sbr.rel (%p255) target = $region44
      $region43: #{_lambda_.5} parent=39 // pred_region
        %s258 = smul.u32 8, %s14
        %p259 = scmp.lt.s32.totalorder %s258, 15
        %s260 = scalar_select %p259, %s258, 15
        %s261 = smul.addr %s260, 8
        %s262 = scalar_lea.vmem %s0, %s261
        %s263 = smul.u32 8, %s14
      $region44: #{_lambda_.5} parent=39 // pred_fallthru
        _
      // Predicated region
      $region45: #{_lambda_.5} parent=39 // pred_check
        %p264 = pneg %p60
      $region46: #{_lambda_.5} parent=39 // pred_check_branch
        %266 = sbr.rel (%p264) target = $region48
      $region47: #{_lambda_.5} parent=39 // pred_region
        %s267 = smul.u32 8, %s14
        %p268 = scmp.lt.s32.totalorder %s267, 15
        %s269 = scalar_select %p268, %s267, 15
        %s270 = smul.addr %s269, 4
        %s271 = scalar_lea.vmem %s1, %s270
        %s272 = smul.u32 8, %s14
      $region48: #{_lambda_.5} parent=39 // pred_fallthru
        _
    $region40: #{_lambda_.5} parent=5 // pred_fallthru
      _
    %p273 = scmp.le.s32.totalorder 1, %s14
    %p274 = scmp.lt.s32.totalorder %s14, 3
    %p275 = pnand %p273, %p274
    %p276 = pneg %p275
    // Predicated region
    $region49: #{_lambda_.5} parent=5 // pred_check
      _
    $region50: #{_lambda_.5} parent=5 // pred_check_branch
      %278 = sbr.rel (%p275) target = $region52
    $region51: #{_lambda_.5} parent=5 // pred_region
      %s279 = ssub.s32 %s14, 1
      %s280 = smul.u32 8, %s19
      %p281 = scmp.lt.s32.totalorder %s280, 15
      %s282 = scalar_select %p281, %s280, 15
      %s283 = smul.addr %s282, 8
      %s284 = scalar_lea.vmem %s0, %s283
      %p285 = pneg %p40
      %p286 = pneg %p37
      %s287 = smul.u32 8, %s19
      %p288 = scmp.lt.s32.totalorder %s287, 15
      %s289 = scalar_select %p288, %s287, 15
      %s290 = smul.addr %s289, 4
      %s291 = scalar_lea.vmem %s1, %s290
      %p292 = pneg %p66
      %p293 = pneg %p63
      %p294 = pneg %p87
      %p295 = pneg %p84
      %p296 = pneg %p108
      %p297 = pneg %p105
      %p298 = pneg %p129
      %p299 = pneg %p126
      %p300 = pneg %p150
      %p301 = pneg %p147
      %p302 = pneg %p171
      %p303 = pneg %p168
      %p304 = pneg %p192
      %p305 = pneg %p189
      %p306 = pneg %p218
      %p307 = pneg %p215
      %s308 = smul.u32 8, %s19
      %p309 = scmp.lt.s32.totalorder %s308, 15
      %s310 = scalar_select %p309, %s308, 15
      %s311 = smul.addr %s310, 8
      %s312 = scalar_lea.vmem %s8, %s311
      %s313 = smul.u32 8, %s19
      %p314 = scmp.lt.s32.totalorder %s313, 15
      %s315 = scalar_select %p314, %s313, 15
      %s316 = smul.addr %s315, 8
      %s317 = scalar_lea.vmem %s0, %s316
      %s318 = smul.u32 8, %s19
      %s319 = smul.u32 8, %s19
      %p320 = scmp.lt.s32.totalorder %s319, 15
      %s321 = scalar_select %p320, %s319, 15
      %s322 = smul.addr %s321, 4
      %s323 = scalar_lea.vmem %s1, %s322
      %s324 = smul.u32 8, %s19
      %s325 = smul.u32 8, %s19
      %p326 = scmp.lt.s32.totalorder %s325, 15
      %s327 = scalar_select %p326, %s325, 15
      %s328 = smul.addr %s327, 8
      %s329 = scalar_lea.vmem %s8, %s328
      %s330 = smul.u32 8, %s19
      %v332 = vld [vmem:[%s317] sm:$0xff]
      %v333 = vld [vmem:[%s317 + $0x8] sm:$0xff]
      %v334 = vld [vmem:[%s317 + $0x10] sm:$0xff]
      %v335 = vld [vmem:[%s317 + $0x18] sm:$0xff]
      %v336 = vld [vmem:[%s317 + $0x20] sm:$0xff]
      %v337 = vld [vmem:[%s317 + $0x28] sm:$0xff]
      %v338 = vld [vmem:[%s317 + $0x30] sm:$0xff]
      %v339 = vld [vmem:[%s317 + $0x38] sm:$0xff]
      %v340 = vld [vmem:[%s323] sm:$0xf]
      %v341 = vld [vmem:[%s323 + $0x4] sm:$0xf]
      %v342 = vld [vmem:[%s323 + $0x8] sm:$0xf]
      %v343 = vld [vmem:[%s323 + $0xc] sm:$0xf]
      %v344 = vld [vmem:[%s323 + $0x10] sm:$0xf]
      %v345 = vld [vmem:[%s323 + $0x14] sm:$0xf]
      %v346 = vld [vmem:[%s323 + $0x18] sm:$0xf]
      %v347 = vld [vmem:[%s323 + $0x1c] sm:$0xf]
      %v348 = vunpack.c.l.bf16 %v340
      %v349 = vunpack.c.l.bf16 %v341
      %v350 = vunpack.c.l.bf16 %v342
      %v351 = vunpack.c.l.bf16 %v343
      %v352 = vunpack.c.l.bf16 %v344
      %v353 = vunpack.c.l.bf16 %v345
      %v354 = vunpack.c.l.bf16 %v346
      %v355 = vunpack.c.l.bf16 %v347
      %v356 = vadd.f32 %v332, %v348
      %v357 = vadd.f32 %v333, %v349
      %v358 = vadd.f32 %v334, %v350
      %v359 = vadd.f32 %v335, %v351
      %v360 = vadd.f32 %v336, %v352
      %v361 = vadd.f32 %v337, %v353
      %v362 = vadd.f32 %v338, %v354
      %v363 = vadd.f32 %v339, %v355
      %vm364 = vcmask 261120
      %v365 = vsel %vm364, %v356, 0.0
      %366 = vadd.xlane.f32.xlu0 %v365
      %v367 = vpop.xlane.xlu0 %366
      %v368 = vsel %vm364, %v357, 0.0
      %369 = vadd.xlane.f32.xlu0 %v368
      %v370 = vpop.xlane.xlu0 %369
      %v371 = vsel %vm364, %v358, 0.0
      %372 = vadd.xlane.f32.xlu0 %v371
      %v373 = vpop.xlane.xlu0 %372
      %v374 = vsel %vm364, %v359, 0.0
      %375 = vadd.xlane.f32.xlu0 %v374
      %v376 = vpop.xlane.xlu0 %375
      %v377 = vsel %vm364, %v360, 0.0
      %378 = vadd.xlane.f32.xlu0 %v377
      %v379 = vpop.xlane.xlu0 %378
      %v380 = vsel %vm364, %v361, 0.0
      %381 = vadd.xlane.f32.xlu0 %v380
      %v382 = vpop.xlane.xlu0 %381
      %v383 = vsel %vm364, %v362, 0.0
      %384 = vadd.xlane.f32.xlu0 %v383
      %v385 = vpop.xlane.xlu0 %384
      %v386 = vsel %vm364, %v363, 0.0
      %387 = vadd.xlane.f32.xlu0 %v386
      %v388 = vpop.xlane.xlu0 %387
      %v389 = vrcp.pop 32.0
      %v390 = vmul.f32 %v367, %v389
      %v391 = vmul.f32 %v370, %v389
      %v392 = vmul.f32 %v373, %v389
      %v393 = vmul.f32 %v376, %v389
      %v394 = vmul.f32 %v379, %v389
      %v395 = vmul.f32 %v382, %v389
      %v396 = vmul.f32 %v385, %v389
      %v397 = vmul.f32 %v388, %v389
      %v398 = vsub.f32 %v356, %v390
      %v399 = vsub.f32 %v357, %v391
      %v400 = vsub.f32 %v358, %v392
      %v401 = vsub.f32 %v359, %v393
      %v402 = vsub.f32 %v360, %v394
      %v403 = vsub.f32 %v361, %v395
      %v404 = vsub.f32 %v362, %v396
      %v405 = vsub.f32 %v363, %v397
      %v406 = vmul.f32 %v398, %v398
      %v407 = vmul.f32 %v399, %v399
      %v408 = vmul.f32 %v400, %v400
      %v409 = vmul.f32 %v401, %v401
      %v410 = vmul.f32 %v402, %v402
      %v411 = vmul.f32 %v403, %v403
      %v412 = vmul.f32 %v404, %v404
      %v413 = vmul.f32 %v405, %v405
      %v414 = vsel %vm364, %v406, 0.0
      %415 = vadd.xlane.f32.xlu0 %v414
      %v416 = vpop.xlane.xlu0 %415
      %v417 = vsel %vm364, %v407, 0.0
      %418 = vadd.xlane.f32.xlu0 %v417
      %v419 = vpop.xlane.xlu0 %418
      %v420 = vsel %vm364, %v408, 0.0
      %421 = vadd.xlane.f32.xlu0 %v420
      %v422 = vpop.xlane.xlu0 %421
      %v423 = vsel %vm364, %v409, 0.0
      %424 = vadd.xlane.f32.xlu0 %v423
      %v425 = vpop.xlane.xlu0 %424
      %v426 = vsel %vm364, %v410, 0.0
      %427 = vadd.xlane.f32.xlu0 %v426
      %v428 = vpop.xlane.xlu0 %427
      %v429 = vsel %vm364, %v411, 0.0
      %430 = vadd.xlane.f32.xlu0 %v429
      %v431 = vpop.xlane.xlu0 %430
      %v432 = vsel %vm364, %v412, 0.0
      %433 = vadd.xlane.f32.xlu0 %v432
      %v434 = vpop.xlane.xlu0 %433
      %v435 = vsel %vm364, %v413, 0.0
      %436 = vadd.xlane.f32.xlu0 %v435
      %v437 = vpop.xlane.xlu0 %436
      %v438 = vmul.f32 %v416, %v389
      %v439 = vmul.f32 %v419, %v389
      %v440 = vmul.f32 %v422, %v389
      %v441 = vmul.f32 %v425, %v389
      %v442 = vmul.f32 %v428, %v389
      %v443 = vmul.f32 %v431, %v389
      %v444 = vmul.f32 %v434, %v389
      %v445 = vmul.f32 %v437, %v389
      %v446 = vadd.f32 %v438, 1e-05
      %v447 = vadd.f32 %v439, 1e-05
      %v448 = vadd.f32 %v440, 1e-05
      %v449 = vadd.f32 %v441, 1e-05
      %v450 = vadd.f32 %v442, 1e-05
      %v451 = vadd.f32 %v443, 1e-05
      %v452 = vadd.f32 %v444, 1e-05
      %v453 = vadd.f32 %v445, 1e-05
      %v454 = vrsqrt.pop %v446
      %v455 = vrsqrt.pop %v447
      %v456 = vrsqrt.pop %v448
      %v457 = vrsqrt.pop %v449
      %v458 = vrsqrt.pop %v450
      %v459 = vrsqrt.pop %v451
      %v460 = vrsqrt.pop %v452
      %v461 = vrsqrt.pop %v453
      %v462 = vmul.f32 %v398, %v454
      %v463 = vmul.f32 %v399, %v455
      %v464 = vmul.f32 %v400, %v456
      %v465 = vmul.f32 %v401, %v457
      %v466 = vmul.f32 %v402, %v458
      %v467 = vmul.f32 %v403, %v459
      %v468 = vmul.f32 %v404, %v460
      %v469 = vmul.f32 %v405, %v461
      %v470 = vld [vmem:[%s2] sm:$0x1]
      %v472 = vlaneseq
      %v473 = vshrl.u32 %v472, 7
      %v474 = vsub.s32 0, %v473
      %v475 = vrot.slane %v470, %v474
      %v477 = vmul.f32 %v462, %v475
      %v478 = vmul.f32 %v463, %v475
      %v479 = vmul.f32 %v464, %v475
      %v480 = vmul.f32 %v465, %v475
      %v481 = vmul.f32 %v466, %v475
      %v482 = vmul.f32 %v467, %v475
      %v483 = vmul.f32 %v468, %v475
      %v484 = vmul.f32 %v469, %v475
      %v485 = vld [vmem:[%s3] sm:$0x1]
      %v487 = vlaneseq
      %v488 = vshrl.u32 %v487, 7
      %v489 = vsub.s32 0, %v488
      %v490 = vrot.slane %v485, %v489
      %v492 = vadd.f32 %v477, %v490
      %v493 = vadd.f32 %v478, %v490
      %v494 = vadd.f32 %v479, %v490
      %v495 = vadd.f32 %v480, %v490
      %v496 = vadd.f32 %v481, %v490
      %v497 = vadd.f32 %v482, %v490
      %v498 = vadd.f32 %v483, %v490
      %v499 = vadd.f32 %v484, %v490
      %v500 = vpack.c.bf16 %v493, %v492
      %v501 = vpack.c.bf16 %v495, %v494
      %v502 = vpack.c.bf16 %v497, %v496
      %v503 = vpack.c.bf16 %v499, %v498
      %v504 = vld [vmem:[%s4] sm:$0xf]
      %v505 = vld [vmem:[%s4 + $0x4] sm:$0xf]
      %v506 = vld [vmem:[%s4 + $0x8] sm:$0xf]
      %v507 = vld [vmem:[%s4 + $0xc] sm:$0xf]
      %v508 = vld [vmem:[%s5] sm:$0x1]
      %v510 = vlaneseq
      %v511 = vshrl.u32 %v510, 7
      %v512 = vsub.s32 0, %v511
      %v513 = vrot.slane %v508, %v512
      %v519 = vunpack.c.l.b16 %v504
      %v520 = vunpack.c.l.b16 %v505
      %v521 = vunpack.c.l.b16 %v506
      %v522 = vunpack.c.l.b16 %v507
      %v523 = vpack.c.b16 %v520, %v519
      %v524 = vpack.c.b16 %v522, %v521
      %v528 = vsel %vm364, %v500, 0
      %v531 = vsel %vm364, %v501, 0
      %v534 = vsel %vm364, %v502, 0
      %v537 = vsel %vm364, %v503, 0
      %539 = vmatprep.subr.bf16.mxu0 0
      %540 = vmatpush1.bf16.msra.mxu0 %v523
      %541 = vmatprep.subr.bf16.mxu0 0
      %542 = vmatpush1.bf16.msra.mxu0 %v524
      %543 = vmatprep.subr.bf16.mxu0 0
      %544 = vmatpush1.bf16.msra.mxu0 0
      %545 = vmatprep.subr.bf16.mxu0 0
      %546 = vmatpush1.bf16.msra.mxu0 0
      %547 = vmatprep.subr.bf16.mxu0 0
      %548 = vmatpush1.bf16.msra.mxu0 0
      %549 = vmatprep.subr.bf16.mxu0 0
      %550 = vmatpush1.bf16.msra.mxu0 0
      %551 = vmatprep.subr.bf16.mxu0 0
      %552 = vmatpush1.bf16.msra.mxu0 0
      %553 = vmatprep.subr.bf16.mxu0 0
      %554 = vmatpush1.bf16.msra.mxu0 0
      %555 = vmatprep.subr.bf16.mxu0 0
      %556 = vmatpush1.bf16.msra.mxu0 0
      %557 = vmatprep.subr.bf16.mxu0 0
      %558 = vmatpush1.bf16.msra.mxu0 0
      %559 = vmatprep.subr.bf16.mxu0 0
      %560 = vmatpush1.bf16.msra.mxu0 0
      %561 = vmatprep.subr.bf16.mxu0 0
      %562 = vmatpush1.bf16.msra.mxu0 0
      %563 = vmatprep.subr.bf16.mxu0 0
      %564 = vmatpush1.bf16.msra.mxu0 0
      %565 = vmatprep.subr.bf16.mxu0 0
      %566 = vmatpush1.bf16.msra.mxu0 0
      %567 = vmatprep.subr.bf16.mxu0 0
      %568 = vmatpush1.bf16.msra.mxu0 0
      %569 = vmatprep.subr.bf16.mxu0 0
      %570 = vmatpush1.bf16.msra.mxu0 0
      %571 = vmatprep.mubr.bf16.mxu0 0
      %572 = vmatmul.mubr.bf16.gmra.mrb[0].mxu0 %v528
      %v573 = vpop.f32.mrb[0].mxu0
      %v574 = vadd.f32 %v513, %v573
      %v575 = vpop.f32.mrb[0].mxu0
      %v576 = vpop.f32.mrb[0].mxu0
      %v577 = vadd.f32 %v513, %v576
      %v578 = vpop.f32.mrb[0].mxu0
      %579 = vmatprep.mubr.bf16.mxu0 0
      %580 = vmatmul.mubr.bf16.gmra.mrb[0].mxu0 %v531
      %v581 = vpop.f32.mrb[0].mxu0
      %v582 = vadd.f32 %v513, %v581
      %v583 = vpop.f32.mrb[0].mxu0
      %v584 = vpop.f32.mrb[0].mxu0
      %v585 = vadd.f32 %v513, %v584
      %v586 = vpop.f32.mrb[0].mxu0
      %587 = vmatprep.mubr.bf16.mxu0 0
      %588 = vmatmul.mubr.bf16.gmra.mrb[0].mxu0 %v534
      %v589 = vpop.f32.mrb[0].mxu0
      %v590 = vadd.f32 %v513, %v589
      %v591 = vpop.f32.mrb[0].mxu0
      %v592 = vpop.f32.mrb[0].mxu0
      %v593 = vadd.f32 %v513, %v592
      %v594 = vpop.f32.mrb[0].mxu0
      %595 = vmatprep.mubr.bf16.mxu0 0
      %596 = vmatmul.mubr.bf16.gmra.mrb[0].mxu0 %v537
      %v597 = vpop.f32.mrb[0].mxu0
      %v598 = vadd.f32 %v513, %v597
      %v599 = vpop.f32.mrb[0].mxu0
      %v600 = vpop.f32.mrb[0].mxu0
      %v601 = vadd.f32 %v513, %v600
      %v602 = vpop.f32.mrb[0].mxu0
      %603 = vdwg.mxu0
      %v604 = vmul.f32 %v574, 0.5
      %v605 = vmul.f32 %v577, 0.5
      %v606 = vmul.f32 %v582, 0.5
      %v607 = vmul.f32 %v585, 0.5
      %v608 = vmul.f32 %v590, 0.5
      %v609 = vmul.f32 %v593, 0.5
      %v610 = vmul.f32 %v598, 0.5
      %v611 = vmul.f32 %v601, 0.5
      %v612 = vmul.f32 %v574, 0.70710677
      %v613 = vmul.f32 %v577, 0.70710677
      %v614 = vmul.f32 %v582, 0.70710677
      %v615 = vmul.f32 %v585, 0.70710677
      %v616 = vmul.f32 %v590, 0.70710677
      %v617 = vmul.f32 %v593, 0.70710677
      %v618 = vmul.f32 %v598, 0.70710677
      %v619 = vmul.f32 %v601, 0.70710677
      %v620 = verf.f32.pop %v612
      %v621 = verf.f32.pop %v613
      %v622 = verf.f32.pop %v614
      %v623 = verf.f32.pop %v615
      %v624 = verf.f32.pop %v616
      %v625 = verf.f32.pop %v617
      %v626 = verf.f32.pop %v618
      %v627 = verf.f32.pop %v619
      %v628 = vadd.f32 %v620, 1.0
      %v629 = vadd.f32 %v621, 1.0
      %v630 = vadd.f32 %v622, 1.0
      %v631 = vadd.f32 %v623, 1.0
      %v632 = vadd.f32 %v624, 1.0
      %v633 = vadd.f32 %v625, 1.0
      %v634 = vadd.f32 %v626, 1.0
      %v635 = vadd.f32 %v627, 1.0
      %v636 = vmul.f32 %v604, %v628
      %v637 = vmul.f32 %v605, %v629
      %v638 = vmul.f32 %v606, %v630
      %v639 = vmul.f32 %v607, %v631
      %v640 = vmul.f32 %v608, %v632
      %v641 = vmul.f32 %v609, %v633
      %v642 = vmul.f32 %v610, %v634
      %v643 = vmul.f32 %v611, %v635
      %v644 = vpack.c.bf16 %v637, %v636
      %v645 = vpack.c.bf16 %v639, %v638
      %v646 = vpack.c.bf16 %v641, %v640
      %v647 = vpack.c.bf16 %v643, %v642
      %v648 = vld [vmem:[%s6] sm:$0xf]
      %v649 = vld [vmem:[%s6 + $0x4] sm:$0xf]
      %v650 = vld [vmem:[%s6 + $0x8] sm:$0xf]
      %v651 = vld [vmem:[%s6 + $0xc] sm:$0xf]
      %v652 = vld [vmem:[%s6 + $0x10] sm:$0xf]
      %v653 = vld [vmem:[%s6 + $0x14] sm:$0xf]
      %v654 = vld [vmem:[%s6 + $0x18] sm:$0xf]
      %v655 = vld [vmem:[%s6 + $0x1c] sm:$0xf]
      %v656 = vld [vmem:[%s6 + $0x20] sm:$0xf]
      %v657 = vld [vmem:[%s6 + $0x24] sm:$0xf]
      %v658 = vld [vmem:[%s6 + $0x28] sm:$0xf]
      %v659 = vld [vmem:[%s6 + $0x2c] sm:$0xf]
      %v660 = vld [vmem:[%s6 + $0x30] sm:$0xf]
      %v661 = vld [vmem:[%s6 + $0x34] sm:$0xf]
      %v662 = vld [vmem:[%s6 + $0x38] sm:$0xf]
      %v663 = vld [vmem:[%s6 + $0x3c] sm:$0xf]
      %v664 = vld [vmem:[%s7] sm:$0x1]
      %v666 = vlaneseq
      %v667 = vshrl.u32 %v666, 7
      %v668 = vsub.s32 0, %v667
      %v669 = vrot.slane %v664, %v668
      %v687 = vunpack.c.l.b16 %v648
      %v688 = vunpack.c.l.b16 %v649
      %v689 = vunpack.c.l.b16 %v650
      %v690 = vunpack.c.l.b16 %v651
      %v691 = vunpack.c.l.b16 %v652
      %v692 = vunpack.c.l.b16 %v653
      %v693 = vunpack.c.l.b16 %v654
      %v694 = vunpack.c.l.b16 %v655
      %v695 = vunpack.c.l.b16 %v656
      %v696 = vunpack.c.l.b16 %v657
      %v697 = vunpack.c.l.b16 %v658
      %v698 = vunpack.c.l.b16 %v659
      %v699 = vunpack.c.l.b16 %v660
      %v700 = vunpack.c.l.b16 %v661
      %v701 = vunpack.c.l.b16 %v662
      %v702 = vunpack.c.l.b16 %v663
      %v703 = vpack.c.b16 %v688, %v687
      %v704 = vpack.c.b16 %v690, %v689
      %v705 = vpack.c.b16 %v692, %v691
      %v706 = vpack.c.b16 %v694, %v693
      %v707 = vpack.c.b16 %v696, %v695
      %v708 = vpack.c.b16 %v698, %v697
      %v709 = vpack.c.b16 %v700, %v699
      %v710 = vpack.c.b16 %v702, %v701
      %719 = vmatprep.subr.bf16.mxu0 0
      %720 = vmatpush1.bf16.msra.mxu0 %v703
      %721 = vmatprep.subr.bf16.mxu0 0
      %722 = vmatpush1.bf16.msra.mxu0 %v704
      %723 = vmatprep.subr.bf16.mxu0 0
      %724 = vmatpush1.bf16.msra.mxu0 %v705
      %725 = vmatprep.subr.bf16.mxu0 0
      %726 = vmatpush1.bf16.msra.mxu0 %v706
      %727 = vmatprep.subr.bf16.mxu0 0
      %728 = vmatpush1.bf16.msra.mxu0 %v707
      %729 = vmatprep.subr.bf16.mxu0 0
      %730 = vmatpush1.bf16.msra.mxu0 %v708
      %731 = vmatprep.subr.bf16.mxu0 0
      %732 = vmatpush1.bf16.msra.mxu0 %v709
      %733 = vmatprep.subr.bf16.mxu0 0
      %734 = vmatpush1.bf16.msra.mxu0 %v710
      %735 = vmatprep.subr.bf16.mxu0 0
      %736 = vmatpush1.bf16.msra.mxu0 0
      %737 = vmatprep.subr.bf16.mxu0 0
      %738 = vmatpush1.bf16.msra.mxu0 0
      %739 = vmatprep.subr.bf16.mxu0 0
      %740 = vmatpush1.bf16.msra.mxu0 0
      %741 = vmatprep.subr.bf16.mxu0 0
      %742 = vmatpush1.bf16.msra.mxu0 0
      %743 = vmatprep.subr.bf16.mxu0 0
      %744 = vmatpush1.bf16.msra.mxu0 0
      %745 = vmatprep.subr.bf16.mxu0 0
      %746 = vmatpush1.bf16.msra.mxu0 0
      %747 = vmatprep.subr.bf16.mxu0 0
      %748 = vmatpush1.bf16.msra.mxu0 0
      %749 = vmatprep.subr.bf16.mxu0 0
      %750 = vmatpush1.bf16.msra.mxu0 0
      %751 = vmatprep.mubr.bf16.mxu0 0
      %752 = vmatmul.mubr.bf16.gmra.mrb[0].mxu0 %v644
      %v753 = vpop.f32.mrb[0].mxu0
      %v754 = vadd.f32 %v669, %v753
      %v755 = vpop.f32.mrb[0].mxu0
      %v756 = vpop.f32.mrb[0].mxu0
      %v757 = vadd.f32 %v669, %v756
      %v758 = vpop.f32.mrb[0].mxu0
      %759 = vmatprep.mubr.bf16.mxu0 0
      %760 = vmatmul.mubr.bf16.gmra.mrb[0].mxu0 %v645
      %v761 = vpop.f32.mrb[0].mxu0
      %v762 = vadd.f32 %v669, %v761
      %v763 = vpop.f32.mrb[0].mxu0
      %v764 = vpop.f32.mrb[0].mxu0
      %v765 = vadd.f32 %v669, %v764
      %v766 = vpop.f32.mrb[0].mxu0
      %767 = vmatprep.mubr.bf16.mxu0 0
      %768 = vmatmul.mubr.bf16.gmra.mrb[0].mxu0 %v646
      %v769 = vpop.f32.mrb[0].mxu0
      %v770 = vadd.f32 %v669, %v769
      %v771 = vpop.f32.mrb[0].mxu0
      %v772 = vpop.f32.mrb[0].mxu0
      %v773 = vadd.f32 %v669, %v772
      %v774 = vpop.f32.mrb[0].mxu0
      %775 = vmatprep.mubr.bf16.mxu0 0
      %776 = vmatmul.mubr.bf16.gmra.mrb[0].mxu0 %v647
      %v777 = vpop.f32.mrb[0].mxu0
      %v778 = vadd.f32 %v669, %v777
      %v779 = vpop.f32.mrb[0].mxu0
      %v780 = vpop.f32.mrb[0].mxu0
      %v781 = vadd.f32 %v669, %v780
      %v782 = vpop.f32.mrb[0].mxu0
      %783 = vdwg.mxu0
      %v784 = vadd.f32 %v356, %v754
      %v785 = vadd.f32 %v357, %v757
      %v786 = vadd.f32 %v358, %v762
      %v787 = vadd.f32 %v359, %v765
      %v788 = vadd.f32 %v360, %v770
      %v789 = vadd.f32 %v361, %v773
      %v790 = vadd.f32 %v362, %v778
      %v791 = vadd.f32 %v363, %v781
      %792 = vst.msk [vmem:[%s329] sm:$0xff] %vm364, %v784
      %793 = vst.msk [vmem:[%s329 + $0x8] sm:$0xff] %vm364, %v785
      %794 = vst.msk [vmem:[%s329 + $0x10] sm:$0xff] %vm364, %v786
      %795 = vst.msk [vmem:[%s329 + $0x18] sm:$0xff] %vm364, %v787
      %796 = vst.msk [vmem:[%s329 + $0x20] sm:$0xff] %vm364, %v788
      %797 = vst.msk [vmem:[%s329 + $0x28] sm:$0xff] %vm364, %v789
      %798 = vst.msk [vmem:[%s329 + $0x30] sm:$0xff] %vm364, %v790
      %799 = vst.msk [vmem:[%s329 + $0x38] sm:$0xff] %vm364, %v791
      %s800 = smul.u32 8, %s19
      %p801 = scmp.lt.s32.totalorder %s800, 15
      %s802 = scalar_select %p801, %s800, 15
      %s803 = smul.addr %s802, 8
      %s804 = scalar_lea.vmem %s8, %s803
      // Predicated region
      $region53: #{_lambda_.5} parent=51 // pred_check
        %p805 = pneg %p215
      $region54: #{_lambda_.5} parent=51 // pred_check_branch
        %807 = sbr.rel (%p805) target = $region56
      $region55: #{_lambda_.5} parent=51 // pred_region
        %s808 = smul.u32 8, %s19
      $region56: #{_lambda_.5} parent=51 // pred_fallthru
        _
    $region52: #{_lambda_.5} parent=5 // pred_fallthru
      _
    %p809 = scmp.le.s32.totalorder 2, %s14
    // Predicated region
    $region57: #{_lambda_.5} parent=5 // pred_check
      %p810 = pneg %p809
    $region58: #{_lambda_.5} parent=5 // pred_check_branch
      %812 = sbr.rel (%p810) target = $region60
    $region59: #{_lambda_.5} parent=5 // pred_region
      %s813 = ssub.s32 %s14, 2
      // Predicated region
      $region61: #{_lambda_.5} parent=59 // pred_check
        %p814 = pneg %p221
      $region62: #{_lambda_.5} parent=59 // pred_check_branch
        %816 = sbr.rel (%p814) target = $region64
      $region63: #{_lambda_.5} parent=59 // pred_region
        %s817 = smul.u32 8, %s20
        %p818 = scmp.lt.s32.totalorder %s817, 15
        %s819 = scalar_select %p818, %s817, 15
        %s820 = smul.addr %s819, 8
        %s821 = scalar_lea.vmem %s8, %s820
      $region64: #{_lambda_.5} parent=59 // pred_fallthru
        _
    $region60: #{_lambda_.5} parent=5 // pred_fallthru
      _
  $region6: #{_lambda_.5} parent=0 // loop_footer
    %s18 = sadd.s32 1, %s14
  $region7: #{_lambda_.5} parent=0 // loop_footer_branch
    %13 = sbr.rel target = $region3
  $region8: #{_lambda_.5} parent=0 // loop_exit
    _

// kernel: _lambda_.4
$region0: #{_lambda_.4}
  #allocation0 [shape = 'u32[]', space=smem, size = 0x4, offset = 0x4, fixed_abs, tag = 'smem constant byte address 0x4 - core index']
  #allocation1 [shape = 'u32[144,128]{1,0:T(1,128)}', space=vmem, size = 0x12000, scoped, tag = 'internal scratch']
  #allocation2 [shape = 'bf16[64,32]{1,0:T(16,128)(2,1)}', space=vmem, size = 0x4000, scoped, tag = 'scratch operand']
  %s0 = inlined_call_operand.vmem [shape: f32[8,16,32], index: 0, kind: input, shape index: {}]
  %s1 = inlined_call_operand.vmem [shape: f32[4,16,16], index: 1, kind: input, shape index: {}]
  %s2 = inlined_call_operand.vmem [shape: f32[4], index: 2, kind: input, shape index: {}]
  %s3 = inlined_call_operand.vmem [shape: f32[4], index: 3, kind: input, shape index: {}]
  %s4 = inlined_call_operand.vmem [shape: f32[1,32], index: 4, kind: input, shape index: {}]
  %s5 = inlined_call_operand.vmem [shape: f32[1,32], index: 5, kind: input, shape index: {}]
  %s6 = inlined_call_operand.vmem [shape: bf16[32,96], index: 6, kind: input, shape index: {}]
  %s7 = inlined_call_operand.vmem [shape: f32[1,96], index: 7, kind: input, shape index: {}]
  %s8 = inlined_call_operand.vmem [shape: bf16[32,32], index: 8, kind: input, shape index: {}]
  %s9 = inlined_call_operand.vmem [shape: f32[1,32], index: 9, kind: input, shape index: {}]
  %s10 = inlined_call_operand.vmem [shape: bf16[8,16,32], index: 10, kind: output, shape index: {}]
  %s11 = sld [smem:[#allocation0]]
  $region81: #{_lambda_.4} parent=0
    _
  %s13 = ssub.s32 1, %s11
  %s14 = scalar_select 0, %s13, %s11
  $region1: #{_lambda_.4} parent=0
    #allocation3 [shape = 'u8[512]{0}', space=smem, size = 0x200, scoped, tag = 'input window, operand 2, single buffered']
    #allocation4 [shape = 's32[2]{0}', space=sflag, size = 0x8, scoped, tag = 'scoped memory for _lambda_.4']
    #allocation5 [shape = 'u8[512]{0}', space=smem, size = 0x200, scoped, tag = 'input window, operand 3, single buffered']
    #allocation6 [shape = 's32[1]{0}', space=sflag, size = 0x4, scoped, tag = 'scoped memory for _lambda_.4']
    %15 = vsyncpa [#allocation4], 0
    %16 = vsyncpa [#allocation6], 0
    loop: start=0, step=1, limit=4
    $region2: #{_lambda_.4} parent=1 // loop_pre_header
      _
    $region3: #{_lambda_.4} parent=1 // loop_header
      %s18 = sphi 0, %s22
      %p19 = scmp.ge.s32.totalorder %s18, 4
      %s28 = sphi 0, %s30
      %s31 = sphi 0, %s28
      %s32 = sphi 0, %s31
      %s48 = sphi 0, %s32
      %s52 = sphi 0, %s52
      %s54 = sphi 0, %s52
      %s55 = sphi 0, %s54
      %s69 = sphi 0, %s55
      %s73 = sphi 0, %s73
      %s75 = sphi 0, %s73
      %s76 = sphi 0, %s75
      %s90 = sphi 0, %s76
      %s94 = sphi 0, %s94
      %s96 = sphi 0, %s94
      %s97 = sphi 0, %s96
      %s111 = sphi 0, %s97
      %s115 = sphi 0, %s115
      %s117 = sphi 0, %s115
      %s118 = sphi 0, %s117
      %s132 = sphi 0, %s118
      %s136 = sphi 0, %s136
      %s138 = sphi 0, %s136
      %s139 = sphi 0, %s138
      %s153 = sphi 0, %s139
      %s157 = sphi 0, %s157
      %s159 = sphi 0, %s157
      %s160 = sphi 0, %s159
      %s174 = sphi 0, %s160
      %s178 = sphi 0, %s178
      %s180 = sphi 0, %s178
      %s181 = sphi 0, %s180
      %s195 = sphi 0, %s181
      %s199 = sphi 0, %s199
      %s201 = sphi 0, %s199
      %s202 = sphi 0, %s201
      %s216 = sphi 0, %s202
      %s220 = sphi 0, %s220
      %s222 = sphi 0, %s220
      %s223 = sphi 0, %s222
      %s237 = sphi 0, %s223
      %s243 = sphi 0, %s245
      %s246 = sphi 0, %s243
      %s247 = sphi 0, %s246
      %s263 = sphi 0, %s247
    $region4: #{_lambda_.4} parent=1 // loop_header_branch
      %21 = sbr.rel (%p19) target = $region8
    $region5: #{_lambda_.4} parent=1 // loop_body
      %s23 = ssub.s32 %s18, 1
      %s24 = ssub.s32 %s18, 2
      %s25 = sadd.s32 %s18, 1
      %s26 = ssub.s32 %s18, %s25
      %p27 = scmp.eq.s32.totalorder %s26, 0
      %s29 = sadd.s32 %s28, 1
      %s30 = scalar_select %p27, %s28, %s29
      %p33 = pneg %p27
      %p34 = scmp.eq.s32.totalorder %s18, 1
      %p35 = por %p33, %p34
      %p36 = scmp.ne.s32.totalorder %s28, %s31
      %p37 = scmp.eq.s32.totalorder %s18, 0
      %p38 = por %p36, %p37
      %p39 = scmp.ne.s32.totalorder %s28, %s31
      %p40 = scmp.eq.s32.totalorder %s23, 1
      %p41 = por %p39, %p40
      %p42 = scmp.ne.s32.totalorder %s31, %s32
      %p43 = scmp.eq.s32.totalorder %s23, 0
      %p44 = por %p42, %p43
      %p45 = scmp.ne.s32.totalorder %s31, %s32
      %p46 = scmp.eq.s32.totalorder %s24, 1
      %p47 = por %p45, %p46
      %p49 = scmp.ne.s32.totalorder %s32, %s48
      %p50 = scmp.eq.s32.totalorder %s24, 0
      %p51 = por %p49, %p50
      %s53 = sadd.s32 %s52, 1
      %p56 = scmp.eq.s32.totalorder %s18, 1
      %p57 = scmp.ne.s32.totalorder %s52, %s54
      %p58 = scmp.eq.s32.totalorder %s18, 0
      %p59 = por %p57, %p58
      %p60 = scmp.ne.s32.totalorder %s52, %s54
      %p61 = scmp.eq.s32.totalorder %s23, 1
      %p62 = por %p60, %p61
      %p63 = scmp.ne.s32.totalorder %s54, %s55
      %p64 = scmp.eq.s32.totalorder %s23, 0
      %p65 = por %p63, %p64
      %p66 = scmp.ne.s32.totalorder %s54, %s55
      %p67 = scmp.eq.s32.totalorder %s24, 1
      %p68 = por %p66, %p67
      %p70 = scmp.ne.s32.totalorder %s55, %s69
      %p71 = scmp.eq.s32.totalorder %s24, 0
      %p72 = por %p70, %p71
      %s74 = sadd.s32 %s73, 1
      %p77 = scmp.eq.s32.totalorder %s18, 1
      %p78 = scmp.ne.s32.totalorder %s73, %s75
      %p79 = scmp.eq.s32.totalorder %s18, 0
      %p80 = por %p78, %p79
      %p81 = scmp.ne.s32.totalorder %s73, %s75
      %p82 = scmp.eq.s32.totalorder %s23, 1
      %p83 = por %p81, %p82
      %p84 = scmp.ne.s32.totalorder %s75, %s76
      %p85 = scmp.eq.s32.totalorder %s23, 0
      %p86 = por %p84, %p85
      %p87 = scmp.ne.s32.totalorder %s75, %s76
      %p88 = scmp.eq.s32.totalorder %s24, 1
      %p89 = por %p87, %p88
      %p91 = scmp.ne.s32.totalorder %s76, %s90
      %p92 = scmp.eq.s32.totalorder %s24, 0
      %p93 = por %p91, %p92
      %s95 = sadd.s32 %s94, 1
      %p98 = scmp.eq.s32.totalorder %s18, 1
      %p99 = scmp.ne.s32.totalorder %s94, %s96
      %p100 = scmp.eq.s32.totalorder %s18, 0
      %p101 = por %p99, %p100
      %p102 = scmp.ne.s32.totalorder %s94, %s96
      %p103 = scmp.eq.s32.totalorder %s23, 1
      %p104 = por %p102, %p103
      %p105 = scmp.ne.s32.totalorder %s96, %s97
      %p106 = scmp.eq.s32.totalorder %s23, 0
      %p107 = por %p105, %p106
      %p108 = scmp.ne.s32.totalorder %s96, %s97
      %p109 = scmp.eq.s32.totalorder %s24, 1
      %p110 = por %p108, %p109
      %p112 = scmp.ne.s32.totalorder %s97, %s111
      %p113 = scmp.eq.s32.totalorder %s24, 0
      %p114 = por %p112, %p113
      %s116 = sadd.s32 %s115, 1
      %p119 = scmp.eq.s32.totalorder %s18, 1
      %p120 = scmp.ne.s32.totalorder %s115, %s117
      %p121 = scmp.eq.s32.totalorder %s18, 0
      %p122 = por %p120, %p121
      %p123 = scmp.ne.s32.totalorder %s115, %s117
      %p124 = scmp.eq.s32.totalorder %s23, 1
      %p125 = por %p123, %p124
      %p126 = scmp.ne.s32.totalorder %s117, %s118
      %p127 = scmp.eq.s32.totalorder %s23, 0
      %p128 = por %p126, %p127
      %p129 = scmp.ne.s32.totalorder %s117, %s118
      %p130 = scmp.eq.s32.totalorder %s24, 1
      %p131 = por %p129, %p130
      %p133 = scmp.ne.s32.totalorder %s118, %s132
      %p134 = scmp.eq.s32.totalorder %s24, 0
      %p135 = por %p133, %p134
      %s137 = sadd.s32 %s136, 1
      %p140 = scmp.eq.s32.totalorder %s18, 1
      %p141 = scmp.ne.s32.totalorder %s136, %s138
      %p142 = scmp.eq.s32.totalorder %s18, 0
      %p143 = por %p141, %p142
      %p144 = scmp.ne.s32.totalorder %s136, %s138
      %p145 = scmp.eq.s32.totalorder %s23, 1
      %p146 = por %p144, %p145
      %p147 = scmp.ne.s32.totalorder %s138, %s139
      %p148 = scmp.eq.s32.totalorder %s23, 0
      %p149 = por %p147, %p148
      %p150 = scmp.ne.s32.totalorder %s138, %s139
      %p151 = scmp.eq.s32.totalorder %s24, 1
      %p152 = por %p150, %p151
      %p154 = scmp.ne.s32.totalorder %s139, %s153
      %p155 = scmp.eq.s32.totalorder %s24, 0
      %p156 = por %p154, %p155
      %s158 = sadd.s32 %s157, 1
      %p161 = scmp.eq.s32.totalorder %s18, 1
      %p162 = scmp.ne.s32.totalorder %s157, %s159
      %p163 = scmp.eq.s32.totalorder %s18, 0
      %p164 = por %p162, %p163
      %p165 = scmp.ne.s32.totalorder %s157, %s159
      %p166 = scmp.eq.s32.totalorder %s23, 1
      %p167 = por %p165, %p166
      %p168 = scmp.ne.s32.totalorder %s159, %s160
      %p169 = scmp.eq.s32.totalorder %s23, 0
      %p170 = por %p168, %p169
      %p171 = scmp.ne.s32.totalorder %s159, %s160
      %p172 = scmp.eq.s32.totalorder %s24, 1
      %p173 = por %p171, %p172
      %p175 = scmp.ne.s32.totalorder %s160, %s174
      %p176 = scmp.eq.s32.totalorder %s24, 0
      %p177 = por %p175, %p176
      %s179 = sadd.s32 %s178, 1
      %p182 = scmp.eq.s32.totalorder %s18, 1
      %p183 = scmp.ne.s32.totalorder %s178, %s180
      %p184 = scmp.eq.s32.totalorder %s18, 0
      %p185 = por %p183, %p184
      %p186 = scmp.ne.s32.totalorder %s178, %s180
      %p187 = scmp.eq.s32.totalorder %s23, 1
      %p188 = por %p186, %p187
      %p189 = scmp.ne.s32.totalorder %s180, %s181
      %p190 = scmp.eq.s32.totalorder %s23, 0
      %p191 = por %p189, %p190
      %p192 = scmp.ne.s32.totalorder %s180, %s181
      %p193 = scmp.eq.s32.totalorder %s24, 1
      %p194 = por %p192, %p193
      %p196 = scmp.ne.s32.totalorder %s181, %s195
      %p197 = scmp.eq.s32.totalorder %s24, 0
      %p198 = por %p196, %p197
      %s200 = sadd.s32 %s199, 1
      %p203 = scmp.eq.s32.totalorder %s18, 1
      %p204 = scmp.ne.s32.totalorder %s199, %s201
      %p205 = scmp.eq.s32.totalorder %s18, 0
      %p206 = por %p204, %p205
      %p207 = scmp.ne.s32.totalorder %s199, %s201
      %p208 = scmp.eq.s32.totalorder %s23, 1
      %p209 = por %p207, %p208
      %p210 = scmp.ne.s32.totalorder %s201, %s202
      %p211 = scmp.eq.s32.totalorder %s23, 0
      %p212 = por %p210, %p211
      %p213 = scmp.ne.s32.totalorder %s201, %s202
      %p214 = scmp.eq.s32.totalorder %s24, 1
      %p215 = por %p213, %p214
      %p217 = scmp.ne.s32.totalorder %s202, %s216
      %p218 = scmp.eq.s32.totalorder %s24, 0
      %p219 = por %p217, %p218
      %s221 = sadd.s32 %s220, 1
      %p224 = scmp.eq.s32.totalorder %s18, 1
      %p225 = scmp.ne.s32.totalorder %s220, %s222
      %p226 = scmp.eq.s32.totalorder %s18, 0
      %p227 = por %p225, %p226
      %p228 = scmp.ne.s32.totalorder %s220, %s222
      %p229 = scmp.eq.s32.totalorder %s23, 1
      %p230 = por %p228, %p229
      %p231 = scmp.ne.s32.totalorder %s222, %s223
      %p232 = scmp.eq.s32.totalorder %s23, 0
      %p233 = por %p231, %p232
      %p234 = scmp.ne.s32.totalorder %s222, %s223
      %p235 = scmp.eq.s32.totalorder %s24, 1
      %p236 = por %p234, %p235
      %p238 = scmp.ne.s32.totalorder %s223, %s237
      %p239 = scmp.eq.s32.totalorder %s24, 0
      %p240 = por %p238, %p239
      %s241 = ssub.s32 %s18, %s25
      %p242 = scmp.eq.s32.totalorder %s241, 0
      %s244 = sadd.s32 %s243, 1
      %s245 = scalar_select %p242, %s243, %s244
      %p248 = pneg %p242
      %p249 = scmp.eq.s32.totalorder %s18, 1
      %p250 = por %p248, %p249
      %p251 = scmp.ne.s32.totalorder %s243, %s246
      %p252 = scmp.eq.s32.totalorder %s18, 0
      %p253 = por %p251, %p252
      %p254 = scmp.ne.s32.totalorder %s243, %s246
      %p255 = scmp.eq.s32.totalorder %s23, 1
      %p256 = por %p254, %p255
      %p257 = scmp.ne.s32.totalorder %s246, %s247
      %p258 = scmp.eq.s32.totalorder %s23, 0
      %p259 = por %p257, %p258
      %p260 = scmp.ne.s32.totalorder %s246, %s247
      %p261 = scmp.eq.s32.totalorder %s24, 1
      %p262 = por %p260, %p261
      %p264 = scmp.ne.s32.totalorder %s247, %s263
      %p265 = scmp.eq.s32.totalorder %s24, 0
      %p266 = por %p264, %p265
      %p267 = scmp.le.s32.totalorder 1, %s18
      %p268 = scmp.lt.s32.totalorder %s18, 3
      %p269 = pnand %p267, %p268
      %p270 = pneg %p269
      // Predicated region
      $region9: #{_lambda_.4} parent=5 // pred_check
        _
      $region10: #{_lambda_.4} parent=5 // pred_check_branch
        %272 = sbr.rel (%p269) target = $region12
      $region11: #{_lambda_.4} parent=5 // pred_region
        %s273 = ssub.s32 %s18, 1
        // Predicated region
        $region13: #{_lambda_.4} parent=11 // pred_check
          %p274 = pneg %p65
        $region14: #{_lambda_.4} parent=11 // pred_check_branch
          %276 = sbr.rel (%p274) target = $region16
        $region15: #{_lambda_.4} parent=11 // pred_region
          _
        $region16: #{_lambda_.4} parent=11 // pred_fallthru
          _
        // Predicated region
        $region17: #{_lambda_.4} parent=11 // pred_check
          %p277 = pneg %p86
        $region18: #{_lambda_.4} parent=11 // pred_check_branch
          %279 = sbr.rel (%p277) target = $region20
        $region19: #{_lambda_.4} parent=11 // pred_region
          %s281 = ssub.s32 16, 16
          %282 = vsyncadd [#allocation4], %s281
          %s284 = sshll.u32 %s2, 4
          %s285 = int_to_ptr.vmem [resolvable:$true] %s284
          %287 = dma.vmem_to_smem %s285, 16, [#allocation3], [#allocation4]
        $region20: #{_lambda_.4} parent=11 // pred_fallthru
          _
        // Predicated region
        $region21: #{_lambda_.4} parent=11 // pred_check
          %p288 = pneg %p107
        $region22: #{_lambda_.4} parent=11 // pred_check_branch
          %290 = sbr.rel (%p288) target = $region24
        $region23: #{_lambda_.4} parent=11 // pred_region
          %s292 = ssub.s32 16, 16
          %293 = vsyncadd [#allocation6], %s292
          %s295 = sshll.u32 %s3, 4
          %s296 = int_to_ptr.vmem [resolvable:$true] %s295
          %298 = dma.vmem_to_smem %s296, 16, [#allocation5], [#allocation6]
        $region24: #{_lambda_.4} parent=11 // pred_fallthru
          _
        // Predicated region
        $region25: #{_lambda_.4} parent=11 // pred_check
          %p299 = pneg %p128
        $region26: #{_lambda_.4} parent=11 // pred_check_branch
          %301 = sbr.rel (%p299) target = $region28
        $region27: #{_lambda_.4} parent=11 // pred_region
          _
        $region28: #{_lambda_.4} parent=11 // pred_fallthru
          _
        // Predicated region
        $region29: #{_lambda_.4} parent=11 // pred_check
          %p302 = pneg %p149
        $region30: #{_lambda_.4} parent=11 // pred_check_branch
          %304 = sbr.rel (%p302) target = $region32
        $region31: #{_lambda_.4} parent=11 // pred_region
          _
        $region32: #{_lambda_.4} parent=11 // pred_fallthru
          _
        // Predicated region
        $region33: #{_lambda_.4} parent=11 // pred_check
          %p305 = pneg %p170
        $region34: #{_lambda_.4} parent=11 // pred_check_branch
          %307 = sbr.rel (%p305) target = $region36
        $region35: #{_lambda_.4} parent=11 // pred_region
          _
        $region36: #{_lambda_.4} parent=11 // pred_fallthru
          _
        // Predicated region
        $region37: #{_lambda_.4} parent=11 // pred_check
          %p308 = pneg %p191
        $region38: #{_lambda_.4} parent=11 // pred_check_branch
          %310 = sbr.rel (%p308) target = $region40
        $region39: #{_lambda_.4} parent=11 // pred_region
          _
        $region40: #{_lambda_.4} parent=11 // pred_fallthru
          _
        // Predicated region
        $region41: #{_lambda_.4} parent=11 // pred_check
          %p311 = pneg %p212
        $region42: #{_lambda_.4} parent=11 // pred_check_branch
          %313 = sbr.rel (%p311) target = $region44
        $region43: #{_lambda_.4} parent=11 // pred_region
          _
        $region44: #{_lambda_.4} parent=11 // pred_fallthru
          _
        // Predicated region
        $region45: #{_lambda_.4} parent=11 // pred_check
          %p314 = pneg %p233
        $region46: #{_lambda_.4} parent=11 // pred_check_branch
          %316 = sbr.rel (%p314) target = $region48
        $region47: #{_lambda_.4} parent=11 // pred_region
          _
        $region48: #{_lambda_.4} parent=11 // pred_fallthru
          _
      $region12: #{_lambda_.4} parent=5 // pred_fallthru
        _
      %p317 = scmp.lt.s32.totalorder %s18, 2
      // Predicated region
      $region49: #{_lambda_.4} parent=5 // pred_check
        %p318 = pneg %p317
      $region50: #{_lambda_.4} parent=5 // pred_check_branch
        %320 = sbr.rel (%p318) target = $region52
      $region51: #{_lambda_.4} parent=5 // pred_region
        // Predicated region
        $region53: #{_lambda_.4} parent=51 // pred_check
          %p321 = pneg %p38
        $region54: #{_lambda_.4} parent=51 // pred_check_branch
          %323 = sbr.rel (%p321) target = $region56
        $region55: #{_lambda_.4} parent=51 // pred_region
          %s324 = smul.u32 4, %s18
          %p325 = scmp.lt.s32.totalorder %s324, 7
          %s326 = scalar_select %p325, %s324, 7
          %s327 = smul.addr %s326, 2
          %s328 = smul.addr %s327, 8
          %s329 = scalar_lea.vmem %s0, %s328
          %s330 = smul.u32 4, %s18
        $region56: #{_lambda_.4} parent=51 // pred_fallthru
          _
      $region52: #{_lambda_.4} parent=5 // pred_fallthru
        _
      %p331 = scmp.le.s32.totalorder 1, %s18
      %p332 = scmp.lt.s32.totalorder %s18, 3
      %p333 = pnand %p331, %p332
      %p334 = pneg %p333
      // Predicated region
      $region57: #{_lambda_.4} parent=5 // pred_check
        _
      $region58: #{_lambda_.4} parent=5 // pred_check_branch
        %336 = sbr.rel (%p333) target = $region60
      $region59: #{_lambda_.4} parent=5 // pred_region
        %s337 = ssub.s32 %s18, 1
        // Predicated region
        $region61: #{_lambda_.4} parent=59 // pred_check
          %p338 = pneg %p86
        $region62: #{_lambda_.4} parent=59 // pred_check_branch
          %340 = sbr.rel (%p338) target = $region64
        $region63: #{_lambda_.4} parent=59 // pred_region
          %341 = dma.done [#allocation4], 16
        $region64: #{_lambda_.4} parent=59 // pred_fallthru
          _
        // Predicated region
        $region65: #{_lambda_.4} parent=59 // pred_check
          %p342 = pneg %p107
        $region66: #{_lambda_.4} parent=59 // pred_check_branch
          %344 = sbr.rel (%p342) target = $region68
        $region67: #{_lambda_.4} parent=59 // pred_region
          %345 = dma.done [#allocation6], 16
        $region68: #{_lambda_.4} parent=59 // pred_fallthru
          _
        %346 = sfence
        %s347 = smul.u32 4, %s23
        %p348 = scmp.lt.s32.totalorder %s347, 7
        %s349 = scalar_select %p348, %s347, 7
        %s350 = smul.addr %s349, 2
        %s351 = smul.addr %s350, 8
        %s352 = scalar_lea.vmem %s0, %s351
        %p353 = pneg %p44
        %p354 = pneg %p41
        %p355 = pneg %p65
        %p356 = pneg %p62
        %p357 = pneg %p86
        %p358 = pneg %p83
        %p359 = pneg %p107
        %p360 = pneg %p104
        %p361 = pneg %p128
        %p362 = pneg %p125
        %p363 = pneg %p149
        %p364 = pneg %p146
        %p365 = pneg %p170
        %p366 = pneg %p167
        %p367 = pneg %p191
        %p368 = pneg %p188
        %p369 = pneg %p212
        %p370 = pneg %p209
        %p371 = pneg %p233
        %p372 = pneg %p230
        %p373 = pneg %p259
        %p374 = pneg %p256
        %s375 = smul.u32 4, %s23
        %p376 = scmp.lt.s32.totalorder %s375, 7
        %s377 = scalar_select %p376, %s375, 7
        %s378 = smul.addr %s377, 2
        %s379 = smul.addr %s378, 4
        %s380 = scalar_lea.vmem %s10, %s379
        %s381 = smul.u32 4, %s23
        %p382 = scmp.lt.s32.totalorder %s381, 7
        %s383 = scalar_select %p382, %s381, 7
        %s384 = smul.addr %s383, 2
        %s385 = smul.addr %s384, 8
        %s386 = scalar_lea.vmem %s0, %s385
        %s387 = smul.u32 4, %s23
        %s388 = smul.u32 4, %s23
        %p389 = scmp.lt.s32.totalorder %s388, 7
        %s390 = scalar_select %p389, %s388, 7
        %s391 = smul.addr %s390, 2
        %s392 = smul.addr %s391, 4
        %s393 = scalar_lea.vmem %s10, %s392
        %s394 = smul.u32 4, %s23
        %v396 = vld [vmem:[%s386] sm:$0xff]
        %v397 = vld [vmem:[%s386 + $0x8] sm:$0xff]
        %v398 = vld [vmem:[%s386 + $0x10] sm:$0xff]
        %v399 = vld [vmem:[%s386 + $0x18] sm:$0xff]
        %v400 = vld [vmem:[%s386 + $0x20] sm:$0xff]
        %v401 = vld [vmem:[%s386 + $0x28] sm:$0xff]
        %v402 = vld [vmem:[%s386 + $0x30] sm:$0xff]
        %v403 = vld [vmem:[%s386 + $0x38] sm:$0xff]
        %vm404 = vcmask 261120
        %v405 = vsel %vm404, %v396, 0.0
        %406 = vadd.xlane.f32.xlu0 %v405
        %v407 = vpop.xlane.xlu0 %406
        %v408 = vsel %vm404, %v397, 0.0
        %409 = vadd.xlane.f32.xlu0 %v408
        %v410 = vpop.xlane.xlu0 %409
        %v411 = vsel %vm404, %v398, 0.0
        %412 = vadd.xlane.f32.xlu0 %v411
        %v413 = vpop.xlane.xlu0 %412
        %v414 = vsel %vm404, %v399, 0.0
        %415 = vadd.xlane.f32.xlu0 %v414
        %v416 = vpop.xlane.xlu0 %415
        %v417 = vsel %vm404, %v400, 0.0
        %418 = vadd.xlane.f32.xlu0 %v417
        %v419 = vpop.xlane.xlu0 %418
        %v420 = vsel %vm404, %v401, 0.0
        %421 = vadd.xlane.f32.xlu0 %v420
        %v422 = vpop.xlane.xlu0 %421
        %v423 = vsel %vm404, %v402, 0.0
        %424 = vadd.xlane.f32.xlu0 %v423
        %v425 = vpop.xlane.xlu0 %424
        %v426 = vsel %vm404, %v403, 0.0
        %427 = vadd.xlane.f32.xlu0 %v426
        %v428 = vpop.xlane.xlu0 %427
        %v429 = vrcp.pop 32.0
        %v430 = vmul.f32 %v407, %v429
        %v431 = vmul.f32 %v410, %v429
        %v432 = vmul.f32 %v413, %v429
        %v433 = vmul.f32 %v416, %v429
        %v434 = vmul.f32 %v419, %v429
        %v435 = vmul.f32 %v422, %v429
        %v436 = vmul.f32 %v425, %v429
        %v437 = vmul.f32 %v428, %v429
        %v438 = vsub.f32 %v396, %v430
        %v439 = vsub.f32 %v397, %v431
        %v440 = vsub.f32 %v398, %v432
        %v441 = vsub.f32 %v399, %v433
        %v442 = vsub.f32 %v400, %v434
        %v443 = vsub.f32 %v401, %v435
        %v444 = vsub.f32 %v402, %v436
        %v445 = vsub.f32 %v403, %v437
        %v446 = vmul.f32 %v438, %v438
        %v447 = vmul.f32 %v439, %v439
        %v448 = vmul.f32 %v440, %v440
        %v449 = vmul.f32 %v441, %v441
        %v450 = vmul.f32 %v442, %v442
        %v451 = vmul.f32 %v443, %v443
        %v452 = vmul.f32 %v444, %v444
        %v453 = vmul.f32 %v445, %v445
        %v454 = vsel %vm404, %v446, 0.0
        %455 = vadd.xlane.f32.xlu0 %v454
        %v456 = vpop.xlane.xlu0 %455
        %v457 = vsel %vm404, %v447, 0.0
        %458 = vadd.xlane.f32.xlu0 %v457
        %v459 = vpop.xlane.xlu0 %458
        %v460 = vsel %vm404, %v448, 0.0
        %461 = vadd.xlane.f32.xlu0 %v460
        %v462 = vpop.xlane.xlu0 %461
        %v463 = vsel %vm404, %v449, 0.0
        %464 = vadd.xlane.f32.xlu0 %v463
        %v465 = vpop.xlane.xlu0 %464
        %v466 = vsel %vm404, %v450, 0.0
        %467 = vadd.xlane.f32.xlu0 %v466
        %v468 = vpop.xlane.xlu0 %467
        %v469 = vsel %vm404, %v451, 0.0
        %470 = vadd.xlane.f32.xlu0 %v469
        %v471 = vpop.xlane.xlu0 %470
        %v472 = vsel %vm404, %v452, 0.0
        %473 = vadd.xlane.f32.xlu0 %v472
        %v474 = vpop.xlane.xlu0 %473
        %v475 = vsel %vm404, %v453, 0.0
        %476 = vadd.xlane.f32.xlu0 %v475
        %v477 = vpop.xlane.xlu0 %476
        %v478 = vmul.f32 %v456, %v429
        %v479 = vmul.f32 %v459, %v429
        %v480 = vmul.f32 %v462, %v429
        %v481 = vmul.f32 %v465, %v429
        %v482 = vmul.f32 %v468, %v429
        %v483 = vmul.f32 %v471, %v429
        %v484 = vmul.f32 %v474, %v429
        %v485 = vmul.f32 %v477, %v429
        %v486 = vadd.f32 %v478, 1e-05
        %v487 = vadd.f32 %v479, 1e-05
        %v488 = vadd.f32 %v480, 1e-05
        %v489 = vadd.f32 %v481, 1e-05
        %v490 = vadd.f32 %v482, 1e-05
        %v491 = vadd.f32 %v483, 1e-05
        %v492 = vadd.f32 %v484, 1e-05
        %v493 = vadd.f32 %v485, 1e-05
        %v494 = vrsqrt.pop %v486
        %v495 = vrsqrt.pop %v487
        %v496 = vrsqrt.pop %v488
        %v497 = vrsqrt.pop %v489
        %v498 = vrsqrt.pop %v490
        %v499 = vrsqrt.pop %v491
        %v500 = vrsqrt.pop %v492
        %v501 = vrsqrt.pop %v493
        %v502 = vmul.f32 %v438, %v494
        %v503 = vmul.f32 %v439, %v495
        %v504 = vmul.f32 %v440, %v496
        %v505 = vmul.f32 %v441, %v497
        %v506 = vmul.f32 %v442, %v498
        %v507 = vmul.f32 %v443, %v499
        %v508 = vmul.f32 %v444, %v500
        %v509 = vmul.f32 %v445, %v501
        %v510 = vld [vmem:[%s4] sm:$0x1]
        %v512 = vlaneseq
        %v513 = vshrl.u32 %v512, 7
        %v514 = vsub.s32 0, %v513
        %v515 = vrot.slane %v510, %v514
        %v517 = vmul.f32 %v502, %v515
        %v518 = vmul.f32 %v503, %v515
        %v519 = vmul.f32 %v504, %v515
        %v520 = vmul.f32 %v505, %v515
        %v521 = vmul.f32 %v506, %v515
        %v522 = vmul.f32 %v507, %v515
        %v523 = vmul.f32 %v508, %v515
        %v524 = vmul.f32 %v509, %v515
        %v525 = vld [vmem:[%s5] sm:$0x1]
        %v527 = vlaneseq
        %v528 = vshrl.u32 %v527, 7
        %v529 = vsub.s32 0, %v528
        %v530 = vrot.slane %v525, %v529
        %v532 = vadd.f32 %v517, %v530
        %v533 = vadd.f32 %v518, %v530
        %v534 = vadd.f32 %v519, %v530
        %v535 = vadd.f32 %v520, %v530
        %v536 = vadd.f32 %v521, %v530
        %v537 = vadd.f32 %v522, %v530
        %v538 = vadd.f32 %v523, %v530
        %v539 = vadd.f32 %v524, %v530
        %v540 = vpack.c.bf16 %v533, %v532
        %v541 = vpack.c.bf16 %v535, %v534
        %v542 = vpack.c.bf16 %v537, %v536
        %v543 = vpack.c.bf16 %v539, %v538
        %v544 = vld [vmem:[%s6] sm:$0xf]
        %v545 = vld [vmem:[%s6 + $0x4] sm:$0xf]
        %v546 = vld [vmem:[%s6 + $0x8] sm:$0xf]
        %v547 = vld [vmem:[%s6 + $0xc] sm:$0xf]
        %v548 = vld [vmem:[%s7] sm:$0x1]
        %v550 = vlaneseq
        %v551 = vshrl.u32 %v550, 7
        %v552 = vsub.s32 0, %v551
        %v553 = vrot.slane %v548, %v552
        %v559 = vunpack.c.l.b16 %v544
        %v560 = vunpack.c.l.b16 %v545
        %v561 = vunpack.c.l.b16 %v546
        %v562 = vunpack.c.l.b16 %v547
        %v563 = vpack.c.b16 %v560, %v559
        %v564 = vpack.c.b16 %v562, %v561
        %v568 = vsel %vm404, %v540, 0
        %v571 = vsel %vm404, %v541, 0
        %v574 = vsel %vm404, %v542, 0
        %v577 = vsel %vm404, %v543, 0
        %579 = vmatprep.subr.bf16.mxu0 0
        %580 = vmatpush1.bf16.msra.mxu0 %v563
        %581 = vmatprep.subr.bf16.mxu0 0
        %582 = vmatpush1.bf16.msra.mxu0 %v564
        %583 = vmatprep.subr.bf16.mxu0 0
        %584 = vmatpush1.bf16.msra.mxu0 0
        %585 = vmatprep.subr.bf16.mxu0 0
        %586 = vmatpush1.bf16.msra.mxu0 0
        %587 = vmatprep.subr.bf16.mxu0 0
        %588 = vmatpush1.bf16.msra.mxu0 0
        %589 = vmatprep.subr.bf16.mxu0 0
        %590 = vmatpush1.bf16.msra.mxu0 0
        %591 = vmatprep.subr.bf16.mxu0 0
        %592 = vmatpush1.bf16.msra.mxu0 0
        %593 = vmatprep.subr.bf16.mxu0 0
        %594 = vmatpush1.bf16.msra.mxu0 0
        %595 = vmatprep.subr.bf16.mxu0 0
        %596 = vmatpush1.bf16.msra.mxu0 0
        %597 = vmatprep.subr.bf16.mxu0 0
        %598 = vmatpush1.bf16.msra.mxu0 0
        %599 = vmatprep.subr.bf16.mxu0 0
        %600 = vmatpush1.bf16.msra.mxu0 0
        %601 = vmatprep.subr.bf16.mxu0 0
        %602 = vmatpush1.bf16.msra.mxu0 0
        %603 = vmatprep.subr.bf16.mxu0 0
        %604 = vmatpush1.bf16.msra.mxu0 0
        %605 = vmatprep.subr.bf16.mxu0 0
        %606 = vmatpush1.bf16.msra.mxu0 0
        %607 = vmatprep.subr.bf16.mxu0 0
        %608 = vmatpush1.bf16.msra.mxu0 0
        %609 = vmatprep.subr.bf16.mxu0 0
        %610 = vmatpush1.bf16.msra.mxu0 0
        %611 = vmatprep.mubr.bf16.mxu0 0
        %612 = vmatmul.mubr.bf16.gmra.mrb[0].mxu0 %v568
        %v613 = vpop.f32.mrb[0].mxu0
        %v614 = vadd.f32 %v553, %v613
        %v615 = vpop.f32.mrb[0].mxu0
        %v616 = vpop.f32.mrb[0].mxu0
        %v617 = vadd.f32 %v553, %v616
        %v618 = vpop.f32.mrb[0].mxu0
        %619 = vmatprep.mubr.bf16.mxu0 0
        %620 = vmatmul.mubr.bf16.gmra.mrb[0].mxu0 %v571
        %v621 = vpop.f32.mrb[0].mxu0
        %v622 = vadd.f32 %v553, %v621
        %v623 = vpop.f32.mrb[0].mxu0
        %v624 = vpop.f32.mrb[0].mxu0
        %v625 = vadd.f32 %v553, %v624
        %v626 = vpop.f32.mrb[0].mxu0
        %627 = vmatprep.mubr.bf16.mxu0 0
        %628 = vmatmul.mubr.bf16.gmra.mrb[0].mxu0 %v574
        %v629 = vpop.f32.mrb[0].mxu0
        %v630 = vadd.f32 %v553, %v629
        %v631 = vpop.f32.mrb[0].mxu0
        %v632 = vpop.f32.mrb[0].mxu0
        %v633 = vadd.f32 %v553, %v632
        %v634 = vpop.f32.mrb[0].mxu0
        %635 = vmatprep.mubr.bf16.mxu0 0
        %636 = vmatmul.mubr.bf16.gmra.mrb[0].mxu0 %v577
        %v637 = vpop.f32.mrb[0].mxu0
        %v638 = vadd.f32 %v553, %v637
        %v639 = vpop.f32.mrb[0].mxu0
        %v640 = vpop.f32.mrb[0].mxu0
        %v641 = vadd.f32 %v553, %v640
        %v642 = vpop.f32.mrb[0].mxu0
        %643 = vdwg.mxu0
        %v644 = vld [vmem:[%s1] sm:$0xff]
        %v645 = vld [vmem:[%s1 + $0x8] sm:$0xff]
        %v646 = vld [vmem:[%s1 + $0x10] sm:$0xff]
        %v647 = vld [vmem:[%s1 + $0x18] sm:$0xff]
        %v648 = vld [vmem:[%s1 + $0x20] sm:$0xff]
        %v649 = vld [vmem:[%s1 + $0x28] sm:$0xff]
        %v650 = vld [vmem:[%s1 + $0x30] sm:$0xff]
        %v651 = vld [vmem:[%s1 + $0x38] sm:$0xff]
        %v652 = vmul.f32 %v614, 0.35355338
        %v653 = vmul.f32 %v617, 0.35355338
        %v654 = vmul.f32 %v622, 0.35355338
        %v655 = vmul.f32 %v625, 0.35355338
        %v656 = vmul.f32 %v630, 0.35355338
        %v657 = vmul.f32 %v633, 0.35355338
        %v658 = vmul.f32 %v638, 0.35355338
        %v659 = vmul.f32 %v641, 0.35355338
        %662 = vrot.lane.b32.xlu0 %v614, 96
        %v663 = vpop.permute.xlu0 %662
        %664 = vrot.lane.b32.xlu0 %v617, 96
        %v665 = vpop.permute.xlu0 %664
        %vm666 = vcmask 64512
        %v668 = vsel %vm666, %v652, 0
        %v671 = vsel %vm666, %v653, 0
        %v673 = vsel %vm666, %v663, 0
        %v675 = vsel %vm666, %v665, 0
        %677 = vmatprep.subr.mxu0 0.0
        %678 = vmatpush1.xpose.msra.mxu0 %v673
        %679 = vmatprep.subr.mxu0 0.0
        %680 = vmatpush1.xpose.msra.mxu0 %v675
        %681 = vmatprep.subr.mxu0 0.0
        %682 = vmatpush1.xpose.msra.mxu0 0.0
        %683 = vmatprep.subr.mxu0 0.0
        %684 = vmatpush1.xpose.msra.mxu0 0.0
        %685 = vmatprep.subr.mxu0 0.0
        %686 = vmatpush1.xpose.msra.mxu0 0.0
        %687 = vmatprep.subr.mxu0 0.0
        %688 = vmatpush1.xpose.msra.mxu0 0.0
        %689 = vmatprep.subr.mxu0 0.0
        %690 = vmatpush1.xpose.msra.mxu0 0.0
        %691 = vmatprep.subr.mxu0 0.0
        %692 = vmatpush1.xpose.msra.mxu0 0.0
        %693 = vmatprep.subr.mxu0 0.0
        %694 = vmatpush1.xpose.msra.mxu0 0.0
        %695 = vmatprep.subr.mxu0 0.0
        %696 = vmatpush1.xpose.msra.mxu0 0.0
        %697 = vmatprep.subr.mxu0 0.0
        %698 = vmatpush1.xpose.msra.mxu0 0.0
        %699 = vmatprep.subr.mxu0 0.0
        %700 = vmatpush1.xpose.msra.mxu0 0.0
        %701 = vmatprep.subr.mxu0 0.0
        %702 = vmatpush1.xpose.msra.mxu0 0.0
        %703 = vmatprep.subr.mxu0 0.0
        %704 = vmatpush1.xpose.msra.mxu0 0.0
        %705 = vmatprep.subr.mxu0 0.0
        %706 = vmatpush1.xpose.msra.mxu0 0.0
        %707 = vmatprep.subr.mxu0 0.0
        %708 = vmatpush1.xpose.msra.mxu0 0.0
        %709 = vmatprep.subr.mxu0 0.0
        %710 = vmatpush1.xpose.msra.mxu0 0.0
        %711 = vmatprep.subr.mxu0 0.0
        %712 = vmatpush1.xpose.msra.mxu0 0.0
        %713 = vmatprep.subr.mxu0 0.0
        %714 = vmatpush1.xpose.msra.mxu0 0.0
        %715 = vmatprep.subr.mxu0 0.0
        %716 = vmatpush1.xpose.msra.mxu0 0.0
        %717 = vmatprep.subr.mxu0 0.0
        %718 = vmatpush1.xpose.msra.mxu0 0.0
        %719 = vmatprep.subr.mxu0 0.0
        %720 = vmatpush1.xpose.msra.mxu0 0.0
        %721 = vmatprep.subr.mxu0 0.0
        %722 = vmatpush1.xpose.msra.mxu0 0.0
        %723 = vmatprep.subr.mxu0 0.0
        %724 = vmatpush1.xpose.msra.mxu0 0.0
        %725 = vmatprep.subr.mxu0 0.0
        %726 = vmatpush1.xpose.msra.mxu0 0.0
        %727 = vmatprep.subr.mxu0 0.0
        %728 = vmatpush1.xpose.msra.mxu0 0.0
        %729 = vmatprep.subr.mxu0 0.0
        %730 = vmatpush1.xpose.msra.mxu0 0.0
        %731 = vmatprep.subr.mxu0 0.0
        %732 = vmatpush1.xpose.msra.mxu0 0.0
        %733 = vmatprep.subr.mxu0 0.0
        %734 = vmatpush1.xpose.msra.mxu0 0.0
        %735 = vmatprep.subr.mxu0 0.0
        %736 = vmatpush1.xpose.msra.mxu0 0.0
        %737 = vmatprep.subr.mxu0 0.0
        %738 = vmatpush1.xpose.msra.mxu0 0.0
        %739 = vmatprep.subr.mxu0 0.0
        %740 = vmatpush1.xpose.msra.mxu0 0.0
        %741 = vmatprep.mubr.f32.mxu0 0.0
        %742 = vmatmul.mubr.f32.gmra.mrb[0].mxu0 %v668
        %v743 = vpop.f32.mrb[0].mxu0
        %v744 = vadd.f32 %v644, %v743
        %v745 = vpop.f32.mrb[0].mxu0
        %746 = vmatprep.mubr.f32.mxu0 0.0
        %747 = vmatmul.mubr.f32.gmra.mrb[0].mxu0 %v671
        %v748 = vpop.f32.mrb[0].mxu0
        %v749 = vadd.f32 %v645, %v748
        %v750 = vpop.f32.mrb[0].mxu0
        %751 = vdwg.mxu0
        %754 = vrot.lane.b32.xlu0 %v622, 96
        %v755 = vpop.permute.xlu0 %754
        %756 = vrot.lane.b32.xlu0 %v625, 96
        %v757 = vpop.permute.xlu0 %756
        %v759 = vsel %vm666, %v654, 0
        %v762 = vsel %vm666, %v655, 0
        %v764 = vsel %vm666, %v755, 0
        %v766 = vsel %vm666, %v757, 0
        %768 = vmatprep.subr.mxu0 0.0
        %769 = vmatpush1.xpose.msra.mxu0 %v764
        %770 = vmatprep.subr.mxu0 0.0
        %771 = vmatpush1.xpose.msra.mxu0 %v766
        %772 = vmatprep.subr.mxu0 0.0
        %773 = vmatpush1.xpose.msra.mxu0 0.0
        %774 = vmatprep.subr.mxu0 0.0
        %775 = vmatpush1.xpose.msra.mxu0 0.0
        %776 = vmatprep.subr.mxu0 0.0
        %777 = vmatpush1.xpose.msra.mxu0 0.0
        %778 = vmatprep.subr.mxu0 0.0
        %779 = vmatpush1.xpose.msra.mxu0 0.0
        %780 = vmatprep.subr.mxu0 0.0
        %781 = vmatpush1.xpose.msra.mxu0 0.0
        %782 = vmatprep.subr.mxu0 0.0
        %783 = vmatpush1.xpose.msra.mxu0 0.0
        %784 = vmatprep.subr.mxu0 0.0
        %785 = vmatpush1.xpose.msra.mxu0 0.0
        %786 = vmatprep.subr.mxu0 0.0
        %787 = vmatpush1.xpose.msra.mxu0 0.0
        %788 = vmatprep.subr.mxu0 0.0
        %789 = vmatpush1.xpose.msra.mxu0 0.0
        %790 = vmatprep.subr.mxu0 0.0
        %791 = vmatpush1.xpose.msra.mxu0 0.0
        %792 = vmatprep.subr.mxu0 0.0
        %793 = vmatpush1.xpose.msra.mxu0 0.0
        %794 = vmatprep.subr.mxu0 0.0
        %795 = vmatpush1.xpose.msra.mxu0 0.0
        %796 = vmatprep.subr.mxu0 0.0
        %797 = vmatpush1.xpose.msra.mxu0 0.0
        %798 = vmatprep.subr.mxu0 0.0
        %799 = vmatpush1.xpose.msra.mxu0 0.0
        %800 = vmatprep.subr.mxu0 0.0
        %801 = vmatpush1.xpose.msra.mxu0 0.0
        %802 = vmatprep.subr.mxu0 0.0
        %803 = vmatpush1.xpose.msra.mxu0 0.0
        %804 = vmatprep.subr.mxu0 0.0
        %805 = vmatpush1.xpose.msra.mxu0 0.0
        %806 = vmatprep.subr.mxu0 0.0
        %807 = vmatpush1.xpose.msra.mxu0 0.0
        %808 = vmatprep.subr.mxu0 0.0
        %809 = vmatpush1.xpose.msra.mxu0 0.0
        %810 = vmatprep.subr.mxu0 0.0
        %811 = vmatpush1.xpose.msra.mxu0 0.0
        %812 = vmatprep.subr.mxu0 0.0
        %813 = vmatpush1.xpose.msra.mxu0 0.0
        %814 = vmatprep.subr.mxu0 0.0
        %815 = vmatpush1.xpose.msra.mxu0 0.0
        %816 = vmatprep.subr.mxu0 0.0
        %817 = vmatpush1.xpose.msra.mxu0 0.0
        %818 = vmatprep.subr.mxu0 0.0
        %819 = vmatpush1.xpose.msra.mxu0 0.0
        %820 = vmatprep.subr.mxu0 0.0
        %821 = vmatpush1.xpose.msra.mxu0 0.0
        %822 = vmatprep.subr.mxu0 0.0
        %823 = vmatpush1.xpose.msra.mxu0 0.0
        %824 = vmatprep.subr.mxu0 0.0
        %825 = vmatpush1.xpose.msra.mxu0 0.0
        %826 = vmatprep.subr.mxu0 0.0
        %827 = vmatpush1.xpose.msra.mxu0 0.0
        %828 = vmatprep.subr.mxu0 0.0
        %829 = vmatpush1.xpose.msra.mxu0 0.0
        %830 = vmatprep.subr.mxu0 0.0
        %831 = vmatpush1.xpose.msra.mxu0 0.0
        %832 = vmatprep.mubr.f32.mxu0 0.0
        %833 = vmatmul.mubr.f32.gmra.mrb[0].mxu0 %v759
        %v834 = vpop.f32.mrb[0].mxu0
        %v835 = vadd.f32 %v644, %v834
        %v836 = vpop.f32.mrb[0].mxu0
        %837 = vmatprep.mubr.f32.mxu0 0.0
        %838 = vmatmul.mubr.f32.gmra.mrb[0].mxu0 %v762
        %v839 = vpop.f32.mrb[0].mxu0
        %v840 = vadd.f32 %v645, %v839
        %v841 = vpop.f32.mrb[0].mxu0
        %842 = vdwg.mxu0
        %845 = vrot.lane.b32.xlu0 %v630, 96
        %v846 = vpop.permute.xlu0 %845
        %847 = vrot.lane.b32.xlu0 %v633, 96
        %v848 = vpop.permute.xlu0 %847
        %v850 = vsel %vm666, %v656, 0
        %v853 = vsel %vm666, %v657, 0
        %v855 = vsel %vm666, %v846, 0
        %v857 = vsel %vm666, %v848, 0
        %859 = vmatprep.subr.mxu0 0.0
        %860 = vmatpush1.xpose.msra.mxu0 %v855
        %861 = vmatprep.subr.mxu0 0.0
        %862 = vmatpush1.xpose.msra.mxu0 %v857
        %863 = vmatprep.subr.mxu0 0.0
        %864 = vmatpush1.xpose.msra.mxu0 0.0
        %865 = vmatprep.subr.mxu0 0.0
        %866 = vmatpush1.xpose.msra.mxu0 0.0
        %867 = vmatprep.subr.mxu0 0.0
        %868 = vmatpush1.xpose.msra.mxu0 0.0
        %869 = vmatprep.subr.mxu0 0.0
        %870 = vmatpush1.xpose.msra.mxu0 0.0
        %871 = vmatprep.subr.mxu0 0.0
        %872 = vmatpush1.xpose.msra.mxu0 0.0
        %873 = vmatprep.subr.mxu0 0.0
        %874 = vmatpush1.xpose.msra.mxu0 0.0
        %875 = vmatprep.subr.mxu0 0.0
        %876 = vmatpush1.xpose.msra.mxu0 0.0
        %877 = vmatprep.subr.mxu0 0.0
        %878 = vmatpush1.xpose.msra.mxu0 0.0
        %879 = vmatprep.subr.mxu0 0.0
        %880 = vmatpush1.xpose.msra.mxu0 0.0
        %881 = vmatprep.subr.mxu0 0.0
        %882 = vmatpush1.xpose.msra.mxu0 0.0
        %883 = vmatprep.subr.mxu0 0.0
        %884 = vmatpush1.xpose.msra.mxu0 0.0
        %885 = vmatprep.subr.mxu0 0.0
        %886 = vmatpush1.xpose.msra.mxu0 0.0
        %887 = vmatprep.subr.mxu0 0.0
        %888 = vmatpush1.xpose.msra.mxu0 0.0
        %889 = vmatprep.subr.mxu0 0.0
        %890 = vmatpush1.xpose.msra.mxu0 0.0
        %891 = vmatprep.subr.mxu0 0.0
        %892 = vmatpush1.xpose.msra.mxu0 0.0
        %893 = vmatprep.subr.mxu0 0.0
        %894 = vmatpush1.xpose.msra.mxu0 0.0
        %895 = vmatprep.subr.mxu0 0.0
        %896 = vmatpush1.xpose.msra.mxu0 0.0
        %897 = vmatprep.subr.mxu0 0.0
        %898 = vmatpush1.xpose.msra.mxu0 0.0
        %899 = vmatprep.subr.mxu0 0.0
        %900 = vmatpush1.xpose.msra.mxu0 0.0
        %901 = vmatprep.subr.mxu0 0.0
        %902 = vmatpush1.xpose.msra.mxu0 0.0
        %903 = vmatprep.subr.mxu0 0.0
        %904 = vmatpush1.xpose.msra.mxu0 0.0
        %905 = vmatprep.subr.mxu0 0.0
        %906 = vmatpush1.xpose.msra.mxu0 0.0
        %907 = vmatprep.subr.mxu0 0.0
        %908 = vmatpush1.xpose.msra.mxu0 0.0
        %909 = vmatprep.subr.mxu0 0.0
        %910 = vmatpush1.xpose.msra.mxu0 0.0
        %911 = vmatprep.subr.mxu0 0.0
        %912 = vmatpush1.xpose.msra.mxu0 0.0
        %913 = vmatprep.subr.mxu0 0.0
        %914 = vmatpush1.xpose.msra.mxu0 0.0
        %915 = vmatprep.subr.mxu0 0.0
        %916 = vmatpush1.xpose.msra.mxu0 0.0
        %917 = vmatprep.subr.mxu0 0.0
        %918 = vmatpush1.xpose.msra.mxu0 0.0
        %919 = vmatprep.subr.mxu0 0.0
        %920 = vmatpush1.xpose.msra.mxu0 0.0
        %921 = vmatprep.subr.mxu0 0.0
        %922 = vmatpush1.xpose.msra.mxu0 0.0
        %923 = vmatprep.mubr.f32.mxu0 0.0
        %924 = vmatmul.mubr.f32.gmra.mrb[0].mxu0 %v850
        %v925 = vpop.f32.mrb[0].mxu0
        %v926 = vadd.f32 %v644, %v925
        %v927 = vpop.f32.mrb[0].mxu0
        %928 = vmatprep.mubr.f32.mxu0 0.0
        %929 = vmatmul.mubr.f32.gmra.mrb[0].mxu0 %v853
        %v930 = vpop.f32.mrb[0].mxu0
        %v931 = vadd.f32 %v645, %v930
        %v932 = vpop.f32.mrb[0].mxu0
        %933 = vdwg.mxu0
        %936 = vrot.lane.b32.xlu0 %v638, 96
        %v937 = vpop.permute.xlu0 %936
        %938 = vrot.lane.b32.xlu0 %v641, 96
        %v939 = vpop.permute.xlu0 %938
        %v941 = vsel %vm666, %v658, 0
        %v944 = vsel %vm666, %v659, 0
        %v946 = vsel %vm666, %v937, 0
        %v948 = vsel %vm666, %v939, 0
        %950 = vmatprep.subr.mxu0 0.0
        %951 = vmatpush1.xpose.msra.mxu0 %v946
        %952 = vmatprep.subr.mxu0 0.0
        %953 = vmatpush1.xpose.msra.mxu0 %v948
        %954 = vmatprep.subr.mxu0 0.0
        %955 = vmatpush1.xpose.msra.mxu0 0.0
        %956 = vmatprep.subr.mxu0 0.0
        %957 = vmatpush1.xpose.msra.mxu0 0.0
        %958 = vmatprep.subr.mxu0 0.0
        %959 = vmatpush1.xpose.msra.mxu0 0.0
        %960 = vmatprep.subr.mxu0 0.0
        %961 = vmatpush1.xpose.msra.mxu0 0.0
        %962 = vmatprep.subr.mxu0 0.0
        %963 = vmatpush1.xpose.msra.mxu0 0.0
        %964 = vmatprep.subr.mxu0 0.0
        %965 = vmatpush1.xpose.msra.mxu0 0.0
        %966 = vmatprep.subr.mxu0 0.0
        %967 = vmatpush1.xpose.msra.mxu0 0.0
        %968 = vmatprep.subr.mxu0 0.0
        %969 = vmatpush1.xpose.msra.mxu0 0.0
        %970 = vmatprep.subr.mxu0 0.0
        %971 = vmatpush1.xpose.msra.mxu0 0.0
        %972 = vmatprep.subr.mxu0 0.0
        %973 = vmatpush1.xpose.msra.mxu0 0.0
        %974 = vmatprep.subr.mxu0 0.0
        %975 = vmatpush1.xpose.msra.mxu0 0.0
        %976 = vmatprep.subr.mxu0 0.0
        %977 = vmatpush1.xpose.msra.mxu0 0.0
        %978 = vmatprep.subr.mxu0 0.0
        %979 = vmatpush1.xpose.msra.mxu0 0.0
        %980 = vmatprep.subr.mxu0 0.0
        %981 = vmatpush1.xpose.msra.mxu0 0.0
        %982 = vmatprep.subr.mxu0 0.0
        %983 = vmatpush1.xpose.msra.mxu0 0.0
        %984 = vmatprep.subr.mxu0 0.0
        %985 = vmatpush1.xpose.msra.mxu0 0.0
        %986 = vmatprep.subr.mxu0 0.0
        %987 = vmatpush1.xpose.msra.mxu0 0.0
        %988 = vmatprep.subr.mxu0 0.0
        %989 = vmatpush1.xpose.msra.mxu0 0.0
        %990 = vmatprep.subr.mxu0 0.0
        %991 = vmatpush1.xpose.msra.mxu0 0.0
        %992 = vmatprep.subr.mxu0 0.0
        %993 = vmatpush1.xpose.msra.mxu0 0.0
        %994 = vmatprep.subr.mxu0 0.0
        %995 = vmatpush1.xpose.msra.mxu0 0.0
        %996 = vmatprep.subr.mxu0 0.0
        %997 = vmatpush1.xpose.msra.mxu0 0.0
        %998 = vmatprep.subr.mxu0 0.0
        %999 = vmatpush1.xpose.msra.mxu0 0.0
        %1000 = vmatprep.subr.mxu0 0.0
        %1001 = vmatpush1.xpose.msra.mxu0 0.0
        %1002 = vmatprep.subr.mxu0 0.0
        %1003 = vmatpush1.xpose.msra.mxu0 0.0
        %1004 = vmatprep.subr.mxu0 0.0
        %1005 = vmatpush1.xpose.msra.mxu0 0.0
        %1006 = vmatprep.subr.mxu0 0.0
        %1007 = vmatpush1.xpose.msra.mxu0 0.0
        %1008 = vmatprep.subr.mxu0 0.0
        %1009 = vmatpush1.xpose.msra.mxu0 0.0
        %1010 = vmatprep.subr.mxu0 0.0
        %1011 = vmatpush1.xpose.msra.mxu0 0.0
        %1012 = vmatprep.subr.mxu0 0.0
        %1013 = vmatpush1.xpose.msra.mxu0 0.0
        %1014 = vmatprep.mubr.f32.mxu0 0.0
        %1015 = vmatmul.mubr.f32.gmra.mrb[0].mxu0 %v941
        %v1016 = vpop.f32.mrb[0].mxu0
        %v1017 = vadd.f32 %v644, %v1016
        %v1018 = vpop.f32.mrb[0].mxu0
        %1019 = vmatprep.mubr.f32.mxu0 0.0
        %1020 = vmatmul.mubr.f32.gmra.mrb[0].mxu0 %v944
        %v1021 = vpop.f32.mrb[0].mxu0
        %v1022 = vadd.f32 %v645, %v1021
        %v1023 = vpop.f32.mrb[0].mxu0
        %1024 = vdwg.mxu0
        %vm1025 = vcmask 130048
        %v1026 = vsel %vm1025, %v744, -inf
        %1027 = vmax.xlane.f32.xlu0 %v1026
        %v1028 = vpop.xlane.xlu0 %1027
        %v1029 = vsel %vm1025, %v749, -inf
        %1030 = vmax.xlane.f32.xlu0 %v1029
        %v1031 = vpop.xlane.xlu0 %1030
        %v1032 = vsel %vm1025, %v835, -inf
        %1033 = vmax.xlane.f32.xlu0 %v1032
        %v1034 = vpop.xlane.xlu0 %1033
        %v1035 = vsel %vm1025, %v840, -inf
        %1036 = vmax.xlane.f32.xlu0 %v1035
        %v1037 = vpop.xlane.xlu0 %1036
        %v1038 = vsel %vm1025, %v926, -inf
        %1039 = vmax.xlane.f32.xlu0 %v1038
        %v1040 = vpop.xlane.xlu0 %1039
        %v1041 = vsel %vm1025, %v931, -inf
        %1042 = vmax.xlane.f32.xlu0 %v1041
        %v1043 = vpop.xlane.xlu0 %1042
        %v1044 = vsel %vm1025, %v1017, -inf
        %1045 = vmax.xlane.f32.xlu0 %v1044
        %v1046 = vpop.xlane.xlu0 %1045
        %v1047 = vsel %vm1025, %v1022, -inf
        %1048 = vmax.xlane.f32.xlu0 %v1047
        %v1049 = vpop.xlane.xlu0 %1048
        %v1050 = vsub.f32 %v744, %v1028
        %v1051 = vsub.f32 %v749, %v1031
        %v1052 = vsub.f32 %v835, %v1034
        %v1053 = vsub.f32 %v840, %v1037
        %v1054 = vsub.f32 %v926, %v1040
        %v1055 = vsub.f32 %v931, %v1043
        %v1056 = vsub.f32 %v1017, %v1046
        %v1057 = vsub.f32 %v1022, %v1049
        %v1058 = vmul.f32 %v1050, 1.442695
        %v1059 = vpow.pop %v1058
        %v1060 = vmul.f32 %v1051, 1.442695
        %v1061 = vpow.pop %v1060
        %v1062 = vmul.f32 %v1052, 1.442695
        %v1063 = vpow.pop %v1062
        %v1064 = vmul.f32 %v1053, 1.442695
        %v1065 = vpow.pop %v1064
        %v1066 = vmul.f32 %v1054, 1.442695
        %v1067 = vpow.pop %v1066
        %v1068 = vmul.f32 %v1055, 1.442695
        %v1069 = vpow.pop %v1068
        %v1070 = vmul.f32 %v1056, 1.442695
        %v1071 = vpow.pop %v1070
        %v1072 = vmul.f32 %v1057, 1.442695
        %v1073 = vpow.pop %v1072
        %v1074 = vsel %vm1025, %v1059, 0.0
        %1075 = vadd.xlane.f32.xlu0 %v1074
        %v1076 = vpop.xlane.xlu0 %1075
        %v1077 = vsel %vm1025, %v1061, 0.0
        %1078 = vadd.xlane.f32.xlu0 %v1077
        %v1079 = vpop.xlane.xlu0 %1078
        %v1080 = vsel %vm1025, %v1063, 0.0
        %1081 = vadd.xlane.f32.xlu0 %v1080
        %v1082 = vpop.xlane.xlu0 %1081
        %v1083 = vsel %vm1025, %v1065, 0.0
        %1084 = vadd.xlane.f32.xlu0 %v1083
        %v1085 = vpop.xlane.xlu0 %1084
        %v1086 = vsel %vm1025, %v1067, 0.0
        %1087 = vadd.xlane.f32.xlu0 %v1086
        %v1088 = vpop.xlane.xlu0 %1087
        %v1089 = vsel %vm1025, %v1069, 0.0
        %1090 = vadd.xlane.f32.xlu0 %v1089
        %v1091 = vpop.xlane.xlu0 %1090
        %v1092 = vsel %vm1025, %v1071, 0.0
        %1093 = vadd.xlane.f32.xlu0 %v1092
        %v1094 = vpop.xlane.xlu0 %1093
        %v1095 = vsel %vm1025, %v1073, 0.0
        %1096 = vadd.xlane.f32.xlu0 %v1095
        %v1097 = vpop.xlane.xlu0 %1096
        %v1098 = vrcp.pop %v1076
        %v1099 = vrcp.pop %v1079
        %v1100 = vrcp.pop %v1082
        %v1101 = vrcp.pop %v1085
        %v1102 = vrcp.pop %v1088
        %v1103 = vrcp.pop %v1091
        %v1104 = vrcp.pop %v1094
        %v1105 = vrcp.pop %v1097
        %v1106 = vmul.f32 %v1059, %v1098
        %v1107 = vmul.f32 %v1061, %v1099
        %v1108 = vmul.f32 %v1063, %v1100
        %v1109 = vmul.f32 %v1065, %v1101
        %v1110 = vmul.f32 %v1067, %v1102
        %v1111 = vmul.f32 %v1069, %v1103
        %v1112 = vmul.f32 %v1071, %v1104
        %v1113 = vmul.f32 %v1073, %v1105
        %s1114 = sld [smem:[#allocation3]]
        %v1115 = vstv %s1114
        %v1116 = vmul.f32 %v1106, %v1115
        %v1117 = vmul.f32 %v1107, %v1115
        %v1118 = vmul.f32 %v1108, %v1115
        %v1119 = vmul.f32 %v1109, %v1115
        %v1120 = vmul.f32 %v1110, %v1115
        %v1121 = vmul.f32 %v1111, %v1115
        %v1122 = vmul.f32 %v1112, %v1115
        %v1123 = vmul.f32 %v1113, %v1115
        %s1124 = sld [smem:[#allocation5]]
        %v1125 = vstv %s1124
        %v1126 = vsub.f32 %v1116, %v1125
        %v1127 = vsub.f32 %v1117, %v1125
        %v1128 = vsub.f32 %v1118, %v1125
        %v1129 = vsub.f32 %v1119, %v1125
        %v1130 = vsub.f32 %v1120, %v1125
        %v1131 = vsub.f32 %v1121, %v1125
        %v1132 = vsub.f32 %v1122, %v1125
        %v1133 = vsub.f32 %v1123, %v1125
        %1134 = vrot.lane.b32.xlu0 %v614, 64
        %v1135 = vpop.permute.xlu0 %1134
        %1136 = vrot.lane.b32.xlu0 %v617, 64
        %v1137 = vpop.permute.xlu0 %1136
        %v1141 = vsel %vm1025, %v1126, 0
        %v1144 = vsel %vm1025, %v1127, 0
        %1146 = vmatprep.subr.mxu0 0.0
        %1147 = vmatpush1.msra.mxu0 %v1135
        %1148 = vmatprep.subr.mxu0 0.0
        %1149 = vmatpush1.msra.mxu0 %v1137
        %1150 = vmatprep.subr.mxu0 0.0
        %1151 = vmatpush1.msra.mxu0 0.0
        %1152 = vmatprep.subr.mxu0 0.0
        %1153 = vmatpush1.msra.mxu0 0.0
        %1154 = vmatprep.subr.mxu0 0.0
        %1155 = vmatpush1.msra.mxu0 0.0
        %1156 = vmatprep.subr.mxu0 0.0
        %1157 = vmatpush1.msra.mxu0 0.0
        %1158 = vmatprep.subr.mxu0 0.0
        %1159 = vmatpush1.msra.mxu0 0.0
        %1160 = vmatprep.subr.mxu0 0.0
        %1161 = vmatpush1.msra.mxu0 0.0
        %1162 = vmatprep.subr.mxu0 0.0
        %1163 = vmatpush1.msra.mxu0 0.0
        %1164 = vmatprep.subr.mxu0 0.0
        %1165 = vmatpush1.msra.mxu0 0.0
        %1166 = vmatprep.subr.mxu0 0.0
        %1167 = vmatpush1.msra.mxu0 0.0
        %1168 = vmatprep.subr.mxu0 0.0
        %1169 = vmatpush1.msra.mxu0 0.0
        %1170 = vmatprep.subr.mxu0 0.0
        %1171 = vmatpush1.msra.mxu0 0.0
        %1172 = vmatprep.subr.mxu0 0.0
        %1173 = vmatpush1.msra.mxu0 0.0
        %1174 = vmatprep.subr.mxu0 0.0
        %1175 = vmatpush1.msra.mxu0 0.0
        %1176 = vmatprep.subr.mxu0 0.0
        %1177 = vmatpush1.msra.mxu0 0.0
        %1178 = vmatprep.subr.mxu0 0.0
        %1179 = vmatpush1.msra.mxu0 0.0
        %1180 = vmatprep.subr.mxu0 0.0
        %1181 = vmatpush1.msra.mxu0 0.0
        %1182 = vmatprep.subr.mxu0 0.0
        %1183 = vmatpush1.msra.mxu0 0.0
        %1184 = vmatprep.subr.mxu0 0.0
        %1185 = vmatpush1.msra.mxu0 0.0
        %1186 = vmatprep.subr.mxu0 0.0
        %1187 = vmatpush1.msra.mxu0 0.0
        %1188 = vmatprep.subr.mxu0 0.0
        %1189 = vmatpush1.msra.mxu0 0.0
        %1190 = vmatprep.subr.mxu0 0.0
        %1191 = vmatpush1.msra.mxu0 0.0
        %1192 = vmatprep.subr.mxu0 0.0
        %1193 = vmatpush1.msra.mxu0 0.0
        %1194 = vmatprep.subr.mxu0 0.0
        %1195 = vmatpush1.msra.mxu0 0.0
        %1196 = vmatprep.subr.mxu0 0.0
        %1197 = vmatpush1.msra.mxu0 0.0
        %1198 = vmatprep.subr.mxu0 0.0
        %1199 = vmatpush1.msra.mxu0 0.0
        %1200 = vmatprep.subr.mxu0 0.0
        %1201 = vmatpush1.msra.mxu0 0.0
        %1202 = vmatprep.subr.mxu0 0.0
        %1203 = vmatpush1.msra.mxu0 0.0
        %1204 = vmatprep.subr.mxu0 0.0
        %1205 = vmatpush1.msra.mxu0 0.0
        %1206 = vmatprep.subr.mxu0 0.0
        %1207 = vmatpush1.msra.mxu0 0.0
        %1208 = vmatprep.subr.mxu0 0.0
        %1209 = vmatpush1.msra.mxu0 0.0
        %1210 = vmatprep.mubr.f32.mxu0 0.0
        %1211 = vmatmul.mubr.f32.gmra.mrb[0].mxu0 %v1141
        %v1212 = vpop.f32.mrb[0].mxu0
        %v1213 = vadd.f32 0.0, %v1212
        %v1214 = vpop.f32.mrb[0].mxu0
        %1215 = vmatprep.mubr.f32.mxu0 0.0
        %1216 = vmatmul.mubr.f32.gmra.mrb[0].mxu0 %v1144
        %v1217 = vpop.f32.mrb[0].mxu0
        %v1218 = vadd.f32 0.0, %v1217
        %v1219 = vpop.f32.mrb[0].mxu0
        %1220 = vdwg.mxu0
        %1221 = vrot.lane.b32.xlu0 %v622, 64
        %v1222 = vpop.permute.xlu0 %1221
        %1223 = vrot.lane.b32.xlu0 %v625, 64
        %v1224 = vpop.permute.xlu0 %1223
        %v1228 = vsel %vm1025, %v1128, 0
        %v1231 = vsel %vm1025, %v1129, 0
        %1233 = vmatprep.subr.mxu0 0.0
        %1234 = vmatpush1.msra.mxu0 %v1222
        %1235 = vmatprep.subr.mxu0 0.0
        %1236 = vmatpush1.msra.mxu0 %v1224
        %1237 = vmatprep.subr.mxu0 0.0
        %1238 = vmatpush1.msra.mxu0 0.0
        %1239 = vmatprep.subr.mxu0 0.0
        %1240 = vmatpush1.msra.mxu0 0.0
        %1241 = vmatprep.subr.mxu0 0.0
        %1242 = vmatpush1.msra.mxu0 0.0
        %1243 = vmatprep.subr.mxu0 0.0
        %1244 = vmatpush1.msra.mxu0 0.0
        %1245 = vmatprep.subr.mxu0 0.0
        %1246 = vmatpush1.msra.mxu0 0.0
        %1247 = vmatprep.subr.mxu0 0.0
        %1248 = vmatpush1.msra.mxu0 0.0
        %1249 = vmatprep.subr.mxu0 0.0
        %1250 = vmatpush1.msra.mxu0 0.0
        %1251 = vmatprep.subr.mxu0 0.0
        %1252 = vmatpush1.msra.mxu0 0.0
        %1253 = vmatprep.subr.mxu0 0.0
        %1254 = vmatpush1.msra.mxu0 0.0
        %1255 = vmatprep.subr.mxu0 0.0
        %1256 = vmatpush1.msra.mxu0 0.0
        %1257 = vmatprep.subr.mxu0 0.0
        %1258 = vmatpush1.msra.mxu0 0.0
        %1259 = vmatprep.subr.mxu0 0.0
        %1260 = vmatpush1.msra.mxu0 0.0
        %1261 = vmatprep.subr.mxu0 0.0
        %1262 = vmatpush1.msra.mxu0 0.0
        %1263 = vmatprep.subr.mxu0 0.0
        %1264 = vmatpush1.msra.mxu0 0.0
        %1265 = vmatprep.subr.mxu0 0.0
        %1266 = vmatpush1.msra.mxu0 0.0
        %1267 = vmatprep.subr.mxu0 0.0
        %1268 = vmatpush1.msra.mxu0 0.0
        %1269 = vmatprep.subr.mxu0 0.0
        %1270 = vmatpush1.msra.mxu0 0.0
        %1271 = vmatprep.subr.mxu0 0.0
        %1272 = vmatpush1.msra.mxu0 0.0
        %1273 = vmatprep.subr.mxu0 0.0
        %1274 = vmatpush1.msra.mxu0 0.0
        %1275 = vmatprep.subr.mxu0 0.0
        %1276 = vmatpush1.msra.mxu0 0.0
        %1277 = vmatprep.subr.mxu0 0.0
        %1278 = vmatpush1.msra.mxu0 0.0
        %1279 = vmatprep.subr.mxu0 0.0
        %1280 = vmatpush1.msra.mxu0 0.0
        %1281 = vmatprep.subr.mxu0 0.0
        %1282 = vmatpush1.msra.mxu0 0.0
        %1283 = vmatprep.subr.mxu0 0.0
        %1284 = vmatpush1.msra.mxu0 0.0
        %1285 = vmatprep.subr.mxu0 0.0
        %1286 = vmatpush1.msra.mxu0 0.0
        %1287 = vmatprep.subr.mxu0 0.0
        %1288 = vmatpush1.msra.mxu0 0.0
        %1289 = vmatprep.subr.mxu0 0.0
        %1290 = vmatpush1.msra.mxu0 0.0
        %1291 = vmatprep.subr.mxu0 0.0
        %1292 = vmatpush1.msra.mxu0 0.0
        %1293 = vmatprep.subr.mxu0 0.0
        %1294 = vmatpush1.msra.mxu0 0.0
        %1295 = vmatprep.subr.mxu0 0.0
        %1296 = vmatpush1.msra.mxu0 0.0
        %1297 = vmatprep.mubr.f32.mxu0 0.0
        %1298 = vmatmul.mubr.f32.gmra.mrb[0].mxu0 %v1228
        %v1299 = vpop.f32.mrb[0].mxu0
        %v1300 = vadd.f32 0.0, %v1299
        %v1301 = vpop.f32.mrb[0].mxu0
        %1302 = vmatprep.mubr.f32.mxu0 0.0
        %1303 = vmatmul.mubr.f32.gmra.mrb[0].mxu0 %v1231
        %v1304 = vpop.f32.mrb[0].mxu0
        %v1305 = vadd.f32 0.0, %v1304
        %v1306 = vpop.f32.mrb[0].mxu0
        %1307 = vdwg.mxu0
        %1308 = vrot.lane.b32.xlu0 %v630, 64
        %v1309 = vpop.permute.xlu0 %1308
        %1310 = vrot.lane.b32.xlu0 %v633, 64
        %v1311 = vpop.permute.xlu0 %1310
        %v1315 = vsel %vm1025, %v1130, 0
        %v1318 = vsel %vm1025, %v1131, 0
        %1320 = vmatprep.subr.mxu0 0.0
        %1321 = vmatpush1.msra.mxu0 %v1309
        %1322 = vmatprep.subr.mxu0 0.0
        %1323 = vmatpush1.msra.mxu0 %v1311
        %1324 = vmatprep.subr.mxu0 0.0
        %1325 = vmatpush1.msra.mxu0 0.0
        %1326 = vmatprep.subr.mxu0 0.0
        %1327 = vmatpush1.msra.mxu0 0.0
        %1328 = vmatprep.subr.mxu0 0.0
        %1329 = vmatpush1.msra.mxu0 0.0
        %1330 = vmatprep.subr.mxu0 0.0
        %1331 = vmatpush1.msra.mxu0 0.0
        %1332 = vmatprep.subr.mxu0 0.0
        %1333 = vmatpush1.msra.mxu0 0.0
        %1334 = vmatprep.subr.mxu0 0.0
        %1335 = vmatpush1.msra.mxu0 0.0
        %1336 = vmatprep.subr.mxu0 0.0
        %1337 = vmatpush1.msra.mxu0 0.0
        %1338 = vmatprep.subr.mxu0 0.0
        %1339 = vmatpush1.msra.mxu0 0.0
        %1340 = vmatprep.subr.mxu0 0.0
        %1341 = vmatpush1.msra.mxu0 0.0
        %1342 = vmatprep.subr.mxu0 0.0
        %1343 = vmatpush1.msra.mxu0 0.0
        %1344 = vmatprep.subr.mxu0 0.0
        %1345 = vmatpush1.msra.mxu0 0.0
        %1346 = vmatprep.subr.mxu0 0.0
        %1347 = vmatpush1.msra.mxu0 0.0
        %1348 = vmatprep.subr.mxu0 0.0
        %1349 = vmatpush1.msra.mxu0 0.0
        %1350 = vmatprep.subr.mxu0 0.0
        %1351 = vmatpush1.msra.mxu0 0.0
        %1352 = vmatprep.subr.mxu0 0.0
        %1353 = vmatpush1.msra.mxu0 0.0
        %1354 = vmatprep.subr.mxu0 0.0
        %1355 = vmatpush1.msra.mxu0 0.0
        %1356 = vmatprep.subr.mxu0 0.0
        %1357 = vmatpush1.msra.mxu0 0.0
        %1358 = vmatprep.subr.mxu0 0.0
        %1359 = vmatpush1.msra.mxu0 0.0
        %1360 = vmatprep.subr.mxu0 0.0
        %1361 = vmatpush1.msra.mxu0 0.0
        %1362 = vmatprep.subr.mxu0 0.0
        %1363 = vmatpush1.msra.mxu0 0.0
        %1364 = vmatprep.subr.mxu0 0.0
        %1365 = vmatpush1.msra.mxu0 0.0
        %1366 = vmatprep.subr.mxu0 0.0
        %1367 = vmatpush1.msra.mxu0 0.0
        %1368 = vmatprep.subr.mxu0 0.0
        %1369 = vmatpush1.msra.mxu0 0.0
        %1370 = vmatprep.subr.mxu0 0.0
        %1371 = vmatpush1.msra.mxu0 0.0
        %1372 = vmatprep.subr.mxu0 0.0
        %1373 = vmatpush1.msra.mxu0 0.0
        %1374 = vmatprep.subr.mxu0 0.0
        %1375 = vmatpush1.msra.mxu0 0.0
        %1376 = vmatprep.subr.mxu0 0.0
        %1377 = vmatpush1.msra.mxu0 0.0
        %1378 = vmatprep.subr.mxu0 0.0
        %1379 = vmatpush1.msra.mxu0 0.0
        %1380 = vmatprep.subr.mxu0 0.0
        %1381 = vmatpush1.msra.mxu0 0.0
        %1382 = vmatprep.subr.mxu0 0.0
        %1383 = vmatpush1.msra.mxu0 0.0
        %1384 = vmatprep.mubr.f32.mxu0 0.0
        %1385 = vmatmul.mubr.f32.gmra.mrb[0].mxu0 %v1315
        %v1386 = vpop.f32.mrb[0].mxu0
        %v1387 = vadd.f32 0.0, %v1386
        %v1388 = vpop.f32.mrb[0].mxu0
        %1389 = vmatprep.mubr.f32.mxu0 0.0
        %1390 = vmatmul.mubr.f32.gmra.mrb[0].mxu0 %v1318
        %v1391 = vpop.f32.mrb[0].mxu0
        %v1392 = vadd.f32 0.0, %v1391
        %v1393 = vpop.f32.mrb[0].mxu0
        %1394 = vdwg.mxu0
        %1395 = vrot.lane.b32.xlu0 %v638, 64
        %v1396 = vpop.permute.xlu0 %1395
        %1397 = vrot.lane.b32.xlu0 %v641, 64
        %v1398 = vpop.permute.xlu0 %1397
        %v1402 = vsel %vm1025, %v1132, 0
        %v1405 = vsel %vm1025, %v1133, 0
        %1407 = vmatprep.subr.mxu0 0.0
        %1408 = vmatpush1.msra.mxu0 %v1396
        %1409 = vmatprep.subr.mxu0 0.0
        %1410 = vmatpush1.msra.mxu0 %v1398
        %1411 = vmatprep.subr.mxu0 0.0
        %1412 = vmatpush1.msra.mxu0 0.0
        %1413 = vmatprep.subr.mxu0 0.0
        %1414 = vmatpush1.msra.mxu0 0.0
        %1415 = vmatprep.subr.mxu0 0.0
        %1416 = vmatpush1.msra.mxu0 0.0
        %1417 = vmatprep.subr.mxu0 0.0
        %1418 = vmatpush1.msra.mxu0 0.0
        %1419 = vmatprep.subr.mxu0 0.0
        %1420 = vmatpush1.msra.mxu0 0.0
        %1421 = vmatprep.subr.mxu0 0.0
        %1422 = vmatpush1.msra.mxu0 0.0
        %1423 = vmatprep.subr.mxu0 0.0
        %1424 = vmatpush1.msra.mxu0 0.0
        %1425 = vmatprep.subr.mxu0 0.0
        %1426 = vmatpush1.msra.mxu0 0.0
        %1427 = vmatprep.subr.mxu0 0.0
        %1428 = vmatpush1.msra.mxu0 0.0
        %1429 = vmatprep.subr.mxu0 0.0
        %1430 = vmatpush1.msra.mxu0 0.0
        %1431 = vmatprep.subr.mxu0 0.0
        %1432 = vmatpush1.msra.mxu0 0.0
        %1433 = vmatprep.subr.mxu0 0.0
        %1434 = vmatpush1.msra.mxu0 0.0
        %1435 = vmatprep.subr.mxu0 0.0
        %1436 = vmatpush1.msra.mxu0 0.0
        %1437 = vmatprep.subr.mxu0 0.0
        %1438 = vmatpush1.msra.mxu0 0.0
        %1439 = vmatprep.subr.mxu0 0.0
        %1440 = vmatpush1.msra.mxu0 0.0
        %1441 = vmatprep.subr.mxu0 0.0
        %1442 = vmatpush1.msra.mxu0 0.0
        %1443 = vmatprep.subr.mxu0 0.0
        %1444 = vmatpush1.msra.mxu0 0.0
        %1445 = vmatprep.subr.mxu0 0.0
        %1446 = vmatpush1.msra.mxu0 0.0
        %1447 = vmatprep.subr.mxu0 0.0
        %1448 = vmatpush1.msra.mxu0 0.0
        %1449 = vmatprep.subr.mxu0 0.0
        %1450 = vmatpush1.msra.mxu0 0.0
        %1451 = vmatprep.subr.mxu0 0.0
        %1452 = vmatpush1.msra.mxu0 0.0
        %1453 = vmatprep.subr.mxu0 0.0
        %1454 = vmatpush1.msra.mxu0 0.0
        %1455 = vmatprep.subr.mxu0 0.0
        %1456 = vmatpush1.msra.mxu0 0.0
        %1457 = vmatprep.subr.mxu0 0.0
        %1458 = vmatpush1.msra.mxu0 0.0
        %1459 = vmatprep.subr.mxu0 0.0
        %1460 = vmatpush1.msra.mxu0 0.0
        %1461 = vmatprep.subr.mxu0 0.0
        %1462 = vmatpush1.msra.mxu0 0.0
        %1463 = vmatprep.subr.mxu0 0.0
        %1464 = vmatpush1.msra.mxu0 0.0
        %1465 = vmatprep.subr.mxu0 0.0
        %1466 = vmatpush1.msra.mxu0 0.0
        %1467 = vmatprep.subr.mxu0 0.0
        %1468 = vmatpush1.msra.mxu0 0.0
        %1469 = vmatprep.subr.mxu0 0.0
        %1470 = vmatpush1.msra.mxu0 0.0
        %1471 = vmatprep.mubr.f32.mxu0 0.0
        %1472 = vmatmul.mubr.f32.gmra.mrb[0].mxu0 %v1402
        %v1473 = vpop.f32.mrb[0].mxu0
        %v1474 = vadd.f32 0.0, %v1473
        %v1475 = vpop.f32.mrb[0].mxu0
        %1476 = vmatprep.mubr.f32.mxu0 0.0
        %1477 = vmatmul.mubr.f32.gmra.mrb[0].mxu0 %v1405
        %v1478 = vpop.f32.mrb[0].mxu0
        %v1479 = vadd.f32 0.0, %v1478
        %v1480 = vpop.f32.mrb[0].mxu0
        %1481 = vdwg.mxu0
        %v1482 = vpack.c.bf16 %v1218, %v1213
        %v1483 = vpack.c.bf16 %v1305, %v1300
        %v1484 = vpack.c.bf16 %v1392, %v1387
        %v1485 = vpack.c.bf16 %v1479, %v1474
        %1486 = vst.msk [vmem:[#allocation2] sm:$0xff] %vm666, %v1482
        %1487 = vst.msk [vmem:[#allocation2 + $0x8] sm:$0xff] %vm666, %v1483
        %1488 = vst.msk [vmem:[#allocation2 + $0x10] sm:$0xff] %vm666, %v1484
        %1489 = vst.msk [vmem:[#allocation2 + $0x18] sm:$0xff] %vm666, %v1485
        %1490 = vrot.lane.b32.xlu0 %v652, 120
        %v1491 = vpop.permute.xlu0 %1490
        %1492 = vrot.lane.b32.xlu0 %v653, 120
        %v1493 = vpop.permute.xlu0 %1492
        %1494 = vrot.lane.b32.xlu0 %v614, 88
        %v1495 = vpop.permute.xlu0 %1494
        %1496 = vrot.lane.b32.xlu0 %v617, 88
        %v1497 = vpop.permute.xlu0 %1496
        %v1498 = vsel %vm666, %v1491, 0
        %v1500 = vsel %vm666, %v1493, 0
        %v1502 = vsel %vm666, %v1495, 0
        %v1504 = vsel %vm666, %v1497, 0
        %1506 = vmatprep.subr.mxu0 0.0
        %1507 = vmatpush1.xpose.msra.mxu0 %v1502
        %1508 = vmatprep.subr.mxu0 0.0
        %1509 = vmatpush1.xpose.msra.mxu0 %v1504
        %1510 = vmatprep.subr.mxu0 0.0
        %1511 = vmatpush1.xpose.msra.mxu0 0.0
        %1512 = vmatprep.subr.mxu0 0.0
        %1513 = vmatpush1.xpose.msra.mxu0 0.0
        %1514 = vmatprep.subr.mxu0 0.0
        %1515 = vmatpush1.xpose.msra.mxu0 0.0
        %1516 = vmatprep.subr.mxu0 0.0
        %1517 = vmatpush1.xpose.msra.mxu0 0.0
        %1518 = vmatprep.subr.mxu0 0.0
        %1519 = vmatpush1.xpose.msra.mxu0 0.0
        %1520 = vmatprep.subr.mxu0 0.0
        %1521 = vmatpush1.xpose.msra.mxu0 0.0
        %1522 = vmatprep.subr.mxu0 0.0
        %1523 = vmatpush1.xpose.msra.mxu0 0.0
        %1524 = vmatprep.subr.mxu0 0.0
        %1525 = vmatpush1.xpose.msra.mxu0 0.0
        %1526 = vmatprep.subr.mxu0 0.0
        %1527 = vmatpush1.xpose.msra.mxu0 0.0
        %1528 = vmatprep.subr.mxu0 0.0
        %1529 = vmatpush1.xpose.msra.mxu0 0.0
        %1530 = vmatprep.subr.mxu0 0.0
        %1531 = vmatpush1.xpose.msra.mxu0 0.0
        %1532 = vmatprep.subr.mxu0 0.0
        %1533 = vmatpush1.xpose.msra.mxu0 0.0
        %1534 = vmatprep.subr.mxu0 0.0
        %1535 = vmatpush1.xpose.msra.mxu0 0.0
        %1536 = vmatprep.subr.mxu0 0.0
        %1537 = vmatpush1.xpose.msra.mxu0 0.0
        %1538 = vmatprep.subr.mxu0 0.0
        %1539 = vmatpush1.xpose.msra.mxu0 0.0
        %1540 = vmatprep.subr.mxu0 0.0
        %1541 = vmatpush1.xpose.msra.mxu0 0.0
        %1542 = vmatprep.subr.mxu0 0.0
        %1543 = vmatpush1.xpose.msra.mxu0 0.0
        %1544 = vmatprep.subr.mxu0 0.0
        %1545 = vmatpush1.xpose.msra.mxu0 0.0
        %1546 = vmatprep.subr.mxu0 0.0
        %1547 = vmatpush1.xpose.msra.mxu0 0.0
        %1548 = vmatprep.subr.mxu0 0.0
        %1549 = vmatpush1.xpose.msra.mxu0 0.0
        %1550 = vmatprep.subr.mxu0 0.0
        %1551 = vmatpush1.xpose.msra.mxu0 0.0
        %1552 = vmatprep.subr.mxu0 0.0
        %1553 = vmatpush1.xpose.msra.mxu0 0.0
        %1554 = vmatprep.subr.mxu0 0.0
        %1555 = vmatpush1.xpose.msra.mxu0 0.0
        %1556 = vmatprep.subr.mxu0 0.0
        %1557 = vmatpush1.xpose.msra.mxu0 0.0
        %1558 = vmatprep.subr.mxu0 0.0
        %1559 = vmatpush1.xpose.msra.mxu0 0.0
        %1560 = vmatprep.subr.mxu0 0.0
        %1561 = vmatpush1.xpose.msra.mxu0 0.0
        %1562 = vmatprep.subr.mxu0 0.0
        %1563 = vmatpush1.xpose.msra.mxu0 0.0
        %1564 = vmatprep.subr.mxu0 0.0
        %1565 = vmatpush1.xpose.msra.mxu0 0.0
        %1566 = vmatprep.subr.mxu0 0.0
        %1567 = vmatpush1.xpose.msra.mxu0 0.0
        %1568 = vmatprep.subr.mxu0 0.0
        %1569 = vmatpush1.xpose.msra.mxu0 0.0
        %1570 = vmatprep.mubr.f32.mxu0 0.0
        %1571 = vmatmul.mubr.f32.gmra.mrb[0].mxu0 %v1498
        %v1572 = vpop.f32.mrb[0].mxu0
        %v1573 = vadd.f32 %v646, %v1572
        %v1574 = vpop.f32.mrb[0].mxu0
        %1575 = vmatprep.mubr.f32.mxu0 0.0
        %1576 = vmatmul.mubr.f32.gmra.mrb[0].mxu0 %v1500
        %v1577 = vpop.f32.mrb[0].mxu0
        %v1578 = vadd.f32 %v647, %v1577
        %v1579 = vpop.f32.mrb[0].mxu0
        %1580 = vdwg.mxu0
        %1581 = vrot.lane.b32.xlu0 %v654, 120
        %v1582 = vpop.permute.xlu0 %1581
        %1583 = vrot.lane.b32.xlu0 %v655, 120
        %v1584 = vpop.permute.xlu0 %1583
        %1585 = vrot.lane.b32.xlu0 %v622, 88
        %v1586 = vpop.permute.xlu0 %1585
        %1587 = vrot.lane.b32.xlu0 %v625, 88
        %v1588 = vpop.permute.xlu0 %1587
        %v1589 = vsel %vm666, %v1582, 0
        %v1591 = vsel %vm666, %v1584, 0
        %v1593 = vsel %vm666, %v1586, 0
        %v1595 = vsel %vm666, %v1588, 0
        %1597 = vmatprep.subr.mxu0 0.0
        %1598 = vmatpush1.xpose.msra.mxu0 %v1593
        %1599 = vmatprep.subr.mxu0 0.0
        %1600 = vmatpush1.xpose.msra.mxu0 %v1595
        %1601 = vmatprep.subr.mxu0 0.0
        %1602 = vmatpush1.xpose.msra.mxu0 0.0
        %1603 = vmatprep.subr.mxu0 0.0
        %1604 = vmatpush1.xpose.msra.mxu0 0.0
        %1605 = vmatprep.subr.mxu0 0.0
        %1606 = vmatpush1.xpose.msra.mxu0 0.0
        %1607 = vmatprep.subr.mxu0 0.0
        %1608 = vmatpush1.xpose.msra.mxu0 0.0
        %1609 = vmatprep.subr.mxu0 0.0
        %1610 = vmatpush1.xpose.msra.mxu0 0.0
        %1611 = vmatprep.subr.mxu0 0.0
        %1612 = vmatpush1.xpose.msra.mxu0 0.0
        %1613 = vmatprep.subr.mxu0 0.0
        %1614 = vmatpush1.xpose.msra.mxu0 0.0
        %1615 = vmatprep.subr.mxu0 0.0
        %1616 = vmatpush1.xpose.msra.mxu0 0.0
        %1617 = vmatprep.subr.mxu0 0.0
        %1618 = vmatpush1.xpose.msra.mxu0 0.0
        %1619 = vmatprep.subr.mxu0 0.0
        %1620 = vmatpush1.xpose.msra.mxu0 0.0
        %1621 = vmatprep.subr.mxu0 0.0
        %1622 = vmatpush1.xpose.msra.mxu0 0.0
        %1623 = vmatprep.subr.mxu0 0.0
        %1624 = vmatpush1.xpose.msra.mxu0 0.0
        %1625 = vmatprep.subr.mxu0 0.0
        %1626 = vmatpush1.xpose.msra.mxu0 0.0
        %1627 = vmatprep.subr.mxu0 0.0
        %1628 = vmatpush1.xpose.msra.mxu0 0.0
        %1629 = vmatprep.subr.mxu0 0.0
        %1630 = vmatpush1.xpose.msra.mxu0 0.0
        %1631 = vmatprep.subr.mxu0 0.0
        %1632 = vmatpush1.xpose.msra.mxu0 0.0
        %1633 = vmatprep.subr.mxu0 0.0
        %1634 = vmatpush1.xpose.msra.mxu0 0.0
        %1635 = vmatprep.subr.mxu0 0.0
        %1636 = vmatpush1.xpose.msra.mxu0 0.0
        %1637 = vmatprep.subr.mxu0 0.0
        %1638 = vmatpush1.xpose.msra.mxu0 0.0
        %1639 = vmatprep.subr.mxu0 0.0
        %1640 = vmatpush1.xpose.msra.mxu0 0.0
        %1641 = vmatprep.subr.mxu0 0.0
        %1642 = vmatpush1.xpose.msra.mxu0 0.0
        %1643 = vmatprep.subr.mxu0 0.0
        %1644 = vmatpush1.xpose.msra.mxu0 0.0
        %1645 = vmatprep.subr.mxu0 0.0
        %1646 = vmatpush1.xpose.msra.mxu0 0.0
        %1647 = vmatprep.subr.mxu0 0.0
        %1648 = vmatpush1.xpose.msra.mxu0 0.0
        %1649 = vmatprep.subr.mxu0 0.0
        %1650 = vmatpush1.xpose.msra.mxu0 0.0
        %1651 = vmatprep.subr.mxu0 0.0
        %1652 = vmatpush1.xpose.msra.mxu0 0.0
        %1653 = vmatprep.subr.mxu0 0.0
        %1654 = vmatpush1.xpose.msra.mxu0 0.0
        %1655 = vmatprep.subr.mxu0 0.0
        %1656 = vmatpush1.xpose.msra.mxu0 0.0
        %1657 = vmatprep.subr.mxu0 0.0
        %1658 = vmatpush1.xpose.msra.mxu0 0.0
        %1659 = vmatprep.subr.mxu0 0.0
        %1660 = vmatpush1.xpose.msra.mxu0 0.0
        %1661 = vmatprep.mubr.f32.mxu0 0.0
        %1662 = vmatmul.mubr.f32.gmra.mrb[0].mxu0 %v1589
        %v1663 = vpop.f32.mrb[0].mxu0
        %v1664 = vadd.f32 %v646, %v1663
        %v1665 = vpop.f32.mrb[0].mxu0
        %1666 = vmatprep.mubr.f32.mxu0 0.0
        %1667 = vmatmul.mubr.f32.gmra.mrb[0].mxu0 %v1591
        %v1668 = vpop.f32.mrb[0].mxu0
        %v1669 = vadd.f32 %v647, %v1668
        %v1670 = vpop.f32.mrb[0].mxu0
        %1671 = vdwg.mxu0
        %1672 = vrot.lane.b32.xlu0 %v656, 120
        %v1673 = vpop.permute.xlu0 %1672
        %1674 = vrot.lane.b32.xlu0 %v657, 120
        %v1675 = vpop.permute.xlu0 %1674
        %1676 = vrot.lane.b32.xlu0 %v630, 88
        %v1677 = vpop.permute.xlu0 %1676
        %1678 = vrot.lane.b32.xlu0 %v633, 88
        %v1679 = vpop.permute.xlu0 %1678
        %v1680 = vsel %vm666, %v1673, 0
        %v1682 = vsel %vm666, %v1675, 0
        %v1684 = vsel %vm666, %v1677, 0
        %v1686 = vsel %vm666, %v1679, 0
        %1688 = vmatprep.subr.mxu0 0.0
        %1689 = vmatpush1.xpose.msra.mxu0 %v1684
        %1690 = vmatprep.subr.mxu0 0.0
        %1691 = vmatpush1.xpose.msra.mxu0 %v1686
        %1692 = vmatprep.subr.mxu0 0.0
        %1693 = vmatpush1.xpose.msra.mxu0 0.0
        %1694 = vmatprep.subr.mxu0 0.0
        %1695 = vmatpush1.xpose.msra.mxu0 0.0
        %1696 = vmatprep.subr.mxu0 0.0
        %1697 = vmatpush1.xpose.msra.mxu0 0.0
        %1698 = vmatprep.subr.mxu0 0.0
        %1699 = vmatpush1.xpose.msra.mxu0 0.0
        %1700 = vmatprep.subr.mxu0 0.0
        %1701 = vmatpush1.xpose.msra.mxu0 0.0
        %1702 = vmatprep.subr.mxu0 0.0
        %1703 = vmatpush1.xpose.msra.mxu0 0.0
        %1704 = vmatprep.subr.mxu0 0.0
        %1705 = vmatpush1.xpose.msra.mxu0 0.0
        %1706 = vmatprep.subr.mxu0 0.0
        %1707 = vmatpush1.xpose.msra.mxu0 0.0
        %1708 = vmatprep.subr.mxu0 0.0
        %1709 = vmatpush1.xpose.msra.mxu0 0.0
        %1710 = vmatprep.subr.mxu0 0.0
        %1711 = vmatpush1.xpose.msra.mxu0 0.0
        %1712 = vmatprep.subr.mxu0 0.0
        %1713 = vmatpush1.xpose.msra.mxu0 0.0
        %1714 = vmatprep.subr.mxu0 0.0
        %1715 = vmatpush1.xpose.msra.mxu0 0.0
        %1716 = vmatprep.subr.mxu0 0.0
        %1717 = vmatpush1.xpose.msra.mxu0 0.0
        %1718 = vmatprep.subr.mxu0 0.0
        %1719 = vmatpush1.xpose.msra.mxu0 0.0
        %1720 = vmatprep.subr.mxu0 0.0
        %1721 = vmatpush1.xpose.msra.mxu0 0.0
        %1722 = vmatprep.subr.mxu0 0.0
        %1723 = vmatpush1.xpose.msra.mxu0 0.0
        %1724 = vmatprep.subr.mxu0 0.0
        %1725 = vmatpush1.xpose.msra.mxu0 0.0
        %1726 = vmatprep.subr.mxu0 0.0
        %1727 = vmatpush1.xpose.msra.mxu0 0.0
        %1728 = vmatprep.subr.mxu0 0.0
        %1729 = vmatpush1.xpose.msra.mxu0 0.0
        %1730 = vmatprep.subr.mxu0 0.0
        %1731 = vmatpush1.xpose.msra.mxu0 0.0
        %1732 = vmatprep.subr.mxu0 0.0
        %1733 = vmatpush1.xpose.msra.mxu0 0.0
        %1734 = vmatprep.subr.mxu0 0.0
        %1735 = vmatpush1.xpose.msra.mxu0 0.0
        %1736 = vmatprep.subr.mxu0 0.0
        %1737 = vmatpush1.xpose.msra.mxu0 0.0
        %1738 = vmatprep.subr.mxu0 0.0
        %1739 = vmatpush1.xpose.msra.mxu0 0.0
        %1740 = vmatprep.subr.mxu0 0.0
        %1741 = vmatpush1.xpose.msra.mxu0 0.0
        %1742 = vmatprep.subr.mxu0 0.0
        %1743 = vmatpush1.xpose.msra.mxu0 0.0
        %1744 = vmatprep.subr.mxu0 0.0
        %1745 = vmatpush1.xpose.msra.mxu0 0.0
        %1746 = vmatprep.subr.mxu0 0.0
        %1747 = vmatpush1.xpose.msra.mxu0 0.0
        %1748 = vmatprep.subr.mxu0 0.0
        %1749 = vmatpush1.xpose.msra.mxu0 0.0
        %1750 = vmatprep.subr.mxu0 0.0
        %1751 = vmatpush1.xpose.msra.mxu0 0.0
        %1752 = vmatprep.mubr.f32.mxu0 0.0
        %1753 = vmatmul.mubr.f32.gmra.mrb[0].mxu0 %v1680
        %v1754 = vpop.f32.mrb[0].mxu0
        %v1755 = vadd.f32 %v646, %v1754
        %v1756 = vpop.f32.mrb[0].mxu0
        %1757 = vmatprep.mubr.f32.mxu0 0.0
        %1758 = vmatmul.mubr.f32.gmra.mrb[0].mxu0 %v1682
        %v1759 = vpop.f32.mrb[0].mxu0
        %v1760 = vadd.f32 %v647, %v1759
        %v1761 = vpop.f32.mrb[0].mxu0
        %1762 = vdwg.mxu0
        %1763 = vrot.lane.b32.xlu0 %v658, 120
        %v1764 = vpop.permute.xlu0 %1763
        %1765 = vrot.lane.b32.xlu0 %v659, 120
        %v1766 = vpop.permute.xlu0 %1765
        %1767 = vrot.lane.b32.xlu0 %v638, 88
        %v1768 = vpop.permute.xlu0 %1767
        %1769 = vrot.lane.b32.xlu0 %v641, 88
        %v1770 = vpop.permute.xlu0 %1769
        %v1771 = vsel %vm666, %v1764, 0
        %v1773 = vsel %vm666, %v1766, 0
        %v1775 = vsel %vm666, %v1768, 0
        %v1777 = vsel %vm666, %v1770, 0
        %1779 = vmatprep.subr.mxu0 0.0
        %1780 = vmatpush1.xpose.msra.mxu0 %v1775
        %1781 = vmatprep.subr.mxu0 0.0
        %1782 = vmatpush1.xpose.msra.mxu0 %v1777
        %1783 = vmatprep.subr.mxu0 0.0
        %1784 = vmatpush1.xpose.msra.mxu0 0.0
        %1785 = vmatprep.subr.mxu0 0.0
        %1786 = vmatpush1.xpose.msra.mxu0 0.0
        %1787 = vmatprep.subr.mxu0 0.0
        %1788 = vmatpush1.xpose.msra.mxu0 0.0
        %1789 = vmatprep.subr.mxu0 0.0
        %1790 = vmatpush1.xpose.msra.mxu0 0.0
        %1791 = vmatprep.subr.mxu0 0.0
        %1792 = vmatpush1.xpose.msra.mxu0 0.0
        %1793 = vmatprep.subr.mxu0 0.0
        %1794 = vmatpush1.xpose.msra.mxu0 0.0
        %1795 = vmatprep.subr.mxu0 0.0
        %1796 = vmatpush1.xpose.msra.mxu0 0.0
        %1797 = vmatprep.subr.mxu0 0.0
        %1798 = vmatpush1.xpose.msra.mxu0 0.0
        %1799 = vmatprep.subr.mxu0 0.0
        %1800 = vmatpush1.xpose.msra.mxu0 0.0
        %1801 = vmatprep.subr.mxu0 0.0
        %1802 = vmatpush1.xpose.msra.mxu0 0.0
        %1803 = vmatprep.subr.mxu0 0.0
        %1804 = vmatpush1.xpose.msra.mxu0 0.0
        %1805 = vmatprep.subr.mxu0 0.0
        %1806 = vmatpush1.xpose.msra.mxu0 0.0
        %1807 = vmatprep.subr.mxu0 0.0
        %1808 = vmatpush1.xpose.msra.mxu0 0.0
        %1809 = vmatprep.subr.mxu0 0.0
        %1810 = vmatpush1.xpose.msra.mxu0 0.0
        %1811 = vmatprep.subr.mxu0 0.0
        %1812 = vmatpush1.xpose.msra.mxu0 0.0
        %1813 = vmatprep.subr.mxu0 0.0
        %1814 = vmatpush1.xpose.msra.mxu0 0.0
        %1815 = vmatprep.subr.mxu0 0.0
        %1816 = vmatpush1.xpose.msra.mxu0 0.0
        %1817 = vmatprep.subr.mxu0 0.0
        %1818 = vmatpush1.xpose.msra.mxu0 0.0
        %1819 = vmatprep.subr.mxu0 0.0
        %1820 = vmatpush1.xpose.msra.mxu0 0.0
        %1821 = vmatprep.subr.mxu0 0.0
        %1822 = vmatpush1.xpose.msra.mxu0 0.0
        %1823 = vmatprep.subr.mxu0 0.0
        %1824 = vmatpush1.xpose.msra.mxu0 0.0
        %1825 = vmatprep.subr.mxu0 0.0
        %1826 = vmatpush1.xpose.msra.mxu0 0.0
        %1827 = vmatprep.subr.mxu0 0.0
        %1828 = vmatpush1.xpose.msra.mxu0 0.0
        %1829 = vmatprep.subr.mxu0 0.0
        %1830 = vmatpush1.xpose.msra.mxu0 0.0
        %1831 = vmatprep.subr.mxu0 0.0
        %1832 = vmatpush1.xpose.msra.mxu0 0.0
        %1833 = vmatprep.subr.mxu0 0.0
        %1834 = vmatpush1.xpose.msra.mxu0 0.0
        %1835 = vmatprep.subr.mxu0 0.0
        %1836 = vmatpush1.xpose.msra.mxu0 0.0
        %1837 = vmatprep.subr.mxu0 0.0
        %1838 = vmatpush1.xpose.msra.mxu0 0.0
        %1839 = vmatprep.subr.mxu0 0.0
        %1840 = vmatpush1.xpose.msra.mxu0 0.0
        %1841 = vmatprep.subr.mxu0 0.0
        %1842 = vmatpush1.xpose.msra.mxu0 0.0
        %1843 = vmatprep.mubr.f32.mxu0 0.0
        %1844 = vmatmul.mubr.f32.gmra.mrb[0].mxu0 %v1771
        %v1845 = vpop.f32.mrb[0].mxu0
        %v1846 = vadd.f32 %v646, %v1845
        %v1847 = vpop.f32.mrb[0].mxu0
        %1848 = vmatprep.mubr.f32.mxu0 0.0
        %1849 = vmatmul.mubr.f32.gmra.mrb[0].mxu0 %v1773
        %v1850 = vpop.f32.mrb[0].mxu0
        %v1851 = vadd.f32 %v647, %v1850
        %v1852 = vpop.f32.mrb[0].mxu0
        %1853 = vdwg.mxu0
        %v1854 = vsel %vm1025, %v1573, -inf
        %1855 = vmax.xlane.f32.xlu0 %v1854
        %v1856 = vpop.xlane.xlu0 %1855
        %v1857 = vsel %vm1025, %v1578, -inf
        %1858 = vmax.xlane.f32.xlu0 %v1857
        %v1859 = vpop.xlane.xlu0 %1858
        %v1860 = vsel %vm1025, %v1664, -inf
        %1861 = vmax.xlane.f32.xlu0 %v1860
        %v1862 = vpop.xlane.xlu0 %1861
        %v1863 = vsel %vm1025, %v1669, -inf
        %1864 = vmax.xlane.f32.xlu0 %v1863
        %v1865 = vpop.xlane.xlu0 %1864
        %v1866 = vsel %vm1025, %v1755, -inf
        %1867 = vmax.xlane.f32.xlu0 %v1866
        %v1868 = vpop.xlane.xlu0 %1867
        %v1869 = vsel %vm1025, %v1760, -inf
        %1870 = vmax.xlane.f32.xlu0 %v1869
        %v1871 = vpop.xlane.xlu0 %1870
        %v1872 = vsel %vm1025, %v1846, -inf
        %1873 = vmax.xlane.f32.xlu0 %v1872
        %v1874 = vpop.xlane.xlu0 %1873
        %v1875 = vsel %vm1025, %v1851, -inf
        %1876 = vmax.xlane.f32.xlu0 %v1875
        %v1877 = vpop.xlane.xlu0 %1876
        %v1878 = vsub.f32 %v1573, %v1856
        %v1879 = vsub.f32 %v1578, %v1859
        %v1880 = vsub.f32 %v1664, %v1862
        %v1881 = vsub.f32 %v1669, %v1865
        %v1882 = vsub.f32 %v1755, %v1868
        %v1883 = vsub.f32 %v1760, %v1871
        %v1884 = vsub.f32 %v1846, %v1874
        %v1885 = vsub.f32 %v1851, %v1877
        %v1886 = vmul.f32 %v1878, 1.442695
        %v1887 = vpow.pop %v1886
        %v1888 = vmul.f32 %v1879, 1.442695
        %v1889 = vpow.pop %v1888
        %v1890 = vmul.f32 %v1880, 1.442695
        %v1891 = vpow.pop %v1890
        %v1892 = vmul.f32 %v1881, 1.442695
        %v1893 = vpow.pop %v1892
        %v1894 = vmul.f32 %v1882, 1.442695
        %v1895 = vpow.pop %v1894
        %v1896 = vmul.f32 %v1883, 1.442695
        %v1897 = vpow.pop %v1896
        %v1898 = vmul.f32 %v1884, 1.442695
        %v1899 = vpow.pop %v1898
        %v1900 = vmul.f32 %v1885, 1.442695
        %v1901 = vpow.pop %v1900
        %v1902 = vsel %vm1025, %v1887, 0.0
        %1903 = vadd.xlane.f32.xlu0 %v1902
        %v1904 = vpop.xlane.xlu0 %1903
        %v1905 = vsel %vm1025, %v1889, 0.0
        %1906 = vadd.xlane.f32.xlu0 %v1905
        %v1907 = vpop.xlane.xlu0 %1906
        %v1908 = vsel %vm1025, %v1891, 0.0
        %1909 = vadd.xlane.f32.xlu0 %v1908
        %v1910 = vpop.xlane.xlu0 %1909
        %v1911 = vsel %vm1025, %v1893, 0.0
        %1912 = vadd.xlane.f32.xlu0 %v1911
        %v1913 = vpop.xlane.xlu0 %1912
        %v1914 = vsel %vm1025, %v1895, 0.0
        %1915 = vadd.xlane.f32.xlu0 %v1914
        %v1916 = vpop.xlane.xlu0 %1915
        %v1917 = vsel %vm1025, %v1897, 0.0
        %1918 = vadd.xlane.f32.xlu0 %v1917
        %v1919 = vpop.xlane.xlu0 %1918
        %v1920 = vsel %vm1025, %v1899, 0.0
        %1921 = vadd.xlane.f32.xlu0 %v1920
        %v1922 = vpop.xlane.xlu0 %1921
        %v1923 = vsel %vm1025, %v1901, 0.0
        %1924 = vadd.xlane.f32.xlu0 %v1923
        %v1925 = vpop.xlane.xlu0 %1924
        %v1926 = vrcp.pop %v1904
        %v1927 = vrcp.pop %v1907
        %v1928 = vrcp.pop %v1910
        %v1929 = vrcp.pop %v1913
        %v1930 = vrcp.pop %v1916
        %v1931 = vrcp.pop %v1919
        %v1932 = vrcp.pop %v1922
        %v1933 = vrcp.pop %v1925
        %v1934 = vmul.f32 %v1887, %v1926
        %v1935 = vmul.f32 %v1889, %v1927
        %v1936 = vmul.f32 %v1891, %v1928
        %v1937 = vmul.f32 %v1893, %v1929
        %v1938 = vmul.f32 %v1895, %v1930
        %v1939 = vmul.f32 %v1897, %v1931
        %v1940 = vmul.f32 %v1899, %v1932
        %v1941 = vmul.f32 %v1901, %v1933
        %s1942 = sld [smem:[#allocation3 + $0x1]]
        %v1943 = vstv %s1942
        %v1944 = vmul.f32 %v1934, %v1943
        %v1945 = vmul.f32 %v1935, %v1943
        %v1946 = vmul.f32 %v1936, %v1943
        %v1947 = vmul.f32 %v1937, %v1943
        %v1948 = vmul.f32 %v1938, %v1943
        %v1949 = vmul.f32 %v1939, %v1943
        %v1950 = vmul.f32 %v1940, %v1943
        %v1951 = vmul.f32 %v1941, %v1943
        %s1952 = sld [smem:[#allocation5 + $0x1]]
        %v1953 = vstv %s1952
        %v1954 = vsub.f32 %v1944, %v1953
        %v1955 = vsub.f32 %v1945, %v1953
        %v1956 = vsub.f32 %v1946, %v1953
        %v1957 = vsub.f32 %v1947, %v1953
        %v1958 = vsub.f32 %v1948, %v1953
        %v1959 = vsub.f32 %v1949, %v1953
        %v1960 = vsub.f32 %v1950, %v1953
        %v1961 = vsub.f32 %v1951, %v1953
        %1962 = vrot.lane.b32.xlu0 %v614, 56
        %v1963 = vpop.permute.xlu0 %1962
        %1964 = vrot.lane.b32.xlu0 %v617, 56
        %v1965 = vpop.permute.xlu0 %1964
        %v1969 = vsel %vm1025, %v1954, 0
        %v1972 = vsel %vm1025, %v1955, 0
        %1974 = vmatprep.subr.mxu0 0.0
        %1975 = vmatpush1.msra.mxu0 %v1963
        %1976 = vmatprep.subr.mxu0 0.0
        %1977 = vmatpush1.msra.mxu0 %v1965
        %1978 = vmatprep.subr.mxu0 0.0
        %1979 = vmatpush1.msra.mxu0 0.0
        %1980 = vmatprep.subr.mxu0 0.0
        %1981 = vmatpush1.msra.mxu0 0.0
        %1982 = vmatprep.subr.mxu0 0.0
        %1983 = vmatpush1.msra.mxu0 0.0
        %1984 = vmatprep.subr.mxu0 0.0
        %1985 = vmatpush1.msra.mxu0 0.0
        %1986 = vmatprep.subr.mxu0 0.0
        %1987 = vmatpush1.msra.mxu0 0.0
        %1988 = vmatprep.subr.mxu0 0.0
        %1989 = vmatpush1.msra.mxu0 0.0
        %1990 = vmatprep.subr.mxu0 0.0
        %1991 = vmatpush1.msra.mxu0 0.0
        %1992 = vmatprep.subr.mxu0 0.0
        %1993 = vmatpush1.msra.mxu0 0.0
        %1994 = vmatprep.subr.mxu0 0.0
        %1995 = vmatpush1.msra.mxu0 0.0
        %1996 = vmatprep.subr.mxu0 0.0
        %1997 = vmatpush1.msra.mxu0 0.0
        %1998 = vmatprep.subr.mxu0 0.0
        %1999 = vmatpush1.msra.mxu0 0.0
        %2000 = vmatprep.subr.mxu0 0.0
        %2001 = vmatpush1.msra.mxu0 0.0
        %2002 = vmatprep.subr.mxu0 0.0
        %2003 = vmatpush1.msra.mxu0 0.0
        %2004 = vmatprep.subr.mxu0 0.0
        %2005 = vmatpush1.msra.mxu0 0.0
        %2006 = vmatprep.subr.mxu0 0.0
        %2007 = vmatpush1.msra.mxu0 0.0
        %2008 = vmatprep.subr.mxu0 0.0
        %2009 = vmatpush1.msra.mxu0 0.0
        %2010 = vmatprep.subr.mxu0 0.0
        %2011 = vmatpush1.msra.mxu0 0.0
        %2012 = vmatprep.subr.mxu0 0.0
        %2013 = vmatpush1.msra.mxu0 0.0
        %2014 = vmatprep.subr.mxu0 0.0
        %2015 = vmatpush1.msra.mxu0 0.0
        %2016 = vmatprep.subr.mxu0 0.0
        %2017 = vmatpush1.msra.mxu0 0.0
        %2018 = vmatprep.subr.mxu0 0.0
        %2019 = vmatpush1.msra.mxu0 0.0
        %2020 = vmatprep.subr.mxu0 0.0
        %2021 = vmatpush1.msra.mxu0 0.0
        %2022 = vmatprep.subr.mxu0 0.0
        %2023 = vmatpush1.msra.mxu0 0.0
        %2024 = vmatprep.subr.mxu0 0.0
        %2025 = vmatpush1.msra.mxu0 0.0
        %2026 = vmatprep.subr.mxu0 0.0
        %2027 = vmatpush1.msra.mxu0 0.0
        %2028 = vmatprep.subr.mxu0 0.0
        %2029 = vmatpush1.msra.mxu0 0.0
        %2030 = vmatprep.subr.mxu0 0.0
        %2031 = vmatpush1.msra.mxu0 0.0
        %2032 = vmatprep.subr.mxu0 0.0
        %2033 = vmatpush1.msra.mxu0 0.0
        %2034 = vmatprep.subr.mxu0 0.0
        %2035 = vmatpush1.msra.mxu0 0.0
        %2036 = vmatprep.subr.mxu0 0.0
        %2037 = vmatpush1.msra.mxu0 0.0
        %2038 = vmatprep.mubr.f32.mxu0 0.0
        %2039 = vmatmul.mubr.f32.gmra.mrb[0].mxu0 %v1969
        %v2040 = vpop.f32.mrb[0].mxu0
        %v2041 = vadd.f32 0.0, %v2040
        %v2042 = vpop.f32.mrb[0].mxu0
        %2043 = vmatprep.mubr.f32.mxu0 0.0
        %2044 = vmatmul.mubr.f32.gmra.mrb[0].mxu0 %v1972
        %v2045 = vpop.f32.mrb[0].mxu0
        %v2046 = vadd.f32 0.0, %v2045
        %v2047 = vpop.f32.mrb[0].mxu0
        %2048 = vdwg.mxu0
        %2049 = vrot.lane.b32.xlu0 %v622, 56
        %v2050 = vpop.permute.xlu0 %2049
        %2051 = vrot.lane.b32.xlu0 %v625, 56
        %v2052 = vpop.permute.xlu0 %2051
        %v2056 = vsel %vm1025, %v1956, 0
        %v2059 = vsel %vm1025, %v1957, 0
        %2061 = vmatprep.subr.mxu0 0.0
        %2062 = vmatpush1.msra.mxu0 %v2050
        %2063 = vmatprep.subr.mxu0 0.0
        %2064 = vmatpush1.msra.mxu0 %v2052
        %2065 = vmatprep.subr.mxu0 0.0
        %2066 = vmatpush1.msra.mxu0 0.0
        %2067 = vmatprep.subr.mxu0 0.0
        %2068 = vmatpush1.msra.mxu0 0.0
        %2069 = vmatprep.subr.mxu0 0.0
        %2070 = vmatpush1.msra.mxu0 0.0
        %2071 = vmatprep.subr.mxu0 0.0
        %2072 = vmatpush1.msra.mxu0 0.0
        %2073 = vmatprep.subr.mxu0 0.0
        %2074 = vmatpush1.msra.mxu0 0.0
        %2075 = vmatprep.subr.mxu0 0.0
        %2076 = vmatpush1.msra.mxu0 0.0
        %2077 = vmatprep.subr.mxu0 0.0
        %2078 = vmatpush1.msra.mxu0 0.0
        %2079 = vmatprep.subr.mxu0 0.0
        %2080 = vmatpush1.msra.mxu0 0.0
        %2081 = vmatprep.subr.mxu0 0.0
        %2082 = vmatpush1.msra.mxu0 0.0
        %2083 = vmatprep.subr.mxu0 0.0
        %2084 = vmatpush1.msra.mxu0 0.0
        %2085 = vmatprep.subr.mxu0 0.0
        %2086 = vmatpush1.msra.mxu0 0.0
        %2087 = vmatprep.subr.mxu0 0.0
        %2088 = vmatpush1.msra.mxu0 0.0
        %2089 = vmatprep.subr.mxu0 0.0
        %2090 = vmatpush1.msra.mxu0 0.0
        %2091 = vmatprep.subr.mxu0 0.0
        %2092 = vmatpush1.msra.mxu0 0.0
        %2093 = vmatprep.subr.mxu0 0.0
        %2094 = vmatpush1.msra.mxu0 0.0
        %2095 = vmatprep.subr.mxu0 0.0
        %2096 = vmatpush1.msra.mxu0 0.0
        %2097 = vmatprep.subr.mxu0 0.0
        %2098 = vmatpush1.msra.mxu0 0.0
        %2099 = vmatprep.subr.mxu0 0.0
        %2100 = vmatpush1.msra.mxu0 0.0
        %2101 = vmatprep.subr.mxu0 0.0
        %2102 = vmatpush1.msra.mxu0 0.0
        %2103 = vmatprep.subr.mxu0 0.0
        %2104 = vmatpush1.msra.mxu0 0.0
        %2105 = vmatprep.subr.mxu0 0.0
        %2106 = vmatpush1.msra.mxu0 0.0
        %2107 = vmatprep.subr.mxu0 0.0
        %2108 = vmatpush1.msra.mxu0 0.0
        %2109 = vmatprep.subr.mxu0 0.0
        %2110 = vmatpush1.msra.mxu0 0.0
        %2111 = vmatprep.subr.mxu0 0.0
        %2112 = vmatpush1.msra.mxu0 0.0
        %2113 = vmatprep.subr.mxu0 0.0
        %2114 = vmatpush1.msra.mxu0 0.0
        %2115 = vmatprep.subr.mxu0 0.0
        %2116 = vmatpush1.msra.mxu0 0.0
        %2117 = vmatprep.subr.mxu0 0.0
        %2118 = vmatpush1.msra.mxu0 0.0
        %2119 = vmatprep.subr.mxu0 0.0
        %2120 = vmatpush1.msra.mxu0 0.0
        %2121 = vmatprep.subr.mxu0 0.0
        %2122 = vmatpush1.msra.mxu0 0.0
        %2123 = vmatprep.subr.mxu0 0.0
        %2124 = vmatpush1.msra.mxu0 0.0
        %2125 = vmatprep.mubr.f32.mxu0 0.0
        %2126 = vmatmul.mubr.f32.gmra.mrb[0].mxu0 %v2056
        %v2127 = vpop.f32.mrb[0].mxu0
        %v2128 = vadd.f32 0.0, %v2127
        %v2129 = vpop.f32.mrb[0].mxu0
        %2130 = vmatprep.mubr.f32.mxu0 0.0
        %2131 = vmatmul.mubr.f32.gmra.mrb[0].mxu0 %v2059
        %v2132 = vpop.f32.mrb[0].mxu0
        %v2133 = vadd.f32 0.0, %v2132
        %v2134 = vpop.f32.mrb[0].mxu0
        %2135 = vdwg.mxu0
        %2136 = vrot.lane.b32.xlu0 %v630, 56
        %v2137 = vpop.permute.xlu0 %2136
        %2138 = vrot.lane.b32.xlu0 %v633, 56
        %v2139 = vpop.permute.xlu0 %2138
        %v2143 = vsel %vm1025, %v1958, 0
        %v2146 = vsel %vm1025, %v1959, 0
        %2148 = vmatprep.subr.mxu0 0.0
        %2149 = vmatpush1.msra.mxu0 %v2137
        %2150 = vmatprep.subr.mxu0 0.0
        %2151 = vmatpush1.msra.mxu0 %v2139
        %2152 = vmatprep.subr.mxu0 0.0
        %2153 = vmatpush1.msra.mxu0 0.0
        %2154 = vmatprep.subr.mxu0 0.0
        %2155 = vmatpush1.msra.mxu0 0.0
        %2156 = vmatprep.subr.mxu0 0.0
        %2157 = vmatpush1.msra.mxu0 0.0
        %2158 = vmatprep.subr.mxu0 0.0
        %2159 = vmatpush1.msra.mxu0 0.0
        %2160 = vmatprep.subr.mxu0 0.0
        %2161 = vmatpush1.msra.mxu0 0.0
        %2162 = vmatprep.subr.mxu0 0.0
        %2163 = vmatpush1.msra.mxu0 0.0
        %2164 = vmatprep.subr.mxu0 0.0
        %2165 = vmatpush1.msra.mxu0 0.0
        %2166 = vmatprep.subr.mxu0 0.0
        %2167 = vmatpush1.msra.mxu0 0.0
        %2168 = vmatprep.subr.mxu0 0.0
        %2169 = vmatpush1.msra.mxu0 0.0
        %2170 = vmatprep.subr.mxu0 0.0
        %2171 = vmatpush1.msra.mxu0 0.0
        %2172 = vmatprep.subr.mxu0 0.0
        %2173 = vmatpush1.msra.mxu0 0.0
        %2174 = vmatprep.subr.mxu0 0.0
        %2175 = vmatpush1.msra.mxu0 0.0
        %2176 = vmatprep.subr.mxu0 0.0
        %2177 = vmatpush1.msra.mxu0 0.0
        %2178 = vmatprep.subr.mxu0 0.0
        %2179 = vmatpush1.msra.mxu0 0.0
        %2180 = vmatprep.subr.mxu0 0.0
        %2181 = vmatpush1.msra.mxu0 0.0
        %2182 = vmatprep.subr.mxu0 0.0
        %2183 = vmatpush1.msra.mxu0 0.0
        %2184 = vmatprep.subr.mxu0 0.0
        %2185 = vmatpush1.msra.mxu0 0.0
        %2186 = vmatprep.subr.mxu0 0.0
        %2187 = vmatpush1.msra.mxu0 0.0
        %2188 = vmatprep.subr.mxu0 0.0
        %2189 = vmatpush1.msra.mxu0 0.0
        %2190 = vmatprep.subr.mxu0 0.0
        %2191 = vmatpush1.msra.mxu0 0.0
        %2192 = vmatprep.subr.mxu0 0.0
        %2193 = vmatpush1.msra.mxu0 0.0
        %2194 = vmatprep.subr.mxu0 0.0
        %2195 = vmatpush1.msra.mxu0 0.0
        %2196 = vmatprep.subr.mxu0 0.0
        %2197 = vmatpush1.msra.mxu0 0.0
        %2198 = vmatprep.subr.mxu0 0.0
        %2199 = vmatpush1.msra.mxu0 0.0
        %2200 = vmatprep.subr.mxu0 0.0
        %2201 = vmatpush1.msra.mxu0 0.0
        %2202 = vmatprep.subr.mxu0 0.0
        %2203 = vmatpush1.msra.mxu0 0.0
        %2204 = vmatprep.subr.mxu0 0.0
        %2205 = vmatpush1.msra.mxu0 0.0
        %2206 = vmatprep.subr.mxu0 0.0
        %2207 = vmatpush1.msra.mxu0 0.0
        %2208 = vmatprep.subr.mxu0 0.0
        %2209 = vmatpush1.msra.mxu0 0.0
        %2210 = vmatprep.subr.mxu0 0.0
        %2211 = vmatpush1.msra.mxu0 0.0
        %2212 = vmatprep.mubr.f32.mxu0 0.0
        %2213 = vmatmul.mubr.f32.gmra.mrb[0].mxu0 %v2143
        %v2214 = vpop.f32.mrb[0].mxu0
        %v2215 = vadd.f32 0.0, %v2214
        %v2216 = vpop.f32.mrb[0].mxu0
        %2217 = vmatprep.mubr.f32.mxu0 0.0
        %2218 = vmatmul.mubr.f32.gmra.mrb[0].mxu0 %v2146
        %v2219 = vpop.f32.mrb[0].mxu0
        %v2220 = vadd.f32 0.0, %v2219
        %v2221 = vpop.f32.mrb[0].mxu0
        %2222 = vdwg.mxu0
        %2223 = vrot.lane.b32.xlu0 %v638, 56
        %v2224 = vpop.permute.xlu0 %2223
        %2225 = vrot.lane.b32.xlu0 %v641, 56
        %v2226 = vpop.permute.xlu0 %2225
        %v2230 = vsel %vm1025, %v1960, 0
        %v2233 = vsel %vm1025, %v1961, 0
        %2235 = vmatprep.subr.mxu0 0.0
        %2236 = vmatpush1.msra.mxu0 %v2224
        %2237 = vmatprep.subr.mxu0 0.0
        %2238 = vmatpush1.msra.mxu0 %v2226
        %2239 = vmatprep.subr.mxu0 0.0
        %2240 = vmatpush1.msra.mxu0 0.0
        %2241 = vmatprep.subr.mxu0 0.0
        %2242 = vmatpush1.msra.mxu0 0.0
        %2243 = vmatprep.subr.mxu0 0.0
        %2244 = vmatpush1.msra.mxu0 0.0
        %2245 = vmatprep.subr.mxu0 0.0
        %2246 = vmatpush1.msra.mxu0 0.0
        %2247 = vmatprep.subr.mxu0 0.0
        %2248 = vmatpush1.msra.mxu0 0.0
        %2249 = vmatprep.subr.mxu0 0.0
        %2250 = vmatpush1.msra.mxu0 0.0
        %2251 = vmatprep.subr.mxu0 0.0
        %2252 = vmatpush1.msra.mxu0 0.0
        %2253 = vmatprep.subr.mxu0 0.0
        %2254 = vmatpush1.msra.mxu0 0.0
        %2255 = vmatprep.subr.mxu0 0.0
        %2256 = vmatpush1.msra.mxu0 0.0
        %2257 = vmatprep.subr.mxu0 0.0
        %2258 = vmatpush1.msra.mxu0 0.0
        %2259 = vmatprep.subr.mxu0 0.0
        %2260 = vmatpush1.msra.mxu0 0.0
        %2261 = vmatprep.subr.mxu0 0.0
        %2262 = vmatpush1.msra.mxu0 0.0
        %2263 = vmatprep.subr.mxu0 0.0
        %2264 = vmatpush1.msra.mxu0 0.0
        %2265 = vmatprep.subr.mxu0 0.0
        %2266 = vmatpush1.msra.mxu0 0.0
        %2267 = vmatprep.subr.mxu0 0.0
        %2268 = vmatpush1.msra.mxu0 0.0
        %2269 = vmatprep.subr.mxu0 0.0
        %2270 = vmatpush1.msra.mxu0 0.0
        %2271 = vmatprep.subr.mxu0 0.0
        %2272 = vmatpush1.msra.mxu0 0.0
        %2273 = vmatprep.subr.mxu0 0.0
        %2274 = vmatpush1.msra.mxu0 0.0
        %2275 = vmatprep.subr.mxu0 0.0
        %2276 = vmatpush1.msra.mxu0 0.0
        %2277 = vmatprep.subr.mxu0 0.0
        %2278 = vmatpush1.msra.mxu0 0.0
        %2279 = vmatprep.subr.mxu0 0.0
        %2280 = vmatpush1.msra.mxu0 0.0
        %2281 = vmatprep.subr.mxu0 0.0
        %2282 = vmatpush1.msra.mxu0 0.0
        %2283 = vmatprep.subr.mxu0 0.0
        %2284 = vmatpush1.msra.mxu0 0.0
        %2285 = vmatprep.subr.mxu0 0.0
        %2286 = vmatpush1.msra.mxu0 0.0
        %2287 = vmatprep.subr.mxu0 0.0
        %2288 = vmatpush1.msra.mxu0 0.0
        %2289 = vmatprep.subr.mxu0 0.0
        %2290 = vmatpush1.msra.mxu0 0.0
        %2291 = vmatprep.subr.mxu0 0.0
        %2292 = vmatpush1.msra.mxu0 0.0
        %2293 = vmatprep.subr.mxu0 0.0
        %2294 = vmatpush1.msra.mxu0 0.0
        %2295 = vmatprep.subr.mxu0 0.0
        %2296 = vmatpush1.msra.mxu0 0.0
        %2297 = vmatprep.subr.mxu0 0.0
        %2298 = vmatpush1.msra.mxu0 0.0
        %2299 = vmatprep.mubr.f32.mxu0 0.0
        %2300 = vmatmul.mubr.f32.gmra.mrb[0].mxu0 %v2230
        %v2301 = vpop.f32.mrb[0].mxu0
        %v2302 = vadd.f32 0.0, %v2301
        %v2303 = vpop.f32.mrb[0].mxu0
        %2304 = vmatprep.mubr.f32.mxu0 0.0
        %2305 = vmatmul.mubr.f32.gmra.mrb[0].mxu0 %v2233
        %v2306 = vpop.f32.mrb[0].mxu0
        %v2307 = vadd.f32 0.0, %v2306
        %v2308 = vpop.f32.mrb[0].mxu0
        %2309 = vdwg.mxu0
        %v2310 = vpack.c.bf16 %v2046, %v2041
        %v2311 = vpack.c.bf16 %v2133, %v2128
        %v2312 = vpack.c.bf16 %v2220, %v2215
        %v2313 = vpack.c.bf16 %v2307, %v2302
        %2318 = vrot.lane.b32.xlu0 %v2310, 8
        %v2319 = vpop.permute.xlu0 %2318
        %2320 = vrot.lane.b32.xlu0 %v2311, 8
        %v2321 = vpop.permute.xlu0 %2320
        %2322 = vrot.lane.b32.xlu0 %v2312, 8
        %v2323 = vpop.permute.xlu0 %2322
        %2324 = vrot.lane.b32.xlu0 %v2313, 8
        %v2325 = vpop.permute.xlu0 %2324
        %vm2330 = vcmask 130112
        %2331 = vst.msk [vmem:[#allocation2] sm:$0xff] %vm2330, %v2319
        %2332 = vst.msk [vmem:[#allocation2 + $0x8] sm:$0xff] %vm2330, %v2321
        %2333 = vst.msk [vmem:[#allocation2 + $0x10] sm:$0xff] %vm2330, %v2323
        %2334 = vst.msk [vmem:[#allocation2 + $0x18] sm:$0xff] %vm2330, %v2325
        %2335 = vrot.lane.b32.xlu0 %v652, 112
        %v2336 = vpop.permute.xlu0 %2335
        %2337 = vrot.lane.b32.xlu0 %v653, 112
        %v2338 = vpop.permute.xlu0 %2337
        %2339 = vrot.lane.b32.xlu0 %v614, 80
        %v2340 = vpop.permute.xlu0 %2339
        %2341 = vrot.lane.b32.xlu0 %v617, 80
        %v2342 = vpop.permute.xlu0 %2341
        %v2343 = vsel %vm666, %v2336, 0
        %v2345 = vsel %vm666, %v2338, 0
        %v2347 = vsel %vm666, %v2340, 0
        %v2349 = vsel %vm666, %v2342, 0
        %2351 = vmatprep.subr.mxu0 0.0
        %2352 = vmatpush1.xpose.msra.mxu0 %v2347
        %2353 = vmatprep.subr.mxu0 0.0
        %2354 = vmatpush1.xpose.msra.mxu0 %v2349
        %2355 = vmatprep.subr.mxu0 0.0
        %2356 = vmatpush1.xpose.msra.mxu0 0.0
        %2357 = vmatprep.subr.mxu0 0.0
        %2358 = vmatpush1.xpose.msra.mxu0 0.0
        %2359 = vmatprep.subr.mxu0 0.0
        %2360 = vmatpush1.xpose.msra.mxu0 0.0
        %2361 = vmatprep.subr.mxu0 0.0
        %2362 = vmatpush1.xpose.msra.mxu0 0.0
        %2363 = vmatprep.subr.mxu0 0.0
        %2364 = vmatpush1.xpose.msra.mxu0 0.0
        %2365 = vmatprep.subr.mxu0 0.0
        %2366 = vmatpush1.xpose.msra.mxu0 0.0
        %2367 = vmatprep.subr.mxu0 0.0
        %2368 = vmatpush1.xpose.msra.mxu0 0.0
        %2369 = vmatprep.subr.mxu0 0.0
        %2370 = vmatpush1.xpose.msra.mxu0 0.0
        %2371 = vmatprep.subr.mxu0 0.0
        %2372 = vmatpush1.xpose.msra.mxu0 0.0
        %2373 = vmatprep.subr.mxu0 0.0
        %2374 = vmatpush1.xpose.msra.mxu0 0.0
        %2375 = vmatprep.subr.mxu0 0.0
        %2376 = vmatpush1.xpose.msra.mxu0 0.0
        %2377 = vmatprep.subr.mxu0 0.0
        %2378 = vmatpush1.xpose.msra.mxu0 0.0
        %2379 = vmatprep.subr.mxu0 0.0
        %2380 = vmatpush1.xpose.msra.mxu0 0.0
        %2381 = vmatprep.subr.mxu0 0.0
        %2382 = vmatpush1.xpose.msra.mxu0 0.0
        %2383 = vmatprep.subr.mxu0 0.0
        %2384 = vmatpush1.xpose.msra.mxu0 0.0
        %2385 = vmatprep.subr.mxu0 0.0
        %2386 = vmatpush1.xpose.msra.mxu0 0.0
        %2387 = vmatprep.subr.mxu0 0.0
        %2388 = vmatpush1.xpose.msra.mxu0 0.0
        %2389 = vmatprep.subr.mxu0 0.0
        %2390 = vmatpush1.xpose.msra.mxu0 0.0
        %2391 = vmatprep.subr.mxu0 0.0
        %2392 = vmatpush1.xpose.msra.mxu0 0.0
        %2393 = vmatprep.subr.mxu0 0.0
        %2394 = vmatpush1.xpose.msra.mxu0 0.0
        %2395 = vmatprep.subr.mxu0 0.0
        %2396 = vmatpush1.xpose.msra.mxu0 0.0
        %2397 = vmatprep.subr.mxu0 0.0
        %2398 = vmatpush1.xpose.msra.mxu0 0.0
        %2399 = vmatprep.subr.mxu0 0.0
        %2400 = vmatpush1.xpose.msra.mxu0 0.0
        %2401 = vmatprep.subr.mxu0 0.0
        %2402 = vmatpush1.xpose.msra.mxu0 0.0
        %2403 = vmatprep.subr.mxu0 0.0
        %2404 = vmatpush1.xpose.msra.mxu0 0.0
        %2405 = vmatprep.subr.mxu0 0.0
        %2406 = vmatpush1.xpose.msra.mxu0 0.0
        %2407 = vmatprep.subr.mxu0 0.0
        %2408 = vmatpush1.xpose.msra.mxu0 0.0
        %2409 = vmatprep.subr.mxu0 0.0
        %2410 = vmatpush1.xpose.msra.mxu0 0.0
        %2411 = vmatprep.subr.mxu0 0.0
        %2412 = vmatpush1.xpose.msra.mxu0 0.0
        %2413 = vmatprep.subr.mxu0 0.0
        %2414 = vmatpush1.xpose.msra.mxu0 0.0
        %2415 = vmatprep.mubr.f32.mxu0 0.0
        %2416 = vmatmul.mubr.f32.gmra.mrb[0].mxu0 %v2343
        %v2417 = vpop.f32.mrb[0].mxu0
        %v2418 = vadd.f32 %v648, %v2417
        %v2419 = vpop.f32.mrb[0].mxu0
        %2420 = vmatprep.mubr.f32.mxu0 0.0
        %2421 = vmatmul.mubr.f32.gmra.mrb[0].mxu0 %v2345
        %v2422 = vpop.f32.mrb[0].mxu0
        %v2423 = vadd.f32 %v649, %v2422
        %v2424 = vpop.f32.mrb[0].mxu0
        %2425 = vdwg.mxu0
        %2426 = vrot.lane.b32.xlu0 %v654, 112
        %v2427 = vpop.permute.xlu0 %2426
        %2428 = vrot.lane.b32.xlu0 %v655, 112
        %v2429 = vpop.permute.xlu0 %2428
        %2430 = vrot.lane.b32.xlu0 %v622, 80
        %v2431 = vpop.permute.xlu0 %2430
        %2432 = vrot.lane.b32.xlu0 %v625, 80
        %v2433 = vpop.permute.xlu0 %2432
        %v2434 = vsel %vm666, %v2427, 0
        %v2436 = vsel %vm666, %v2429, 0
        %v2438 = vsel %vm666, %v2431, 0
        %v2440 = vsel %vm666, %v2433, 0
        %2442 = vmatprep.subr.mxu0 0.0
        %2443 = vmatpush1.xpose.msra.mxu0 %v2438
        %2444 = vmatprep.subr.mxu0 0.0
        %2445 = vmatpush1.xpose.msra.mxu0 %v2440
        %2446 = vmatprep.subr.mxu0 0.0
        %2447 = vmatpush1.xpose.msra.mxu0 0.0
        %2448 = vmatprep.subr.mxu0 0.0
        %2449 = vmatpush1.xpose.msra.mxu0 0.0
        %2450 = vmatprep.subr.mxu0 0.0
        %2451 = vmatpush1.xpose.msra.mxu0 0.0
        %2452 = vmatprep.subr.mxu0 0.0
        %2453 = vmatpush1.xpose.msra.mxu0 0.0
        %2454 = vmatprep.subr.mxu0 0.0
        %2455 = vmatpush1.xpose.msra.mxu0 0.0
        %2456 = vmatprep.subr.mxu0 0.0
        %2457 = vmatpush1.xpose.msra.mxu0 0.0
        %2458 = vmatprep.subr.mxu0 0.0
        %2459 = vmatpush1.xpose.msra.mxu0 0.0
        %2460 = vmatprep.subr.mxu0 0.0
        %2461 = vmatpush1.xpose.msra.mxu0 0.0
        %2462 = vmatprep.subr.mxu0 0.0
        %2463 = vmatpush1.xpose.msra.mxu0 0.0
        %2464 = vmatprep.subr.mxu0 0.0
        %2465 = vmatpush1.xpose.msra.mxu0 0.0
        %2466 = vmatprep.subr.mxu0 0.0
        %2467 = vmatpush1.xpose.msra.mxu0 0.0
        %2468 = vmatprep.subr.mxu0 0.0
        %2469 = vmatpush1.xpose.msra.mxu0 0.0
        %2470 = vmatprep.subr.mxu0 0.0
        %2471 = vmatpush1.xpose.msra.mxu0 0.0
        %2472 = vmatprep.subr.mxu0 0.0
        %2473 = vmatpush1.xpose.msra.mxu0 0.0
        %2474 = vmatprep.subr.mxu0 0.0
        %2475 = vmatpush1.xpose.msra.mxu0 0.0
        %2476 = vmatprep.subr.mxu0 0.0
        %2477 = vmatpush1.xpose.msra.mxu0 0.0
        %2478 = vmatprep.subr.mxu0 0.0
        %2479 = vmatpush1.xpose.msra.mxu0 0.0
        %2480 = vmatprep.subr.mxu0 0.0
        %2481 = vmatpush1.xpose.msra.mxu0 0.0
        %2482 = vmatprep.subr.mxu0 0.0
        %2483 = vmatpush1.xpose.msra.mxu0 0.0
        %2484 = vmatprep.subr.mxu0 0.0
        %2485 = vmatpush1.xpose.msra.mxu0 0.0
        %2486 = vmatprep.subr.mxu0 0.0
        %2487 = vmatpush1.xpose.msra.mxu0 0.0
        %2488 = vmatprep.subr.mxu0 0.0
        %2489 = vmatpush1.xpose.msra.mxu0 0.0
        %2490 = vmatprep.subr.mxu0 0.0
        %2491 = vmatpush1.xpose.msra.mxu0 0.0
        %2492 = vmatprep.subr.mxu0 0.0
        %2493 = vmatpush1.xpose.msra.mxu0 0.0
        %2494 = vmatprep.subr.mxu0 0.0
        %2495 = vmatpush1.xpose.msra.mxu0 0.0
        %2496 = vmatprep.subr.mxu0 0.0
        %2497 = vmatpush1.xpose.msra.mxu0 0.0
        %2498 = vmatprep.subr.mxu0 0.0
        %2499 = vmatpush1.xpose.msra.mxu0 0.0
        %2500 = vmatprep.subr.mxu0 0.0
        %2501 = vmatpush1.xpose.msra.mxu0 0.0
        %2502 = vmatprep.subr.mxu0 0.0
        %2503 = vmatpush1.xpose.msra.mxu0 0.0
        %2504 = vmatprep.subr.mxu0 0.0
        %2505 = vmatpush1.xpose.msra.mxu0 0.0
        %2506 = vmatprep.mubr.f32.mxu0 0.0
        %2507 = vmatmul.mubr.f32.gmra.mrb[0].mxu0 %v2434
        %v2508 = vpop.f32.mrb[0].mxu0
        %v2509 = vadd.f32 %v648, %v2508
        %v2510 = vpop.f32.mrb[0].mxu0
        %2511 = vmatprep.mubr.f32.mxu0 0.0
        %2512 = vmatmul.mubr.f32.gmra.mrb[0].mxu0 %v2436
        %v2513 = vpop.f32.mrb[0].mxu0
        %v2514 = vadd.f32 %v649, %v2513
        %v2515 = vpop.f32.mrb[0].mxu0
        %2516 = vdwg.mxu0
        %2517 = vrot.lane.b32.xlu0 %v656, 112
        %v2518 = vpop.permute.xlu0 %2517
        %2519 = vrot.lane.b32.xlu0 %v657, 112
        %v2520 = vpop.permute.xlu0 %2519
        %2521 = vrot.lane.b32.xlu0 %v630, 80
        %v2522 = vpop.permute.xlu0 %2521
        %2523 = vrot.lane.b32.xlu0 %v633, 80
        %v2524 = vpop.permute.xlu0 %2523
        %v2525 = vsel %vm666, %v2518, 0
        %v2527 = vsel %vm666, %v2520, 0
        %v2529 = vsel %vm666, %v2522, 0
        %v2531 = vsel %vm666, %v2524, 0
        %2533 = vmatprep.subr.mxu0 0.0
        %2534 = vmatpush1.xpose.msra.mxu0 %v2529
        %2535 = vmatprep.subr.mxu0 0.0
        %2536 = vmatpush1.xpose.msra.mxu0 %v2531
        %2537 = vmatprep.subr.mxu0 0.0
        %2538 = vmatpush1.xpose.msra.mxu0 0.0
        %2539 = vmatprep.subr.mxu0 0.0
        %2540 = vmatpush1.xpose.msra.mxu0 0.0
        %2541 = vmatprep.subr.mxu0 0.0
        %2542 = vmatpush1.xpose.msra.mxu0 0.0
        %2543 = vmatprep.subr.mxu0 0.0
        %2544 = vmatpush1.xpose.msra.mxu0 0.0
        %2545 = vmatprep.subr.mxu0 0.0
        %2546 = vmatpush1.xpose.msra.mxu0 0.0
        %2547 = vmatprep.subr.mxu0 0.0
        %2548 = vmatpush1.xpose.msra.mxu0 0.0
        %2549 = vmatprep.subr.mxu0 0.0
        %2550 = vmatpush1.xpose.msra.mxu0 0.0
        %2551 = vmatprep.subr.mxu0 0.0
        %2552 = vmatpush1.xpose.msra.mxu0 0.0
        %2553 = vmatprep.subr.mxu0 0.0
        %2554 = vmatpush1.xpose.msra.mxu0 0.0
        %2555 = vmatprep.subr.mxu0 0.0
        %2556 = vmatpush1.xpose.msra.mxu0 0.0
        %2557 = vmatprep.subr.mxu0 0.0
        %2558 = vmatpush1.xpose.msra.mxu0 0.0
        %2559 = vmatprep.subr.mxu0 0.0
        %2560 = vmatpush1.xpose.msra.mxu0 0.0
        %2561 = vmatprep.subr.mxu0 0.0
        %2562 = vmatpush1.xpose.msra.mxu0 0.0
        %2563 = vmatprep.subr.mxu0 0.0
        %2564 = vmatpush1.xpose.msra.mxu0 0.0
        %2565 = vmatprep.subr.mxu0 0.0
        %2566 = vmatpush1.xpose.msra.mxu0 0.0
        %2567 = vmatprep.subr.mxu0 0.0
        %2568 = vmatpush1.xpose.msra.mxu0 0.0
        %2569 = vmatprep.subr.mxu0 0.0
        %2570 = vmatpush1.xpose.msra.mxu0 0.0
        %2571 = vmatprep.subr.mxu0 0.0
        %2572 = vmatpush1.xpose.msra.mxu0 0.0
        %2573 = vmatprep.subr.mxu0 0.0
        %2574 = vmatpush1.xpose.msra.mxu0 0.0
        %2575 = vmatprep.subr.mxu0 0.0
        %2576 = vmatpush1.xpose.msra.mxu0 0.0
        %2577 = vmatprep.subr.mxu0 0.0
        %2578 = vmatpush1.xpose.msra.mxu0 0.0
        %2579 = vmatprep.subr.mxu0 0.0
        %2580 = vmatpush1.xpose.msra.mxu0 0.0
        %2581 = vmatprep.subr.mxu0 0.0
        %2582 = vmatpush1.xpose.msra.mxu0 0.0
        %2583 = vmatprep.subr.mxu0 0.0
        %2584 = vmatpush1.xpose.msra.mxu0 0.0
        %2585 = vmatprep.subr.mxu0 0.0
        %2586 = vmatpush1.xpose.msra.mxu0 0.0
        %2587 = vmatprep.subr.mxu0 0.0
        %2588 = vmatpush1.xpose.msra.mxu0 0.0
        %2589 = vmatprep.subr.mxu0 0.0
        %2590 = vmatpush1.xpose.msra.mxu0 0.0
        %2591 = vmatprep.subr.mxu0 0.0
        %2592 = vmatpush1.xpose.msra.mxu0 0.0
        %2593 = vmatprep.subr.mxu0 0.0
        %2594 = vmatpush1.xpose.msra.mxu0 0.0
        %2595 = vmatprep.subr.mxu0 0.0
        %2596 = vmatpush1.xpose.msra.mxu0 0.0
        %2597 = vmatprep.mubr.f32.mxu0 0.0
        %2598 = vmatmul.mubr.f32.gmra.mrb[0].mxu0 %v2525
        %v2599 = vpop.f32.mrb[0].mxu0
        %v2600 = vadd.f32 %v648, %v2599
        %v2601 = vpop.f32.mrb[0].mxu0
        %2602 = vmatprep.mubr.f32.mxu0 0.0
        %2603 = vmatmul.mubr.f32.gmra.mrb[0].mxu0 %v2527
        %v2604 = vpop.f32.mrb[0].mxu0
        %v2605 = vadd.f32 %v649, %v2604
        %v2606 = vpop.f32.mrb[0].mxu0
        %2607 = vdwg.mxu0
        %2608 = vrot.lane.b32.xlu0 %v658, 112
        %v2609 = vpop.permute.xlu0 %2608
        %2610 = vrot.lane.b32.xlu0 %v659, 112
        %v2611 = vpop.permute.xlu0 %2610
        %2612 = vrot.lane.b32.xlu0 %v638, 80
        %v2613 = vpop.permute.xlu0 %2612
        %2614 = vrot.lane.b32.xlu0 %v641, 80
        %v2615 = vpop.permute.xlu0 %2614
        %v2616 = vsel %vm666, %v2609, 0
        %v2618 = vsel %vm666, %v2611, 0
        %v2620 = vsel %vm666, %v2613, 0
        %v2622 = vsel %vm666, %v2615, 0
        %2624 = vmatprep.subr.mxu0 0.0
        %2625 = vmatpush1.xpose.msra.mxu0 %v2620
        %2626 = vmatprep.subr.mxu0 0.0
        %2627 = vmatpush1.xpose.msra.mxu0 %v2622
        %2628 = vmatprep.subr.mxu0 0.0
        %2629 = vmatpush1.xpose.msra.mxu0 0.0
        %2630 = vmatprep.subr.mxu0 0.0
        %2631 = vmatpush1.xpose.msra.mxu0 0.0
        %2632 = vmatprep.subr.mxu0 0.0
        %2633 = vmatpush1.xpose.msra.mxu0 0.0
        %2634 = vmatprep.subr.mxu0 0.0
        %2635 = vmatpush1.xpose.msra.mxu0 0.0
        %2636 = vmatprep.subr.mxu0 0.0
        %2637 = vmatpush1.xpose.msra.mxu0 0.0
        %2638 = vmatprep.subr.mxu0 0.0
        %2639 = vmatpush1.xpose.msra.mxu0 0.0
        %2640 = vmatprep.subr.mxu0 0.0
        %2641 = vmatpush1.xpose.msra.mxu0 0.0
        %2642 = vmatprep.subr.mxu0 0.0
        %2643 = vmatpush1.xpose.msra.mxu0 0.0
        %2644 = vmatprep.subr.mxu0 0.0
        %2645 = vmatpush1.xpose.msra.mxu0 0.0
        %2646 = vmatprep.subr.mxu0 0.0
        %2647 = vmatpush1.xpose.msra.mxu0 0.0
        %2648 = vmatprep.subr.mxu0 0.0
        %2649 = vmatpush1.xpose.msra.mxu0 0.0
        %2650 = vmatprep.subr.mxu0 0.0
        %2651 = vmatpush1.xpose.msra.mxu0 0.0
        %2652 = vmatprep.subr.mxu0 0.0
        %2653 = vmatpush1.xpose.msra.mxu0 0.0
        %2654 = vmatprep.subr.mxu0 0.0
        %2655 = vmatpush1.xpose.msra.mxu0 0.0
        %2656 = vmatprep.subr.mxu0 0.0
        %2657 = vmatpush1.xpose.msra.mxu0 0.0
        %2658 = vmatprep.subr.mxu0 0.0
        %2659 = vmatpush1.xpose.msra.mxu0 0.0
        %2660 = vmatprep.subr.mxu0 0.0
        %2661 = vmatpush1.xpose.msra.mxu0 0.0
        %2662 = vmatprep.subr.mxu0 0.0
        %2663 = vmatpush1.xpose.msra.mxu0 0.0
        %2664 = vmatprep.subr.mxu0 0.0
        %2665 = vmatpush1.xpose.msra.mxu0 0.0
        %2666 = vmatprep.subr.mxu0 0.0
        %2667 = vmatpush1.xpose.msra.mxu0 0.0
        %2668 = vmatprep.subr.mxu0 0.0
        %2669 = vmatpush1.xpose.msra.mxu0 0.0
        %2670 = vmatprep.subr.mxu0 0.0
        %2671 = vmatpush1.xpose.msra.mxu0 0.0
        %2672 = vmatprep.subr.mxu0 0.0
        %2673 = vmatpush1.xpose.msra.mxu0 0.0
        %2674 = vmatprep.subr.mxu0 0.0
        %2675 = vmatpush1.xpose.msra.mxu0 0.0
        %2676 = vmatprep.subr.mxu0 0.0
        %2677 = vmatpush1.xpose.msra.mxu0 0.0
        %2678 = vmatprep.subr.mxu0 0.0
        %2679 = vmatpush1.xpose.msra.mxu0 0.0
        %2680 = vmatprep.subr.mxu0 0.0
        %2681 = vmatpush1.xpose.msra.mxu0 0.0
        %2682 = vmatprep.subr.mxu0 0.0
        %2683 = vmatpush1.xpose.msra.mxu0 0.0
        %2684 = vmatprep.subr.mxu0 0.0
        %2685 = vmatpush1.xpose.msra.mxu0 0.0
        %2686 = vmatprep.subr.mxu0 0.0
        %2687 = vmatpush1.xpose.msra.mxu0 0.0
        %2688 = vmatprep.mubr.f32.mxu0 0.0
        %2689 = vmatmul.mubr.f32.gmra.mrb[0].mxu0 %v2616
        %v2690 = vpop.f32.mrb[0].mxu0
        %v2691 = vadd.f32 %v648, %v2690
        %v2692 = vpop.f32.mrb[0].mxu0
        %2693 = vmatprep.mubr.f32.mxu0 0.0
        %2694 = vmatmul.mubr.f32.gmra.mrb[0].mxu0 %v2618
        %v2695 = vpop.f32.mrb[0].mxu0
        %v2696 = vadd.f32 %v649, %v2695
        %v2697 = vpop.f32.mrb[0].mxu0
        %2698 = vdwg.mxu0
        %v2699 = vsel %vm1025, %v2418, -inf
        %2700 = vmax.xlane.f32.xlu0 %v2699
        %v2701 = vpop.xlane.xlu0 %2700
        %v2702 = vsel %vm1025, %v2423, -inf
        %2703 = vmax.xlane.f32.xlu0 %v2702
        %v2704 = vpop.xlane.xlu0 %2703
        %v2705 = vsel %vm1025, %v2509, -inf
        %2706 = vmax.xlane.f32.xlu0 %v2705
        %v2707 = vpop.xlane.xlu0 %2706
        %v2708 = vsel %vm1025, %v2514, -inf
        %2709 = vmax.xlane.f32.xlu0 %v2708
        %v2710 = vpop.xlane.xlu0 %2709
        %v2711 = vsel %vm1025, %v2600, -inf
        %2712 = vmax.xlane.f32.xlu0 %v2711
        %v2713 = vpop.xlane.xlu0 %2712
        %v2714 = vsel %vm1025, %v2605, -inf
        %2715 = vmax.xlane.f32.xlu0 %v2714
        %v2716 = vpop.xlane.xlu0 %2715
        %v2717 = vsel %vm1025, %v2691, -inf
        %2718 = vmax.xlane.f32.xlu0 %v2717
        %v2719 = vpop.xlane.xlu0 %2718
        %v2720 = vsel %vm1025, %v2696, -inf
        %2721 = vmax.xlane.f32.xlu0 %v2720
        %v2722 = vpop.xlane.xlu0 %2721
        %v2723 = vsub.f32 %v2418, %v2701
        %v2724 = vsub.f32 %v2423, %v2704
        %v2725 = vsub.f32 %v2509, %v2707
        %v2726 = vsub.f32 %v2514, %v2710
        %v2727 = vsub.f32 %v2600, %v2713
        %v2728 = vsub.f32 %v2605, %v2716
        %v2729 = vsub.f32 %v2691, %v2719
        %v2730 = vsub.f32 %v2696, %v2722
        %v2731 = vmul.f32 %v2723, 1.442695
        %v2732 = vpow.pop %v2731
        %v2733 = vmul.f32 %v2724, 1.442695
        %v2734 = vpow.pop %v2733
        %v2735 = vmul.f32 %v2725, 1.442695
        %v2736 = vpow.pop %v2735
        %v2737 = vmul.f32 %v2726, 1.442695
        %v2738 = vpow.pop %v2737
        %v2739 = vmul.f32 %v2727, 1.442695
        %v2740 = vpow.pop %v2739
        %v2741 = vmul.f32 %v2728, 1.442695
        %v2742 = vpow.pop %v2741
        %v2743 = vmul.f32 %v2729, 1.442695
        %v2744 = vpow.pop %v2743
        %v2745 = vmul.f32 %v2730, 1.442695
        %v2746 = vpow.pop %v2745
        %v2747 = vsel %vm1025, %v2732, 0.0
        %2748 = vadd.xlane.f32.xlu0 %v2747
        %v2749 = vpop.xlane.xlu0 %2748
        %v2750 = vsel %vm1025, %v2734, 0.0
        %2751 = vadd.xlane.f32.xlu0 %v2750
        %v2752 = vpop.xlane.xlu0 %2751
        %v2753 = vsel %vm1025, %v2736, 0.0
        %2754 = vadd.xlane.f32.xlu0 %v2753
        %v2755 = vpop.xlane.xlu0 %2754
        %v2756 = vsel %vm1025, %v2738, 0.0
        %2757 = vadd.xlane.f32.xlu0 %v2756
        %v2758 = vpop.xlane.xlu0 %2757
        %v2759 = vsel %vm1025, %v2740, 0.0
        %2760 = vadd.xlane.f32.xlu0 %v2759
        %v2761 = vpop.xlane.xlu0 %2760
        %v2762 = vsel %vm1025, %v2742, 0.0
        %2763 = vadd.xlane.f32.xlu0 %v2762
        %v2764 = vpop.xlane.xlu0 %2763
        %v2765 = vsel %vm1025, %v2744, 0.0
        %2766 = vadd.xlane.f32.xlu0 %v2765
        %v2767 = vpop.xlane.xlu0 %2766
        %v2768 = vsel %vm1025, %v2746, 0.0
        %2769 = vadd.xlane.f32.xlu0 %v2768
        %v2770 = vpop.xlane.xlu0 %2769
        %v2771 = vrcp.pop %v2749
        %v2772 = vrcp.pop %v2752
        %v2773 = vrcp.pop %v2755
        %v2774 = vrcp.pop %v2758
        %v2775 = vrcp.pop %v2761
        %v2776 = vrcp.pop %v2764
        %v2777 = vrcp.pop %v2767
        %v2778 = vrcp.pop %v2770
        %v2779 = vmul.f32 %v2732, %v2771
        %v2780 = vmul.f32 %v2734, %v2772
        %v2781 = vmul.f32 %v2736, %v2773
        %v2782 = vmul.f32 %v2738, %v2774
        %v2783 = vmul.f32 %v2740, %v2775
        %v2784 = vmul.f32 %v2742, %v2776
        %v2785 = vmul.f32 %v2744, %v2777
        %v2786 = vmul.f32 %v2746, %v2778
        %s2787 = sld [smem:[#allocation3 + $0x2]]
        %v2788 = vstv %s2787
        %v2789 = vmul.f32 %v2779, %v2788
        %v2790 = vmul.f32 %v2780, %v2788
        %v2791 = vmul.f32 %v2781, %v2788
        %v2792 = vmul.f32 %v2782, %v2788
        %v2793 = vmul.f32 %v2783, %v2788
        %v2794 = vmul.f32 %v2784, %v2788
        %v2795 = vmul.f32 %v2785, %v2788
        %v2796 = vmul.f32 %v2786, %v2788
        %s2797 = sld [smem:[#allocation5 + $0x2]]
        %v2798 = vstv %s2797
        %v2799 = vsub.f32 %v2789, %v2798
        %v2800 = vsub.f32 %v2790, %v2798
        %v2801 = vsub.f32 %v2791, %v2798
        %v2802 = vsub.f32 %v2792, %v2798
        %v2803 = vsub.f32 %v2793, %v2798
        %v2804 = vsub.f32 %v2794, %v2798
        %v2805 = vsub.f32 %v2795, %v2798
        %v2806 = vsub.f32 %v2796, %v2798
        %2807 = vrot.lane.b32.xlu0 %v614, 48
        %v2808 = vpop.permute.xlu0 %2807
        %2809 = vrot.lane.b32.xlu0 %v617, 48
        %v2810 = vpop.permute.xlu0 %2809
        %v2814 = vsel %vm1025, %v2799, 0
        %v2817 = vsel %vm1025, %v2800, 0
        %2819 = vmatprep.subr.mxu0 0.0
        %2820 = vmatpush1.msra.mxu0 %v2808
        %2821 = vmatprep.subr.mxu0 0.0
        %2822 = vmatpush1.msra.mxu0 %v2810
        %2823 = vmatprep.subr.mxu0 0.0
        %2824 = vmatpush1.msra.mxu0 0.0
        %2825 = vmatprep.subr.mxu0 0.0
        %2826 = vmatpush1.msra.mxu0 0.0
        %2827 = vmatprep.subr.mxu0 0.0
        %2828 = vmatpush1.msra.mxu0 0.0
        %2829 = vmatprep.subr.mxu0 0.0
        %2830 = vmatpush1.msra.mxu0 0.0
        %2831 = vmatprep.subr.mxu0 0.0
        %2832 = vmatpush1.msra.mxu0 0.0
        %2833 = vmatprep.subr.mxu0 0.0
        %2834 = vmatpush1.msra.mxu0 0.0
        %2835 = vmatprep.subr.mxu0 0.0
        %2836 = vmatpush1.msra.mxu0 0.0
        %2837 = vmatprep.subr.mxu0 0.0
        %2838 = vmatpush1.msra.mxu0 0.0
        %2839 = vmatprep.subr.mxu0 0.0
        %2840 = vmatpush1.msra.mxu0 0.0
        %2841 = vmatprep.subr.mxu0 0.0
        %2842 = vmatpush1.msra.mxu0 0.0
        %2843 = vmatprep.subr.mxu0 0.0
        %2844 = vmatpush1.msra.mxu0 0.0
        %2845 = vmatprep.subr.mxu0 0.0
        %2846 = vmatpush1.msra.mxu0 0.0
        %2847 = vmatprep.subr.mxu0 0.0
        %2848 = vmatpush1.msra.mxu0 0.0
        %2849 = vmatprep.subr.mxu0 0.0
        %2850 = vmatpush1.msra.mxu0 0.0
        %2851 = vmatprep.subr.mxu0 0.0
        %2852 = vmatpush1.msra.mxu0 0.0
        %2853 = vmatprep.subr.mxu0 0.0
        %2854 = vmatpush1.msra.mxu0 0.0
        %2855 = vmatprep.subr.mxu0 0.0
        %2856 = vmatpush1.msra.mxu0 0.0
        %2857 = vmatprep.subr.mxu0 0.0
        %2858 = vmatpush1.msra.mxu0 0.0
        %2859 = vmatprep.subr.mxu0 0.0
        %2860 = vmatpush1.msra.mxu0 0.0
        %2861 = vmatprep.subr.mxu0 0.0
        %2862 = vmatpush1.msra.mxu0 0.0
        %2863 = vmatprep.subr.mxu0 0.0
        %2864 = vmatpush1.msra.mxu0 0.0
        %2865 = vmatprep.subr.mxu0 0.0
        %2866 = vmatpush1.msra.mxu0 0.0
        %2867 = vmatprep.subr.mxu0 0.0
        %2868 = vmatpush1.msra.mxu0 0.0
        %2869 = vmatprep.subr.mxu0 0.0
        %2870 = vmatpush1.msra.mxu0 0.0
        %2871 = vmatprep.subr.mxu0 0.0
        %2872 = vmatpush1.msra.mxu0 0.0
        %2873 = vmatprep.subr.mxu0 0.0
        %2874 = vmatpush1.msra.mxu0 0.0
        %2875 = vmatprep.subr.mxu0 0.0
        %2876 = vmatpush1.msra.mxu0 0.0
        %2877 = vmatprep.subr.mxu0 0.0
        %2878 = vmatpush1.msra.mxu0 0.0
        %2879 = vmatprep.subr.mxu0 0.0
        %2880 = vmatpush1.msra.mxu0 0.0
        %2881 = vmatprep.subr.mxu0 0.0
        %2882 = vmatpush1.msra.mxu0 0.0
        %2883 = vmatprep.mubr.f32.mxu0 0.0
        %2884 = vmatmul.mubr.f32.gmra.mrb[0].mxu0 %v2814
        %v2885 = vpop.f32.mrb[0].mxu0
        %v2886 = vadd.f32 0.0, %v2885
        %v2887 = vpop.f32.mrb[0].mxu0
        %2888 = vmatprep.mubr.f32.mxu0 0.0
        %2889 = vmatmul.mubr.f32.gmra.mrb[0].mxu0 %v2817
        %v2890 = vpop.f32.mrb[0].mxu0
        %v2891 = vadd.f32 0.0, %v2890
        %v2892 = vpop.f32.mrb[0].mxu0
        %2893 = vdwg.mxu0
        %2894 = vrot.lane.b32.xlu0 %v622, 48
        %v2895 = vpop.permute.xlu0 %2894
        %2896 = vrot.lane.b32.xlu0 %v625, 48
        %v2897 = vpop.permute.xlu0 %2896
        %v2901 = vsel %vm1025, %v2801, 0
        %v2904 = vsel %vm1025, %v2802, 0
        %2906 = vmatprep.subr.mxu0 0.0
        %2907 = vmatpush1.msra.mxu0 %v2895
        %2908 = vmatprep.subr.mxu0 0.0
        %2909 = vmatpush1.msra.mxu0 %v2897
        %2910 = vmatprep.subr.mxu0 0.0
        %2911 = vmatpush1.msra.mxu0 0.0
        %2912 = vmatprep.subr.mxu0 0.0
        %2913 = vmatpush1.msra.mxu0 0.0
        %2914 = vmatprep.subr.mxu0 0.0
        %2915 = vmatpush1.msra.mxu0 0.0
        %2916 = vmatprep.subr.mxu0 0.0
        %2917 = vmatpush1.msra.mxu0 0.0
        %2918 = vmatprep.subr.mxu0 0.0
        %2919 = vmatpush1.msra.mxu0 0.0
        %2920 = vmatprep.subr.mxu0 0.0
        %2921 = vmatpush1.msra.mxu0 0.0
        %2922 = vmatprep.subr.mxu0 0.0
        %2923 = vmatpush1.msra.mxu0 0.0
        %2924 = vmatprep.subr.mxu0 0.0
        %2925 = vmatpush1.msra.mxu0 0.0
        %2926 = vmatprep.subr.mxu0 0.0
        %2927 = vmatpush1.msra.mxu0 0.0
        %2928 = vmatprep.subr.mxu0 0.0
        %2929 = vmatpush1.msra.mxu0 0.0
        %2930 = vmatprep.subr.mxu0 0.0
        %2931 = vmatpush1.msra.mxu0 0.0
        %2932 = vmatprep.subr.mxu0 0.0
        %2933 = vmatpush1.msra.mxu0 0.0
        %2934 = vmatprep.subr.mxu0 0.0
        %2935 = vmatpush1.msra.mxu0 0.0
        %2936 = vmatprep.subr.mxu0 0.0
        %2937 = vmatpush1.msra.mxu0 0.0
        %2938 = vmatprep.subr.mxu0 0.0
        %2939 = vmatpush1.msra.mxu0 0.0
        %2940 = vmatprep.subr.mxu0 0.0
        %2941 = vmatpush1.msra.mxu0 0.0
        %2942 = vmatprep.subr.mxu0 0.0
        %2943 = vmatpush1.msra.mxu0 0.0
        %2944 = vmatprep.subr.mxu0 0.0
        %2945 = vmatpush1.msra.mxu0 0.0
        %2946 = vmatprep.subr.mxu0 0.0
        %2947 = vmatpush1.msra.mxu0 0.0
        %2948 = vmatprep.subr.mxu0 0.0
        %2949 = vmatpush1.msra.mxu0 0.0
        %2950 = vmatprep.subr.mxu0 0.0
        %2951 = vmatpush1.msra.mxu0 0.0
        %2952 = vmatprep.subr.mxu0 0.0
        %2953 = vmatpush1.msra.mxu0 0.0
        %2954 = vmatprep.subr.mxu0 0.0
        %2955 = vmatpush1.msra.mxu0 0.0
        %2956 = vmatprep.subr.mxu0 0.0
        %2957 = vmatpush1.msra.mxu0 0.0
        %2958 = vmatprep.subr.mxu0 0.0
        %2959 = vmatpush1.msra.mxu0 0.0
        %2960 = vmatprep.subr.mxu0 0.0
        %2961 = vmatpush1.msra.mxu0 0.0
        %2962 = vmatprep.subr.mxu0 0.0
        %2963 = vmatpush1.msra.mxu0 0.0
        %2964 = vmatprep.subr.mxu0 0.0
        %2965 = vmatpush1.msra.mxu0 0.0
        %2966 = vmatprep.subr.mxu0 0.0
        %2967 = vmatpush1.msra.mxu0 0.0
        %2968 = vmatprep.subr.mxu0 0.0
        %2969 = vmatpush1.msra.mxu0 0.0
        %2970 = vmatprep.mubr.f32.mxu0 0.0
        %2971 = vmatmul.mubr.f32.gmra.mrb[0].mxu0 %v2901
        %v2972 = vpop.f32.mrb[0].mxu0
        %v2973 = vadd.f32 0.0, %v2972
        %v2974 = vpop.f32.mrb[0].mxu0
        %2975 = vmatprep.mubr.f32.mxu0 0.0
        %2976 = vmatmul.mubr.f32.gmra.mrb[0].mxu0 %v2904
        %v2977 = vpop.f32.mrb[0].mxu0
        %v2978 = vadd.f32 0.0, %v2977
        %v2979 = vpop.f32.mrb[0].mxu0
        %2980 = vdwg.mxu0
        %2981 = vrot.lane.b32.xlu0 %v630, 48
        %v2982 = vpop.permute.xlu0 %2981
        %2983 = vrot.lane.b32.xlu0 %v633, 48
        %v2984 = vpop.permute.xlu0 %2983
        %v2988 = vsel %vm1025, %v2803, 0
        %v2991 = vsel %vm1025, %v2804, 0
        %2993 = vmatprep.subr.mxu0 0.0
        %2994 = vmatpush1.msra.mxu0 %v2982
        %2995 = vmatprep.subr.mxu0 0.0
        %2996 = vmatpush1.msra.mxu0 %v2984
        %2997 = vmatprep.subr.mxu0 0.0
        %2998 = vmatpush1.msra.mxu0 0.0
        %2999 = vmatprep.subr.mxu0 0.0
        %3000 = vmatpush1.msra.mxu0 0.0
        %3001 = vmatprep.subr.mxu0 0.0
        %3002 = vmatpush1.msra.mxu0 0.0
        %3003 = vmatprep.subr.mxu0 0.0
        %3004 = vmatpush1.msra.mxu0 0.0
        %3005 = vmatprep.subr.mxu0 0.0
        %3006 = vmatpush1.msra.mxu0 0.0
        %3007 = vmatprep.subr.mxu0 0.0
        %3008 = vmatpush1.msra.mxu0 0.0
        %3009 = vmatprep.subr.mxu0 0.0
        %3010 = vmatpush1.msra.mxu0 0.0
        %3011 = vmatprep.subr.mxu0 0.0
        %3012 = vmatpush1.msra.mxu0 0.0
        %3013 = vmatprep.subr.mxu0 0.0
        %3014 = vmatpush1.msra.mxu0 0.0
        %3015 = vmatprep.subr.mxu0 0.0
        %3016 = vmatpush1.msra.mxu0 0.0
        %3017 = vmatprep.subr.mxu0 0.0
        %3018 = vmatpush1.msra.mxu0 0.0
        %3019 = vmatprep.subr.mxu0 0.0
        %3020 = vmatpush1.msra.mxu0 0.0
        %3021 = vmatprep.subr.mxu0 0.0
        %3022 = vmatpush1.msra.mxu0 0.0
        %3023 = vmatprep.subr.mxu0 0.0
        %3024 = vmatpush1.msra.mxu0 0.0
        %3025 = vmatprep.subr.mxu0 0.0
        %3026 = vmatpush1.msra.mxu0 0.0
        %3027 = vmatprep.subr.mxu0 0.0
        %3028 = vmatpush1.msra.mxu0 0.0
        %3029 = vmatprep.subr.mxu0 0.0
        %3030 = vmatpush1.msra.mxu0 0.0
        %3031 = vmatprep.subr.mxu0 0.0
        %3032 = vmatpush1.msra.mxu0 0.0
        %3033 = vmatprep.subr.mxu0 0.0
        %3034 = vmatpush1.msra.mxu0 0.0
        %3035 = vmatprep.subr.mxu0 0.0
        %3036 = vmatpush1.msra.mxu0 0.0
        %3037 = vmatprep.subr.mxu0 0.0
        %3038 = vmatpush1.msra.mxu0 0.0
        %3039 = vmatprep.subr.mxu0 0.0
        %3040 = vmatpush1.msra.mxu0 0.0
        %3041 = vmatprep.subr.mxu0 0.0
        %3042 = vmatpush1.msra.mxu0 0.0
        %3043 = vmatprep.subr.mxu0 0.0
        %3044 = vmatpush1.msra.mxu0 0.0
        %3045 = vmatprep.subr.mxu0 0.0
        %3046 = vmatpush1.msra.mxu0 0.0
        %3047 = vmatprep.subr.mxu0 0.0
        %3048 = vmatpush1.msra.mxu0 0.0
        %3049 = vmatprep.subr.mxu0 0.0
        %3050 = vmatpush1.msra.mxu0 0.0
        %3051 = vmatprep.subr.mxu0 0.0
        %3052 = vmatpush1.msra.mxu0 0.0
        %3053 = vmatprep.subr.mxu0 0.0
        %3054 = vmatpush1.msra.mxu0 0.0
        %3055 = vmatprep.subr.mxu0 0.0
        %3056 = vmatpush1.msra.mxu0 0.0
        %3057 = vmatprep.mubr.f32.mxu0 0.0
        %3058 = vmatmul.mubr.f32.gmra.mrb[0].mxu0 %v2988
        %v3059 = vpop.f32.mrb[0].mxu0
        %v3060 = vadd.f32 0.0, %v3059
        %v3061 = vpop.f32.mrb[0].mxu0
        %3062 = vmatprep.mubr.f32.mxu0 0.0
        %3063 = vmatmul.mubr.f32.gmra.mrb[0].mxu0 %v2991
        %v3064 = vpop.f32.mrb[0].mxu0
        %v3065 = vadd.f32 0.0, %v3064
        %v3066 = vpop.f32.mrb[0].mxu0
        %3067 = vdwg.mxu0
        %3068 = vrot.lane.b32.xlu0 %v638, 48
        %v3069 = vpop.permute.xlu0 %3068
        %3070 = vrot.lane.b32.xlu0 %v641, 48
        %v3071 = vpop.permute.xlu0 %3070
        %v3075 = vsel %vm1025, %v2805, 0
        %v3078 = vsel %vm1025, %v2806, 0
        %3080 = vmatprep.subr.mxu0 0.0
        %3081 = vmatpush1.msra.mxu0 %v3069
        %3082 = vmatprep.subr.mxu0 0.0
        %3083 = vmatpush1.msra.mxu0 %v3071
        %3084 = vmatprep.subr.mxu0 0.0
        %3085 = vmatpush1.msra.mxu0 0.0
        %3086 = vmatprep.subr.mxu0 0.0
        %3087 = vmatpush1.msra.mxu0 0.0
        %3088 = vmatprep.subr.mxu0 0.0
        %3089 = vmatpush1.msra.mxu0 0.0
        %3090 = vmatprep.subr.mxu0 0.0
        %3091 = vmatpush1.msra.mxu0 0.0
        %3092 = vmatprep.subr.mxu0 0.0
        %3093 = vmatpush1.msra.mxu0 0.0
        %3094 = vmatprep.subr.mxu0 0.0
        %3095 = vmatpush1.msra.mxu0 0.0
        %3096 = vmatprep.subr.mxu0 0.0
        %3097 = vmatpush1.msra.mxu0 0.0
        %3098 = vmatprep.subr.mxu0 0.0
        %3099 = vmatpush1.msra.mxu0 0.0
        %3100 = vmatprep.subr.mxu0 0.0
        %3101 = vmatpush1.msra.mxu0 0.0
        %3102 = vmatprep.subr.mxu0 0.0
        %3103 = vmatpush1.msra.mxu0 0.0
        %3104 = vmatprep.subr.mxu0 0.0
        %3105 = vmatpush1.msra.mxu0 0.0
        %3106 = vmatprep.subr.mxu0 0.0
        %3107 = vmatpush1.msra.mxu0 0.0
        %3108 = vmatprep.subr.mxu0 0.0
        %3109 = vmatpush1.msra.mxu0 0.0
        %3110 = vmatprep.subr.mxu0 0.0
        %3111 = vmatpush1.msra.mxu0 0.0
        %3112 = vmatprep.subr.mxu0 0.0
        %3113 = vmatpush1.msra.mxu0 0.0
        %3114 = vmatprep.subr.mxu0 0.0
        %3115 = vmatpush1.msra.mxu0 0.0
        %3116 = vmatprep.subr.mxu0 0.0
        %3117 = vmatpush1.msra.mxu0 0.0
        %3118 = vmatprep.subr.mxu0 0.0
        %3119 = vmatpush1.msra.mxu0 0.0
        %3120 = vmatprep.subr.mxu0 0.0
        %3121 = vmatpush1.msra.mxu0 0.0
        %3122 = vmatprep.subr.mxu0 0.0
        %3123 = vmatpush1.msra.mxu0 0.0
        %3124 = vmatprep.subr.mxu0 0.0
        %3125 = vmatpush1.msra.mxu0 0.0
        %3126 = vmatprep.subr.mxu0 0.0
        %3127 = vmatpush1.msra.mxu0 0.0
        %3128 = vmatprep.subr.mxu0 0.0
        %3129 = vmatpush1.msra.mxu0 0.0
        %3130 = vmatprep.subr.mxu0 0.0
        %3131 = vmatpush1.msra.mxu0 0.0
        %3132 = vmatprep.subr.mxu0 0.0
        %3133 = vmatpush1.msra.mxu0 0.0
        %3134 = vmatprep.subr.mxu0 0.0
        %3135 = vmatpush1.msra.mxu0 0.0
        %3136 = vmatprep.subr.mxu0 0.0
        %3137 = vmatpush1.msra.mxu0 0.0
        %3138 = vmatprep.subr.mxu0 0.0
        %3139 = vmatpush1.msra.mxu0 0.0
        %3140 = vmatprep.subr.mxu0 0.0
        %3141 = vmatpush1.msra.mxu0 0.0
        %3142 = vmatprep.subr.mxu0 0.0
        %3143 = vmatpush1.msra.mxu0 0.0
        %3144 = vmatprep.mubr.f32.mxu0 0.0
        %3145 = vmatmul.mubr.f32.gmra.mrb[0].mxu0 %v3075
        %v3146 = vpop.f32.mrb[0].mxu0
        %v3147 = vadd.f32 0.0, %v3146
        %v3148 = vpop.f32.mrb[0].mxu0
        %3149 = vmatprep.mubr.f32.mxu0 0.0
        %3150 = vmatmul.mubr.f32.gmra.mrb[0].mxu0 %v3078
        %v3151 = vpop.f32.mrb[0].mxu0
        %v3152 = vadd.f32 0.0, %v3151
        %v3153 = vpop.f32.mrb[0].mxu0
        %3154 = vdwg.mxu0
        %v3155 = vpack.c.bf16 %v2891, %v2886
        %v3156 = vpack.c.bf16 %v2978, %v2973
        %v3157 = vpack.c.bf16 %v3065, %v3060
        %v3158 = vpack.c.bf16 %v3152, %v3147
        %3163 = vrot.lane.b32.xlu0 %v3155, 16
        %v3164 = vpop.permute.xlu0 %3163
        %3165 = vrot.lane.b32.xlu0 %v3156, 16
        %v3166 = vpop.permute.xlu0 %3165
        %3167 = vrot.lane.b32.xlu0 %v3157, 16
        %v3168 = vpop.permute.xlu0 %3167
        %3169 = vrot.lane.b32.xlu0 %v3158, 16
        %v3170 = vpop.permute.xlu0 %3169
        %vm3175 = vcmask 195712
        %3176 = vst.msk [vmem:[#allocation2] sm:$0xff] %vm3175, %v3164
        %3177 = vst.msk [vmem:[#allocation2 + $0x8] sm:$0xff] %vm3175, %v3166
        %3178 = vst.msk [vmem:[#allocation2 + $0x10] sm:$0xff] %vm3175, %v3168
        %3179 = vst.msk [vmem:[#allocation2 + $0x18] sm:$0xff] %vm3175, %v3170
        %3180 = vrot.lane.b32.xlu0 %v652, 104
        %v3181 = vpop.permute.xlu0 %3180
        %3182 = vrot.lane.b32.xlu0 %v653, 104
        %v3183 = vpop.permute.xlu0 %3182
        %3184 = vrot.lane.b32.xlu0 %v614, 72
        %v3185 = vpop.permute.xlu0 %3184
        %3186 = vrot.lane.b32.xlu0 %v617, 72
        %v3187 = vpop.permute.xlu0 %3186
        %v3188 = vsel %vm666, %v3181, 0
        %v3190 = vsel %vm666, %v3183, 0
        %v3192 = vsel %vm666, %v3185, 0
        %v3194 = vsel %vm666, %v3187, 0
        %3196 = vmatprep.subr.mxu0 0.0
        %3197 = vmatpush1.xpose.msra.mxu0 %v3192
        %3198 = vmatprep.subr.mxu0 0.0
        %3199 = vmatpush1.xpose.msra.mxu0 %v3194
        %3200 = vmatprep.subr.mxu0 0.0
        %3201 = vmatpush1.xpose.msra.mxu0 0.0
        %3202 = vmatprep.subr.mxu0 0.0
        %3203 = vmatpush1.xpose.msra.mxu0 0.0
        %3204 = vmatprep.subr.mxu0 0.0
        %3205 = vmatpush1.xpose.msra.mxu0 0.0
        %3206 = vmatprep.subr.mxu0 0.0
        %3207 = vmatpush1.xpose.msra.mxu0 0.0
        %3208 = vmatprep.subr.mxu0 0.0
        %3209 = vmatpush1.xpose.msra.mxu0 0.0
        %3210 = vmatprep.subr.mxu0 0.0
        %3211 = vmatpush1.xpose.msra.mxu0 0.0
        %3212 = vmatprep.subr.mxu0 0.0
        %3213 = vmatpush1.xpose.msra.mxu0 0.0
        %3214 = vmatprep.subr.mxu0 0.0
        %3215 = vmatpush1.xpose.msra.mxu0 0.0
        %3216 = vmatprep.subr.mxu0 0.0
        %3217 = vmatpush1.xpose.msra.mxu0 0.0
        %3218 = vmatprep.subr.mxu0 0.0
        %3219 = vmatpush1.xpose.msra.mxu0 0.0
        %3220 = vmatprep.subr.mxu0 0.0
        %3221 = vmatpush1.xpose.msra.mxu0 0.0
        %3222 = vmatprep.subr.mxu0 0.0
        %3223 = vmatpush1.xpose.msra.mxu0 0.0
        %3224 = vmatprep.subr.mxu0 0.0
        %3225 = vmatpush1.xpose.msra.mxu0 0.0
        %3226 = vmatprep.subr.mxu0 0.0
        %3227 = vmatpush1.xpose.msra.mxu0 0.0
        %3228 = vmatprep.subr.mxu0 0.0
        %3229 = vmatpush1.xpose.msra.mxu0 0.0
        %3230 = vmatprep.subr.mxu0 0.0
        %3231 = vmatpush1.xpose.msra.mxu0 0.0
        %3232 = vmatprep.subr.mxu0 0.0
        %3233 = vmatpush1.xpose.msra.mxu0 0.0
        %3234 = vmatprep.subr.mxu0 0.0
        %3235 = vmatpush1.xpose.msra.mxu0 0.0
        %3236 = vmatprep.subr.mxu0 0.0
        %3237 = vmatpush1.xpose.msra.mxu0 0.0
        %3238 = vmatprep.subr.mxu0 0.0
        %3239 = vmatpush1.xpose.msra.mxu0 0.0
        %3240 = vmatprep.subr.mxu0 0.0
        %3241 = vmatpush1.xpose.msra.mxu0 0.0
        %3242 = vmatprep.subr.mxu0 0.0
        %3243 = vmatpush1.xpose.msra.mxu0 0.0
        %3244 = vmatprep.subr.mxu0 0.0
        %3245 = vmatpush1.xpose.msra.mxu0 0.0
        %3246 = vmatprep.subr.mxu0 0.0
        %3247 = vmatpush1.xpose.msra.mxu0 0.0
        %3248 = vmatprep.subr.mxu0 0.0
        %3249 = vmatpush1.xpose.msra.mxu0 0.0
        %3250 = vmatprep.subr.mxu0 0.0
        %3251 = vmatpush1.xpose.msra.mxu0 0.0
        %3252 = vmatprep.subr.mxu0 0.0
        %3253 = vmatpush1.xpose.msra.mxu0 0.0
        %3254 = vmatprep.subr.mxu0 0.0
        %3255 = vmatpush1.xpose.msra.mxu0 0.0
        %3256 = vmatprep.subr.mxu0 0.0
        %3257 = vmatpush1.xpose.msra.mxu0 0.0
        %3258 = vmatprep.subr.mxu0 0.0
        %3259 = vmatpush1.xpose.msra.mxu0 0.0
        %3260 = vmatprep.mubr.f32.mxu0 0.0
        %3261 = vmatmul.mubr.f32.gmra.mrb[0].mxu0 %v3188
        %v3262 = vpop.f32.mrb[0].mxu0
        %v3263 = vadd.f32 %v650, %v3262
        %v3264 = vpop.f32.mrb[0].mxu0
        %3265 = vmatprep.mubr.f32.mxu0 0.0
        %3266 = vmatmul.mubr.f32.gmra.mrb[0].mxu0 %v3190
        %v3267 = vpop.f32.mrb[0].mxu0
        %v3268 = vadd.f32 %v651, %v3267
        %v3269 = vpop.f32.mrb[0].mxu0
        %3270 = vdwg.mxu0
        %3271 = vrot.lane.b32.xlu0 %v654, 104
        %v3272 = vpop.permute.xlu0 %3271
        %3273 = vrot.lane.b32.xlu0 %v655, 104
        %v3274 = vpop.permute.xlu0 %3273
        %3275 = vrot.lane.b32.xlu0 %v622, 72
        %v3276 = vpop.permute.xlu0 %3275
        %3277 = vrot.lane.b32.xlu0 %v625, 72
        %v3278 = vpop.permute.xlu0 %3277
        %v3279 = vsel %vm666, %v3272, 0
        %v3281 = vsel %vm666, %v3274, 0
        %v3283 = vsel %vm666, %v3276, 0
        %v3285 = vsel %vm666, %v3278, 0
        %3287 = vmatprep.subr.mxu0 0.0
        %3288 = vmatpush1.xpose.msra.mxu0 %v3283
        %3289 = vmatprep.subr.mxu0 0.0
        %3290 = vmatpush1.xpose.msra.mxu0 %v3285
        %3291 = vmatprep.subr.mxu0 0.0
        %3292 = vmatpush1.xpose.msra.mxu0 0.0
        %3293 = vmatprep.subr.mxu0 0.0
        %3294 = vmatpush1.xpose.msra.mxu0 0.0
        %3295 = vmatprep.subr.mxu0 0.0
        %3296 = vmatpush1.xpose.msra.mxu0 0.0
        %3297 = vmatprep.subr.mxu0 0.0
        %3298 = vmatpush1.xpose.msra.mxu0 0.0
        %3299 = vmatprep.subr.mxu0 0.0
        %3300 = vmatpush1.xpose.msra.mxu0 0.0
        %3301 = vmatprep.subr.mxu0 0.0
        %3302 = vmatpush1.xpose.msra.mxu0 0.0
        %3303 = vmatprep.subr.mxu0 0.0
        %3304 = vmatpush1.xpose.msra.mxu0 0.0
        %3305 = vmatprep.subr.mxu0 0.0
        %3306 = vmatpush1.xpose.msra.mxu0 0.0
        %3307 = vmatprep.subr.mxu0 0.0
        %3308 = vmatpush1.xpose.msra.mxu0 0.0
        %3309 = vmatprep.subr.mxu0 0.0
        %3310 = vmatpush1.xpose.msra.mxu0 0.0
        %3311 = vmatprep.subr.mxu0 0.0
        %3312 = vmatpush1.xpose.msra.mxu0 0.0
        %3313 = vmatprep.subr.mxu0 0.0
        %3314 = vmatpush1.xpose.msra.mxu0 0.0
        %3315 = vmatprep.subr.mxu0 0.0
        %3316 = vmatpush1.xpose.msra.mxu0 0.0
        %3317 = vmatprep.subr.mxu0 0.0
        %3318 = vmatpush1.xpose.msra.mxu0 0.0
        %3319 = vmatprep.subr.mxu0 0.0
        %3320 = vmatpush1.xpose.msra.mxu0 0.0
        %3321 = vmatprep.subr.mxu0 0.0
        %3322 = vmatpush1.xpose.msra.mxu0 0.0
        %3323 = vmatprep.subr.mxu0 0.0
        %3324 = vmatpush1.xpose.msra.mxu0 0.0
        %3325 = vmatprep.subr.mxu0 0.0
        %3326 = vmatpush1.xpose.msra.mxu0 0.0
        %3327 = vmatprep.subr.mxu0 0.0
        %3328 = vmatpush1.xpose.msra.mxu0 0.0
        %3329 = vmatprep.subr.mxu0 0.0
        %3330 = vmatpush1.xpose.msra.mxu0 0.0
        %3331 = vmatprep.subr.mxu0 0.0
        %3332 = vmatpush1.xpose.msra.mxu0 0.0
        %3333 = vmatprep.subr.mxu0 0.0
        %3334 = vmatpush1.xpose.msra.mxu0 0.0
        %3335 = vmatprep.subr.mxu0 0.0
        %3336 = vmatpush1.xpose.msra.mxu0 0.0
        %3337 = vmatprep.subr.mxu0 0.0
        %3338 = vmatpush1.xpose.msra.mxu0 0.0
        %3339 = vmatprep.subr.mxu0 0.0
        %3340 = vmatpush1.xpose.msra.mxu0 0.0
        %3341 = vmatprep.subr.mxu0 0.0
        %3342 = vmatpush1.xpose.msra.mxu0 0.0
        %3343 = vmatprep.subr.mxu0 0.0
        %3344 = vmatpush1.xpose.msra.mxu0 0.0
        %3345 = vmatprep.subr.mxu0 0.0
        %3346 = vmatpush1.xpose.msra.mxu0 0.0
        %3347 = vmatprep.subr.mxu0 0.0
        %3348 = vmatpush1.xpose.msra.mxu0 0.0
        %3349 = vmatprep.subr.mxu0 0.0
        %3350 = vmatpush1.xpose.msra.mxu0 0.0
        %3351 = vmatprep.mubr.f32.mxu0 0.0
        %3352 = vmatmul.mubr.f32.gmra.mrb[0].mxu0 %v3279
        %v3353 = vpop.f32.mrb[0].mxu0
        %v3354 = vadd.f32 %v650, %v3353
        %v3355 = vpop.f32.mrb[0].mxu0
        %3356 = vmatprep.mubr.f32.mxu0 0.0
        %3357 = vmatmul.mubr.f32.gmra.mrb[0].mxu0 %v3281
        %v3358 = vpop.f32.mrb[0].mxu0
        %v3359 = vadd.f32 %v651, %v3358
        %v3360 = vpop.f32.mrb[0].mxu0
        %3361 = vdwg.mxu0
        %3362 = vrot.lane.b32.xlu0 %v656, 104
        %v3363 = vpop.permute.xlu0 %3362
        %3364 = vrot.lane.b32.xlu0 %v657, 104
        %v3365 = vpop.permute.xlu0 %3364
        %3366 = vrot.lane.b32.xlu0 %v630, 72
        %v3367 = vpop.permute.xlu0 %3366
        %3368 = vrot.lane.b32.xlu0 %v633, 72
        %v3369 = vpop.permute.xlu0 %3368
        %v3370 = vsel %vm666, %v3363, 0
        %v3372 = vsel %vm666, %v3365, 0
        %v3374 = vsel %vm666, %v3367, 0
        %v3376 = vsel %vm666, %v3369, 0
        %3378 = vmatprep.subr.mxu0 0.0
        %3379 = vmatpush1.xpose.msra.mxu0 %v3374
        %3380 = vmatprep.subr.mxu0 0.0
        %3381 = vmatpush1.xpose.msra.mxu0 %v3376
        %3382 = vmatprep.subr.mxu0 0.0
        %3383 = vmatpush1.xpose.msra.mxu0 0.0
        %3384 = vmatprep.subr.mxu0 0.0
        %3385 = vmatpush1.xpose.msra.mxu0 0.0
        %3386 = vmatprep.subr.mxu0 0.0
        %3387 = vmatpush1.xpose.msra.mxu0 0.0
        %3388 = vmatprep.subr.mxu0 0.0
        %3389 = vmatpush1.xpose.msra.mxu0 0.0
        %3390 = vmatprep.subr.mxu0 0.0
        %3391 = vmatpush1.xpose.msra.mxu0 0.0
        %3392 = vmatprep.subr.mxu0 0.0
        %3393 = vmatpush1.xpose.msra.mxu0 0.0
        %3394 = vmatprep.subr.mxu0 0.0
        %3395 = vmatpush1.xpose.msra.mxu0 0.0
        %3396 = vmatprep.subr.mxu0 0.0
        %3397 = vmatpush1.xpose.msra.mxu0 0.0
        %3398 = vmatprep.subr.mxu0 0.0
        %3399 = vmatpush1.xpose.msra.mxu0 0.0
        %3400 = vmatprep.subr.mxu0 0.0
        %3401 = vmatpush1.xpose.msra.mxu0 0.0
        %3402 = vmatprep.subr.mxu0 0.0
        %3403 = vmatpush1.xpose.msra.mxu0 0.0
        %3404 = vmatprep.subr.mxu0 0.0
        %3405 = vmatpush1.xpose.msra.mxu0 0.0
        %3406 = vmatprep.subr.mxu0 0.0
        %3407 = vmatpush1.xpose.msra.mxu0 0.0
        %3408 = vmatprep.subr.mxu0 0.0
        %3409 = vmatpush1.xpose.msra.mxu0 0.0
        %3410 = vmatprep.subr.mxu0 0.0
        %3411 = vmatpush1.xpose.msra.mxu0 0.0
        %3412 = vmatprep.subr.mxu0 0.0
        %3413 = vmatpush1.xpose.msra.mxu0 0.0
        %3414 = vmatprep.subr.mxu0 0.0
        %3415 = vmatpush1.xpose.msra.mxu0 0.0
        %3416 = vmatprep.subr.mxu0 0.0
        %3417 = vmatpush1.xpose.msra.mxu0 0.0
        %3418 = vmatprep.subr.mxu0 0.0
        %3419 = vmatpush1.xpose.msra.mxu0 0.0
        %3420 = vmatprep.subr.mxu0 0.0
        %3421 = vmatpush1.xpose.msra.mxu0 0.0
        %3422 = vmatprep.subr.mxu0 0.0
        %3423 = vmatpush1.xpose.msra.mxu0 0.0
        %3424 = vmatprep.subr.mxu0 0.0
        %3425 = vmatpush1.xpose.msra.mxu0 0.0
        %3426 = vmatprep.subr.mxu0 0.0
        %3427 = vmatpush1.xpose.msra.mxu0 0.0
        %3428 = vmatprep.subr.mxu0 0.0
        %3429 = vmatpush1.xpose.msra.mxu0 0.0
        %3430 = vmatprep.subr.mxu0 0.0
        %3431 = vmatpush1.xpose.msra.mxu0 0.0
        %3432 = vmatprep.subr.mxu0 0.0
        %3433 = vmatpush1.xpose.msra.mxu0 0.0
        %3434 = vmatprep.subr.mxu0 0.0
        %3435 = vmatpush1.xpose.msra.mxu0 0.0
        %3436 = vmatprep.subr.mxu0 0.0
        %3437 = vmatpush1.xpose.msra.mxu0 0.0
        %3438 = vmatprep.subr.mxu0 0.0
        %3439 = vmatpush1.xpose.msra.mxu0 0.0
        %3440 = vmatprep.subr.mxu0 0.0
        %3441 = vmatpush1.xpose.msra.mxu0 0.0
        %3442 = vmatprep.mubr.f32.mxu0 0.0
        %3443 = vmatmul.mubr.f32.gmra.mrb[0].mxu0 %v3370
        %v3444 = vpop.f32.mrb[0].mxu0
        %v3445 = vadd.f32 %v650, %v3444
        %v3446 = vpop.f32.mrb[0].mxu0
        %3447 = vmatprep.mubr.f32.mxu0 0.0
        %3448 = vmatmul.mubr.f32.gmra.mrb[0].mxu0 %v3372
        %v3449 = vpop.f32.mrb[0].mxu0
        %v3450 = vadd.f32 %v651, %v3449
        %v3451 = vpop.f32.mrb[0].mxu0
        %3452 = vdwg.mxu0
        %3453 = vrot.lane.b32.xlu0 %v658, 104
        %v3454 = vpop.permute.xlu0 %3453
        %3455 = vrot.lane.b32.xlu0 %v659, 104
        %v3456 = vpop.permute.xlu0 %3455
        %3457 = vrot.lane.b32.xlu0 %v638, 72
        %v3458 = vpop.permute.xlu0 %3457
        %3459 = vrot.lane.b32.xlu0 %v641, 72
        %v3460 = vpop.permute.xlu0 %3459
        %v3461 = vsel %vm666, %v3454, 0
        %v3463 = vsel %vm666, %v3456, 0
        %v3465 = vsel %vm666, %v3458, 0
        %v3467 = vsel %vm666, %v3460, 0
        %3469 = vmatprep.subr.mxu0 0.0
        %3470 = vmatpush1.xpose.msra.mxu0 %v3465
        %3471 = vmatprep.subr.mxu0 0.0
        %3472 = vmatpush1.xpose.msra.mxu0 %v3467
        %3473 = vmatprep.subr.mxu0 0.0
        %3474 = vmatpush1.xpose.msra.mxu0 0.0
        %3475 = vmatprep.subr.mxu0 0.0
        %3476 = vmatpush1.xpose.msra.mxu0 0.0
        %3477 = vmatprep.subr.mxu0 0.0
        %3478 = vmatpush1.xpose.msra.mxu0 0.0
        %3479 = vmatprep.subr.mxu0 0.0
        %3480 = vmatpush1.xpose.msra.mxu0 0.0
        %3481 = vmatprep.subr.mxu0 0.0
        %3482 = vmatpush1.xpose.msra.mxu0 0.0
        %3483 = vmatprep.subr.mxu0 0.0
        %3484 = vmatpush1.xpose.msra.mxu0 0.0
        %3485 = vmatprep.subr.mxu0 0.0
        %3486 = vmatpush1.xpose.msra.mxu0 0.0
        %3487 = vmatprep.subr.mxu0 0.0
        %3488 = vmatpush1.xpose.msra.mxu0 0.0
        %3489 = vmatprep.subr.mxu0 0.0
        %3490 = vmatpush1.xpose.msra.mxu0 0.0
        %3491 = vmatprep.subr.mxu0 0.0
        %3492 = vmatpush1.xpose.msra.mxu0 0.0
        %3493 = vmatprep.subr.mxu0 0.0
        %3494 = vmatpush1.xpose.msra.mxu0 0.0
        %3495 = vmatprep.subr.mxu0 0.0
        %3496 = vmatpush1.xpose.msra.mxu0 0.0
        %3497 = vmatprep.subr.mxu0 0.0
        %3498 = vmatpush1.xpose.msra.mxu0 0.0
        %3499 = vmatprep.subr.mxu0 0.0
        %3500 = vmatpush1.xpose.msra.mxu0 0.0
        %3501 = vmatprep.subr.mxu0 0.0
        %3502 = vmatpush1.xpose.msra.mxu0 0.0
        %3503 = vmatprep.subr.mxu0 0.0
        %3504 = vmatpush1.xpose.msra.mxu0 0.0
        %3505 = vmatprep.subr.mxu0 0.0
        %3506 = vmatpush1.xpose.msra.mxu0 0.0
        %3507 = vmatprep.subr.mxu0 0.0
        %3508 = vmatpush1.xpose.msra.mxu0 0.0
        %3509 = vmatprep.subr.mxu0 0.0
        %3510 = vmatpush1.xpose.msra.mxu0 0.0
        %3511 = vmatprep.subr.mxu0 0.0
        %3512 = vmatpush1.xpose.msra.mxu0 0.0
        %3513 = vmatprep.subr.mxu0 0.0
        %3514 = vmatpush1.xpose.msra.mxu0 0.0
        %3515 = vmatprep.subr.mxu0 0.0
        %3516 = vmatpush1.xpose.msra.mxu0 0.0
        %3517 = vmatprep.subr.mxu0 0.0
        %3518 = vmatpush1.xpose.msra.mxu0 0.0
        %3519 = vmatprep.subr.mxu0 0.0
        %3520 = vmatpush1.xpose.msra.mxu0 0.0
        %3521 = vmatprep.subr.mxu0 0.0
        %3522 = vmatpush1.xpose.msra.mxu0 0.0
        %3523 = vmatprep.subr.mxu0 0.0
        %3524 = vmatpush1.xpose.msra.mxu0 0.0
        %3525 = vmatprep.subr.mxu0 0.0
        %3526 = vmatpush1.xpose.msra.mxu0 0.0
        %3527 = vmatprep.subr.mxu0 0.0
        %3528 = vmatpush1.xpose.msra.mxu0 0.0
        %3529 = vmatprep.subr.mxu0 0.0
        %3530 = vmatpush1.xpose.msra.mxu0 0.0
        %3531 = vmatprep.subr.mxu0 0.0
        %3532 = vmatpush1.xpose.msra.mxu0 0.0
        %3533 = vmatprep.mubr.f32.mxu0 0.0
        %3534 = vmatmul.mubr.f32.gmra.mrb[0].mxu0 %v3461
        %v3535 = vpop.f32.mrb[0].mxu0
        %v3536 = vadd.f32 %v650, %v3535
        %v3537 = vpop.f32.mrb[0].mxu0
        %3538 = vmatprep.mubr.f32.mxu0 0.0
        %3539 = vmatmul.mubr.f32.gmra.mrb[0].mxu0 %v3463
        %v3540 = vpop.f32.mrb[0].mxu0
        %v3541 = vadd.f32 %v651, %v3540
        %v3542 = vpop.f32.mrb[0].mxu0
        %3543 = vdwg.mxu0
        %v3544 = vsel %vm1025, %v3263, -inf
        %3545 = vmax.xlane.f32.xlu0 %v3544
        %v3546 = vpop.xlane.xlu0 %3545
        %v3547 = vsel %vm1025, %v3268, -inf
        %3548 = vmax.xlane.f32.xlu0 %v3547
        %v3549 = vpop.xlane.xlu0 %3548
        %v3550 = vsel %vm1025, %v3354, -inf
        %3551 = vmax.xlane.f32.xlu0 %v3550
        %v3552 = vpop.xlane.xlu0 %3551
        %v3553 = vsel %vm1025, %v3359, -inf
        %3554 = vmax.xlane.f32.xlu0 %v3553
        %v3555 = vpop.xlane.xlu0 %3554
        %v3556 = vsel %vm1025, %v3445, -inf
        %3557 = vmax.xlane.f32.xlu0 %v3556
        %v3558 = vpop.xlane.xlu0 %3557
        %v3559 = vsel %vm1025, %v3450, -inf
        %3560 = vmax.xlane.f32.xlu0 %v3559
        %v3561 = vpop.xlane.xlu0 %3560
        %v3562 = vsel %vm1025, %v3536, -inf
        %3563 = vmax.xlane.f32.xlu0 %v3562
        %v3564 = vpop.xlane.xlu0 %3563
        %v3565 = vsel %vm1025, %v3541, -inf
        %3566 = vmax.xlane.f32.xlu0 %v3565
        %v3567 = vpop.xlane.xlu0 %3566
        %v3568 = vsub.f32 %v3263, %v3546
        %v3569 = vsub.f32 %v3268, %v3549
        %v3570 = vsub.f32 %v3354, %v3552
        %v3571 = vsub.f32 %v3359, %v3555
        %v3572 = vsub.f32 %v3445, %v3558
        %v3573 = vsub.f32 %v3450, %v3561
        %v3574 = vsub.f32 %v3536, %v3564
        %v3575 = vsub.f32 %v3541, %v3567
        %v3576 = vmul.f32 %v3568, 1.442695
        %v3577 = vpow.pop %v3576
        %v3578 = vmul.f32 %v3569, 1.442695
        %v3579 = vpow.pop %v3578
        %v3580 = vmul.f32 %v3570, 1.442695
        %v3581 = vpow.pop %v3580
        %v3582 = vmul.f32 %v3571, 1.442695
        %v3583 = vpow.pop %v3582
        %v3584 = vmul.f32 %v3572, 1.442695
        %v3585 = vpow.pop %v3584
        %v3586 = vmul.f32 %v3573, 1.442695
        %v3587 = vpow.pop %v3586
        %v3588 = vmul.f32 %v3574, 1.442695
        %v3589 = vpow.pop %v3588
        %v3590 = vmul.f32 %v3575, 1.442695
        %v3591 = vpow.pop %v3590
        %v3592 = vsel %vm1025, %v3577, 0.0
        %3593 = vadd.xlane.f32.xlu0 %v3592
        %v3594 = vpop.xlane.xlu0 %3593
        %v3595 = vsel %vm1025, %v3579, 0.0
        %3596 = vadd.xlane.f32.xlu0 %v3595
        %v3597 = vpop.xlane.xlu0 %3596
        %v3598 = vsel %vm1025, %v3581, 0.0
        %3599 = vadd.xlane.f32.xlu0 %v3598
        %v3600 = vpop.xlane.xlu0 %3599
        %v3601 = vsel %vm1025, %v3583, 0.0
        %3602 = vadd.xlane.f32.xlu0 %v3601
        %v3603 = vpop.xlane.xlu0 %3602
        %v3604 = vsel %vm1025, %v3585, 0.0
        %3605 = vadd.xlane.f32.xlu0 %v3604
        %v3606 = vpop.xlane.xlu0 %3605
        %v3607 = vsel %vm1025, %v3587, 0.0
        %3608 = vadd.xlane.f32.xlu0 %v3607
        %v3609 = vpop.xlane.xlu0 %3608
        %v3610 = vsel %vm1025, %v3589, 0.0
        %3611 = vadd.xlane.f32.xlu0 %v3610
        %v3612 = vpop.xlane.xlu0 %3611
        %v3613 = vsel %vm1025, %v3591, 0.0
        %3614 = vadd.xlane.f32.xlu0 %v3613
        %v3615 = vpop.xlane.xlu0 %3614
        %v3616 = vrcp.pop %v3594
        %v3617 = vrcp.pop %v3597
        %v3618 = vrcp.pop %v3600
        %v3619 = vrcp.pop %v3603
        %v3620 = vrcp.pop %v3606
        %v3621 = vrcp.pop %v3609
        %v3622 = vrcp.pop %v3612
        %v3623 = vrcp.pop %v3615
        %v3624 = vmul.f32 %v3577, %v3616
        %v3625 = vmul.f32 %v3579, %v3617
        %v3626 = vmul.f32 %v3581, %v3618
        %v3627 = vmul.f32 %v3583, %v3619
        %v3628 = vmul.f32 %v3585, %v3620
        %v3629 = vmul.f32 %v3587, %v3621
        %v3630 = vmul.f32 %v3589, %v3622
        %v3631 = vmul.f32 %v3591, %v3623
        %s3632 = sld [smem:[#allocation3 + $0x3]]
        %v3633 = vstv %s3632
        %v3634 = vmul.f32 %v3624, %v3633
        %v3635 = vmul.f32 %v3625, %v3633
        %v3636 = vmul.f32 %v3626, %v3633
        %v3637 = vmul.f32 %v3627, %v3633
        %v3638 = vmul.f32 %v3628, %v3633
        %v3639 = vmul.f32 %v3629, %v3633
        %v3640 = vmul.f32 %v3630, %v3633
        %v3641 = vmul.f32 %v3631, %v3633
        %s3642 = sld [smem:[#allocation5 + $0x3]]
        %v3643 = vstv %s3642
        %v3644 = vsub.f32 %v3634, %v3643
        %v3645 = vsub.f32 %v3635, %v3643
        %v3646 = vsub.f32 %v3636, %v3643
        %v3647 = vsub.f32 %v3637, %v3643
        %v3648 = vsub.f32 %v3638, %v3643
        %v3649 = vsub.f32 %v3639, %v3643
        %v3650 = vsub.f32 %v3640, %v3643
        %v3651 = vsub.f32 %v3641, %v3643
        %3652 = vrot.lane.b32.xlu0 %v614, 40
        %v3653 = vpop.permute.xlu0 %3652
        %3654 = vrot.lane.b32.xlu0 %v617, 40
        %v3655 = vpop.permute.xlu0 %3654
        %v3659 = vsel %vm1025, %v3644, 0
        %v3662 = vsel %vm1025, %v3645, 0
        %3664 = vmatprep.subr.mxu0 0.0
        %3665 = vmatpush1.msra.mxu0 %v3653
        %3666 = vmatprep.subr.mxu0 0.0
        %3667 = vmatpush1.msra.mxu0 %v3655
        %3668 = vmatprep.subr.mxu0 0.0
        %3669 = vmatpush1.msra.mxu0 0.0
        %3670 = vmatprep.subr.mxu0 0.0
        %3671 = vmatpush1.msra.mxu0 0.0
        %3672 = vmatprep.subr.mxu0 0.0
        %3673 = vmatpush1.msra.mxu0 0.0
        %3674 = vmatprep.subr.mxu0 0.0
        %3675 = vmatpush1.msra.mxu0 0.0
        %3676 = vmatprep.subr.mxu0 0.0
        %3677 = vmatpush1.msra.mxu0 0.0
        %3678 = vmatprep.subr.mxu0 0.0
        %3679 = vmatpush1.msra.mxu0 0.0
        %3680 = vmatprep.subr.mxu0 0.0
        %3681 = vmatpush1.msra.mxu0 0.0
        %3682 = vmatprep.subr.mxu0 0.0
        %3683 = vmatpush1.msra.mxu0 0.0
        %3684 = vmatprep.subr.mxu0 0.0
        %3685 = vmatpush1.msra.mxu0 0.0
        %3686 = vmatprep.subr.mxu0 0.0
        %3687 = vmatpush1.msra.mxu0 0.0
        %3688 = vmatprep.subr.mxu0 0.0
        %3689 = vmatpush1.msra.mxu0 0.0
        %3690 = vmatprep.subr.mxu0 0.0
        %3691 = vmatpush1.msra.mxu0 0.0
        %3692 = vmatprep.subr.mxu0 0.0
        %3693 = vmatpush1.msra.mxu0 0.0
        %3694 = vmatprep.subr.mxu0 0.0
        %3695 = vmatpush1.msra.mxu0 0.0
        %3696 = vmatprep.subr.mxu0 0.0
        %3697 = vmatpush1.msra.mxu0 0.0
        %3698 = vmatprep.subr.mxu0 0.0
        %3699 = vmatpush1.msra.mxu0 0.0
        %3700 = vmatprep.subr.mxu0 0.0
        %3701 = vmatpush1.msra.mxu0 0.0
        %3702 = vmatprep.subr.mxu0 0.0
        %3703 = vmatpush1.msra.mxu0 0.0
        %3704 = vmatprep.subr.mxu0 0.0
        %3705 = vmatpush1.msra.mxu0 0.0
        %3706 = vmatprep.subr.mxu0 0.0
        %3707 = vmatpush1.msra.mxu0 0.0
        %3708 = vmatprep.subr.mxu0 0.0
        %3709 = vmatpush1.msra.mxu0 0.0
        %3710 = vmatprep.subr.mxu0 0.0
        %3711 = vmatpush1.msra.mxu0 0.0
        %3712 = vmatprep.subr.mxu0 0.0
        %3713 = vmatpush1.msra.mxu0 0.0
        %3714 = vmatprep.subr.mxu0 0.0
        %3715 = vmatpush1.msra.mxu0 0.0
        %3716 = vmatprep.subr.mxu0 0.0
        %3717 = vmatpush1.msra.mxu0 0.0
        %3718 = vmatprep.subr.mxu0 0.0
        %3719 = vmatpush1.msra.mxu0 0.0
        %3720 = vmatprep.subr.mxu0 0.0
        %3721 = vmatpush1.msra.mxu0 0.0
        %3722 = vmatprep.subr.mxu0 0.0
        %3723 = vmatpush1.msra.mxu0 0.0
        %3724 = vmatprep.subr.mxu0 0.0
        %3725 = vmatpush1.msra.mxu0 0.0
        %3726 = vmatprep.subr.mxu0 0.0
        %3727 = vmatpush1.msra.mxu0 0.0
        %3728 = vmatprep.mubr.f32.mxu0 0.0
        %3729 = vmatmul.mubr.f32.gmra.mrb[0].mxu0 %v3659
        %v3730 = vpop.f32.mrb[0].mxu0
        %v3731 = vadd.f32 0.0, %v3730
        %v3732 = vpop.f32.mrb[0].mxu0
        %3733 = vmatprep.mubr.f32.mxu0 0.0
        %3734 = vmatmul.mubr.f32.gmra.mrb[0].mxu0 %v3662
        %v3735 = vpop.f32.mrb[0].mxu0
        %v3736 = vadd.f32 0.0, %v3735
        %v3737 = vpop.f32.mrb[0].mxu0
        %3738 = vdwg.mxu0
        %3739 = vrot.lane.b32.xlu0 %v622, 40
        %v3740 = vpop.permute.xlu0 %3739
        %3741 = vrot.lane.b32.xlu0 %v625, 40
        %v3742 = vpop.permute.xlu0 %3741
        %v3746 = vsel %vm1025, %v3646, 0
        %v3749 = vsel %vm1025, %v3647, 0
        %3751 = vmatprep.subr.mxu0 0.0
        %3752 = vmatpush1.msra.mxu0 %v3740
        %3753 = vmatprep.subr.mxu0 0.0
        %3754 = vmatpush1.msra.mxu0 %v3742
        %3755 = vmatprep.subr.mxu0 0.0
        %3756 = vmatpush1.msra.mxu0 0.0
        %3757 = vmatprep.subr.mxu0 0.0
        %3758 = vmatpush1.msra.mxu0 0.0
        %3759 = vmatprep.subr.mxu0 0.0
        %3760 = vmatpush1.msra.mxu0 0.0
        %3761 = vmatprep.subr.mxu0 0.0
        %3762 = vmatpush1.msra.mxu0 0.0
        %3763 = vmatprep.subr.mxu0 0.0
        %3764 = vmatpush1.msra.mxu0 0.0
        %3765 = vmatprep.subr.mxu0 0.0
        %3766 = vmatpush1.msra.mxu0 0.0
        %3767 = vmatprep.subr.mxu0 0.0
        %3768 = vmatpush1.msra.mxu0 0.0
        %3769 = vmatprep.subr.mxu0 0.0
        %3770 = vmatpush1.msra.mxu0 0.0
        %3771 = vmatprep.subr.mxu0 0.0
        %3772 = vmatpush1.msra.mxu0 0.0
        %3773 = vmatprep.subr.mxu0 0.0
        %3774 = vmatpush1.msra.mxu0 0.0
        %3775 = vmatprep.subr.mxu0 0.0
        %3776 = vmatpush1.msra.mxu0 0.0
        %3777 = vmatprep.subr.mxu0 0.0
        %3778 = vmatpush1.msra.mxu0 0.0
        %3779 = vmatprep.subr.mxu0 0.0
        %3780 = vmatpush1.msra.mxu0 0.0
        %3781 = vmatprep.subr.mxu0 0.0
        %3782 = vmatpush1.msra.mxu0 0.0
        %3783 = vmatprep.subr.mxu0 0.0
        %3784 = vmatpush1.msra.mxu0 0.0
        %3785 = vmatprep.subr.mxu0 0.0
        %3786 = vmatpush1.msra.mxu0 0.0
        %3787 = vmatprep.subr.mxu0 0.0
        %3788 = vmatpush1.msra.mxu0 0.0
        %3789 = vmatprep.subr.mxu0 0.0
        %3790 = vmatpush1.msra.mxu0 0.0
        %3791 = vmatprep.subr.mxu0 0.0
        %3792 = vmatpush1.msra.mxu0 0.0
        %3793 = vmatprep.subr.mxu0 0.0
        %3794 = vmatpush1.msra.mxu0 0.0
        %3795 = vmatprep.subr.mxu0 0.0
        %3796 = vmatpush1.msra.mxu0 0.0
        %3797 = vmatprep.subr.mxu0 0.0
        %3798 = vmatpush1.msra.mxu0 0.0
        %3799 = vmatprep.subr.mxu0 0.0
        %3800 = vmatpush1.msra.mxu0 0.0
        %3801 = vmatprep.subr.mxu0 0.0
        %3802 = vmatpush1.msra.mxu0 0.0
        %3803 = vmatprep.subr.mxu0 0.0
        %3804 = vmatpush1.msra.mxu0 0.0
        %3805 = vmatprep.subr.mxu0 0.0
        %3806 = vmatpush1.msra.mxu0 0.0
        %3807 = vmatprep.subr.mxu0 0.0
        %3808 = vmatpush1.msra.mxu0 0.0
        %3809 = vmatprep.subr.mxu0 0.0
        %3810 = vmatpush1.msra.mxu0 0.0
        %3811 = vmatprep.subr.mxu0 0.0
        %3812 = vmatpush1.msra.mxu0 0.0
        %3813 = vmatprep.subr.mxu0 0.0
        %3814 = vmatpush1.msra.mxu0 0.0
        %3815 = vmatprep.mubr.f32.mxu0 0.0
        %3816 = vmatmul.mubr.f32.gmra.mrb[0].mxu0 %v3746
        %v3817 = vpop.f32.mrb[0].mxu0
        %v3818 = vadd.f32 0.0, %v3817
        %v3819 = vpop.f32.mrb[0].mxu0
        %3820 = vmatprep.mubr.f32.mxu0 0.0
        %3821 = vmatmul.mubr.f32.gmra.mrb[0].mxu0 %v3749
        %v3822 = vpop.f32.mrb[0].mxu0
        %v3823 = vadd.f32 0.0, %v3822
        %v3824 = vpop.f32.mrb[0].mxu0
        %3825 = vdwg.mxu0
        %3826 = vrot.lane.b32.xlu0 %v630, 40
        %v3827 = vpop.permute.xlu0 %3826
        %3828 = vrot.lane.b32.xlu0 %v633, 40
        %v3829 = vpop.permute.xlu0 %3828
        %v3833 = vsel %vm1025, %v3648, 0
        %v3836 = vsel %vm1025, %v3649, 0
        %3838 = vmatprep.subr.mxu0 0.0
        %3839 = vmatpush1.msra.mxu0 %v3827
        %3840 = vmatprep.subr.mxu0 0.0
        %3841 = vmatpush1.msra.mxu0 %v3829
        %3842 = vmatprep.subr.mxu0 0.0
        %3843 = vmatpush1.msra.mxu0 0.0
        %3844 = vmatprep.subr.mxu0 0.0
        %3845 = vmatpush1.msra.mxu0 0.0
        %3846 = vmatprep.subr.mxu0 0.0
        %3847 = vmatpush1.msra.mxu0 0.0
        %3848 = vmatprep.subr.mxu0 0.0
        %3849 = vmatpush1.msra.mxu0 0.0
        %3850 = vmatprep.subr.mxu0 0.0
        %3851 = vmatpush1.msra.mxu0 0.0
        %3852 = vmatprep.subr.mxu0 0.0
        %3853 = vmatpush1.msra.mxu0 0.0
        %3854 = vmatprep.subr.mxu0 0.0
        %3855 = vmatpush1.msra.mxu0 0.0
        %3856 = vmatprep.subr.mxu0 0.0
        %3857 = vmatpush1.msra.mxu0 0.0
        %3858 = vmatprep.subr.mxu0 0.0
        %3859 = vmatpush1.msra.mxu0 0.0
        %3860 = vmatprep.subr.mxu0 0.0
        %3861 = vmatpush1.msra.mxu0 0.0
        %3862 = vmatprep.subr.mxu0 0.0
        %3863 = vmatpush1.msra.mxu0 0.0
        %3864 = vmatprep.subr.mxu0 0.0
        %3865 = vmatpush1.msra.mxu0 0.0
        %3866 = vmatprep.subr.mxu0 0.0
        %3867 = vmatpush1.msra.mxu0 0.0
        %3868 = vmatprep.subr.mxu0 0.0
        %3869 = vmatpush1.msra.mxu0 0.0
        %3870 = vmatprep.subr.mxu0 0.0
        %3871 = vmatpush1.msra.mxu0 0.0
        %3872 = vmatprep.subr.mxu0 0.0
        %3873 = vmatpush1.msra.mxu0 0.0
        %3874 = vmatprep.subr.mxu0 0.0
        %3875 = vmatpush1.msra.mxu0 0.0
        %3876 = vmatprep.subr.mxu0 0.0
        %3877 = vmatpush1.msra.mxu0 0.0
        %3878 = vmatprep.subr.mxu0 0.0
        %3879 = vmatpush1.msra.mxu0 0.0
        %3880 = vmatprep.subr.mxu0 0.0
        %3881 = vmatpush1.msra.mxu0 0.0
        %3882 = vmatprep.subr.mxu0 0.0
        %3883 = vmatpush1.msra.mxu0 0.0
        %3884 = vmatprep.subr.mxu0 0.0
        %3885 = vmatpush1.msra.mxu0 0.0
        %3886 = vmatprep.subr.mxu0 0.0
        %3887 = vmatpush1.msra.mxu0 0.0
        %3888 = vmatprep.subr.mxu0 0.0
        %3889 = vmatpush1.msra.mxu0 0.0
        %3890 = vmatprep.subr.mxu0 0.0
        %3891 = vmatpush1.msra.mxu0 0.0
        %3892 = vmatprep.subr.mxu0 0.0
        %3893 = vmatpush1.msra.mxu0 0.0
        %3894 = vmatprep.subr.mxu0 0.0
        %3895 = vmatpush1.msra.mxu0 0.0
        %3896 = vmatprep.subr.mxu0 0.0
        %3897 = vmatpush1.msra.mxu0 0.0
        %3898 = vmatprep.subr.mxu0 0.0
        %3899 = vmatpush1.msra.mxu0 0.0
        %3900 = vmatprep.subr.mxu0 0.0
        %3901 = vmatpush1.msra.mxu0 0.0
        %3902 = vmatprep.mubr.f32.mxu0 0.0
        %3903 = vmatmul.mubr.f32.gmra.mrb[0].mxu0 %v3833
        %v3904 = vpop.f32.mrb[0].mxu0
        %v3905 = vadd.f32 0.0, %v3904
        %v3906 = vpop.f32.mrb[0].mxu0
        %3907 = vmatprep.mubr.f32.mxu0 0.0
        %3908 = vmatmul.mubr.f32.gmra.mrb[0].mxu0 %v3836
        %v3909 = vpop.f32.mrb[0].mxu0
        %v3910 = vadd.f32 0.0, %v3909
        %v3911 = vpop.f32.mrb[0].mxu0
        %3912 = vdwg.mxu0
        %3913 = vrot.lane.b32.xlu0 %v638, 40
        %v3914 = vpop.permute.xlu0 %3913
        %3915 = vrot.lane.b32.xlu0 %v641, 40
        %v3916 = vpop.permute.xlu0 %3915
        %v3920 = vsel %vm1025, %v3650, 0
        %v3923 = vsel %vm1025, %v3651, 0
        %3925 = vmatprep.subr.mxu0 0.0
        %3926 = vmatpush1.msra.mxu0 %v3914
        %3927 = vmatprep.subr.mxu0 0.0
        %3928 = vmatpush1.msra.mxu0 %v3916
        %3929 = vmatprep.subr.mxu0 0.0
        %3930 = vmatpush1.msra.mxu0 0.0
        %3931 = vmatprep.subr.mxu0 0.0
        %3932 = vmatpush1.msra.mxu0 0.0
        %3933 = vmatprep.subr.mxu0 0.0
        %3934 = vmatpush1.msra.mxu0 0.0
        %3935 = vmatprep.subr.mxu0 0.0
        %3936 = vmatpush1.msra.mxu0 0.0
        %3937 = vmatprep.subr.mxu0 0.0
        %3938 = vmatpush1.msra.mxu0 0.0
        %3939 = vmatprep.subr.mxu0 0.0
        %3940 = vmatpush1.msra.mxu0 0.0
        %3941 = vmatprep.subr.mxu0 0.0
        %3942 = vmatpush1.msra.mxu0 0.0
        %3943 = vmatprep.subr.mxu0 0.0
        %3944 = vmatpush1.msra.mxu0 0.0
        %3945 = vmatprep.subr.mxu0 0.0
        %3946 = vmatpush1.msra.mxu0 0.0
        %3947 = vmatprep.subr.mxu0 0.0
        %3948 = vmatpush1.msra.mxu0 0.0
        %3949 = vmatprep.subr.mxu0 0.0
        %3950 = vmatpush1.msra.mxu0 0.0
        %3951 = vmatprep.subr.mxu0 0.0
        %3952 = vmatpush1.msra.mxu0 0.0
        %3953 = vmatprep.subr.mxu0 0.0
        %3954 = vmatpush1.msra.mxu0 0.0
        %3955 = vmatprep.subr.mxu0 0.0
        %3956 = vmatpush1.msra.mxu0 0.0
        %3957 = vmatprep.subr.mxu0 0.0
        %3958 = vmatpush1.msra.mxu0 0.0
        %3959 = vmatprep.subr.mxu0 0.0
        %3960 = vmatpush1.msra.mxu0 0.0
        %3961 = vmatprep.subr.mxu0 0.0
        %3962 = vmatpush1.msra.mxu0 0.0
        %3963 = vmatprep.subr.mxu0 0.0
        %3964 = vmatpush1.msra.mxu0 0.0
        %3965 = vmatprep.subr.mxu0 0.0
        %3966 = vmatpush1.msra.mxu0 0.0
        %3967 = vmatprep.subr.mxu0 0.0
        %3968 = vmatpush1.msra.mxu0 0.0
        %3969 = vmatprep.subr.mxu0 0.0
        %3970 = vmatpush1.msra.mxu0 0.0
        %3971 = vmatprep.subr.mxu0 0.0
        %3972 = vmatpush1.msra.mxu0 0.0
        %3973 = vmatprep.subr.mxu0 0.0
        %3974 = vmatpush1.msra.mxu0 0.0
        %3975 = vmatprep.subr.mxu0 0.0
        %3976 = vmatpush1.msra.mxu0 0.0
        %3977 = vmatprep.subr.mxu0 0.0
        %3978 = vmatpush1.msra.mxu0 0.0
        %3979 = vmatprep.subr.mxu0 0.0
        %3980 = vmatpush1.msra.mxu0 0.0
        %3981 = vmatprep.subr.mxu0 0.0
        %3982 = vmatpush1.msra.mxu0 0.0
        %3983 = vmatprep.subr.mxu0 0.0
        %3984 = vmatpush1.msra.mxu0 0.0
        %3985 = vmatprep.subr.mxu0 0.0
        %3986 = vmatpush1.msra.mxu0 0.0
        %3987 = vmatprep.subr.mxu0 0.0
        %3988 = vmatpush1.msra.mxu0 0.0
        %3989 = vmatprep.mubr.f32.mxu0 0.0
        %3990 = vmatmul.mubr.f32.gmra.mrb[0].mxu0 %v3920
        %v3991 = vpop.f32.mrb[0].mxu0
        %v3992 = vadd.f32 0.0, %v3991
        %v3993 = vpop.f32.mrb[0].mxu0
        %3994 = vmatprep.mubr.f32.mxu0 0.0
        %3995 = vmatmul.mubr.f32.gmra.mrb[0].mxu0 %v3923
        %v3996 = vpop.f32.mrb[0].mxu0
        %v3997 = vadd.f32 0.0, %v3996
        %v3998 = vpop.f32.mrb[0].mxu0
        %3999 = vdwg.mxu0
        %v4000 = vpack.c.bf16 %v3736, %v3731
        %v4001 = vpack.c.bf16 %v3823, %v3818
        %v4002 = vpack.c.bf16 %v3910, %v3905
        %v4003 = vpack.c.bf16 %v3997, %v3992
        %4008 = vrot.lane.b32.xlu0 %v4000, 24
        %v4009 = vpop.permute.xlu0 %4008
        %4010 = vrot.lane.b32.xlu0 %v4001, 24
        %v4011 = vpop.permute.xlu0 %4010
        %4012 = vrot.lane.b32.xlu0 %v4002, 24
        %v4013 = vpop.permute.xlu0 %4012
        %4014 = vrot.lane.b32.xlu0 %v4003, 24
        %v4015 = vpop.permute.xlu0 %4014
        %vm4020 = vcmask 261312
        %4021 = vst.msk [vmem:[#allocation2] sm:$0xff] %vm4020, %v4009
        %4022 = vst.msk [vmem:[#allocation2 + $0x8] sm:$0xff] %vm4020, %v4011
        %4023 = vst.msk [vmem:[#allocation2 + $0x10] sm:$0xff] %vm4020, %v4013
        %4024 = vst.msk [vmem:[#allocation2 + $0x18] sm:$0xff] %vm4020, %v4015
        %v4025 = vld [vmem:[#allocation2] sm:$0xff]
        %v4026 = vld [vmem:[#allocation2 + $0x8] sm:$0xff]
        %v4027 = vld [vmem:[#allocation2 + $0x10] sm:$0xff]
        %v4028 = vld [vmem:[#allocation2 + $0x18] sm:$0xff]
        %v4029 = vld [vmem:[%s8] sm:$0xf]
        %v4030 = vld [vmem:[%s8 + $0x4] sm:$0xf]
        %v4031 = vld [vmem:[%s8 + $0x8] sm:$0xf]
        %v4032 = vld [vmem:[%s8 + $0xc] sm:$0xf]
        %v4033 = vld [vmem:[%s9] sm:$0x1]
        %v4035 = vlaneseq
        %v4036 = vshrl.u32 %v4035, 7
        %v4037 = vsub.s32 0, %v4036
        %v4038 = vrot.slane %v4033, %v4037
        %v4044 = vunpack.c.l.b16 %v4029
        %v4045 = vunpack.c.l.b16 %v4030
        %v4046 = vunpack.c.l.b16 %v4031
        %v4047 = vunpack.c.l.b16 %v4032
        %v4048 = vpack.c.b16 %v4045, %v4044
        %v4049 = vpack.c.b16 %v4047, %v4046
        %v4053 = vsel %vm404, %v4025, 0
        %v4056 = vsel %vm404, %v4026, 0
        %v4059 = vsel %vm404, %v4027, 0
        %v4062 = vsel %vm404, %v4028, 0
        %4064 = vmatprep.subr.bf16.mxu0 0
        %4065 = vmatpush1.bf16.msra.mxu0 %v4048
        %4066 = vmatprep.subr.bf16.mxu0 0
        %4067 = vmatpush1.bf16.msra.mxu0 %v4049
        %4068 = vmatprep.subr.bf16.mxu0 0
        %4069 = vmatpush1.bf16.msra.mxu0 0
        %4070 = vmatprep.subr.bf16.mxu0 0
        %4071 = vmatpush1.bf16.msra.mxu0 0
        %4072 = vmatprep.subr.bf16.mxu0 0
        %4073 = vmatpush1.bf16.msra.mxu0 0
        %4074 = vmatprep.subr.bf16.mxu0 0
        %4075 = vmatpush1.bf16.msra.mxu0 0
        %4076 = vmatprep.subr.bf16.mxu0 0
        %4077 = vmatpush1.bf16.msra.mxu0 0
        %4078 = vmatprep.subr.bf16.mxu0 0
        %4079 = vmatpush1.bf16.msra.mxu0 0
        %4080 = vmatprep.subr.bf16.mxu0 0
        %4081 = vmatpush1.bf16.msra.mxu0 0
        %4082 = vmatprep.subr.bf16.mxu0 0
        %4083 = vmatpush1.bf16.msra.mxu0 0
        %4084 = vmatprep.subr.bf16.mxu0 0
        %4085 = vmatpush1.bf16.msra.mxu0 0
        %4086 = vmatprep.subr.bf16.mxu0 0
        %4087 = vmatpush1.bf16.msra.mxu0 0
        %4088 = vmatprep.subr.bf16.mxu0 0
        %4089 = vmatpush1.bf16.msra.mxu0 0
        %4090 = vmatprep.subr.bf16.mxu0 0
        %4091 = vmatpush1.bf16.msra.mxu0 0
        %4092 = vmatprep.subr.bf16.mxu0 0
        %4093 = vmatpush1.bf16.msra.mxu0 0
        %4094 = vmatprep.subr.bf16.mxu0 0
        %4095 = vmatpush1.bf16.msra.mxu0 0
        %4096 = vmatprep.mubr.bf16.mxu0 0
        %4097 = vmatmul.mubr.bf16.gmra.mrb[0].mxu0 %v4053
        %v4098 = vpop.f32.mrb[0].mxu0
        %v4099 = vadd.f32 %v4038, %v4098
        %v4100 = vpop.f32.mrb[0].mxu0
        %v4101 = vpop.f32.mrb[0].mxu0
        %v4102 = vadd.f32 %v4038, %v4101
        %v4103 = vpop.f32.mrb[0].mxu0
        %4104 = vmatprep.mubr.bf16.mxu0 0
        %4105 = vmatmul.mubr.bf16.gmra.mrb[0].mxu0 %v4056
        %v4106 = vpop.f32.mrb[0].mxu0
        %v4107 = vadd.f32 %v4038, %v4106
        %v4108 = vpop.f32.mrb[0].mxu0
        %v4109 = vpop.f32.mrb[0].mxu0
        %v4110 = vadd.f32 %v4038, %v4109
        %v4111 = vpop.f32.mrb[0].mxu0
        %4112 = vmatprep.mubr.bf16.mxu0 0
        %4113 = vmatmul.mubr.bf16.gmra.mrb[0].mxu0 %v4059
        %v4114 = vpop.f32.mrb[0].mxu0
        %v4115 = vadd.f32 %v4038, %v4114
        %v4116 = vpop.f32.mrb[0].mxu0
        %v4117 = vpop.f32.mrb[0].mxu0
        %v4118 = vadd.f32 %v4038, %v4117
        %v4119 = vpop.f32.mrb[0].mxu0
        %4120 = vmatprep.mubr.bf16.mxu0 0
        %4121 = vmatmul.mubr.bf16.gmra.mrb[0].mxu0 %v4062
        %v4122 = vpop.f32.mrb[0].mxu0
        %v4123 = vadd.f32 %v4038, %v4122
        %v4124 = vpop.f32.mrb[0].mxu0
        %v4125 = vpop.f32.mrb[0].mxu0
        %v4126 = vadd.f32 %v4038, %v4125
        %v4127 = vpop.f32.mrb[0].mxu0
        %4128 = vdwg.mxu0
        %v4129 = vpack.c.bf16 %v4102, %v4099
        %v4130 = vpack.c.bf16 %v4110, %v4107
        %v4131 = vpack.c.bf16 %v4118, %v4115
        %v4132 = vpack.c.bf16 %v4126, %v4123
        %v4137 = vunpack.c.l.b16 %v4129
        %v4138 = vunpack.c.h.b16 %v4129
        %v4139 = vunpack.c.l.b16 %v4130
        %v4140 = vunpack.c.h.b16 %v4130
        %v4141 = vunpack.c.l.b16 %v4131
        %v4142 = vunpack.c.h.b16 %v4131
        %v4143 = vunpack.c.l.b16 %v4132
        %v4144 = vunpack.c.h.b16 %v4132
        %v4145 = vpack.c.b16 %v4137, %v4137
        %v4146 = vpack.c.b16 %v4138, %v4138
        %v4147 = vpack.c.b16 %v4139, %v4139
        %v4148 = vpack.c.b16 %v4140, %v4140
        %v4149 = vpack.c.b16 %v4141, %v4141
        %v4150 = vpack.c.b16 %v4142, %v4142
        %v4151 = vpack.c.b16 %v4143, %v4143
        %v4152 = vpack.c.b16 %v4144, %v4144
        %vm4161 = vcmask 257024
        %4162 = vst.msk [vmem:[%s393] sm:$0xf] %vm4161, %v4145
        %4163 = vst.msk [vmem:[%s393 + $0x4] sm:$0xf] %vm4161, %v4146
        %4164 = vst.msk [vmem:[%s393 + $0x8] sm:$0xf] %vm4161, %v4147
        %4165 = vst.msk [vmem:[%s393 + $0xc] sm:$0xf] %vm4161, %v4148
        %4166 = vst.msk [vmem:[%s393 + $0x10] sm:$0xf] %vm4161, %v4149
        %4167 = vst.msk [vmem:[%s393 + $0x14] sm:$0xf] %vm4161, %v4150
        %4168 = vst.msk [vmem:[%s393 + $0x18] sm:$0xf] %vm4161, %v4151
        %4169 = vst.msk [vmem:[%s393 + $0x1c] sm:$0xf] %vm4161, %v4152
        %s4170 = smul.u32 4, %s23
        %p4171 = scmp.lt.s32.totalorder %s4170, 7
        %s4172 = scalar_select %p4171, %s4170, 7
        %s4173 = smul.addr %s4172, 2
        %s4174 = smul.addr %s4173, 4
        %s4175 = scalar_lea.vmem %s10, %s4174
        // Predicated region
        $region69: #{_lambda_.4} parent=59 // pred_check
          %p4176 = pneg %p256
        $region70: #{_lambda_.4} parent=59 // pred_check_branch
          %4178 = sbr.rel (%p4176) target = $region72
        $region71: #{_lambda_.4} parent=59 // pred_region
          %s4179 = smul.u32 4, %s23
        $region72: #{_lambda_.4} parent=59 // pred_fallthru
          _
      $region60: #{_lambda_.4} parent=5 // pred_fallthru
        _
      %p4180 = scmp.le.s32.totalorder 2, %s18
      // Predicated region
      $region73: #{_lambda_.4} parent=5 // pred_check
        %p4181 = pneg %p4180
      $region74: #{_lambda_.4} parent=5 // pred_check_branch
        %4183 = sbr.rel (%p4181) target = $region76
      $region75: #{_lambda_.4} parent=5 // pred_region
        %s4184 = ssub.s32 %s18, 2
        // Predicated region
        $region77: #{_lambda_.4} parent=75 // pred_check
          %p4185 = pneg %p262
        $region78: #{_lambda_.4} parent=75 // pred_check_branch
          %4187 = sbr.rel (%p4185) target = $region80
        $region79: #{_lambda_.4} parent=75 // pred_region
          %s4188 = smul.u32 4, %s24
          %p4189 = scmp.lt.s32.totalorder %s4188, 7
          %s4190 = scalar_select %p4189, %s4188, 7
          %s4191 = smul.addr %s4190, 2
          %s4192 = smul.addr %s4191, 4
          %s4193 = scalar_lea.vmem %s10, %s4192
        $region80: #{_lambda_.4} parent=75 // pred_fallthru
          _
      $region76: #{_lambda_.4} parent=5 // pred_fallthru
        _
    $region6: #{_lambda_.4} parent=1 // loop_footer
      %s22 = sadd.s32 1, %s18
    $region7: #{_lambda_.4} parent=1 // loop_footer_branch
      %17 = sbr.rel target = $region3
    $region8: #{_lambda_.4} parent=1 // loop_exit
      _
    %4194 = vsyncpa [#allocation4], 1
    %s4195 = scalar_lea.sflag [#allocation4], 1
    %4196 = vsyncpa %s4195, 1
    %4197 = vsyncpa [#allocation6], 1

// kernel: _lambda_.6
$region0: #{_lambda_.6}
  #allocation0 [shape = 'u32[]', space=smem, size = 0x4, offset = 0x4, fixed_abs, tag = 'smem constant byte address 0x4 - core index']
  #allocation1 [shape = 'u32[144,128]{1,0:T(1,128)}', space=vmem, size = 0x12000, scoped, tag = 'internal scratch']
  #allocation2 [shape = 'bf16[64,32]{1,0:T(16,128)(2,1)}', space=vmem, size = 0x4000, scoped, tag = 'scratch operand']
  %s0 = inlined_call_operand.vmem [shape: f32[8,16,32], index: 0, kind: input, shape index: {}]
  %s1 = inlined_call_operand.vmem [shape: f32[4,16,16], index: 1, kind: input, shape index: {}]
  %s2 = inlined_call_operand.vmem [shape: f32[4,16,16], index: 2, kind: input, shape index: {}]
  %s3 = inlined_call_operand.vmem [shape: f32[4], index: 3, kind: input, shape index: {}]
  %s4 = inlined_call_operand.vmem [shape: f32[4], index: 4, kind: input, shape index: {}]
  %s5 = inlined_call_operand.vmem [shape: f32[1,32], index: 5, kind: input, shape index: {}]
  %s6 = inlined_call_operand.vmem [shape: f32[1,32], index: 6, kind: input, shape index: {}]
  %s7 = inlined_call_operand.vmem [shape: bf16[32,96], index: 7, kind: input, shape index: {}]
  %s8 = inlined_call_operand.vmem [shape: f32[1,96], index: 8, kind: input, shape index: {}]
  %s9 = inlined_call_operand.vmem [shape: bf16[32,32], index: 9, kind: input, shape index: {}]
  %s10 = inlined_call_operand.vmem [shape: f32[1,32], index: 10, kind: input, shape index: {}]
  %s11 = inlined_call_operand.vmem [shape: bf16[8,16,32], index: 11, kind: output, shape index: {}]
  %s12 = sld [smem:[#allocation0]]
  $region85: #{_lambda_.6} parent=0
    _
  %s14 = ssub.s32 1, %s12
  %s15 = scalar_select 0, %s14, %s12
  $region1: #{_lambda_.6} parent=0
    #allocation3 [shape = 'u8[512]{0}', space=smem, size = 0x200, scoped, tag = 'input window, operand 3, single buffered']
    #allocation4 [shape = 's32[2]{0}', space=sflag, size = 0x8, scoped, tag = 'scoped memory for _lambda_.6']
    #allocation5 [shape = 'u8[512]{0}', space=smem, size = 0x200, scoped, tag = 'input window, operand 4, single buffered']
    #allocation6 [shape = 's32[1]{0}', space=sflag, size = 0x4, scoped, tag = 'scoped memory for _lambda_.6']
    %16 = vsyncpa [#allocation4], 0
    %17 = vsyncpa [#allocation6], 0
    loop: start=0, step=1, limit=4
    $region2: #{_lambda_.6} parent=1 // loop_pre_header
      _
    $region3: #{_lambda_.6} parent=1 // loop_header
      %s19 = sphi 0, %s23
      %p20 = scmp.ge.s32.totalorder %s19, 4
      %s29 = sphi 0, %s31
      %s32 = sphi 0, %s29
      %s33 = sphi 0, %s32
      %s49 = sphi 0, %s33
      %s53 = sphi 0, %s53
      %s55 = sphi 0, %s53
      %s56 = sphi 0, %s55
      %s70 = sphi 0, %s56
      %s74 = sphi 0, %s74
      %s76 = sphi 0, %s74
      %s77 = sphi 0, %s76
      %s91 = sphi 0, %s77
      %s95 = sphi 0, %s95
      %s97 = sphi 0, %s95
      %s98 = sphi 0, %s97
      %s112 = sphi 0, %s98
      %s116 = sphi 0, %s116
      %s118 = sphi 0, %s116
      %s119 = sphi 0, %s118
      %s133 = sphi 0, %s119
      %s137 = sphi 0, %s137
      %s139 = sphi 0, %s137
      %s140 = sphi 0, %s139
      %s154 = sphi 0, %s140
      %s158 = sphi 0, %s158
      %s160 = sphi 0, %s158
      %s161 = sphi 0, %s160
      %s175 = sphi 0, %s161
      %s179 = sphi 0, %s179
      %s181 = sphi 0, %s179
      %s182 = sphi 0, %s181
      %s196 = sphi 0, %s182
      %s200 = sphi 0, %s200
      %s202 = sphi 0, %s200
      %s203 = sphi 0, %s202
      %s217 = sphi 0, %s203
      %s221 = sphi 0, %s221
      %s223 = sphi 0, %s221
      %s224 = sphi 0, %s223
      %s238 = sphi 0, %s224
      %s242 = sphi 0, %s242
      %s244 = sphi 0, %s242
      %s245 = sphi 0, %s244
      %s259 = sphi 0, %s245
      %s265 = sphi 0, %s267
      %s268 = sphi 0, %s265
      %s269 = sphi 0, %s268
      %s285 = sphi 0, %s269
    $region4: #{_lambda_.6} parent=1 // loop_header_branch
      %22 = sbr.rel (%p20) target = $region8
    $region5: #{_lambda_.6} parent=1 // loop_body
      %s24 = ssub.s32 %s19, 1
      %s25 = ssub.s32 %s19, 2
      %s26 = sadd.s32 %s19, 1
      %s27 = ssub.s32 %s19, %s26
      %p28 = scmp.eq.s32.totalorder %s27, 0
      %s30 = sadd.s32 %s29, 1
      %s31 = scalar_select %p28, %s29, %s30
      %p34 = pneg %p28
      %p35 = scmp.eq.s32.totalorder %s19, 1
      %p36 = por %p34, %p35
      %p37 = scmp.ne.s32.totalorder %s29, %s32
      %p38 = scmp.eq.s32.totalorder %s19, 0
      %p39 = por %p37, %p38
      %p40 = scmp.ne.s32.totalorder %s29, %s32
      %p41 = scmp.eq.s32.totalorder %s24, 1
      %p42 = por %p40, %p41
      %p43 = scmp.ne.s32.totalorder %s32, %s33
      %p44 = scmp.eq.s32.totalorder %s24, 0
      %p45 = por %p43, %p44
      %p46 = scmp.ne.s32.totalorder %s32, %s33
      %p47 = scmp.eq.s32.totalorder %s25, 1
      %p48 = por %p46, %p47
      %p50 = scmp.ne.s32.totalorder %s33, %s49
      %p51 = scmp.eq.s32.totalorder %s25, 0
      %p52 = por %p50, %p51
      %s54 = sadd.s32 %s53, 1
      %p57 = scmp.eq.s32.totalorder %s19, 1
      %p58 = scmp.ne.s32.totalorder %s53, %s55
      %p59 = scmp.eq.s32.totalorder %s19, 0
      %p60 = por %p58, %p59
      %p61 = scmp.ne.s32.totalorder %s53, %s55
      %p62 = scmp.eq.s32.totalorder %s24, 1
      %p63 = por %p61, %p62
      %p64 = scmp.ne.s32.totalorder %s55, %s56
      %p65 = scmp.eq.s32.totalorder %s24, 0
      %p66 = por %p64, %p65
      %p67 = scmp.ne.s32.totalorder %s55, %s56
      %p68 = scmp.eq.s32.totalorder %s25, 1
      %p69 = por %p67, %p68
      %p71 = scmp.ne.s32.totalorder %s56, %s70
      %p72 = scmp.eq.s32.totalorder %s25, 0
      %p73 = por %p71, %p72
      %s75 = sadd.s32 %s74, 1
      %p78 = scmp.eq.s32.totalorder %s19, 1
      %p79 = scmp.ne.s32.totalorder %s74, %s76
      %p80 = scmp.eq.s32.totalorder %s19, 0
      %p81 = por %p79, %p80
      %p82 = scmp.ne.s32.totalorder %s74, %s76
      %p83 = scmp.eq.s32.totalorder %s24, 1
      %p84 = por %p82, %p83
      %p85 = scmp.ne.s32.totalorder %s76, %s77
      %p86 = scmp.eq.s32.totalorder %s24, 0
      %p87 = por %p85, %p86
      %p88 = scmp.ne.s32.totalorder %s76, %s77
      %p89 = scmp.eq.s32.totalorder %s25, 1
      %p90 = por %p88, %p89
      %p92 = scmp.ne.s32.totalorder %s77, %s91
      %p93 = scmp.eq.s32.totalorder %s25, 0
      %p94 = por %p92, %p93
      %s96 = sadd.s32 %s95, 1
      %p99 = scmp.eq.s32.totalorder %s19, 1
      %p100 = scmp.ne.s32.totalorder %s95, %s97
      %p101 = scmp.eq.s32.totalorder %s19, 0
      %p102 = por %p100, %p101
      %p103 = scmp.ne.s32.totalorder %s95, %s97
      %p104 = scmp.eq.s32.totalorder %s24, 1
      %p105 = por %p103, %p104
      %p106 = scmp.ne.s32.totalorder %s97, %s98
      %p107 = scmp.eq.s32.totalorder %s24, 0
      %p108 = por %p106, %p107
      %p109 = scmp.ne.s32.totalorder %s97, %s98
      %p110 = scmp.eq.s32.totalorder %s25, 1
      %p111 = por %p109, %p110
      %p113 = scmp.ne.s32.totalorder %s98, %s112
      %p114 = scmp.eq.s32.totalorder %s25, 0
      %p115 = por %p113, %p114
      %s117 = sadd.s32 %s116, 1
      %p120 = scmp.eq.s32.totalorder %s19, 1
      %p121 = scmp.ne.s32.totalorder %s116, %s118
      %p122 = scmp.eq.s32.totalorder %s19, 0
      %p123 = por %p121, %p122
      %p124 = scmp.ne.s32.totalorder %s116, %s118
      %p125 = scmp.eq.s32.totalorder %s24, 1
      %p126 = por %p124, %p125
      %p127 = scmp.ne.s32.totalorder %s118, %s119
      %p128 = scmp.eq.s32.totalorder %s24, 0
      %p129 = por %p127, %p128
      %p130 = scmp.ne.s32.totalorder %s118, %s119
      %p131 = scmp.eq.s32.totalorder %s25, 1
      %p132 = por %p130, %p131
      %p134 = scmp.ne.s32.totalorder %s119, %s133
      %p135 = scmp.eq.s32.totalorder %s25, 0
      %p136 = por %p134, %p135
      %s138 = sadd.s32 %s137, 1
      %p141 = scmp.eq.s32.totalorder %s19, 1
      %p142 = scmp.ne.s32.totalorder %s137, %s139
      %p143 = scmp.eq.s32.totalorder %s19, 0
      %p144 = por %p142, %p143
      %p145 = scmp.ne.s32.totalorder %s137, %s139
      %p146 = scmp.eq.s32.totalorder %s24, 1
      %p147 = por %p145, %p146
      %p148 = scmp.ne.s32.totalorder %s139, %s140
      %p149 = scmp.eq.s32.totalorder %s24, 0
      %p150 = por %p148, %p149
      %p151 = scmp.ne.s32.totalorder %s139, %s140
      %p152 = scmp.eq.s32.totalorder %s25, 1
      %p153 = por %p151, %p152
      %p155 = scmp.ne.s32.totalorder %s140, %s154
      %p156 = scmp.eq.s32.totalorder %s25, 0
      %p157 = por %p155, %p156
      %s159 = sadd.s32 %s158, 1
      %p162 = scmp.eq.s32.totalorder %s19, 1
      %p163 = scmp.ne.s32.totalorder %s158, %s160
      %p164 = scmp.eq.s32.totalorder %s19, 0
      %p165 = por %p163, %p164
      %p166 = scmp.ne.s32.totalorder %s158, %s160
      %p167 = scmp.eq.s32.totalorder %s24, 1
      %p168 = por %p166, %p167
      %p169 = scmp.ne.s32.totalorder %s160, %s161
      %p170 = scmp.eq.s32.totalorder %s24, 0
      %p171 = por %p169, %p170
      %p172 = scmp.ne.s32.totalorder %s160, %s161
      %p173 = scmp.eq.s32.totalorder %s25, 1
      %p174 = por %p172, %p173
      %p176 = scmp.ne.s32.totalorder %s161, %s175
      %p177 = scmp.eq.s32.totalorder %s25, 0
      %p178 = por %p176, %p177
      %s180 = sadd.s32 %s179, 1
      %p183 = scmp.eq.s32.totalorder %s19, 1
      %p184 = scmp.ne.s32.totalorder %s179, %s181
      %p185 = scmp.eq.s32.totalorder %s19, 0
      %p186 = por %p184, %p185
      %p187 = scmp.ne.s32.totalorder %s179, %s181
      %p188 = scmp.eq.s32.totalorder %s24, 1
      %p189 = por %p187, %p188
      %p190 = scmp.ne.s32.totalorder %s181, %s182
      %p191 = scmp.eq.s32.totalorder %s24, 0
      %p192 = por %p190, %p191
      %p193 = scmp.ne.s32.totalorder %s181, %s182
      %p194 = scmp.eq.s32.totalorder %s25, 1
      %p195 = por %p193, %p194
      %p197 = scmp.ne.s32.totalorder %s182, %s196
      %p198 = scmp.eq.s32.totalorder %s25, 0
      %p199 = por %p197, %p198
      %s201 = sadd.s32 %s200, 1
      %p204 = scmp.eq.s32.totalorder %s19, 1
      %p205 = scmp.ne.s32.totalorder %s200, %s202
      %p206 = scmp.eq.s32.totalorder %s19, 0
      %p207 = por %p205, %p206
      %p208 = scmp.ne.s32.totalorder %s200, %s202
      %p209 = scmp.eq.s32.totalorder %s24, 1
      %p210 = por %p208, %p209
      %p211 = scmp.ne.s32.totalorder %s202, %s203
      %p212 = scmp.eq.s32.totalorder %s24, 0
      %p213 = por %p211, %p212
      %p214 = scmp.ne.s32.totalorder %s202, %s203
      %p215 = scmp.eq.s32.totalorder %s25, 1
      %p216 = por %p214, %p215
      %p218 = scmp.ne.s32.totalorder %s203, %s217
      %p219 = scmp.eq.s32.totalorder %s25, 0
      %p220 = por %p218, %p219
      %s222 = sadd.s32 %s221, 1
      %p225 = scmp.eq.s32.totalorder %s19, 1
      %p226 = scmp.ne.s32.totalorder %s221, %s223
      %p227 = scmp.eq.s32.totalorder %s19, 0
      %p228 = por %p226, %p227
      %p229 = scmp.ne.s32.totalorder %s221, %s223
      %p230 = scmp.eq.s32.totalorder %s24, 1
      %p231 = por %p229, %p230
      %p232 = scmp.ne.s32.totalorder %s223, %s224
      %p233 = scmp.eq.s32.totalorder %s24, 0
      %p234 = por %p232, %p233
      %p235 = scmp.ne.s32.totalorder %s223, %s224
      %p236 = scmp.eq.s32.totalorder %s25, 1
      %p237 = por %p235, %p236
      %p239 = scmp.ne.s32.totalorder %s224, %s238
      %p240 = scmp.eq.s32.totalorder %s25, 0
      %p241 = por %p239, %p240
      %s243 = sadd.s32 %s242, 1
      %p246 = scmp.eq.s32.totalorder %s19, 1
      %p247 = scmp.ne.s32.totalorder %s242, %s244
      %p248 = scmp.eq.s32.totalorder %s19, 0
      %p249 = por %p247, %p248
      %p250 = scmp.ne.s32.totalorder %s242, %s244
      %p251 = scmp.eq.s32.totalorder %s24, 1
      %p252 = por %p250, %p251
      %p253 = scmp.ne.s32.totalorder %s244, %s245
      %p254 = scmp.eq.s32.totalorder %s24, 0
      %p255 = por %p253, %p254
      %p256 = scmp.ne.s32.totalorder %s244, %s245
      %p257 = scmp.eq.s32.totalorder %s25, 1
      %p258 = por %p256, %p257
      %p260 = scmp.ne.s32.totalorder %s245, %s259
      %p261 = scmp.eq.s32.totalorder %s25, 0
      %p262 = por %p260, %p261
      %s263 = ssub.s32 %s19, %s26
      %p264 = scmp.eq.s32.totalorder %s263, 0
      %s266 = sadd.s32 %s265, 1
      %s267 = scalar_select %p264, %s265, %s266
      %p270 = pneg %p264
      %p271 = scmp.eq.s32.totalorder %s19, 1
      %p272 = por %p270, %p271
      %p273 = scmp.ne.s32.totalorder %s265, %s268
      %p274 = scmp.eq.s32.totalorder %s19, 0
      %p275 = por %p273, %p274
      %p276 = scmp.ne.s32.totalorder %s265, %s268
      %p277 = scmp.eq.s32.totalorder %s24, 1
      %p278 = por %p276, %p277
      %p279 = scmp.ne.s32.totalorder %s268, %s269
      %p280 = scmp.eq.s32.totalorder %s24, 0
      %p281 = por %p279, %p280
      %p282 = scmp.ne.s32.totalorder %s268, %s269
      %p283 = scmp.eq.s32.totalorder %s25, 1
      %p284 = por %p282, %p283
      %p286 = scmp.ne.s32.totalorder %s269, %s285
      %p287 = scmp.eq.s32.totalorder %s25, 0
      %p288 = por %p286, %p287
      %p289 = scmp.le.s32.totalorder 1, %s19
      %p290 = scmp.lt.s32.totalorder %s19, 3
      %p291 = pnand %p289, %p290
      %p292 = pneg %p291
      // Predicated region
      $region9: #{_lambda_.6} parent=5 // pred_check
        _
      $region10: #{_lambda_.6} parent=5 // pred_check_branch
        %294 = sbr.rel (%p291) target = $region12
      $region11: #{_lambda_.6} parent=5 // pred_region
        %s295 = ssub.s32 %s19, 1
        // Predicated region
        $region13: #{_lambda_.6} parent=11 // pred_check
          %p296 = pneg %p66
        $region14: #{_lambda_.6} parent=11 // pred_check_branch
          %298 = sbr.rel (%p296) target = $region16
        $region15: #{_lambda_.6} parent=11 // pred_region
          _
        $region16: #{_lambda_.6} parent=11 // pred_fallthru
          _
        // Predicated region
        $region17: #{_lambda_.6} parent=11 // pred_check
          %p299 = pneg %p87
        $region18: #{_lambda_.6} parent=11 // pred_check_branch
          %301 = sbr.rel (%p299) target = $region20
        $region19: #{_lambda_.6} parent=11 // pred_region
          _
        $region20: #{_lambda_.6} parent=11 // pred_fallthru
          _
        // Predicated region
        $region21: #{_lambda_.6} parent=11 // pred_check
          %p302 = pneg %p108
        $region22: #{_lambda_.6} parent=11 // pred_check_branch
          %304 = sbr.rel (%p302) target = $region24
        $region23: #{_lambda_.6} parent=11 // pred_region
          %s306 = ssub.s32 16, 16
          %307 = vsyncadd [#allocation4], %s306
          %s309 = sshll.u32 %s3, 4
          %s310 = int_to_ptr.vmem [resolvable:$true] %s309
          %312 = dma.vmem_to_smem %s310, 16, [#allocation3], [#allocation4]
        $region24: #{_lambda_.6} parent=11 // pred_fallthru
          _
        // Predicated region
        $region25: #{_lambda_.6} parent=11 // pred_check
          %p313 = pneg %p129
        $region26: #{_lambda_.6} parent=11 // pred_check_branch
          %315 = sbr.rel (%p313) target = $region28
        $region27: #{_lambda_.6} parent=11 // pred_region
          %s317 = ssub.s32 16, 16
          %318 = vsyncadd [#allocation6], %s317
          %s320 = sshll.u32 %s4, 4
          %s321 = int_to_ptr.vmem [resolvable:$true] %s320
          %323 = dma.vmem_to_smem %s321, 16, [#allocation5], [#allocation6]
        $region28: #{_lambda_.6} parent=11 // pred_fallthru
          _
        // Predicated region
        $region29: #{_lambda_.6} parent=11 // pred_check
          %p324 = pneg %p150
        $region30: #{_lambda_.6} parent=11 // pred_check_branch
          %326 = sbr.rel (%p324) target = $region32
        $region31: #{_lambda_.6} parent=11 // pred_region
          _
        $region32: #{_lambda_.6} parent=11 // pred_fallthru
          _
        // Predicated region
        $region33: #{_lambda_.6} parent=11 // pred_check
          %p327 = pneg %p171
        $region34: #{_lambda_.6} parent=11 // pred_check_branch
          %329 = sbr.rel (%p327) target = $region36
        $region35: #{_lambda_.6} parent=11 // pred_region
          _
        $region36: #{_lambda_.6} parent=11 // pred_fallthru
          _
        // Predicated region
        $region37: #{_lambda_.6} parent=11 // pred_check
          %p330 = pneg %p192
        $region38: #{_lambda_.6} parent=11 // pred_check_branch
          %332 = sbr.rel (%p330) target = $region40
        $region39: #{_lambda_.6} parent=11 // pred_region
          _
        $region40: #{_lambda_.6} parent=11 // pred_fallthru
          _
        // Predicated region
        $region41: #{_lambda_.6} parent=11 // pred_check
          %p333 = pneg %p213
        $region42: #{_lambda_.6} parent=11 // pred_check_branch
          %335 = sbr.rel (%p333) target = $region44
        $region43: #{_lambda_.6} parent=11 // pred_region
          _
        $region44: #{_lambda_.6} parent=11 // pred_fallthru
          _
        // Predicated region
        $region45: #{_lambda_.6} parent=11 // pred_check
          %p336 = pneg %p234
        $region46: #{_lambda_.6} parent=11 // pred_check_branch
          %338 = sbr.rel (%p336) target = $region48
        $region47: #{_lambda_.6} parent=11 // pred_region
          _
        $region48: #{_lambda_.6} parent=11 // pred_fallthru
          _
        // Predicated region
        $region49: #{_lambda_.6} parent=11 // pred_check
          %p339 = pneg %p255
        $region50: #{_lambda_.6} parent=11 // pred_check_branch
          %341 = sbr.rel (%p339) target = $region52
        $region51: #{_lambda_.6} parent=11 // pred_region
          _
        $region52: #{_lambda_.6} parent=11 // pred_fallthru
          _
      $region12: #{_lambda_.6} parent=5 // pred_fallthru
        _
      %p342 = scmp.lt.s32.totalorder %s19, 2
      // Predicated region
      $region53: #{_lambda_.6} parent=5 // pred_check
        %p343 = pneg %p342
      $region54: #{_lambda_.6} parent=5 // pred_check_branch
        %345 = sbr.rel (%p343) target = $region56
      $region55: #{_lambda_.6} parent=5 // pred_region
        // Predicated region
        $region57: #{_lambda_.6} parent=55 // pred_check
          %p346 = pneg %p39
        $region58: #{_lambda_.6} parent=55 // pred_check_branch
          %348 = sbr.rel (%p346) target = $region60
        $region59: #{_lambda_.6} parent=55 // pred_region
          %s349 = smul.u32 4, %s19
          %p350 = scmp.lt.s32.totalorder %s349, 7
          %s351 = scalar_select %p350, %s349, 7
          %s352 = smul.addr %s351, 2
          %s353 = smul.addr %s352, 8
          %s354 = scalar_lea.vmem %s0, %s353
          %s355 = smul.u32 4, %s19
        $region60: #{_lambda_.6} parent=55 // pred_fallthru
          _
      $region56: #{_lambda_.6} parent=5 // pred_fallthru
        _
      %p356 = scmp.le.s32.totalorder 1, %s19
      %p357 = scmp.lt.s32.totalorder %s19, 3
      %p358 = pnand %p356, %p357
      %p359 = pneg %p358
      // Predicated region
      $region61: #{_lambda_.6} parent=5 // pred_check
        _
      $region62: #{_lambda_.6} parent=5 // pred_check_branch
        %361 = sbr.rel (%p358) target = $region64
      $region63: #{_lambda_.6} parent=5 // pred_region
        %s362 = ssub.s32 %s19, 1
        // Predicated region
        $region65: #{_lambda_.6} parent=63 // pred_check
          %p363 = pneg %p108
        $region66: #{_lambda_.6} parent=63 // pred_check_branch
          %365 = sbr.rel (%p363) target = $region68
        $region67: #{_lambda_.6} parent=63 // pred_region
          %366 = dma.done [#allocation4], 16
        $region68: #{_lambda_.6} parent=63 // pred_fallthru
          _
        // Predicated region
        $region69: #{_lambda_.6} parent=63 // pred_check
          %p367 = pneg %p129
        $region70: #{_lambda_.6} parent=63 // pred_check_branch
          %369 = sbr.rel (%p367) target = $region72
        $region71: #{_lambda_.6} parent=63 // pred_region
          %370 = dma.done [#allocation6], 16
        $region72: #{_lambda_.6} parent=63 // pred_fallthru
          _
        %371 = sfence
        %s372 = smul.u32 4, %s24
        %p373 = scmp.lt.s32.totalorder %s372, 7
        %s374 = scalar_select %p373, %s372, 7
        %s375 = smul.addr %s374, 2
        %s376 = smul.addr %s375, 8
        %s377 = scalar_lea.vmem %s0, %s376
        %p378 = pneg %p45
        %p379 = pneg %p42
        %p380 = pneg %p66
        %p381 = pneg %p63
        %p382 = pneg %p87
        %p383 = pneg %p84
        %p384 = pneg %p108
        %p385 = pneg %p105
        %p386 = pneg %p129
        %p387 = pneg %p126
        %p388 = pneg %p150
        %p389 = pneg %p147
        %p390 = pneg %p171
        %p391 = pneg %p168
        %p392 = pneg %p192
        %p393 = pneg %p189
        %p394 = pneg %p213
        %p395 = pneg %p210
        %p396 = pneg %p234
        %p397 = pneg %p231
        %p398 = pneg %p255
        %p399 = pneg %p252
        %p400 = pneg %p281
        %p401 = pneg %p278
        %s402 = smul.u32 4, %s24
        %p403 = scmp.lt.s32.totalorder %s402, 7
        %s404 = scalar_select %p403, %s402, 7
        %s405 = smul.addr %s404, 2
        %s406 = smul.addr %s405, 4
        %s407 = scalar_lea.vmem %s11, %s406
        %s408 = smul.u32 4, %s24
        %p409 = scmp.lt.s32.totalorder %s408, 7
        %s410 = scalar_select %p409, %s408, 7
        %s411 = smul.addr %s410, 2
        %s412 = smul.addr %s411, 8
        %s413 = scalar_lea.vmem %s0, %s412
        %s414 = smul.u32 4, %s24
        %s415 = smul.u32 4, %s24
        %p416 = scmp.lt.s32.totalorder %s415, 7
        %s417 = scalar_select %p416, %s415, 7
        %s418 = smul.addr %s417, 2
        %s419 = smul.addr %s418, 4
        %s420 = scalar_lea.vmem %s11, %s419
        %s421 = smul.u32 4, %s24
        %v423 = vld [vmem:[%s413] sm:$0xff]
        %v424 = vld [vmem:[%s413 + $0x8] sm:$0xff]
        %v425 = vld [vmem:[%s413 + $0x10] sm:$0xff]
        %v426 = vld [vmem:[%s413 + $0x18] sm:$0xff]
        %v427 = vld [vmem:[%s413 + $0x20] sm:$0xff]
        %v428 = vld [vmem:[%s413 + $0x28] sm:$0xff]
        %v429 = vld [vmem:[%s413 + $0x30] sm:$0xff]
        %v430 = vld [vmem:[%s413 + $0x38] sm:$0xff]
        %vm431 = vcmask 261120
        %v432 = vsel %vm431, %v423, 0.0
        %433 = vadd.xlane.f32.xlu0 %v432
        %v434 = vpop.xlane.xlu0 %433
        %v435 = vsel %vm431, %v424, 0.0
        %436 = vadd.xlane.f32.xlu0 %v435
        %v437 = vpop.xlane.xlu0 %436
        %v438 = vsel %vm431, %v425, 0.0
        %439 = vadd.xlane.f32.xlu0 %v438
        %v440 = vpop.xlane.xlu0 %439
        %v441 = vsel %vm431, %v426, 0.0
        %442 = vadd.xlane.f32.xlu0 %v441
        %v443 = vpop.xlane.xlu0 %442
        %v444 = vsel %vm431, %v427, 0.0
        %445 = vadd.xlane.f32.xlu0 %v444
        %v446 = vpop.xlane.xlu0 %445
        %v447 = vsel %vm431, %v428, 0.0
        %448 = vadd.xlane.f32.xlu0 %v447
        %v449 = vpop.xlane.xlu0 %448
        %v450 = vsel %vm431, %v429, 0.0
        %451 = vadd.xlane.f32.xlu0 %v450
        %v452 = vpop.xlane.xlu0 %451
        %v453 = vsel %vm431, %v430, 0.0
        %454 = vadd.xlane.f32.xlu0 %v453
        %v455 = vpop.xlane.xlu0 %454
        %v456 = vrcp.pop 32.0
        %v457 = vmul.f32 %v434, %v456
        %v458 = vmul.f32 %v437, %v456
        %v459 = vmul.f32 %v440, %v456
        %v460 = vmul.f32 %v443, %v456
        %v461 = vmul.f32 %v446, %v456
        %v462 = vmul.f32 %v449, %v456
        %v463 = vmul.f32 %v452, %v456
        %v464 = vmul.f32 %v455, %v456
        %v465 = vsub.f32 %v423, %v457
        %v466 = vsub.f32 %v424, %v458
        %v467 = vsub.f32 %v425, %v459
        %v468 = vsub.f32 %v426, %v460
        %v469 = vsub.f32 %v427, %v461
        %v470 = vsub.f32 %v428, %v462
        %v471 = vsub.f32 %v429, %v463
        %v472 = vsub.f32 %v430, %v464
        %v473 = vmul.f32 %v465, %v465
        %v474 = vmul.f32 %v466, %v466
        %v475 = vmul.f32 %v467, %v467
        %v476 = vmul.f32 %v468, %v468
        %v477 = vmul.f32 %v469, %v469
        %v478 = vmul.f32 %v470, %v470
        %v479 = vmul.f32 %v471, %v471
        %v480 = vmul.f32 %v472, %v472
        %v481 = vsel %vm431, %v473, 0.0
        %482 = vadd.xlane.f32.xlu0 %v481
        %v483 = vpop.xlane.xlu0 %482
        %v484 = vsel %vm431, %v474, 0.0
        %485 = vadd.xlane.f32.xlu0 %v484
        %v486 = vpop.xlane.xlu0 %485
        %v487 = vsel %vm431, %v475, 0.0
        %488 = vadd.xlane.f32.xlu0 %v487
        %v489 = vpop.xlane.xlu0 %488
        %v490 = vsel %vm431, %v476, 0.0
        %491 = vadd.xlane.f32.xlu0 %v490
        %v492 = vpop.xlane.xlu0 %491
        %v493 = vsel %vm431, %v477, 0.0
        %494 = vadd.xlane.f32.xlu0 %v493
        %v495 = vpop.xlane.xlu0 %494
        %v496 = vsel %vm431, %v478, 0.0
        %497 = vadd.xlane.f32.xlu0 %v496
        %v498 = vpop.xlane.xlu0 %497
        %v499 = vsel %vm431, %v479, 0.0
        %500 = vadd.xlane.f32.xlu0 %v499
        %v501 = vpop.xlane.xlu0 %500
        %v502 = vsel %vm431, %v480, 0.0
        %503 = vadd.xlane.f32.xlu0 %v502
        %v504 = vpop.xlane.xlu0 %503
        %v505 = vmul.f32 %v483, %v456
        %v506 = vmul.f32 %v486, %v456
        %v507 = vmul.f32 %v489, %v456
        %v508 = vmul.f32 %v492, %v456
        %v509 = vmul.f32 %v495, %v456
        %v510 = vmul.f32 %v498, %v456
        %v511 = vmul.f32 %v501, %v456
        %v512 = vmul.f32 %v504, %v456
        %v513 = vadd.f32 %v505, 1e-05
        %v514 = vadd.f32 %v506, 1e-05
        %v515 = vadd.f32 %v507, 1e-05
        %v516 = vadd.f32 %v508, 1e-05
        %v517 = vadd.f32 %v509, 1e-05
        %v518 = vadd.f32 %v510, 1e-05
        %v519 = vadd.f32 %v511, 1e-05
        %v520 = vadd.f32 %v512, 1e-05
        %v521 = vrsqrt.pop %v513
        %v522 = vrsqrt.pop %v514
        %v523 = vrsqrt.pop %v515
        %v524 = vrsqrt.pop %v516
        %v525 = vrsqrt.pop %v517
        %v526 = vrsqrt.pop %v518
        %v527 = vrsqrt.pop %v519
        %v528 = vrsqrt.pop %v520
        %v529 = vmul.f32 %v465, %v521
        %v530 = vmul.f32 %v466, %v522
        %v531 = vmul.f32 %v467, %v523
        %v532 = vmul.f32 %v468, %v524
        %v533 = vmul.f32 %v469, %v525
        %v534 = vmul.f32 %v470, %v526
        %v535 = vmul.f32 %v471, %v527
        %v536 = vmul.f32 %v472, %v528
        %v537 = vld [vmem:[%s5] sm:$0x1]
        %v539 = vlaneseq
        %v540 = vshrl.u32 %v539, 7
        %v541 = vsub.s32 0, %v540
        %v542 = vrot.slane %v537, %v541
        %v544 = vmul.f32 %v529, %v542
        %v545 = vmul.f32 %v530, %v542
        %v546 = vmul.f32 %v531, %v542
        %v547 = vmul.f32 %v532, %v542
        %v548 = vmul.f32 %v533, %v542
        %v549 = vmul.f32 %v534, %v542
        %v550 = vmul.f32 %v535, %v542
        %v551 = vmul.f32 %v536, %v542
        %v552 = vld [vmem:[%s6] sm:$0x1]
        %v554 = vlaneseq
        %v555 = vshrl.u32 %v554, 7
        %v556 = vsub.s32 0, %v555
        %v557 = vrot.slane %v552, %v556
        %v559 = vadd.f32 %v544, %v557
        %v560 = vadd.f32 %v545, %v557
        %v561 = vadd.f32 %v546, %v557
        %v562 = vadd.f32 %v547, %v557
        %v563 = vadd.f32 %v548, %v557
        %v564 = vadd.f32 %v549, %v557
        %v565 = vadd.f32 %v550, %v557
        %v566 = vadd.f32 %v551, %v557
        %v567 = vpack.c.bf16 %v560, %v559
        %v568 = vpack.c.bf16 %v562, %v561
        %v569 = vpack.c.bf16 %v564, %v563
        %v570 = vpack.c.bf16 %v566, %v565
        %v571 = vld [vmem:[%s7] sm:$0xf]
        %v572 = vld [vmem:[%s7 + $0x4] sm:$0xf]
        %v573 = vld [vmem:[%s7 + $0x8] sm:$0xf]
        %v574 = vld [vmem:[%s7 + $0xc] sm:$0xf]
        %v575 = vld [vmem:[%s8] sm:$0x1]
        %v577 = vlaneseq
        %v578 = vshrl.u32 %v577, 7
        %v579 = vsub.s32 0, %v578
        %v580 = vrot.slane %v575, %v579
        %v586 = vunpack.c.l.b16 %v571
        %v587 = vunpack.c.l.b16 %v572
        %v588 = vunpack.c.l.b16 %v573
        %v589 = vunpack.c.l.b16 %v574
        %v590 = vpack.c.b16 %v587, %v586
        %v591 = vpack.c.b16 %v589, %v588
        %v595 = vsel %vm431, %v567, 0
        %v598 = vsel %vm431, %v568, 0
        %v601 = vsel %vm431, %v569, 0
        %v604 = vsel %vm431, %v570, 0
        %606 = vmatprep.subr.bf16.mxu0 0
        %607 = vmatpush1.bf16.msra.mxu0 %v590
        %608 = vmatprep.subr.bf16.mxu0 0
        %609 = vmatpush1.bf16.msra.mxu0 %v591
        %610 = vmatprep.subr.bf16.mxu0 0
        %611 = vmatpush1.bf16.msra.mxu0 0
        %612 = vmatprep.subr.bf16.mxu0 0
        %613 = vmatpush1.bf16.msra.mxu0 0
        %614 = vmatprep.subr.bf16.mxu0 0
        %615 = vmatpush1.bf16.msra.mxu0 0
        %616 = vmatprep.subr.bf16.mxu0 0
        %617 = vmatpush1.bf16.msra.mxu0 0
        %618 = vmatprep.subr.bf16.mxu0 0
        %619 = vmatpush1.bf16.msra.mxu0 0
        %620 = vmatprep.subr.bf16.mxu0 0
        %621 = vmatpush1.bf16.msra.mxu0 0
        %622 = vmatprep.subr.bf16.mxu0 0
        %623 = vmatpush1.bf16.msra.mxu0 0
        %624 = vmatprep.subr.bf16.mxu0 0
        %625 = vmatpush1.bf16.msra.mxu0 0
        %626 = vmatprep.subr.bf16.mxu0 0
        %627 = vmatpush1.bf16.msra.mxu0 0
        %628 = vmatprep.subr.bf16.mxu0 0
        %629 = vmatpush1.bf16.msra.mxu0 0
        %630 = vmatprep.subr.bf16.mxu0 0
        %631 = vmatpush1.bf16.msra.mxu0 0
        %632 = vmatprep.subr.bf16.mxu0 0
        %633 = vmatpush1.bf16.msra.mxu0 0
        %634 = vmatprep.subr.bf16.mxu0 0
        %635 = vmatpush1.bf16.msra.mxu0 0
        %636 = vmatprep.subr.bf16.mxu0 0
        %637 = vmatpush1.bf16.msra.mxu0 0
        %638 = vmatprep.mubr.bf16.mxu0 0
        %639 = vmatmul.mubr.bf16.gmra.mrb[0].mxu0 %v595
        %v640 = vpop.f32.mrb[0].mxu0
        %v641 = vadd.f32 %v580, %v640
        %v642 = vpop.f32.mrb[0].mxu0
        %v643 = vpop.f32.mrb[0].mxu0
        %v644 = vadd.f32 %v580, %v643
        %v645 = vpop.f32.mrb[0].mxu0
        %646 = vmatprep.mubr.bf16.mxu0 0
        %647 = vmatmul.mubr.bf16.gmra.mrb[0].mxu0 %v598
        %v648 = vpop.f32.mrb[0].mxu0
        %v649 = vadd.f32 %v580, %v648
        %v650 = vpop.f32.mrb[0].mxu0
        %v651 = vpop.f32.mrb[0].mxu0
        %v652 = vadd.f32 %v580, %v651
        %v653 = vpop.f32.mrb[0].mxu0
        %654 = vmatprep.mubr.bf16.mxu0 0
        %655 = vmatmul.mubr.bf16.gmra.mrb[0].mxu0 %v601
        %v656 = vpop.f32.mrb[0].mxu0
        %v657 = vadd.f32 %v580, %v656
        %v658 = vpop.f32.mrb[0].mxu0
        %v659 = vpop.f32.mrb[0].mxu0
        %v660 = vadd.f32 %v580, %v659
        %v661 = vpop.f32.mrb[0].mxu0
        %662 = vmatprep.mubr.bf16.mxu0 0
        %663 = vmatmul.mubr.bf16.gmra.mrb[0].mxu0 %v604
        %v664 = vpop.f32.mrb[0].mxu0
        %v665 = vadd.f32 %v580, %v664
        %v666 = vpop.f32.mrb[0].mxu0
        %v667 = vpop.f32.mrb[0].mxu0
        %v668 = vadd.f32 %v580, %v667
        %v669 = vpop.f32.mrb[0].mxu0
        %670 = vdwg.mxu0
        %v671 = vld [vmem:[%s1] sm:$0xff]
        %v672 = vld [vmem:[%s1 + $0x8] sm:$0xff]
        %v673 = vld [vmem:[%s1 + $0x10] sm:$0xff]
        %v674 = vld [vmem:[%s1 + $0x18] sm:$0xff]
        %v675 = vld [vmem:[%s1 + $0x20] sm:$0xff]
        %v676 = vld [vmem:[%s1 + $0x28] sm:$0xff]
        %v677 = vld [vmem:[%s1 + $0x30] sm:$0xff]
        %v678 = vld [vmem:[%s1 + $0x38] sm:$0xff]
        %v679 = vld [vmem:[%s2] sm:$0xff]
        %v680 = vld [vmem:[%s2 + $0x8] sm:$0xff]
        %v681 = vld [vmem:[%s2 + $0x10] sm:$0xff]
        %v682 = vld [vmem:[%s2 + $0x18] sm:$0xff]
        %v683 = vld [vmem:[%s2 + $0x20] sm:$0xff]
        %v684 = vld [vmem:[%s2 + $0x28] sm:$0xff]
        %v685 = vld [vmem:[%s2 + $0x30] sm:$0xff]
        %v686 = vld [vmem:[%s2 + $0x38] sm:$0xff]
        %v687 = vmul.f32 %v641, 0.35355338
        %v688 = vmul.f32 %v644, 0.35355338
        %v689 = vmul.f32 %v649, 0.35355338
        %v690 = vmul.f32 %v652, 0.35355338
        %v691 = vmul.f32 %v657, 0.35355338
        %v692 = vmul.f32 %v660, 0.35355338
        %v693 = vmul.f32 %v665, 0.35355338
        %v694 = vmul.f32 %v668, 0.35355338
        %697 = vrot.lane.b32.xlu0 %v641, 96
        %v698 = vpop.permute.xlu0 %697
        %699 = vrot.lane.b32.xlu0 %v644, 96
        %v700 = vpop.permute.xlu0 %699
        %vm701 = vcmask 64512
        %v703 = vsel %vm701, %v687, 0
        %v706 = vsel %vm701, %v688, 0
        %v708 = vsel %vm701, %v698, 0
        %v710 = vsel %vm701, %v700, 0
        %712 = vmatprep.subr.mxu0 0.0
        %713 = vmatpush1.xpose.msra.mxu0 %v708
        %714 = vmatprep.subr.mxu0 0.0
        %715 = vmatpush1.xpose.msra.mxu0 %v710
        %716 = vmatprep.subr.mxu0 0.0
        %717 = vmatpush1.xpose.msra.mxu0 0.0
        %718 = vmatprep.subr.mxu0 0.0
        %719 = vmatpush1.xpose.msra.mxu0 0.0
        %720 = vmatprep.subr.mxu0 0.0
        %721 = vmatpush1.xpose.msra.mxu0 0.0
        %722 = vmatprep.subr.mxu0 0.0
        %723 = vmatpush1.xpose.msra.mxu0 0.0
        %724 = vmatprep.subr.mxu0 0.0
        %725 = vmatpush1.xpose.msra.mxu0 0.0
        %726 = vmatprep.subr.mxu0 0.0
        %727 = vmatpush1.xpose.msra.mxu0 0.0
        %728 = vmatprep.subr.mxu0 0.0
        %729 = vmatpush1.xpose.msra.mxu0 0.0
        %730 = vmatprep.subr.mxu0 0.0
        %731 = vmatpush1.xpose.msra.mxu0 0.0
        %732 = vmatprep.subr.mxu0 0.0
        %733 = vmatpush1.xpose.msra.mxu0 0.0
        %734 = vmatprep.subr.mxu0 0.0
        %735 = vmatpush1.xpose.msra.mxu0 0.0
        %736 = vmatprep.subr.mxu0 0.0
        %737 = vmatpush1.xpose.msra.mxu0 0.0
        %738 = vmatprep.subr.mxu0 0.0
        %739 = vmatpush1.xpose.msra.mxu0 0.0
        %740 = vmatprep.subr.mxu0 0.0
        %741 = vmatpush1.xpose.msra.mxu0 0.0
        %742 = vmatprep.subr.mxu0 0.0
        %743 = vmatpush1.xpose.msra.mxu0 0.0
        %744 = vmatprep.subr.mxu0 0.0
        %745 = vmatpush1.xpose.msra.mxu0 0.0
        %746 = vmatprep.subr.mxu0 0.0
        %747 = vmatpush1.xpose.msra.mxu0 0.0
        %748 = vmatprep.subr.mxu0 0.0
        %749 = vmatpush1.xpose.msra.mxu0 0.0
        %750 = vmatprep.subr.mxu0 0.0
        %751 = vmatpush1.xpose.msra.mxu0 0.0
        %752 = vmatprep.subr.mxu0 0.0
        %753 = vmatpush1.xpose.msra.mxu0 0.0
        %754 = vmatprep.subr.mxu0 0.0
        %755 = vmatpush1.xpose.msra.mxu0 0.0
        %756 = vmatprep.subr.mxu0 0.0
        %757 = vmatpush1.xpose.msra.mxu0 0.0
        %758 = vmatprep.subr.mxu0 0.0
        %759 = vmatpush1.xpose.msra.mxu0 0.0
        %760 = vmatprep.subr.mxu0 0.0
        %761 = vmatpush1.xpose.msra.mxu0 0.0
        %762 = vmatprep.subr.mxu0 0.0
        %763 = vmatpush1.xpose.msra.mxu0 0.0
        %764 = vmatprep.subr.mxu0 0.0
        %765 = vmatpush1.xpose.msra.mxu0 0.0
        %766 = vmatprep.subr.mxu0 0.0
        %767 = vmatpush1.xpose.msra.mxu0 0.0
        %768 = vmatprep.subr.mxu0 0.0
        %769 = vmatpush1.xpose.msra.mxu0 0.0
        %770 = vmatprep.subr.mxu0 0.0
        %771 = vmatpush1.xpose.msra.mxu0 0.0
        %772 = vmatprep.subr.mxu0 0.0
        %773 = vmatpush1.xpose.msra.mxu0 0.0
        %774 = vmatprep.subr.mxu0 0.0
        %775 = vmatpush1.xpose.msra.mxu0 0.0
        %776 = vmatprep.mubr.f32.mxu0 0.0
        %777 = vmatmul.mubr.f32.gmra.mrb[0].mxu0 %v703
        %v778 = vpop.f32.mrb[0].mxu0
        %v779 = vadd.f32 %v671, %v778
        %v780 = vpop.f32.mrb[0].mxu0
        %781 = vmatprep.mubr.f32.mxu0 0.0
        %782 = vmatmul.mubr.f32.gmra.mrb[0].mxu0 %v706
        %v783 = vpop.f32.mrb[0].mxu0
        %v784 = vadd.f32 %v672, %v783
        %v785 = vpop.f32.mrb[0].mxu0
        %786 = vdwg.mxu0
        %789 = vrot.lane.b32.xlu0 %v649, 96
        %v790 = vpop.permute.xlu0 %789
        %791 = vrot.lane.b32.xlu0 %v652, 96
        %v792 = vpop.permute.xlu0 %791
        %v794 = vsel %vm701, %v689, 0
        %v797 = vsel %vm701, %v690, 0
        %v799 = vsel %vm701, %v790, 0
        %v801 = vsel %vm701, %v792, 0
        %803 = vmatprep.subr.mxu0 0.0
        %804 = vmatpush1.xpose.msra.mxu0 %v799
        %805 = vmatprep.subr.mxu0 0.0
        %806 = vmatpush1.xpose.msra.mxu0 %v801
        %807 = vmatprep.subr.mxu0 0.0
        %808 = vmatpush1.xpose.msra.mxu0 0.0
        %809 = vmatprep.subr.mxu0 0.0
        %810 = vmatpush1.xpose.msra.mxu0 0.0
        %811 = vmatprep.subr.mxu0 0.0
        %812 = vmatpush1.xpose.msra.mxu0 0.0
        %813 = vmatprep.subr.mxu0 0.0
        %814 = vmatpush1.xpose.msra.mxu0 0.0
        %815 = vmatprep.subr.mxu0 0.0
        %816 = vmatpush1.xpose.msra.mxu0 0.0
        %817 = vmatprep.subr.mxu0 0.0
        %818 = vmatpush1.xpose.msra.mxu0 0.0
        %819 = vmatprep.subr.mxu0 0.0
        %820 = vmatpush1.xpose.msra.mxu0 0.0
        %821 = vmatprep.subr.mxu0 0.0
        %822 = vmatpush1.xpose.msra.mxu0 0.0
        %823 = vmatprep.subr.mxu0 0.0
        %824 = vmatpush1.xpose.msra.mxu0 0.0
        %825 = vmatprep.subr.mxu0 0.0
        %826 = vmatpush1.xpose.msra.mxu0 0.0
        %827 = vmatprep.subr.mxu0 0.0
        %828 = vmatpush1.xpose.msra.mxu0 0.0
        %829 = vmatprep.subr.mxu0 0.0
        %830 = vmatpush1.xpose.msra.mxu0 0.0
        %831 = vmatprep.subr.mxu0 0.0
        %832 = vmatpush1.xpose.msra.mxu0 0.0
        %833 = vmatprep.subr.mxu0 0.0
        %834 = vmatpush1.xpose.msra.mxu0 0.0
        %835 = vmatprep.subr.mxu0 0.0
        %836 = vmatpush1.xpose.msra.mxu0 0.0
        %837 = vmatprep.subr.mxu0 0.0
        %838 = vmatpush1.xpose.msra.mxu0 0.0
        %839 = vmatprep.subr.mxu0 0.0
        %840 = vmatpush1.xpose.msra.mxu0 0.0
        %841 = vmatprep.subr.mxu0 0.0
        %842 = vmatpush1.xpose.msra.mxu0 0.0
        %843 = vmatprep.subr.mxu0 0.0
        %844 = vmatpush1.xpose.msra.mxu0 0.0
        %845 = vmatprep.subr.mxu0 0.0
        %846 = vmatpush1.xpose.msra.mxu0 0.0
        %847 = vmatprep.subr.mxu0 0.0
        %848 = vmatpush1.xpose.msra.mxu0 0.0
        %849 = vmatprep.subr.mxu0 0.0
        %850 = vmatpush1.xpose.msra.mxu0 0.0
        %851 = vmatprep.subr.mxu0 0.0
        %852 = vmatpush1.xpose.msra.mxu0 0.0
        %853 = vmatprep.subr.mxu0 0.0
        %854 = vmatpush1.xpose.msra.mxu0 0.0
        %855 = vmatprep.subr.mxu0 0.0
        %856 = vmatpush1.xpose.msra.mxu0 0.0
        %857 = vmatprep.subr.mxu0 0.0
        %858 = vmatpush1.xpose.msra.mxu0 0.0
        %859 = vmatprep.subr.mxu0 0.0
        %860 = vmatpush1.xpose.msra.mxu0 0.0
        %861 = vmatprep.subr.mxu0 0.0
        %862 = vmatpush1.xpose.msra.mxu0 0.0
        %863 = vmatprep.subr.mxu0 0.0
        %864 = vmatpush1.xpose.msra.mxu0 0.0
        %865 = vmatprep.subr.mxu0 0.0
        %866 = vmatpush1.xpose.msra.mxu0 0.0
        %867 = vmatprep.mubr.f32.mxu0 0.0
        %868 = vmatmul.mubr.f32.gmra.mrb[0].mxu0 %v794
        %v869 = vpop.f32.mrb[0].mxu0
        %v870 = vadd.f32 %v671, %v869
        %v871 = vpop.f32.mrb[0].mxu0
        %872 = vmatprep.mubr.f32.mxu0 0.0
        %873 = vmatmul.mubr.f32.gmra.mrb[0].mxu0 %v797
        %v874 = vpop.f32.mrb[0].mxu0
        %v875 = vadd.f32 %v672, %v874
        %v876 = vpop.f32.mrb[0].mxu0
        %877 = vdwg.mxu0
        %880 = vrot.lane.b32.xlu0 %v657, 96
        %v881 = vpop.permute.xlu0 %880
        %882 = vrot.lane.b32.xlu0 %v660, 96
        %v883 = vpop.permute.xlu0 %882
        %v885 = vsel %vm701, %v691, 0
        %v888 = vsel %vm701, %v692, 0
        %v890 = vsel %vm701, %v881, 0
        %v892 = vsel %vm701, %v883, 0
        %894 = vmatprep.subr.mxu0 0.0
        %895 = vmatpush1.xpose.msra.mxu0 %v890
        %896 = vmatprep.subr.mxu0 0.0
        %897 = vmatpush1.xpose.msra.mxu0 %v892
        %898 = vmatprep.subr.mxu0 0.0
        %899 = vmatpush1.xpose.msra.mxu0 0.0
        %900 = vmatprep.subr.mxu0 0.0
        %901 = vmatpush1.xpose.msra.mxu0 0.0
        %902 = vmatprep.subr.mxu0 0.0
        %903 = vmatpush1.xpose.msra.mxu0 0.0
        %904 = vmatprep.subr.mxu0 0.0
        %905 = vmatpush1.xpose.msra.mxu0 0.0
        %906 = vmatprep.subr.mxu0 0.0
        %907 = vmatpush1.xpose.msra.mxu0 0.0
        %908 = vmatprep.subr.mxu0 0.0
        %909 = vmatpush1.xpose.msra.mxu0 0.0
        %910 = vmatprep.subr.mxu0 0.0
        %911 = vmatpush1.xpose.msra.mxu0 0.0
        %912 = vmatprep.subr.mxu0 0.0
        %913 = vmatpush1.xpose.msra.mxu0 0.0
        %914 = vmatprep.subr.mxu0 0.0
        %915 = vmatpush1.xpose.msra.mxu0 0.0
        %916 = vmatprep.subr.mxu0 0.0
        %917 = vmatpush1.xpose.msra.mxu0 0.0
        %918 = vmatprep.subr.mxu0 0.0
        %919 = vmatpush1.xpose.msra.mxu0 0.0
        %920 = vmatprep.subr.mxu0 0.0
        %921 = vmatpush1.xpose.msra.mxu0 0.0
        %922 = vmatprep.subr.mxu0 0.0
        %923 = vmatpush1.xpose.msra.mxu0 0.0
        %924 = vmatprep.subr.mxu0 0.0
        %925 = vmatpush1.xpose.msra.mxu0 0.0
        %926 = vmatprep.subr.mxu0 0.0
        %927 = vmatpush1.xpose.msra.mxu0 0.0
        %928 = vmatprep.subr.mxu0 0.0
        %929 = vmatpush1.xpose.msra.mxu0 0.0
        %930 = vmatprep.subr.mxu0 0.0
        %931 = vmatpush1.xpose.msra.mxu0 0.0
        %932 = vmatprep.subr.mxu0 0.0
        %933 = vmatpush1.xpose.msra.mxu0 0.0
        %934 = vmatprep.subr.mxu0 0.0
        %935 = vmatpush1.xpose.msra.mxu0 0.0
        %936 = vmatprep.subr.mxu0 0.0
        %937 = vmatpush1.xpose.msra.mxu0 0.0
        %938 = vmatprep.subr.mxu0 0.0
        %939 = vmatpush1.xpose.msra.mxu0 0.0
        %940 = vmatprep.subr.mxu0 0.0
        %941 = vmatpush1.xpose.msra.mxu0 0.0
        %942 = vmatprep.subr.mxu0 0.0
        %943 = vmatpush1.xpose.msra.mxu0 0.0
        %944 = vmatprep.subr.mxu0 0.0
        %945 = vmatpush1.xpose.msra.mxu0 0.0
        %946 = vmatprep.subr.mxu0 0.0
        %947 = vmatpush1.xpose.msra.mxu0 0.0
        %948 = vmatprep.subr.mxu0 0.0
        %949 = vmatpush1.xpose.msra.mxu0 0.0
        %950 = vmatprep.subr.mxu0 0.0
        %951 = vmatpush1.xpose.msra.mxu0 0.0
        %952 = vmatprep.subr.mxu0 0.0
        %953 = vmatpush1.xpose.msra.mxu0 0.0
        %954 = vmatprep.subr.mxu0 0.0
        %955 = vmatpush1.xpose.msra.mxu0 0.0
        %956 = vmatprep.subr.mxu0 0.0
        %957 = vmatpush1.xpose.msra.mxu0 0.0
        %958 = vmatprep.mubr.f32.mxu0 0.0
        %959 = vmatmul.mubr.f32.gmra.mrb[0].mxu0 %v885
        %v960 = vpop.f32.mrb[0].mxu0
        %v961 = vadd.f32 %v671, %v960
        %v962 = vpop.f32.mrb[0].mxu0
        %963 = vmatprep.mubr.f32.mxu0 0.0
        %964 = vmatmul.mubr.f32.gmra.mrb[0].mxu0 %v888
        %v965 = vpop.f32.mrb[0].mxu0
        %v966 = vadd.f32 %v672, %v965
        %v967 = vpop.f32.mrb[0].mxu0
        %968 = vdwg.mxu0
        %971 = vrot.lane.b32.xlu0 %v665, 96
        %v972 = vpop.permute.xlu0 %971
        %973 = vrot.lane.b32.xlu0 %v668, 96
        %v974 = vpop.permute.xlu0 %973
        %v976 = vsel %vm701, %v693, 0
        %v979 = vsel %vm701, %v694, 0
        %v981 = vsel %vm701, %v972, 0
        %v983 = vsel %vm701, %v974, 0
        %985 = vmatprep.subr.mxu0 0.0
        %986 = vmatpush1.xpose.msra.mxu0 %v981
        %987 = vmatprep.subr.mxu0 0.0
        %988 = vmatpush1.xpose.msra.mxu0 %v983
        %989 = vmatprep.subr.mxu0 0.0
        %990 = vmatpush1.xpose.msra.mxu0 0.0
        %991 = vmatprep.subr.mxu0 0.0
        %992 = vmatpush1.xpose.msra.mxu0 0.0
        %993 = vmatprep.subr.mxu0 0.0
        %994 = vmatpush1.xpose.msra.mxu0 0.0
        %995 = vmatprep.subr.mxu0 0.0
        %996 = vmatpush1.xpose.msra.mxu0 0.0
        %997 = vmatprep.subr.mxu0 0.0
        %998 = vmatpush1.xpose.msra.mxu0 0.0
        %999 = vmatprep.subr.mxu0 0.0
        %1000 = vmatpush1.xpose.msra.mxu0 0.0
        %1001 = vmatprep.subr.mxu0 0.0
        %1002 = vmatpush1.xpose.msra.mxu0 0.0
        %1003 = vmatprep.subr.mxu0 0.0
        %1004 = vmatpush1.xpose.msra.mxu0 0.0
        %1005 = vmatprep.subr.mxu0 0.0
        %1006 = vmatpush1.xpose.msra.mxu0 0.0
        %1007 = vmatprep.subr.mxu0 0.0
        %1008 = vmatpush1.xpose.msra.mxu0 0.0
        %1009 = vmatprep.subr.mxu0 0.0
        %1010 = vmatpush1.xpose.msra.mxu0 0.0
        %1011 = vmatprep.subr.mxu0 0.0
        %1012 = vmatpush1.xpose.msra.mxu0 0.0
        %1013 = vmatprep.subr.mxu0 0.0
        %1014 = vmatpush1.xpose.msra.mxu0 0.0
        %1015 = vmatprep.subr.mxu0 0.0
        %1016 = vmatpush1.xpose.msra.mxu0 0.0
        %1017 = vmatprep.subr.mxu0 0.0
        %1018 = vmatpush1.xpose.msra.mxu0 0.0
        %1019 = vmatprep.subr.mxu0 0.0
        %1020 = vmatpush1.xpose.msra.mxu0 0.0
        %1021 = vmatprep.subr.mxu0 0.0
        %1022 = vmatpush1.xpose.msra.mxu0 0.0
        %1023 = vmatprep.subr.mxu0 0.0
        %1024 = vmatpush1.xpose.msra.mxu0 0.0
        %1025 = vmatprep.subr.mxu0 0.0
        %1026 = vmatpush1.xpose.msra.mxu0 0.0
        %1027 = vmatprep.subr.mxu0 0.0
        %1028 = vmatpush1.xpose.msra.mxu0 0.0
        %1029 = vmatprep.subr.mxu0 0.0
        %1030 = vmatpush1.xpose.msra.mxu0 0.0
        %1031 = vmatprep.subr.mxu0 0.0
        %1032 = vmatpush1.xpose.msra.mxu0 0.0
        %1033 = vmatprep.subr.mxu0 0.0
        %1034 = vmatpush1.xpose.msra.mxu0 0.0
        %1035 = vmatprep.subr.mxu0 0.0
        %1036 = vmatpush1.xpose.msra.mxu0 0.0
        %1037 = vmatprep.subr.mxu0 0.0
        %1038 = vmatpush1.xpose.msra.mxu0 0.0
        %1039 = vmatprep.subr.mxu0 0.0
        %1040 = vmatpush1.xpose.msra.mxu0 0.0
        %1041 = vmatprep.subr.mxu0 0.0
        %1042 = vmatpush1.xpose.msra.mxu0 0.0
        %1043 = vmatprep.subr.mxu0 0.0
        %1044 = vmatpush1.xpose.msra.mxu0 0.0
        %1045 = vmatprep.subr.mxu0 0.0
        %1046 = vmatpush1.xpose.msra.mxu0 0.0
        %1047 = vmatprep.subr.mxu0 0.0
        %1048 = vmatpush1.xpose.msra.mxu0 0.0
        %1049 = vmatprep.mubr.f32.mxu0 0.0
        %1050 = vmatmul.mubr.f32.gmra.mrb[0].mxu0 %v976
        %v1051 = vpop.f32.mrb[0].mxu0
        %v1052 = vadd.f32 %v671, %v1051
        %v1053 = vpop.f32.mrb[0].mxu0
        %1054 = vmatprep.mubr.f32.mxu0 0.0
        %1055 = vmatmul.mubr.f32.gmra.mrb[0].mxu0 %v979
        %v1056 = vpop.f32.mrb[0].mxu0
        %v1057 = vadd.f32 %v672, %v1056
        %v1058 = vpop.f32.mrb[0].mxu0
        %1059 = vdwg.mxu0
        %v1060 = vadd.f32 %v779, %v679
        %v1061 = vadd.f32 %v784, %v680
        %v1062 = vadd.f32 %v870, %v681
        %v1063 = vadd.f32 %v875, %v682
        %v1064 = vadd.f32 %v961, %v683
        %v1065 = vadd.f32 %v966, %v684
        %v1066 = vadd.f32 %v1052, %v685
        %v1067 = vadd.f32 %v1057, %v686
        %vm1068 = vcmask 130048
        %v1069 = vsel %vm1068, %v1060, -inf
        %1070 = vmax.xlane.f32.xlu0 %v1069
        %v1071 = vpop.xlane.xlu0 %1070
        %v1072 = vsel %vm1068, %v1061, -inf
        %1073 = vmax.xlane.f32.xlu0 %v1072
        %v1074 = vpop.xlane.xlu0 %1073
        %v1075 = vsel %vm1068, %v1062, -inf
        %1076 = vmax.xlane.f32.xlu0 %v1075
        %v1077 = vpop.xlane.xlu0 %1076
        %v1078 = vsel %vm1068, %v1063, -inf
        %1079 = vmax.xlane.f32.xlu0 %v1078
        %v1080 = vpop.xlane.xlu0 %1079
        %v1081 = vsel %vm1068, %v1064, -inf
        %1082 = vmax.xlane.f32.xlu0 %v1081
        %v1083 = vpop.xlane.xlu0 %1082
        %v1084 = vsel %vm1068, %v1065, -inf
        %1085 = vmax.xlane.f32.xlu0 %v1084
        %v1086 = vpop.xlane.xlu0 %1085
        %v1087 = vsel %vm1068, %v1066, -inf
        %1088 = vmax.xlane.f32.xlu0 %v1087
        %v1089 = vpop.xlane.xlu0 %1088
        %v1090 = vsel %vm1068, %v1067, -inf
        %1091 = vmax.xlane.f32.xlu0 %v1090
        %v1092 = vpop.xlane.xlu0 %1091
        %v1093 = vsub.f32 %v1060, %v1071
        %v1094 = vsub.f32 %v1061, %v1074
        %v1095 = vsub.f32 %v1062, %v1077
        %v1096 = vsub.f32 %v1063, %v1080
        %v1097 = vsub.f32 %v1064, %v1083
        %v1098 = vsub.f32 %v1065, %v1086
        %v1099 = vsub.f32 %v1066, %v1089
        %v1100 = vsub.f32 %v1067, %v1092
        %v1101 = vmul.f32 %v1093, 1.442695
        %v1102 = vpow.pop %v1101
        %v1103 = vmul.f32 %v1094, 1.442695
        %v1104 = vpow.pop %v1103
        %v1105 = vmul.f32 %v1095, 1.442695
        %v1106 = vpow.pop %v1105
        %v1107 = vmul.f32 %v1096, 1.442695
        %v1108 = vpow.pop %v1107
        %v1109 = vmul.f32 %v1097, 1.442695
        %v1110 = vpow.pop %v1109
        %v1111 = vmul.f32 %v1098, 1.442695
        %v1112 = vpow.pop %v1111
        %v1113 = vmul.f32 %v1099, 1.442695
        %v1114 = vpow.pop %v1113
        %v1115 = vmul.f32 %v1100, 1.442695
        %v1116 = vpow.pop %v1115
        %v1117 = vsel %vm1068, %v1102, 0.0
        %1118 = vadd.xlane.f32.xlu0 %v1117
        %v1119 = vpop.xlane.xlu0 %1118
        %v1120 = vsel %vm1068, %v1104, 0.0
        %1121 = vadd.xlane.f32.xlu0 %v1120
        %v1122 = vpop.xlane.xlu0 %1121
        %v1123 = vsel %vm1068, %v1106, 0.0
        %1124 = vadd.xlane.f32.xlu0 %v1123
        %v1125 = vpop.xlane.xlu0 %1124
        %v1126 = vsel %vm1068, %v1108, 0.0
        %1127 = vadd.xlane.f32.xlu0 %v1126
        %v1128 = vpop.xlane.xlu0 %1127
        %v1129 = vsel %vm1068, %v1110, 0.0
        %1130 = vadd.xlane.f32.xlu0 %v1129
        %v1131 = vpop.xlane.xlu0 %1130
        %v1132 = vsel %vm1068, %v1112, 0.0
        %1133 = vadd.xlane.f32.xlu0 %v1132
        %v1134 = vpop.xlane.xlu0 %1133
        %v1135 = vsel %vm1068, %v1114, 0.0
        %1136 = vadd.xlane.f32.xlu0 %v1135
        %v1137 = vpop.xlane.xlu0 %1136
        %v1138 = vsel %vm1068, %v1116, 0.0
        %1139 = vadd.xlane.f32.xlu0 %v1138
        %v1140 = vpop.xlane.xlu0 %1139
        %v1141 = vrcp.pop %v1119
        %v1142 = vrcp.pop %v1122
        %v1143 = vrcp.pop %v1125
        %v1144 = vrcp.pop %v1128
        %v1145 = vrcp.pop %v1131
        %v1146 = vrcp.pop %v1134
        %v1147 = vrcp.pop %v1137
        %v1148 = vrcp.pop %v1140
        %v1149 = vmul.f32 %v1102, %v1141
        %v1150 = vmul.f32 %v1104, %v1142
        %v1151 = vmul.f32 %v1106, %v1143
        %v1152 = vmul.f32 %v1108, %v1144
        %v1153 = vmul.f32 %v1110, %v1145
        %v1154 = vmul.f32 %v1112, %v1146
        %v1155 = vmul.f32 %v1114, %v1147
        %v1156 = vmul.f32 %v1116, %v1148
        %s1157 = sld [smem:[#allocation3]]
        %v1158 = vstv %s1157
        %v1159 = vmul.f32 %v1149, %v1158
        %v1160 = vmul.f32 %v1150, %v1158
        %v1161 = vmul.f32 %v1151, %v1158
        %v1162 = vmul.f32 %v1152, %v1158
        %v1163 = vmul.f32 %v1153, %v1158
        %v1164 = vmul.f32 %v1154, %v1158
        %v1165 = vmul.f32 %v1155, %v1158
        %v1166 = vmul.f32 %v1156, %v1158
        %s1167 = sld [smem:[#allocation5]]
        %v1168 = vstv %s1167
        %v1169 = vsub.f32 %v1159, %v1168
        %v1170 = vsub.f32 %v1160, %v1168
        %v1171 = vsub.f32 %v1161, %v1168
        %v1172 = vsub.f32 %v1162, %v1168
        %v1173 = vsub.f32 %v1163, %v1168
        %v1174 = vsub.f32 %v1164, %v1168
        %v1175 = vsub.f32 %v1165, %v1168
        %v1176 = vsub.f32 %v1166, %v1168
        %1177 = vrot.lane.b32.xlu0 %v641, 64
        %v1178 = vpop.permute.xlu0 %1177
        %1179 = vrot.lane.b32.xlu0 %v644, 64
        %v1180 = vpop.permute.xlu0 %1179
        %v1184 = vsel %vm1068, %v1169, 0
        %v1187 = vsel %vm1068, %v1170, 0
        %1189 = vmatprep.subr.mxu0 0.0
        %1190 = vmatpush1.msra.mxu0 %v1178
        %1191 = vmatprep.subr.mxu0 0.0
        %1192 = vmatpush1.msra.mxu0 %v1180
        %1193 = vmatprep.subr.mxu0 0.0
        %1194 = vmatpush1.msra.mxu0 0.0
        %1195 = vmatprep.subr.mxu0 0.0
        %1196 = vmatpush1.msra.mxu0 0.0
        %1197 = vmatprep.subr.mxu0 0.0
        %1198 = vmatpush1.msra.mxu0 0.0
        %1199 = vmatprep.subr.mxu0 0.0
        %1200 = vmatpush1.msra.mxu0 0.0
        %1201 = vmatprep.subr.mxu0 0.0
        %1202 = vmatpush1.msra.mxu0 0.0
        %1203 = vmatprep.subr.mxu0 0.0
        %1204 = vmatpush1.msra.mxu0 0.0
        %1205 = vmatprep.subr.mxu0 0.0
        %1206 = vmatpush1.msra.mxu0 0.0
        %1207 = vmatprep.subr.mxu0 0.0
        %1208 = vmatpush1.msra.mxu0 0.0
        %1209 = vmatprep.subr.mxu0 0.0
        %1210 = vmatpush1.msra.mxu0 0.0
        %1211 = vmatprep.subr.mxu0 0.0
        %1212 = vmatpush1.msra.mxu0 0.0
        %1213 = vmatprep.subr.mxu0 0.0
        %1214 = vmatpush1.msra.mxu0 0.0
        %1215 = vmatprep.subr.mxu0 0.0
        %1216 = vmatpush1.msra.mxu0 0.0
        %1217 = vmatprep.subr.mxu0 0.0
        %1218 = vmatpush1.msra.mxu0 0.0
        %1219 = vmatprep.subr.mxu0 0.0
        %1220 = vmatpush1.msra.mxu0 0.0
        %1221 = vmatprep.subr.mxu0 0.0
        %1222 = vmatpush1.msra.mxu0 0.0
        %1223 = vmatprep.subr.mxu0 0.0
        %1224 = vmatpush1.msra.mxu0 0.0
        %1225 = vmatprep.subr.mxu0 0.0
        %1226 = vmatpush1.msra.mxu0 0.0
        %1227 = vmatprep.subr.mxu0 0.0
        %1228 = vmatpush1.msra.mxu0 0.0
        %1229 = vmatprep.subr.mxu0 0.0
        %1230 = vmatpush1.msra.mxu0 0.0
        %1231 = vmatprep.subr.mxu0 0.0
        %1232 = vmatpush1.msra.mxu0 0.0
        %1233 = vmatprep.subr.mxu0 0.0
        %1234 = vmatpush1.msra.mxu0 0.0
        %1235 = vmatprep.subr.mxu0 0.0
        %1236 = vmatpush1.msra.mxu0 0.0
        %1237 = vmatprep.subr.mxu0 0.0
        %1238 = vmatpush1.msra.mxu0 0.0
        %1239 = vmatprep.subr.mxu0 0.0
        %1240 = vmatpush1.msra.mxu0 0.0
        %1241 = vmatprep.subr.mxu0 0.0
        %1242 = vmatpush1.msra.mxu0 0.0
        %1243 = vmatprep.subr.mxu0 0.0
        %1244 = vmatpush1.msra.mxu0 0.0
        %1245 = vmatprep.subr.mxu0 0.0
        %1246 = vmatpush1.msra.mxu0 0.0
        %1247 = vmatprep.subr.mxu0 0.0
        %1248 = vmatpush1.msra.mxu0 0.0
        %1249 = vmatprep.subr.mxu0 0.0
        %1250 = vmatpush1.msra.mxu0 0.0
        %1251 = vmatprep.subr.mxu0 0.0
        %1252 = vmatpush1.msra.mxu0 0.0
        %1253 = vmatprep.mubr.f32.mxu0 0.0
        %1254 = vmatmul.mubr.f32.gmra.mrb[0].mxu0 %v1184
        %v1255 = vpop.f32.mrb[0].mxu0
        %v1256 = vadd.f32 0.0, %v1255
        %v1257 = vpop.f32.mrb[0].mxu0
        %1258 = vmatprep.mubr.f32.mxu0 0.0
        %1259 = vmatmul.mubr.f32.gmra.mrb[0].mxu0 %v1187
        %v1260 = vpop.f32.mrb[0].mxu0
        %v1261 = vadd.f32 0.0, %v1260
        %v1262 = vpop.f32.mrb[0].mxu0
        %1263 = vdwg.mxu0
        %1264 = vrot.lane.b32.xlu0 %v649, 64
        %v1265 = vpop.permute.xlu0 %1264
        %1266 = vrot.lane.b32.xlu0 %v652, 64
        %v1267 = vpop.permute.xlu0 %1266
        %v1271 = vsel %vm1068, %v1171, 0
        %v1274 = vsel %vm1068, %v1172, 0
        %1276 = vmatprep.subr.mxu0 0.0
        %1277 = vmatpush1.msra.mxu0 %v1265
        %1278 = vmatprep.subr.mxu0 0.0
        %1279 = vmatpush1.msra.mxu0 %v1267
        %1280 = vmatprep.subr.mxu0 0.0
        %1281 = vmatpush1.msra.mxu0 0.0
        %1282 = vmatprep.subr.mxu0 0.0
        %1283 = vmatpush1.msra.mxu0 0.0
        %1284 = vmatprep.subr.mxu0 0.0
        %1285 = vmatpush1.msra.mxu0 0.0
        %1286 = vmatprep.subr.mxu0 0.0
        %1287 = vmatpush1.msra.mxu0 0.0
        %1288 = vmatprep.subr.mxu0 0.0
        %1289 = vmatpush1.msra.mxu0 0.0
        %1290 = vmatprep.subr.mxu0 0.0
        %1291 = vmatpush1.msra.mxu0 0.0
        %1292 = vmatprep.subr.mxu0 0.0
        %1293 = vmatpush1.msra.mxu0 0.0
        %1294 = vmatprep.subr.mxu0 0.0
        %1295 = vmatpush1.msra.mxu0 0.0
        %1296 = vmatprep.subr.mxu0 0.0
        %1297 = vmatpush1.msra.mxu0 0.0
        %1298 = vmatprep.subr.mxu0 0.0
        %1299 = vmatpush1.msra.mxu0 0.0
        %1300 = vmatprep.subr.mxu0 0.0
        %1301 = vmatpush1.msra.mxu0 0.0
        %1302 = vmatprep.subr.mxu0 0.0
        %1303 = vmatpush1.msra.mxu0 0.0
        %1304 = vmatprep.subr.mxu0 0.0
        %1305 = vmatpush1.msra.mxu0 0.0
        %1306 = vmatprep.subr.mxu0 0.0
        %1307 = vmatpush1.msra.mxu0 0.0
        %1308 = vmatprep.subr.mxu0 0.0
        %1309 = vmatpush1.msra.mxu0 0.0
        %1310 = vmatprep.subr.mxu0 0.0
        %1311 = vmatpush1.msra.mxu0 0.0
        %1312 = vmatprep.subr.mxu0 0.0
        %1313 = vmatpush1.msra.mxu0 0.0
        %1314 = vmatprep.subr.mxu0 0.0
        %1315 = vmatpush1.msra.mxu0 0.0
        %1316 = vmatprep.subr.mxu0 0.0
        %1317 = vmatpush1.msra.mxu0 0.0
        %1318 = vmatprep.subr.mxu0 0.0
        %1319 = vmatpush1.msra.mxu0 0.0
        %1320 = vmatprep.subr.mxu0 0.0
        %1321 = vmatpush1.msra.mxu0 0.0
        %1322 = vmatprep.subr.mxu0 0.0
        %1323 = vmatpush1.msra.mxu0 0.0
        %1324 = vmatprep.subr.mxu0 0.0
        %1325 = vmatpush1.msra.mxu0 0.0
        %1326 = vmatprep.subr.mxu0 0.0
        %1327 = vmatpush1.msra.mxu0 0.0
        %1328 = vmatprep.subr.mxu0 0.0
        %1329 = vmatpush1.msra.mxu0 0.0
        %1330 = vmatprep.subr.mxu0 0.0
        %1331 = vmatpush1.msra.mxu0 0.0
        %1332 = vmatprep.subr.mxu0 0.0
        %1333 = vmatpush1.msra.mxu0 0.0
        %1334 = vmatprep.subr.mxu0 0.0
        %1335 = vmatpush1.msra.mxu0 0.0
        %1336 = vmatprep.subr.mxu0 0.0
        %1337 = vmatpush1.msra.mxu0 0.0
        %1338 = vmatprep.subr.mxu0 0.0
        %1339 = vmatpush1.msra.mxu0 0.0
        %1340 = vmatprep.mubr.f32.mxu0 0.0
        %1341 = vmatmul.mubr.f32.gmra.mrb[0].mxu0 %v1271
        %v1342 = vpop.f32.mrb[0].mxu0
        %v1343 = vadd.f32 0.0, %v1342
        %v1344 = vpop.f32.mrb[0].mxu0
        %1345 = vmatprep.mubr.f32.mxu0 0.0
        %1346 = vmatmul.mubr.f32.gmra.mrb[0].mxu0 %v1274
        %v1347 = vpop.f32.mrb[0].mxu0
        %v1348 = vadd.f32 0.0, %v1347
        %v1349 = vpop.f32.mrb[0].mxu0
        %1350 = vdwg.mxu0
        %1351 = vrot.lane.b32.xlu0 %v657, 64
        %v1352 = vpop.permute.xlu0 %1351
        %1353 = vrot.lane.b32.xlu0 %v660, 64
        %v1354 = vpop.permute.xlu0 %1353
        %v1358 = vsel %vm1068, %v1173, 0
        %v1361 = vsel %vm1068, %v1174, 0
        %1363 = vmatprep.subr.mxu0 0.0
        %1364 = vmatpush1.msra.mxu0 %v1352
        %1365 = vmatprep.subr.mxu0 0.0
        %1366 = vmatpush1.msra.mxu0 %v1354
        %1367 = vmatprep.subr.mxu0 0.0
        %1368 = vmatpush1.msra.mxu0 0.0
        %1369 = vmatprep.subr.mxu0 0.0
        %1370 = vmatpush1.msra.mxu0 0.0
        %1371 = vmatprep.subr.mxu0 0.0
        %1372 = vmatpush1.msra.mxu0 0.0
        %1373 = vmatprep.subr.mxu0 0.0
        %1374 = vmatpush1.msra.mxu0 0.0
        %1375 = vmatprep.subr.mxu0 0.0
        %1376 = vmatpush1.msra.mxu0 0.0
        %1377 = vmatprep.subr.mxu0 0.0
        %1378 = vmatpush1.msra.mxu0 0.0
        %1379 = vmatprep.subr.mxu0 0.0
        %1380 = vmatpush1.msra.mxu0 0.0
        %1381 = vmatprep.subr.mxu0 0.0
        %1382 = vmatpush1.msra.mxu0 0.0
        %1383 = vmatprep.subr.mxu0 0.0
        %1384 = vmatpush1.msra.mxu0 0.0
        %1385 = vmatprep.subr.mxu0 0.0
        %1386 = vmatpush1.msra.mxu0 0.0
        %1387 = vmatprep.subr.mxu0 0.0
        %1388 = vmatpush1.msra.mxu0 0.0
        %1389 = vmatprep.subr.mxu0 0.0
        %1390 = vmatpush1.msra.mxu0 0.0
        %1391 = vmatprep.subr.mxu0 0.0
        %1392 = vmatpush1.msra.mxu0 0.0
        %1393 = vmatprep.subr.mxu0 0.0
        %1394 = vmatpush1.msra.mxu0 0.0
        %1395 = vmatprep.subr.mxu0 0.0
        %1396 = vmatpush1.msra.mxu0 0.0
        %1397 = vmatprep.subr.mxu0 0.0
        %1398 = vmatpush1.msra.mxu0 0.0
        %1399 = vmatprep.subr.mxu0 0.0
        %1400 = vmatpush1.msra.mxu0 0.0
        %1401 = vmatprep.subr.mxu0 0.0
        %1402 = vmatpush1.msra.mxu0 0.0
        %1403 = vmatprep.subr.mxu0 0.0
        %1404 = vmatpush1.msra.mxu0 0.0
        %1405 = vmatprep.subr.mxu0 0.0
        %1406 = vmatpush1.msra.mxu0 0.0
        %1407 = vmatprep.subr.mxu0 0.0
        %1408 = vmatpush1.msra.mxu0 0.0
        %1409 = vmatprep.subr.mxu0 0.0
        %1410 = vmatpush1.msra.mxu0 0.0
        %1411 = vmatprep.subr.mxu0 0.0
        %1412 = vmatpush1.msra.mxu0 0.0
        %1413 = vmatprep.subr.mxu0 0.0
        %1414 = vmatpush1.msra.mxu0 0.0
        %1415 = vmatprep.subr.mxu0 0.0
        %1416 = vmatpush1.msra.mxu0 0.0
        %1417 = vmatprep.subr.mxu0 0.0
        %1418 = vmatpush1.msra.mxu0 0.0
        %1419 = vmatprep.subr.mxu0 0.0
        %1420 = vmatpush1.msra.mxu0 0.0
        %1421 = vmatprep.subr.mxu0 0.0
        %1422 = vmatpush1.msra.mxu0 0.0
        %1423 = vmatprep.subr.mxu0 0.0
        %1424 = vmatpush1.msra.mxu0 0.0
        %1425 = vmatprep.subr.mxu0 0.0
        %1426 = vmatpush1.msra.mxu0 0.0
        %1427 = vmatprep.mubr.f32.mxu0 0.0
        %1428 = vmatmul.mubr.f32.gmra.mrb[0].mxu0 %v1358
        %v1429 = vpop.f32.mrb[0].mxu0
        %v1430 = vadd.f32 0.0, %v1429
        %v1431 = vpop.f32.mrb[0].mxu0
        %1432 = vmatprep.mubr.f32.mxu0 0.0
        %1433 = vmatmul.mubr.f32.gmra.mrb[0].mxu0 %v1361
        %v1434 = vpop.f32.mrb[0].mxu0
        %v1435 = vadd.f32 0.0, %v1434
        %v1436 = vpop.f32.mrb[0].mxu0
        %1437 = vdwg.mxu0
        %1438 = vrot.lane.b32.xlu0 %v665, 64
        %v1439 = vpop.permute.xlu0 %1438
        %1440 = vrot.lane.b32.xlu0 %v668, 64
        %v1441 = vpop.permute.xlu0 %1440
        %v1445 = vsel %vm1068, %v1175, 0
        %v1448 = vsel %vm1068, %v1176, 0
        %1450 = vmatprep.subr.mxu0 0.0
        %1451 = vmatpush1.msra.mxu0 %v1439
        %1452 = vmatprep.subr.mxu0 0.0
        %1453 = vmatpush1.msra.mxu0 %v1441
        %1454 = vmatprep.subr.mxu0 0.0
        %1455 = vmatpush1.msra.mxu0 0.0
        %1456 = vmatprep.subr.mxu0 0.0
        %1457 = vmatpush1.msra.mxu0 0.0
        %1458 = vmatprep.subr.mxu0 0.0
        %1459 = vmatpush1.msra.mxu0 0.0
        %1460 = vmatprep.subr.mxu0 0.0
        %1461 = vmatpush1.msra.mxu0 0.0
        %1462 = vmatprep.subr.mxu0 0.0
        %1463 = vmatpush1.msra.mxu0 0.0
        %1464 = vmatprep.subr.mxu0 0.0
        %1465 = vmatpush1.msra.mxu0 0.0
        %1466 = vmatprep.subr.mxu0 0.0
        %1467 = vmatpush1.msra.mxu0 0.0
        %1468 = vmatprep.subr.mxu0 0.0
        %1469 = vmatpush1.msra.mxu0 0.0
        %1470 = vmatprep.subr.mxu0 0.0
        %1471 = vmatpush1.msra.mxu0 0.0
        %1472 = vmatprep.subr.mxu0 0.0
        %1473 = vmatpush1.msra.mxu0 0.0
        %1474 = vmatprep.subr.mxu0 0.0
        %1475 = vmatpush1.msra.mxu0 0.0
        %1476 = vmatprep.subr.mxu0 0.0
        %1477 = vmatpush1.msra.mxu0 0.0
        %1478 = vmatprep.subr.mxu0 0.0
        %1479 = vmatpush1.msra.mxu0 0.0
        %1480 = vmatprep.subr.mxu0 0.0
        %1481 = vmatpush1.msra.mxu0 0.0
        %1482 = vmatprep.subr.mxu0 0.0
        %1483 = vmatpush1.msra.mxu0 0.0
        %1484 = vmatprep.subr.mxu0 0.0
        %1485 = vmatpush1.msra.mxu0 0.0
        %1486 = vmatprep.subr.mxu0 0.0
        %1487 = vmatpush1.msra.mxu0 0.0
        %1488 = vmatprep.subr.mxu0 0.0
        %1489 = vmatpush1.msra.mxu0 0.0
        %1490 = vmatprep.subr.mxu0 0.0
        %1491 = vmatpush1.msra.mxu0 0.0
        %1492 = vmatprep.subr.mxu0 0.0
        %1493 = vmatpush1.msra.mxu0 0.0
        %1494 = vmatprep.subr.mxu0 0.0
        %1495 = vmatpush1.msra.mxu0 0.0
        %1496 = vmatprep.subr.mxu0 0.0
        %1497 = vmatpush1.msra.mxu0 0.0
        %1498 = vmatprep.subr.mxu0 0.0
        %1499 = vmatpush1.msra.mxu0 0.0
        %1500 = vmatprep.subr.mxu0 0.0
        %1501 = vmatpush1.msra.mxu0 0.0
        %1502 = vmatprep.subr.mxu0 0.0
        %1503 = vmatpush1.msra.mxu0 0.0
        %1504 = vmatprep.subr.mxu0 0.0
        %1505 = vmatpush1.msra.mxu0 0.0
        %1506 = vmatprep.subr.mxu0 0.0
        %1507 = vmatpush1.msra.mxu0 0.0
        %1508 = vmatprep.subr.mxu0 0.0
        %1509 = vmatpush1.msra.mxu0 0.0
        %1510 = vmatprep.subr.mxu0 0.0
        %1511 = vmatpush1.msra.mxu0 0.0
        %1512 = vmatprep.subr.mxu0 0.0
        %1513 = vmatpush1.msra.mxu0 0.0
        %1514 = vmatprep.mubr.f32.mxu0 0.0
        %1515 = vmatmul.mubr.f32.gmra.mrb[0].mxu0 %v1445
        %v1516 = vpop.f32.mrb[0].mxu0
        %v1517 = vadd.f32 0.0, %v1516
        %v1518 = vpop.f32.mrb[0].mxu0
        %1519 = vmatprep.mubr.f32.mxu0 0.0
        %1520 = vmatmul.mubr.f32.gmra.mrb[0].mxu0 %v1448
        %v1521 = vpop.f32.mrb[0].mxu0
        %v1522 = vadd.f32 0.0, %v1521
        %v1523 = vpop.f32.mrb[0].mxu0
        %1524 = vdwg.mxu0
        %v1525 = vpack.c.bf16 %v1261, %v1256
        %v1526 = vpack.c.bf16 %v1348, %v1343
        %v1527 = vpack.c.bf16 %v1435, %v1430
        %v1528 = vpack.c.bf16 %v1522, %v1517
        %1529 = vst.msk [vmem:[#allocation2] sm:$0xff] %vm701, %v1525
        %1530 = vst.msk [vmem:[#allocation2 + $0x8] sm:$0xff] %vm701, %v1526
        %1531 = vst.msk [vmem:[#allocation2 + $0x10] sm:$0xff] %vm701, %v1527
        %1532 = vst.msk [vmem:[#allocation2 + $0x18] sm:$0xff] %vm701, %v1528
        %1533 = vrot.lane.b32.xlu0 %v687, 120
        %v1534 = vpop.permute.xlu0 %1533
        %1535 = vrot.lane.b32.xlu0 %v688, 120
        %v1536 = vpop.permute.xlu0 %1535
        %1537 = vrot.lane.b32.xlu0 %v641, 88
        %v1538 = vpop.permute.xlu0 %1537
        %1539 = vrot.lane.b32.xlu0 %v644, 88
        %v1540 = vpop.permute.xlu0 %1539
        %v1541 = vsel %vm701, %v1534, 0
        %v1543 = vsel %vm701, %v1536, 0
        %v1545 = vsel %vm701, %v1538, 0
        %v1547 = vsel %vm701, %v1540, 0
        %1549 = vmatprep.subr.mxu0 0.0
        %1550 = vmatpush1.xpose.msra.mxu0 %v1545
        %1551 = vmatprep.subr.mxu0 0.0
        %1552 = vmatpush1.xpose.msra.mxu0 %v1547
        %1553 = vmatprep.subr.mxu0 0.0
        %1554 = vmatpush1.xpose.msra.mxu0 0.0
        %1555 = vmatprep.subr.mxu0 0.0
        %1556 = vmatpush1.xpose.msra.mxu0 0.0
        %1557 = vmatprep.subr.mxu0 0.0
        %1558 = vmatpush1.xpose.msra.mxu0 0.0
        %1559 = vmatprep.subr.mxu0 0.0
        %1560 = vmatpush1.xpose.msra.mxu0 0.0
        %1561 = vmatprep.subr.mxu0 0.0
        %1562 = vmatpush1.xpose.msra.mxu0 0.0
        %1563 = vmatprep.subr.mxu0 0.0
        %1564 = vmatpush1.xpose.msra.mxu0 0.0
        %1565 = vmatprep.subr.mxu0 0.0
        %1566 = vmatpush1.xpose.msra.mxu0 0.0
        %1567 = vmatprep.subr.mxu0 0.0
        %1568 = vmatpush1.xpose.msra.mxu0 0.0
        %1569 = vmatprep.subr.mxu0 0.0
        %1570 = vmatpush1.xpose.msra.mxu0 0.0
        %1571 = vmatprep.subr.mxu0 0.0
        %1572 = vmatpush1.xpose.msra.mxu0 0.0
        %1573 = vmatprep.subr.mxu0 0.0
        %1574 = vmatpush1.xpose.msra.mxu0 0.0
        %1575 = vmatprep.subr.mxu0 0.0
        %1576 = vmatpush1.xpose.msra.mxu0 0.0
        %1577 = vmatprep.subr.mxu0 0.0
        %1578 = vmatpush1.xpose.msra.mxu0 0.0
        %1579 = vmatprep.subr.mxu0 0.0
        %1580 = vmatpush1.xpose.msra.mxu0 0.0
        %1581 = vmatprep.subr.mxu0 0.0
        %1582 = vmatpush1.xpose.msra.mxu0 0.0
        %1583 = vmatprep.subr.mxu0 0.0
        %1584 = vmatpush1.xpose.msra.mxu0 0.0
        %1585 = vmatprep.subr.mxu0 0.0
        %1586 = vmatpush1.xpose.msra.mxu0 0.0
        %1587 = vmatprep.subr.mxu0 0.0
        %1588 = vmatpush1.xpose.msra.mxu0 0.0
        %1589 = vmatprep.subr.mxu0 0.0
        %1590 = vmatpush1.xpose.msra.mxu0 0.0
        %1591 = vmatprep.subr.mxu0 0.0
        %1592 = vmatpush1.xpose.msra.mxu0 0.0
        %1593 = vmatprep.subr.mxu0 0.0
        %1594 = vmatpush1.xpose.msra.mxu0 0.0
        %1595 = vmatprep.subr.mxu0 0.0
        %1596 = vmatpush1.xpose.msra.mxu0 0.0
        %1597 = vmatprep.subr.mxu0 0.0
        %1598 = vmatpush1.xpose.msra.mxu0 0.0
        %1599 = vmatprep.subr.mxu0 0.0
        %1600 = vmatpush1.xpose.msra.mxu0 0.0
        %1601 = vmatprep.subr.mxu0 0.0
        %1602 = vmatpush1.xpose.msra.mxu0 0.0
        %1603 = vmatprep.subr.mxu0 0.0
        %1604 = vmatpush1.xpose.msra.mxu0 0.0
        %1605 = vmatprep.subr.mxu0 0.0
        %1606 = vmatpush1.xpose.msra.mxu0 0.0
        %1607 = vmatprep.subr.mxu0 0.0
        %1608 = vmatpush1.xpose.msra.mxu0 0.0
        %1609 = vmatprep.subr.mxu0 0.0
        %1610 = vmatpush1.xpose.msra.mxu0 0.0
        %1611 = vmatprep.subr.mxu0 0.0
        %1612 = vmatpush1.xpose.msra.mxu0 0.0
        %1613 = vmatprep.mubr.f32.mxu0 0.0
        %1614 = vmatmul.mubr.f32.gmra.mrb[0].mxu0 %v1541
        %v1615 = vpop.f32.mrb[0].mxu0
        %v1616 = vadd.f32 %v673, %v1615
        %v1617 = vpop.f32.mrb[0].mxu0
        %1618 = vmatprep.mubr.f32.mxu0 0.0
        %1619 = vmatmul.mubr.f32.gmra.mrb[0].mxu0 %v1543
        %v1620 = vpop.f32.mrb[0].mxu0
        %v1621 = vadd.f32 %v674, %v1620
        %v1622 = vpop.f32.mrb[0].mxu0
        %1623 = vdwg.mxu0
        %1624 = vrot.lane.b32.xlu0 %v689, 120
        %v1625 = vpop.permute.xlu0 %1624
        %1626 = vrot.lane.b32.xlu0 %v690, 120
        %v1627 = vpop.permute.xlu0 %1626
        %1628 = vrot.lane.b32.xlu0 %v649, 88
        %v1629 = vpop.permute.xlu0 %1628
        %1630 = vrot.lane.b32.xlu0 %v652, 88
        %v1631 = vpop.permute.xlu0 %1630
        %v1632 = vsel %vm701, %v1625, 0
        %v1634 = vsel %vm701, %v1627, 0
        %v1636 = vsel %vm701, %v1629, 0
        %v1638 = vsel %vm701, %v1631, 0
        %1640 = vmatprep.subr.mxu0 0.0
        %1641 = vmatpush1.xpose.msra.mxu0 %v1636
        %1642 = vmatprep.subr.mxu0 0.0
        %1643 = vmatpush1.xpose.msra.mxu0 %v1638
        %1644 = vmatprep.subr.mxu0 0.0
        %1645 = vmatpush1.xpose.msra.mxu0 0.0
        %1646 = vmatprep.subr.mxu0 0.0
        %1647 = vmatpush1.xpose.msra.mxu0 0.0
        %1648 = vmatprep.subr.mxu0 0.0
        %1649 = vmatpush1.xpose.msra.mxu0 0.0
        %1650 = vmatprep.subr.mxu0 0.0
        %1651 = vmatpush1.xpose.msra.mxu0 0.0
        %1652 = vmatprep.subr.mxu0 0.0
        %1653 = vmatpush1.xpose.msra.mxu0 0.0
        %1654 = vmatprep.subr.mxu0 0.0
        %1655 = vmatpush1.xpose.msra.mxu0 0.0
        %1656 = vmatprep.subr.mxu0 0.0
        %1657 = vmatpush1.xpose.msra.mxu0 0.0
        %1658 = vmatprep.subr.mxu0 0.0
        %1659 = vmatpush1.xpose.msra.mxu0 0.0
        %1660 = vmatprep.subr.mxu0 0.0
        %1661 = vmatpush1.xpose.msra.mxu0 0.0
        %1662 = vmatprep.subr.mxu0 0.0
        %1663 = vmatpush1.xpose.msra.mxu0 0.0
        %1664 = vmatprep.subr.mxu0 0.0
        %1665 = vmatpush1.xpose.msra.mxu0 0.0
        %1666 = vmatprep.subr.mxu0 0.0
        %1667 = vmatpush1.xpose.msra.mxu0 0.0
        %1668 = vmatprep.subr.mxu0 0.0
        %1669 = vmatpush1.xpose.msra.mxu0 0.0
        %1670 = vmatprep.subr.mxu0 0.0
        %1671 = vmatpush1.xpose.msra.mxu0 0.0
        %1672 = vmatprep.subr.mxu0 0.0
        %1673 = vmatpush1.xpose.msra.mxu0 0.0
        %1674 = vmatprep.subr.mxu0 0.0
        %1675 = vmatpush1.xpose.msra.mxu0 0.0
        %1676 = vmatprep.subr.mxu0 0.0
        %1677 = vmatpush1.xpose.msra.mxu0 0.0
        %1678 = vmatprep.subr.mxu0 0.0
        %1679 = vmatpush1.xpose.msra.mxu0 0.0
        %1680 = vmatprep.subr.mxu0 0.0
        %1681 = vmatpush1.xpose.msra.mxu0 0.0
        %1682 = vmatprep.subr.mxu0 0.0
        %1683 = vmatpush1.xpose.msra.mxu0 0.0
        %1684 = vmatprep.subr.mxu0 0.0
        %1685 = vmatpush1.xpose.msra.mxu0 0.0
        %1686 = vmatprep.subr.mxu0 0.0
        %1687 = vmatpush1.xpose.msra.mxu0 0.0
        %1688 = vmatprep.subr.mxu0 0.0
        %1689 = vmatpush1.xpose.msra.mxu0 0.0
        %1690 = vmatprep.subr.mxu0 0.0
        %1691 = vmatpush1.xpose.msra.mxu0 0.0
        %1692 = vmatprep.subr.mxu0 0.0
        %1693 = vmatpush1.xpose.msra.mxu0 0.0
        %1694 = vmatprep.subr.mxu0 0.0
        %1695 = vmatpush1.xpose.msra.mxu0 0.0
        %1696 = vmatprep.subr.mxu0 0.0
        %1697 = vmatpush1.xpose.msra.mxu0 0.0
        %1698 = vmatprep.subr.mxu0 0.0
        %1699 = vmatpush1.xpose.msra.mxu0 0.0
        %1700 = vmatprep.subr.mxu0 0.0
        %1701 = vmatpush1.xpose.msra.mxu0 0.0
        %1702 = vmatprep.subr.mxu0 0.0
        %1703 = vmatpush1.xpose.msra.mxu0 0.0
        %1704 = vmatprep.mubr.f32.mxu0 0.0
        %1705 = vmatmul.mubr.f32.gmra.mrb[0].mxu0 %v1632
        %v1706 = vpop.f32.mrb[0].mxu0
        %v1707 = vadd.f32 %v673, %v1706
        %v1708 = vpop.f32.mrb[0].mxu0
        %1709 = vmatprep.mubr.f32.mxu0 0.0
        %1710 = vmatmul.mubr.f32.gmra.mrb[0].mxu0 %v1634
        %v1711 = vpop.f32.mrb[0].mxu0
        %v1712 = vadd.f32 %v674, %v1711
        %v1713 = vpop.f32.mrb[0].mxu0
        %1714 = vdwg.mxu0
        %1715 = vrot.lane.b32.xlu0 %v691, 120
        %v1716 = vpop.permute.xlu0 %1715
        %1717 = vrot.lane.b32.xlu0 %v692, 120
        %v1718 = vpop.permute.xlu0 %1717
        %1719 = vrot.lane.b32.xlu0 %v657, 88
        %v1720 = vpop.permute.xlu0 %1719
        %1721 = vrot.lane.b32.xlu0 %v660, 88
        %v1722 = vpop.permute.xlu0 %1721
        %v1723 = vsel %vm701, %v1716, 0
        %v1725 = vsel %vm701, %v1718, 0
        %v1727 = vsel %vm701, %v1720, 0
        %v1729 = vsel %vm701, %v1722, 0
        %1731 = vmatprep.subr.mxu0 0.0
        %1732 = vmatpush1.xpose.msra.mxu0 %v1727
        %1733 = vmatprep.subr.mxu0 0.0
        %1734 = vmatpush1.xpose.msra.mxu0 %v1729
        %1735 = vmatprep.subr.mxu0 0.0
        %1736 = vmatpush1.xpose.msra.mxu0 0.0
        %1737 = vmatprep.subr.mxu0 0.0
        %1738 = vmatpush1.xpose.msra.mxu0 0.0
        %1739 = vmatprep.subr.mxu0 0.0
        %1740 = vmatpush1.xpose.msra.mxu0 0.0
        %1741 = vmatprep.subr.mxu0 0.0
        %1742 = vmatpush1.xpose.msra.mxu0 0.0
        %1743 = vmatprep.subr.mxu0 0.0
        %1744 = vmatpush1.xpose.msra.mxu0 0.0
        %1745 = vmatprep.subr.mxu0 0.0
        %1746 = vmatpush1.xpose.msra.mxu0 0.0
        %1747 = vmatprep.subr.mxu0 0.0
        %1748 = vmatpush1.xpose.msra.mxu0 0.0
        %1749 = vmatprep.subr.mxu0 0.0
        %1750 = vmatpush1.xpose.msra.mxu0 0.0
        %1751 = vmatprep.subr.mxu0 0.0
        %1752 = vmatpush1.xpose.msra.mxu0 0.0
        %1753 = vmatprep.subr.mxu0 0.0
        %1754 = vmatpush1.xpose.msra.mxu0 0.0
        %1755 = vmatprep.subr.mxu0 0.0
        %1756 = vmatpush1.xpose.msra.mxu0 0.0
        %1757 = vmatprep.subr.mxu0 0.0
        %1758 = vmatpush1.xpose.msra.mxu0 0.0
        %1759 = vmatprep.subr.mxu0 0.0
        %1760 = vmatpush1.xpose.msra.mxu0 0.0
        %1761 = vmatprep.subr.mxu0 0.0
        %1762 = vmatpush1.xpose.msra.mxu0 0.0
        %1763 = vmatprep.subr.mxu0 0.0
        %1764 = vmatpush1.xpose.msra.mxu0 0.0
        %1765 = vmatprep.subr.mxu0 0.0
        %1766 = vmatpush1.xpose.msra.mxu0 0.0
        %1767 = vmatprep.subr.mxu0 0.0
        %1768 = vmatpush1.xpose.msra.mxu0 0.0
        %1769 = vmatprep.subr.mxu0 0.0
        %1770 = vmatpush1.xpose.msra.mxu0 0.0
        %1771 = vmatprep.subr.mxu0 0.0
        %1772 = vmatpush1.xpose.msra.mxu0 0.0
        %1773 = vmatprep.subr.mxu0 0.0
        %1774 = vmatpush1.xpose.msra.mxu0 0.0
        %1775 = vmatprep.subr.mxu0 0.0
        %1776 = vmatpush1.xpose.msra.mxu0 0.0
        %1777 = vmatprep.subr.mxu0 0.0
        %1778 = vmatpush1.xpose.msra.mxu0 0.0
        %1779 = vmatprep.subr.mxu0 0.0
        %1780 = vmatpush1.xpose.msra.mxu0 0.0
        %1781 = vmatprep.subr.mxu0 0.0
        %1782 = vmatpush1.xpose.msra.mxu0 0.0
        %1783 = vmatprep.subr.mxu0 0.0
        %1784 = vmatpush1.xpose.msra.mxu0 0.0
        %1785 = vmatprep.subr.mxu0 0.0
        %1786 = vmatpush1.xpose.msra.mxu0 0.0
        %1787 = vmatprep.subr.mxu0 0.0
        %1788 = vmatpush1.xpose.msra.mxu0 0.0
        %1789 = vmatprep.subr.mxu0 0.0
        %1790 = vmatpush1.xpose.msra.mxu0 0.0
        %1791 = vmatprep.subr.mxu0 0.0
        %1792 = vmatpush1.xpose.msra.mxu0 0.0
        %1793 = vmatprep.subr.mxu0 0.0
        %1794 = vmatpush1.xpose.msra.mxu0 0.0
        %1795 = vmatprep.mubr.f32.mxu0 0.0
        %1796 = vmatmul.mubr.f32.gmra.mrb[0].mxu0 %v1723
        %v1797 = vpop.f32.mrb[0].mxu0
        %v1798 = vadd.f32 %v673, %v1797
        %v1799 = vpop.f32.mrb[0].mxu0
        %1800 = vmatprep.mubr.f32.mxu0 0.0
        %1801 = vmatmul.mubr.f32.gmra.mrb[0].mxu0 %v1725
        %v1802 = vpop.f32.mrb[0].mxu0
        %v1803 = vadd.f32 %v674, %v1802
        %v1804 = vpop.f32.mrb[0].mxu0
        %1805 = vdwg.mxu0
        %1806 = vrot.lane.b32.xlu0 %v693, 120
        %v1807 = vpop.permute.xlu0 %1806
        %1808 = vrot.lane.b32.xlu0 %v694, 120
        %v1809 = vpop.permute.xlu0 %1808
        %1810 = vrot.lane.b32.xlu0 %v665, 88
        %v1811 = vpop.permute.xlu0 %1810
        %1812 = vrot.lane.b32.xlu0 %v668, 88
        %v1813 = vpop.permute.xlu0 %1812
        %v1814 = vsel %vm701, %v1807, 0
        %v1816 = vsel %vm701, %v1809, 0
        %v1818 = vsel %vm701, %v1811, 0
        %v1820 = vsel %vm701, %v1813, 0
        %1822 = vmatprep.subr.mxu0 0.0
        %1823 = vmatpush1.xpose.msra.mxu0 %v1818
        %1824 = vmatprep.subr.mxu0 0.0
        %1825 = vmatpush1.xpose.msra.mxu0 %v1820
        %1826 = vmatprep.subr.mxu0 0.0
        %1827 = vmatpush1.xpose.msra.mxu0 0.0
        %1828 = vmatprep.subr.mxu0 0.0
        %1829 = vmatpush1.xpose.msra.mxu0 0.0
        %1830 = vmatprep.subr.mxu0 0.0
        %1831 = vmatpush1.xpose.msra.mxu0 0.0
        %1832 = vmatprep.subr.mxu0 0.0
        %1833 = vmatpush1.xpose.msra.mxu0 0.0
        %1834 = vmatprep.subr.mxu0 0.0
        %1835 = vmatpush1.xpose.msra.mxu0 0.0
        %1836 = vmatprep.subr.mxu0 0.0
        %1837 = vmatpush1.xpose.msra.mxu0 0.0
        %1838 = vmatprep.subr.mxu0 0.0
        %1839 = vmatpush1.xpose.msra.mxu0 0.0
        %1840 = vmatprep.subr.mxu0 0.0
        %1841 = vmatpush1.xpose.msra.mxu0 0.0
        %1842 = vmatprep.subr.mxu0 0.0
        %1843 = vmatpush1.xpose.msra.mxu0 0.0
        %1844 = vmatprep.subr.mxu0 0.0
        %1845 = vmatpush1.xpose.msra.mxu0 0.0
        %1846 = vmatprep.subr.mxu0 0.0
        %1847 = vmatpush1.xpose.msra.mxu0 0.0
        %1848 = vmatprep.subr.mxu0 0.0
        %1849 = vmatpush1.xpose.msra.mxu0 0.0
        %1850 = vmatprep.subr.mxu0 0.0
        %1851 = vmatpush1.xpose.msra.mxu0 0.0
        %1852 = vmatprep.subr.mxu0 0.0
        %1853 = vmatpush1.xpose.msra.mxu0 0.0
        %1854 = vmatprep.subr.mxu0 0.0
        %1855 = vmatpush1.xpose.msra.mxu0 0.0
        %1856 = vmatprep.subr.mxu0 0.0
        %1857 = vmatpush1.xpose.msra.mxu0 0.0
        %1858 = vmatprep.subr.mxu0 0.0
        %1859 = vmatpush1.xpose.msra.mxu0 0.0
        %1860 = vmatprep.subr.mxu0 0.0
        %1861 = vmatpush1.xpose.msra.mxu0 0.0
        %1862 = vmatprep.subr.mxu0 0.0
        %1863 = vmatpush1.xpose.msra.mxu0 0.0
        %1864 = vmatprep.subr.mxu0 0.0
        %1865 = vmatpush1.xpose.msra.mxu0 0.0
        %1866 = vmatprep.subr.mxu0 0.0
        %1867 = vmatpush1.xpose.msra.mxu0 0.0
        %1868 = vmatprep.subr.mxu0 0.0
        %1869 = vmatpush1.xpose.msra.mxu0 0.0
        %1870 = vmatprep.subr.mxu0 0.0
        %1871 = vmatpush1.xpose.msra.mxu0 0.0
        %1872 = vmatprep.subr.mxu0 0.0
        %1873 = vmatpush1.xpose.msra.mxu0 0.0
        %1874 = vmatprep.subr.mxu0 0.0
        %1875 = vmatpush1.xpose.msra.mxu0 0.0
        %1876 = vmatprep.subr.mxu0 0.0
        %1877 = vmatpush1.xpose.msra.mxu0 0.0
        %1878 = vmatprep.subr.mxu0 0.0
        %1879 = vmatpush1.xpose.msra.mxu0 0.0
        %1880 = vmatprep.subr.mxu0 0.0
        %1881 = vmatpush1.xpose.msra.mxu0 0.0
        %1882 = vmatprep.subr.mxu0 0.0
        %1883 = vmatpush1.xpose.msra.mxu0 0.0
        %1884 = vmatprep.subr.mxu0 0.0
        %1885 = vmatpush1.xpose.msra.mxu0 0.0
        %1886 = vmatprep.mubr.f32.mxu0 0.0
        %1887 = vmatmul.mubr.f32.gmra.mrb[0].mxu0 %v1814
        %v1888 = vpop.f32.mrb[0].mxu0
        %v1889 = vadd.f32 %v673, %v1888
        %v1890 = vpop.f32.mrb[0].mxu0
        %1891 = vmatprep.mubr.f32.mxu0 0.0
        %1892 = vmatmul.mubr.f32.gmra.mrb[0].mxu0 %v1816
        %v1893 = vpop.f32.mrb[0].mxu0
        %v1894 = vadd.f32 %v674, %v1893
        %v1895 = vpop.f32.mrb[0].mxu0
        %1896 = vdwg.mxu0
        %v1897 = vadd.f32 %v1616, %v679
        %v1898 = vadd.f32 %v1621, %v680
        %v1899 = vadd.f32 %v1707, %v681
        %v1900 = vadd.f32 %v1712, %v682
        %v1901 = vadd.f32 %v1798, %v683
        %v1902 = vadd.f32 %v1803, %v684
        %v1903 = vadd.f32 %v1889, %v685
        %v1904 = vadd.f32 %v1894, %v686
        %v1905 = vsel %vm1068, %v1897, -inf
        %1906 = vmax.xlane.f32.xlu0 %v1905
        %v1907 = vpop.xlane.xlu0 %1906
        %v1908 = vsel %vm1068, %v1898, -inf
        %1909 = vmax.xlane.f32.xlu0 %v1908
        %v1910 = vpop.xlane.xlu0 %1909
        %v1911 = vsel %vm1068, %v1899, -inf
        %1912 = vmax.xlane.f32.xlu0 %v1911
        %v1913 = vpop.xlane.xlu0 %1912
        %v1914 = vsel %vm1068, %v1900, -inf
        %1915 = vmax.xlane.f32.xlu0 %v1914
        %v1916 = vpop.xlane.xlu0 %1915
        %v1917 = vsel %vm1068, %v1901, -inf
        %1918 = vmax.xlane.f32.xlu0 %v1917
        %v1919 = vpop.xlane.xlu0 %1918
        %v1920 = vsel %vm1068, %v1902, -inf
        %1921 = vmax.xlane.f32.xlu0 %v1920
        %v1922 = vpop.xlane.xlu0 %1921
        %v1923 = vsel %vm1068, %v1903, -inf
        %1924 = vmax.xlane.f32.xlu0 %v1923
        %v1925 = vpop.xlane.xlu0 %1924
        %v1926 = vsel %vm1068, %v1904, -inf
        %1927 = vmax.xlane.f32.xlu0 %v1926
        %v1928 = vpop.xlane.xlu0 %1927
        %v1929 = vsub.f32 %v1897, %v1907
        %v1930 = vsub.f32 %v1898, %v1910
        %v1931 = vsub.f32 %v1899, %v1913
        %v1932 = vsub.f32 %v1900, %v1916
        %v1933 = vsub.f32 %v1901, %v1919
        %v1934 = vsub.f32 %v1902, %v1922
        %v1935 = vsub.f32 %v1903, %v1925
        %v1936 = vsub.f32 %v1904, %v1928
        %v1937 = vmul.f32 %v1929, 1.442695
        %v1938 = vpow.pop %v1937
        %v1939 = vmul.f32 %v1930, 1.442695
        %v1940 = vpow.pop %v1939
        %v1941 = vmul.f32 %v1931, 1.442695
        %v1942 = vpow.pop %v1941
        %v1943 = vmul.f32 %v1932, 1.442695
        %v1944 = vpow.pop %v1943
        %v1945 = vmul.f32 %v1933, 1.442695
        %v1946 = vpow.pop %v1945
        %v1947 = vmul.f32 %v1934, 1.442695
        %v1948 = vpow.pop %v1947
        %v1949 = vmul.f32 %v1935, 1.442695
        %v1950 = vpow.pop %v1949
        %v1951 = vmul.f32 %v1936, 1.442695
        %v1952 = vpow.pop %v1951
        %v1953 = vsel %vm1068, %v1938, 0.0
        %1954 = vadd.xlane.f32.xlu0 %v1953
        %v1955 = vpop.xlane.xlu0 %1954
        %v1956 = vsel %vm1068, %v1940, 0.0
        %1957 = vadd.xlane.f32.xlu0 %v1956
        %v1958 = vpop.xlane.xlu0 %1957
        %v1959 = vsel %vm1068, %v1942, 0.0
        %1960 = vadd.xlane.f32.xlu0 %v1959
        %v1961 = vpop.xlane.xlu0 %1960
        %v1962 = vsel %vm1068, %v1944, 0.0
        %1963 = vadd.xlane.f32.xlu0 %v1962
        %v1964 = vpop.xlane.xlu0 %1963
        %v1965 = vsel %vm1068, %v1946, 0.0
        %1966 = vadd.xlane.f32.xlu0 %v1965
        %v1967 = vpop.xlane.xlu0 %1966
        %v1968 = vsel %vm1068, %v1948, 0.0
        %1969 = vadd.xlane.f32.xlu0 %v1968
        %v1970 = vpop.xlane.xlu0 %1969
        %v1971 = vsel %vm1068, %v1950, 0.0
        %1972 = vadd.xlane.f32.xlu0 %v1971
        %v1973 = vpop.xlane.xlu0 %1972
        %v1974 = vsel %vm1068, %v1952, 0.0
        %1975 = vadd.xlane.f32.xlu0 %v1974
        %v1976 = vpop.xlane.xlu0 %1975
        %v1977 = vrcp.pop %v1955
        %v1978 = vrcp.pop %v1958
        %v1979 = vrcp.pop %v1961
        %v1980 = vrcp.pop %v1964
        %v1981 = vrcp.pop %v1967
        %v1982 = vrcp.pop %v1970
        %v1983 = vrcp.pop %v1973
        %v1984 = vrcp.pop %v1976
        %v1985 = vmul.f32 %v1938, %v1977
        %v1986 = vmul.f32 %v1940, %v1978
        %v1987 = vmul.f32 %v1942, %v1979
        %v1988 = vmul.f32 %v1944, %v1980
        %v1989 = vmul.f32 %v1946, %v1981
        %v1990 = vmul.f32 %v1948, %v1982
        %v1991 = vmul.f32 %v1950, %v1983
        %v1992 = vmul.f32 %v1952, %v1984
        %s1993 = sld [smem:[#allocation3 + $0x1]]
        %v1994 = vstv %s1993
        %v1995 = vmul.f32 %v1985, %v1994
        %v1996 = vmul.f32 %v1986, %v1994
        %v1997 = vmul.f32 %v1987, %v1994
        %v1998 = vmul.f32 %v1988, %v1994
        %v1999 = vmul.f32 %v1989, %v1994
        %v2000 = vmul.f32 %v1990, %v1994
        %v2001 = vmul.f32 %v1991, %v1994
        %v2002 = vmul.f32 %v1992, %v1994
        %s2003 = sld [smem:[#allocation5 + $0x1]]
        %v2004 = vstv %s2003
        %v2005 = vsub.f32 %v1995, %v2004
        %v2006 = vsub.f32 %v1996, %v2004
        %v2007 = vsub.f32 %v1997, %v2004
        %v2008 = vsub.f32 %v1998, %v2004
        %v2009 = vsub.f32 %v1999, %v2004
        %v2010 = vsub.f32 %v2000, %v2004
        %v2011 = vsub.f32 %v2001, %v2004
        %v2012 = vsub.f32 %v2002, %v2004
        %2013 = vrot.lane.b32.xlu0 %v641, 56
        %v2014 = vpop.permute.xlu0 %2013
        %2015 = vrot.lane.b32.xlu0 %v644, 56
        %v2016 = vpop.permute.xlu0 %2015
        %v2020 = vsel %vm1068, %v2005, 0
        %v2023 = vsel %vm1068, %v2006, 0
        %2025 = vmatprep.subr.mxu0 0.0
        %2026 = vmatpush1.msra.mxu0 %v2014
        %2027 = vmatprep.subr.mxu0 0.0
        %2028 = vmatpush1.msra.mxu0 %v2016
        %2029 = vmatprep.subr.mxu0 0.0
        %2030 = vmatpush1.msra.mxu0 0.0
        %2031 = vmatprep.subr.mxu0 0.0
        %2032 = vmatpush1.msra.mxu0 0.0
        %2033 = vmatprep.subr.mxu0 0.0
        %2034 = vmatpush1.msra.mxu0 0.0
        %2035 = vmatprep.subr.mxu0 0.0
        %2036 = vmatpush1.msra.mxu0 0.0
        %2037 = vmatprep.subr.mxu0 0.0
        %2038 = vmatpush1.msra.mxu0 0.0
        %2039 = vmatprep.subr.mxu0 0.0
        %2040 = vmatpush1.msra.mxu0 0.0
        %2041 = vmatprep.subr.mxu0 0.0
        %2042 = vmatpush1.msra.mxu0 0.0
        %2043 = vmatprep.subr.mxu0 0.0
        %2044 = vmatpush1.msra.mxu0 0.0
        %2045 = vmatprep.subr.mxu0 0.0
        %2046 = vmatpush1.msra.mxu0 0.0
        %2047 = vmatprep.subr.mxu0 0.0
        %2048 = vmatpush1.msra.mxu0 0.0
        %2049 = vmatprep.subr.mxu0 0.0
        %2050 = vmatpush1.msra.mxu0 0.0
        %2051 = vmatprep.subr.mxu0 0.0
        %2052 = vmatpush1.msra.mxu0 0.0
        %2053 = vmatprep.subr.mxu0 0.0
        %2054 = vmatpush1.msra.mxu0 0.0
        %2055 = vmatprep.subr.mxu0 0.0
        %2056 = vmatpush1.msra.mxu0 0.0
        %2057 = vmatprep.subr.mxu0 0.0
        %2058 = vmatpush1.msra.mxu0 0.0
        %2059 = vmatprep.subr.mxu0 0.0
        %2060 = vmatpush1.msra.mxu0 0.0
        %2061 = vmatprep.subr.mxu0 0.0
        %2062 = vmatpush1.msra.mxu0 0.0
        %2063 = vmatprep.subr.mxu0 0.0
        %2064 = vmatpush1.msra.mxu0 0.0
        %2065 = vmatprep.subr.mxu0 0.0
        %2066 = vmatpush1.msra.mxu0 0.0
        %2067 = vmatprep.subr.mxu0 0.0
        %2068 = vmatpush1.msra.mxu0 0.0
        %2069 = vmatprep.subr.mxu0 0.0
        %2070 = vmatpush1.msra.mxu0 0.0
        %2071 = vmatprep.subr.mxu0 0.0
        %2072 = vmatpush1.msra.mxu0 0.0
        %2073 = vmatprep.subr.mxu0 0.0
        %2074 = vmatpush1.msra.mxu0 0.0
        %2075 = vmatprep.subr.mxu0 0.0
        %2076 = vmatpush1.msra.mxu0 0.0
        %2077 = vmatprep.subr.mxu0 0.0
        %2078 = vmatpush1.msra.mxu0 0.0
        %2079 = vmatprep.subr.mxu0 0.0
        %2080 = vmatpush1.msra.mxu0 0.0
        %2081 = vmatprep.subr.mxu0 0.0
        %2082 = vmatpush1.msra.mxu0 0.0
        %2083 = vmatprep.subr.mxu0 0.0
        %2084 = vmatpush1.msra.mxu0 0.0
        %2085 = vmatprep.subr.mxu0 0.0
        %2086 = vmatpush1.msra.mxu0 0.0
        %2087 = vmatprep.subr.mxu0 0.0
        %2088 = vmatpush1.msra.mxu0 0.0
        %2089 = vmatprep.mubr.f32.mxu0 0.0
        %2090 = vmatmul.mubr.f32.gmra.mrb[0].mxu0 %v2020
        %v2091 = vpop.f32.mrb[0].mxu0
        %v2092 = vadd.f32 0.0, %v2091
        %v2093 = vpop.f32.mrb[0].mxu0
        %2094 = vmatprep.mubr.f32.mxu0 0.0
        %2095 = vmatmul.mubr.f32.gmra.mrb[0].mxu0 %v2023
        %v2096 = vpop.f32.mrb[0].mxu0
        %v2097 = vadd.f32 0.0, %v2096
        %v2098 = vpop.f32.mrb[0].mxu0
        %2099 = vdwg.mxu0
        %2100 = vrot.lane.b32.xlu0 %v649, 56
        %v2101 = vpop.permute.xlu0 %2100
        %2102 = vrot.lane.b32.xlu0 %v652, 56
        %v2103 = vpop.permute.xlu0 %2102
        %v2107 = vsel %vm1068, %v2007, 0
        %v2110 = vsel %vm1068, %v2008, 0
        %2112 = vmatprep.subr.mxu0 0.0
        %2113 = vmatpush1.msra.mxu0 %v2101
        %2114 = vmatprep.subr.mxu0 0.0
        %2115 = vmatpush1.msra.mxu0 %v2103
        %2116 = vmatprep.subr.mxu0 0.0
        %2117 = vmatpush1.msra.mxu0 0.0
        %2118 = vmatprep.subr.mxu0 0.0
        %2119 = vmatpush1.msra.mxu0 0.0
        %2120 = vmatprep.subr.mxu0 0.0
        %2121 = vmatpush1.msra.mxu0 0.0
        %2122 = vmatprep.subr.mxu0 0.0
        %2123 = vmatpush1.msra.mxu0 0.0
        %2124 = vmatprep.subr.mxu0 0.0
        %2125 = vmatpush1.msra.mxu0 0.0
        %2126 = vmatprep.subr.mxu0 0.0
        %2127 = vmatpush1.msra.mxu0 0.0
        %2128 = vmatprep.subr.mxu0 0.0
        %2129 = vmatpush1.msra.mxu0 0.0
        %2130 = vmatprep.subr.mxu0 0.0
        %2131 = vmatpush1.msra.mxu0 0.0
        %2132 = vmatprep.subr.mxu0 0.0
        %2133 = vmatpush1.msra.mxu0 0.0
        %2134 = vmatprep.subr.mxu0 0.0
        %2135 = vmatpush1.msra.mxu0 0.0
        %2136 = vmatprep.subr.mxu0 0.0
        %2137 = vmatpush1.msra.mxu0 0.0
        %2138 = vmatprep.subr.mxu0 0.0
        %2139 = vmatpush1.msra.mxu0 0.0
        %2140 = vmatprep.subr.mxu0 0.0
        %2141 = vmatpush1.msra.mxu0 0.0
        %2142 = vmatprep.subr.mxu0 0.0
        %2143 = vmatpush1.msra.mxu0 0.0
        %2144 = vmatprep.subr.mxu0 0.0
        %2145 = vmatpush1.msra.mxu0 0.0
        %2146 = vmatprep.subr.mxu0 0.0
        %2147 = vmatpush1.msra.mxu0 0.0
        %2148 = vmatprep.subr.mxu0 0.0
        %2149 = vmatpush1.msra.mxu0 0.0
        %2150 = vmatprep.subr.mxu0 0.0
        %2151 = vmatpush1.msra.mxu0 0.0
        %2152 = vmatprep.subr.mxu0 0.0
        %2153 = vmatpush1.msra.mxu0 0.0
        %2154 = vmatprep.subr.mxu0 0.0
        %2155 = vmatpush1.msra.mxu0 0.0
        %2156 = vmatprep.subr.mxu0 0.0
        %2157 = vmatpush1.msra.mxu0 0.0
        %2158 = vmatprep.subr.mxu0 0.0
        %2159 = vmatpush1.msra.mxu0 0.0
        %2160 = vmatprep.subr.mxu0 0.0
        %2161 = vmatpush1.msra.mxu0 0.0
        %2162 = vmatprep.subr.mxu0 0.0
        %2163 = vmatpush1.msra.mxu0 0.0
        %2164 = vmatprep.subr.mxu0 0.0
        %2165 = vmatpush1.msra.mxu0 0.0
        %2166 = vmatprep.subr.mxu0 0.0
        %2167 = vmatpush1.msra.mxu0 0.0
        %2168 = vmatprep.subr.mxu0 0.0
        %2169 = vmatpush1.msra.mxu0 0.0
        %2170 = vmatprep.subr.mxu0 0.0
        %2171 = vmatpush1.msra.mxu0 0.0
        %2172 = vmatprep.subr.mxu0 0.0
        %2173 = vmatpush1.msra.mxu0 0.0
        %2174 = vmatprep.subr.mxu0 0.0
        %2175 = vmatpush1.msra.mxu0 0.0
        %2176 = vmatprep.mubr.f32.mxu0 0.0
        %2177 = vmatmul.mubr.f32.gmra.mrb[0].mxu0 %v2107
        %v2178 = vpop.f32.mrb[0].mxu0
        %v2179 = vadd.f32 0.0, %v2178
        %v2180 = vpop.f32.mrb[0].mxu0
        %2181 = vmatprep.mubr.f32.mxu0 0.0
        %2182 = vmatmul.mubr.f32.gmra.mrb[0].mxu0 %v2110
        %v2183 = vpop.f32.mrb[0].mxu0
        %v2184 = vadd.f32 0.0, %v2183
        %v2185 = vpop.f32.mrb[0].mxu0
        %2186 = vdwg.mxu0
        %2187 = vrot.lane.b32.xlu0 %v657, 56
        %v2188 = vpop.permute.xlu0 %2187
        %2189 = vrot.lane.b32.xlu0 %v660, 56
        %v2190 = vpop.permute.xlu0 %2189
        %v2194 = vsel %vm1068, %v2009, 0
        %v2197 = vsel %vm1068, %v2010, 0
        %2199 = vmatprep.subr.mxu0 0.0
        %2200 = vmatpush1.msra.mxu0 %v2188
        %2201 = vmatprep.subr.mxu0 0.0
        %2202 = vmatpush1.msra.mxu0 %v2190
        %2203 = vmatprep.subr.mxu0 0.0
        %2204 = vmatpush1.msra.mxu0 0.0
        %2205 = vmatprep.subr.mxu0 0.0
        %2206 = vmatpush1.msra.mxu0 0.0
        %2207 = vmatprep.subr.mxu0 0.0
        %2208 = vmatpush1.msra.mxu0 0.0
        %2209 = vmatprep.subr.mxu0 0.0
        %2210 = vmatpush1.msra.mxu0 0.0
        %2211 = vmatprep.subr.mxu0 0.0
        %2212 = vmatpush1.msra.mxu0 0.0
        %2213 = vmatprep.subr.mxu0 0.0
        %2214 = vmatpush1.msra.mxu0 0.0
        %2215 = vmatprep.subr.mxu0 0.0
        %2216 = vmatpush1.msra.mxu0 0.0
        %2217 = vmatprep.subr.mxu0 0.0
        %2218 = vmatpush1.msra.mxu0 0.0
        %2219 = vmatprep.subr.mxu0 0.0
        %2220 = vmatpush1.msra.mxu0 0.0
        %2221 = vmatprep.subr.mxu0 0.0
        %2222 = vmatpush1.msra.mxu0 0.0
        %2223 = vmatprep.subr.mxu0 0.0
        %2224 = vmatpush1.msra.mxu0 0.0
        %2225 = vmatprep.subr.mxu0 0.0
        %2226 = vmatpush1.msra.mxu0 0.0
        %2227 = vmatprep.subr.mxu0 0.0
        %2228 = vmatpush1.msra.mxu0 0.0
        %2229 = vmatprep.subr.mxu0 0.0
        %2230 = vmatpush1.msra.mxu0 0.0
        %2231 = vmatprep.subr.mxu0 0.0
        %2232 = vmatpush1.msra.mxu0 0.0
        %2233 = vmatprep.subr.mxu0 0.0
        %2234 = vmatpush1.msra.mxu0 0.0
        %2235 = vmatprep.subr.mxu0 0.0
        %2236 = vmatpush1.msra.mxu0 0.0
        %2237 = vmatprep.subr.mxu0 0.0
        %2238 = vmatpush1.msra.mxu0 0.0
        %2239 = vmatprep.subr.mxu0 0.0
        %2240 = vmatpush1.msra.mxu0 0.0
        %2241 = vmatprep.subr.mxu0 0.0
        %2242 = vmatpush1.msra.mxu0 0.0
        %2243 = vmatprep.subr.mxu0 0.0
        %2244 = vmatpush1.msra.mxu0 0.0
        %2245 = vmatprep.subr.mxu0 0.0
        %2246 = vmatpush1.msra.mxu0 0.0
        %2247 = vmatprep.subr.mxu0 0.0
        %2248 = vmatpush1.msra.mxu0 0.0
        %2249 = vmatprep.subr.mxu0 0.0
        %2250 = vmatpush1.msra.mxu0 0.0
        %2251 = vmatprep.subr.mxu0 0.0
        %2252 = vmatpush1.msra.mxu0 0.0
        %2253 = vmatprep.subr.mxu0 0.0
        %2254 = vmatpush1.msra.mxu0 0.0
        %2255 = vmatprep.subr.mxu0 0.0
        %2256 = vmatpush1.msra.mxu0 0.0
        %2257 = vmatprep.subr.mxu0 0.0
        %2258 = vmatpush1.msra.mxu0 0.0
        %2259 = vmatprep.subr.mxu0 0.0
        %2260 = vmatpush1.msra.mxu0 0.0
        %2261 = vmatprep.subr.mxu0 0.0
        %2262 = vmatpush1.msra.mxu0 0.0
        %2263 = vmatprep.mubr.f32.mxu0 0.0
        %2264 = vmatmul.mubr.f32.gmra.mrb[0].mxu0 %v2194
        %v2265 = vpop.f32.mrb[0].mxu0
        %v2266 = vadd.f32 0.0, %v2265
        %v2267 = vpop.f32.mrb[0].mxu0
        %2268 = vmatprep.mubr.f32.mxu0 0.0
        %2269 = vmatmul.mubr.f32.gmra.mrb[0].mxu0 %v2197
        %v2270 = vpop.f32.mrb[0].mxu0
        %v2271 = vadd.f32 0.0, %v2270
        %v2272 = vpop.f32.mrb[0].mxu0
        %2273 = vdwg.mxu0
        %2274 = vrot.lane.b32.xlu0 %v665, 56
        %v2275 = vpop.permute.xlu0 %2274
        %2276 = vrot.lane.b32.xlu0 %v668, 56
        %v2277 = vpop.permute.xlu0 %2276
        %v2281 = vsel %vm1068, %v2011, 0
        %v2284 = vsel %vm1068, %v2012, 0
        %2286 = vmatprep.subr.mxu0 0.0
        %2287 = vmatpush1.msra.mxu0 %v2275
        %2288 = vmatprep.subr.mxu0 0.0
        %2289 = vmatpush1.msra.mxu0 %v2277
        %2290 = vmatprep.subr.mxu0 0.0
        %2291 = vmatpush1.msra.mxu0 0.0
        %2292 = vmatprep.subr.mxu0 0.0
        %2293 = vmatpush1.msra.mxu0 0.0
        %2294 = vmatprep.subr.mxu0 0.0
        %2295 = vmatpush1.msra.mxu0 0.0
        %2296 = vmatprep.subr.mxu0 0.0
        %2297 = vmatpush1.msra.mxu0 0.0
        %2298 = vmatprep.subr.mxu0 0.0
        %2299 = vmatpush1.msra.mxu0 0.0
        %2300 = vmatprep.subr.mxu0 0.0
        %2301 = vmatpush1.msra.mxu0 0.0
        %2302 = vmatprep.subr.mxu0 0.0
        %2303 = vmatpush1.msra.mxu0 0.0
        %2304 = vmatprep.subr.mxu0 0.0
        %2305 = vmatpush1.msra.mxu0 0.0
        %2306 = vmatprep.subr.mxu0 0.0
        %2307 = vmatpush1.msra.mxu0 0.0
        %2308 = vmatprep.subr.mxu0 0.0
        %2309 = vmatpush1.msra.mxu0 0.0
        %2310 = vmatprep.subr.mxu0 0.0
        %2311 = vmatpush1.msra.mxu0 0.0
        %2312 = vmatprep.subr.mxu0 0.0
        %2313 = vmatpush1.msra.mxu0 0.0
        %2314 = vmatprep.subr.mxu0 0.0
        %2315 = vmatpush1.msra.mxu0 0.0
        %2316 = vmatprep.subr.mxu0 0.0
        %2317 = vmatpush1.msra.mxu0 0.0
        %2318 = vmatprep.subr.mxu0 0.0
        %2319 = vmatpush1.msra.mxu0 0.0
        %2320 = vmatprep.subr.mxu0 0.0
        %2321 = vmatpush1.msra.mxu0 0.0
        %2322 = vmatprep.subr.mxu0 0.0
        %2323 = vmatpush1.msra.mxu0 0.0
        %2324 = vmatprep.subr.mxu0 0.0
        %2325 = vmatpush1.msra.mxu0 0.0
        %2326 = vmatprep.subr.mxu0 0.0
        %2327 = vmatpush1.msra.mxu0 0.0
        %2328 = vmatprep.subr.mxu0 0.0
        %2329 = vmatpush1.msra.mxu0 0.0
        %2330 = vmatprep.subr.mxu0 0.0
        %2331 = vmatpush1.msra.mxu0 0.0
        %2332 = vmatprep.subr.mxu0 0.0
        %2333 = vmatpush1.msra.mxu0 0.0
        %2334 = vmatprep.subr.mxu0 0.0
        %2335 = vmatpush1.msra.mxu0 0.0
        %2336 = vmatprep.subr.mxu0 0.0
        %2337 = vmatpush1.msra.mxu0 0.0
        %2338 = vmatprep.subr.mxu0 0.0
        %2339 = vmatpush1.msra.mxu0 0.0
        %2340 = vmatprep.subr.mxu0 0.0
        %2341 = vmatpush1.msra.mxu0 0.0
        %2342 = vmatprep.subr.mxu0 0.0
        %2343 = vmatpush1.msra.mxu0 0.0
        %2344 = vmatprep.subr.mxu0 0.0
        %2345 = vmatpush1.msra.mxu0 0.0
        %2346 = vmatprep.subr.mxu0 0.0
        %2347 = vmatpush1.msra.mxu0 0.0
        %2348 = vmatprep.subr.mxu0 0.0
        %2349 = vmatpush1.msra.mxu0 0.0
        %2350 = vmatprep.mubr.f32.mxu0 0.0
        %2351 = vmatmul.mubr.f32.gmra.mrb[0].mxu0 %v2281
        %v2352 = vpop.f32.mrb[0].mxu0
        %v2353 = vadd.f32 0.0, %v2352
        %v2354 = vpop.f32.mrb[0].mxu0
        %2355 = vmatprep.mubr.f32.mxu0 0.0
        %2356 = vmatmul.mubr.f32.gmra.mrb[0].mxu0 %v2284
        %v2357 = vpop.f32.mrb[0].mxu0
        %v2358 = vadd.f32 0.0, %v2357
        %v2359 = vpop.f32.mrb[0].mxu0
        %2360 = vdwg.mxu0
        %v2361 = vpack.c.bf16 %v2097, %v2092
        %v2362 = vpack.c.bf16 %v2184, %v2179
        %v2363 = vpack.c.bf16 %v2271, %v2266
        %v2364 = vpack.c.bf16 %v2358, %v2353
        %2369 = vrot.lane.b32.xlu0 %v2361, 8
        %v2370 = vpop.permute.xlu0 %2369
        %2371 = vrot.lane.b32.xlu0 %v2362, 8
        %v2372 = vpop.permute.xlu0 %2371
        %2373 = vrot.lane.b32.xlu0 %v2363, 8
        %v2374 = vpop.permute.xlu0 %2373
        %2375 = vrot.lane.b32.xlu0 %v2364, 8
        %v2376 = vpop.permute.xlu0 %2375
        %vm2381 = vcmask 130112
        %2382 = vst.msk [vmem:[#allocation2] sm:$0xff] %vm2381, %v2370
        %2383 = vst.msk [vmem:[#allocation2 + $0x8] sm:$0xff] %vm2381, %v2372
        %2384 = vst.msk [vmem:[#allocation2 + $0x10] sm:$0xff] %vm2381, %v2374
        %2385 = vst.msk [vmem:[#allocation2 + $0x18] sm:$0xff] %vm2381, %v2376
        %2386 = vrot.lane.b32.xlu0 %v687, 112
        %v2387 = vpop.permute.xlu0 %2386
        %2388 = vrot.lane.b32.xlu0 %v688, 112
        %v2389 = vpop.permute.xlu0 %2388
        %2390 = vrot.lane.b32.xlu0 %v641, 80
        %v2391 = vpop.permute.xlu0 %2390
        %2392 = vrot.lane.b32.xlu0 %v644, 80
        %v2393 = vpop.permute.xlu0 %2392
        %v2394 = vsel %vm701, %v2387, 0
        %v2396 = vsel %vm701, %v2389, 0
        %v2398 = vsel %vm701, %v2391, 0
        %v2400 = vsel %vm701, %v2393, 0
        %2402 = vmatprep.subr.mxu0 0.0
        %2403 = vmatpush1.xpose.msra.mxu0 %v2398
        %2404 = vmatprep.subr.mxu0 0.0
        %2405 = vmatpush1.xpose.msra.mxu0 %v2400
        %2406 = vmatprep.subr.mxu0 0.0
        %2407 = vmatpush1.xpose.msra.mxu0 0.0
        %2408 = vmatprep.subr.mxu0 0.0
        %2409 = vmatpush1.xpose.msra.mxu0 0.0
        %2410 = vmatprep.subr.mxu0 0.0
        %2411 = vmatpush1.xpose.msra.mxu0 0.0
        %2412 = vmatprep.subr.mxu0 0.0
        %2413 = vmatpush1.xpose.msra.mxu0 0.0
        %2414 = vmatprep.subr.mxu0 0.0
        %2415 = vmatpush1.xpose.msra.mxu0 0.0
        %2416 = vmatprep.subr.mxu0 0.0
        %2417 = vmatpush1.xpose.msra.mxu0 0.0
        %2418 = vmatprep.subr.mxu0 0.0
        %2419 = vmatpush1.xpose.msra.mxu0 0.0
        %2420 = vmatprep.subr.mxu0 0.0
        %2421 = vmatpush1.xpose.msra.mxu0 0.0
        %2422 = vmatprep.subr.mxu0 0.0
        %2423 = vmatpush1.xpose.msra.mxu0 0.0
        %2424 = vmatprep.subr.mxu0 0.0
        %2425 = vmatpush1.xpose.msra.mxu0 0.0
        %2426 = vmatprep.subr.mxu0 0.0
        %2427 = vmatpush1.xpose.msra.mxu0 0.0
        %2428 = vmatprep.subr.mxu0 0.0
        %2429 = vmatpush1.xpose.msra.mxu0 0.0
        %2430 = vmatprep.subr.mxu0 0.0
        %2431 = vmatpush1.xpose.msra.mxu0 0.0
        %2432 = vmatprep.subr.mxu0 0.0
        %2433 = vmatpush1.xpose.msra.mxu0 0.0
        %2434 = vmatprep.subr.mxu0 0.0
        %2435 = vmatpush1.xpose.msra.mxu0 0.0
        %2436 = vmatprep.subr.mxu0 0.0
        %2437 = vmatpush1.xpose.msra.mxu0 0.0
        %2438 = vmatprep.subr.mxu0 0.0
        %2439 = vmatpush1.xpose.msra.mxu0 0.0
        %2440 = vmatprep.subr.mxu0 0.0
        %2441 = vmatpush1.xpose.msra.mxu0 0.0
        %2442 = vmatprep.subr.mxu0 0.0
        %2443 = vmatpush1.xpose.msra.mxu0 0.0
        %2444 = vmatprep.subr.mxu0 0.0
        %2445 = vmatpush1.xpose.msra.mxu0 0.0
        %2446 = vmatprep.subr.mxu0 0.0
        %2447 = vmatpush1.xpose.msra.mxu0 0.0
        %2448 = vmatprep.subr.mxu0 0.0
        %2449 = vmatpush1.xpose.msra.mxu0 0.0
        %2450 = vmatprep.subr.mxu0 0.0
        %2451 = vmatpush1.xpose.msra.mxu0 0.0
        %2452 = vmatprep.subr.mxu0 0.0
        %2453 = vmatpush1.xpose.msra.mxu0 0.0
        %2454 = vmatprep.subr.mxu0 0.0
        %2455 = vmatpush1.xpose.msra.mxu0 0.0
        %2456 = vmatprep.subr.mxu0 0.0
        %2457 = vmatpush1.xpose.msra.mxu0 0.0
        %2458 = vmatprep.subr.mxu0 0.0
        %2459 = vmatpush1.xpose.msra.mxu0 0.0
        %2460 = vmatprep.subr.mxu0 0.0
        %2461 = vmatpush1.xpose.msra.mxu0 0.0
        %2462 = vmatprep.subr.mxu0 0.0
        %2463 = vmatpush1.xpose.msra.mxu0 0.0
        %2464 = vmatprep.subr.mxu0 0.0
        %2465 = vmatpush1.xpose.msra.mxu0 0.0
        %2466 = vmatprep.mubr.f32.mxu0 0.0
        %2467 = vmatmul.mubr.f32.gmra.mrb[0].mxu0 %v2394
        %v2468 = vpop.f32.mrb[0].mxu0
        %v2469 = vadd.f32 %v675, %v2468
        %v2470 = vpop.f32.mrb[0].mxu0
        %2471 = vmatprep.mubr.f32.mxu0 0.0
        %2472 = vmatmul.mubr.f32.gmra.mrb[0].mxu0 %v2396
        %v2473 = vpop.f32.mrb[0].mxu0
        %v2474 = vadd.f32 %v676, %v2473
        %v2475 = vpop.f32.mrb[0].mxu0
        %2476 = vdwg.mxu0
        %2477 = vrot.lane.b32.xlu0 %v689, 112
        %v2478 = vpop.permute.xlu0 %2477
        %2479 = vrot.lane.b32.xlu0 %v690, 112
        %v2480 = vpop.permute.xlu0 %2479
        %2481 = vrot.lane.b32.xlu0 %v649, 80
        %v2482 = vpop.permute.xlu0 %2481
        %2483 = vrot.lane.b32.xlu0 %v652, 80
        %v2484 = vpop.permute.xlu0 %2483
        %v2485 = vsel %vm701, %v2478, 0
        %v2487 = vsel %vm701, %v2480, 0
        %v2489 = vsel %vm701, %v2482, 0
        %v2491 = vsel %vm701, %v2484, 0
        %2493 = vmatprep.subr.mxu0 0.0
        %2494 = vmatpush1.xpose.msra.mxu0 %v2489
        %2495 = vmatprep.subr.mxu0 0.0
        %2496 = vmatpush1.xpose.msra.mxu0 %v2491
        %2497 = vmatprep.subr.mxu0 0.0
        %2498 = vmatpush1.xpose.msra.mxu0 0.0
        %2499 = vmatprep.subr.mxu0 0.0
        %2500 = vmatpush1.xpose.msra.mxu0 0.0
        %2501 = vmatprep.subr.mxu0 0.0
        %2502 = vmatpush1.xpose.msra.mxu0 0.0
        %2503 = vmatprep.subr.mxu0 0.0
        %2504 = vmatpush1.xpose.msra.mxu0 0.0
        %2505 = vmatprep.subr.mxu0 0.0
        %2506 = vmatpush1.xpose.msra.mxu0 0.0
        %2507 = vmatprep.subr.mxu0 0.0
        %2508 = vmatpush1.xpose.msra.mxu0 0.0
        %2509 = vmatprep.subr.mxu0 0.0
        %2510 = vmatpush1.xpose.msra.mxu0 0.0
        %2511 = vmatprep.subr.mxu0 0.0
        %2512 = vmatpush1.xpose.msra.mxu0 0.0
        %2513 = vmatprep.subr.mxu0 0.0
        %2514 = vmatpush1.xpose.msra.mxu0 0.0
        %2515 = vmatprep.subr.mxu0 0.0
        %2516 = vmatpush1.xpose.msra.mxu0 0.0
        %2517 = vmatprep.subr.mxu0 0.0
        %2518 = vmatpush1.xpose.msra.mxu0 0.0
        %2519 = vmatprep.subr.mxu0 0.0
        %2520 = vmatpush1.xpose.msra.mxu0 0.0
        %2521 = vmatprep.subr.mxu0 0.0
        %2522 = vmatpush1.xpose.msra.mxu0 0.0
        %2523 = vmatprep.subr.mxu0 0.0
        %2524 = vmatpush1.xpose.msra.mxu0 0.0
        %2525 = vmatprep.subr.mxu0 0.0
        %2526 = vmatpush1.xpose.msra.mxu0 0.0
        %2527 = vmatprep.subr.mxu0 0.0
        %2528 = vmatpush1.xpose.msra.mxu0 0.0
        %2529 = vmatprep.subr.mxu0 0.0
        %2530 = vmatpush1.xpose.msra.mxu0 0.0
        %2531 = vmatprep.subr.mxu0 0.0
        %2532 = vmatpush1.xpose.msra.mxu0 0.0
        %2533 = vmatprep.subr.mxu0 0.0
        %2534 = vmatpush1.xpose.msra.mxu0 0.0
        %2535 = vmatprep.subr.mxu0 0.0
        %2536 = vmatpush1.xpose.msra.mxu0 0.0
        %2537 = vmatprep.subr.mxu0 0.0
        %2538 = vmatpush1.xpose.msra.mxu0 0.0
        %2539 = vmatprep.subr.mxu0 0.0
        %2540 = vmatpush1.xpose.msra.mxu0 0.0
        %2541 = vmatprep.subr.mxu0 0.0
        %2542 = vmatpush1.xpose.msra.mxu0 0.0
        %2543 = vmatprep.subr.mxu0 0.0
        %2544 = vmatpush1.xpose.msra.mxu0 0.0
        %2545 = vmatprep.subr.mxu0 0.0
        %2546 = vmatpush1.xpose.msra.mxu0 0.0
        %2547 = vmatprep.subr.mxu0 0.0
        %2548 = vmatpush1.xpose.msra.mxu0 0.0
        %2549 = vmatprep.subr.mxu0 0.0
        %2550 = vmatpush1.xpose.msra.mxu0 0.0
        %2551 = vmatprep.subr.mxu0 0.0
        %2552 = vmatpush1.xpose.msra.mxu0 0.0
        %2553 = vmatprep.subr.mxu0 0.0
        %2554 = vmatpush1.xpose.msra.mxu0 0.0
        %2555 = vmatprep.subr.mxu0 0.0
        %2556 = vmatpush1.xpose.msra.mxu0 0.0
        %2557 = vmatprep.mubr.f32.mxu0 0.0
        %2558 = vmatmul.mubr.f32.gmra.mrb[0].mxu0 %v2485
        %v2559 = vpop.f32.mrb[0].mxu0
        %v2560 = vadd.f32 %v675, %v2559
        %v2561 = vpop.f32.mrb[0].mxu0
        %2562 = vmatprep.mubr.f32.mxu0 0.0
        %2563 = vmatmul.mubr.f32.gmra.mrb[0].mxu0 %v2487
        %v2564 = vpop.f32.mrb[0].mxu0
        %v2565 = vadd.f32 %v676, %v2564
        %v2566 = vpop.f32.mrb[0].mxu0
        %2567 = vdwg.mxu0
        %2568 = vrot.lane.b32.xlu0 %v691, 112
        %v2569 = vpop.permute.xlu0 %2568
        %2570 = vrot.lane.b32.xlu0 %v692, 112
        %v2571 = vpop.permute.xlu0 %2570
        %2572 = vrot.lane.b32.xlu0 %v657, 80
        %v2573 = vpop.permute.xlu0 %2572
        %2574 = vrot.lane.b32.xlu0 %v660, 80
        %v2575 = vpop.permute.xlu0 %2574
        %v2576 = vsel %vm701, %v2569, 0
        %v2578 = vsel %vm701, %v2571, 0
        %v2580 = vsel %vm701, %v2573, 0
        %v2582 = vsel %vm701, %v2575, 0
        %2584 = vmatprep.subr.mxu0 0.0
        %2585 = vmatpush1.xpose.msra.mxu0 %v2580
        %2586 = vmatprep.subr.mxu0 0.0
        %2587 = vmatpush1.xpose.msra.mxu0 %v2582
        %2588 = vmatprep.subr.mxu0 0.0
        %2589 = vmatpush1.xpose.msra.mxu0 0.0
        %2590 = vmatprep.subr.mxu0 0.0
        %2591 = vmatpush1.xpose.msra.mxu0 0.0
        %2592 = vmatprep.subr.mxu0 0.0
        %2593 = vmatpush1.xpose.msra.mxu0 0.0
        %2594 = vmatprep.subr.mxu0 0.0
        %2595 = vmatpush1.xpose.msra.mxu0 0.0
        %2596 = vmatprep.subr.mxu0 0.0
        %2597 = vmatpush1.xpose.msra.mxu0 0.0
        %2598 = vmatprep.subr.mxu0 0.0
        %2599 = vmatpush1.xpose.msra.mxu0 0.0
        %2600 = vmatprep.subr.mxu0 0.0
        %2601 = vmatpush1.xpose.msra.mxu0 0.0
        %2602 = vmatprep.subr.mxu0 0.0
        %2603 = vmatpush1.xpose.msra.mxu0 0.0
        %2604 = vmatprep.subr.mxu0 0.0
        %2605 = vmatpush1.xpose.msra.mxu0 0.0
        %2606 = vmatprep.subr.mxu0 0.0
        %2607 = vmatpush1.xpose.msra.mxu0 0.0
        %2608 = vmatprep.subr.mxu0 0.0
        %2609 = vmatpush1.xpose.msra.mxu0 0.0
        %2610 = vmatprep.subr.mxu0 0.0
        %2611 = vmatpush1.xpose.msra.mxu0 0.0
        %2612 = vmatprep.subr.mxu0 0.0
        %2613 = vmatpush1.xpose.msra.mxu0 0.0
        %2614 = vmatprep.subr.mxu0 0.0
        %2615 = vmatpush1.xpose.msra.mxu0 0.0
        %2616 = vmatprep.subr.mxu0 0.0
        %2617 = vmatpush1.xpose.msra.mxu0 0.0
        %2618 = vmatprep.subr.mxu0 0.0
        %2619 = vmatpush1.xpose.msra.mxu0 0.0
        %2620 = vmatprep.subr.mxu0 0.0
        %2621 = vmatpush1.xpose.msra.mxu0 0.0
        %2622 = vmatprep.subr.mxu0 0.0
        %2623 = vmatpush1.xpose.msra.mxu0 0.0
        %2624 = vmatprep.subr.mxu0 0.0
        %2625 = vmatpush1.xpose.msra.mxu0 0.0
        %2626 = vmatprep.subr.mxu0 0.0
        %2627 = vmatpush1.xpose.msra.mxu0 0.0
        %2628 = vmatprep.subr.mxu0 0.0
        %2629 = vmatpush1.xpose.msra.mxu0 0.0
        %2630 = vmatprep.subr.mxu0 0.0
        %2631 = vmatpush1.xpose.msra.mxu0 0.0
        %2632 = vmatprep.subr.mxu0 0.0
        %2633 = vmatpush1.xpose.msra.mxu0 0.0
        %2634 = vmatprep.subr.mxu0 0.0
        %2635 = vmatpush1.xpose.msra.mxu0 0.0
        %2636 = vmatprep.subr.mxu0 0.0
        %2637 = vmatpush1.xpose.msra.mxu0 0.0
        %2638 = vmatprep.subr.mxu0 0.0
        %2639 = vmatpush1.xpose.msra.mxu0 0.0
        %2640 = vmatprep.subr.mxu0 0.0
        %2641 = vmatpush1.xpose.msra.mxu0 0.0
        %2642 = vmatprep.subr.mxu0 0.0
        %2643 = vmatpush1.xpose.msra.mxu0 0.0
        %2644 = vmatprep.subr.mxu0 0.0
        %2645 = vmatpush1.xpose.msra.mxu0 0.0
        %2646 = vmatprep.subr.mxu0 0.0
        %2647 = vmatpush1.xpose.msra.mxu0 0.0
        %2648 = vmatprep.mubr.f32.mxu0 0.0
        %2649 = vmatmul.mubr.f32.gmra.mrb[0].mxu0 %v2576
        %v2650 = vpop.f32.mrb[0].mxu0
        %v2651 = vadd.f32 %v675, %v2650
        %v2652 = vpop.f32.mrb[0].mxu0
        %2653 = vmatprep.mubr.f32.mxu0 0.0
        %2654 = vmatmul.mubr.f32.gmra.mrb[0].mxu0 %v2578
        %v2655 = vpop.f32.mrb[0].mxu0
        %v2656 = vadd.f32 %v676, %v2655
        %v2657 = vpop.f32.mrb[0].mxu0
        %2658 = vdwg.mxu0
        %2659 = vrot.lane.b32.xlu0 %v693, 112
        %v2660 = vpop.permute.xlu0 %2659
        %2661 = vrot.lane.b32.xlu0 %v694, 112
        %v2662 = vpop.permute.xlu0 %2661
        %2663 = vrot.lane.b32.xlu0 %v665, 80
        %v2664 = vpop.permute.xlu0 %2663
        %2665 = vrot.lane.b32.xlu0 %v668, 80
        %v2666 = vpop.permute.xlu0 %2665
        %v2667 = vsel %vm701, %v2660, 0
        %v2669 = vsel %vm701, %v2662, 0
        %v2671 = vsel %vm701, %v2664, 0
        %v2673 = vsel %vm701, %v2666, 0
        %2675 = vmatprep.subr.mxu0 0.0
        %2676 = vmatpush1.xpose.msra.mxu0 %v2671
        %2677 = vmatprep.subr.mxu0 0.0
        %2678 = vmatpush1.xpose.msra.mxu0 %v2673
        %2679 = vmatprep.subr.mxu0 0.0
        %2680 = vmatpush1.xpose.msra.mxu0 0.0
        %2681 = vmatprep.subr.mxu0 0.0
        %2682 = vmatpush1.xpose.msra.mxu0 0.0
        %2683 = vmatprep.subr.mxu0 0.0
        %2684 = vmatpush1.xpose.msra.mxu0 0.0
        %2685 = vmatprep.subr.mxu0 0.0
        %2686 = vmatpush1.xpose.msra.mxu0 0.0
        %2687 = vmatprep.subr.mxu0 0.0
        %2688 = vmatpush1.xpose.msra.mxu0 0.0
        %2689 = vmatprep.subr.mxu0 0.0
        %2690 = vmatpush1.xpose.msra.mxu0 0.0
        %2691 = vmatprep.subr.mxu0 0.0
        %2692 = vmatpush1.xpose.msra.mxu0 0.0
        %2693 = vmatprep.subr.mxu0 0.0
        %2694 = vmatpush1.xpose.msra.mxu0 0.0
        %2695 = vmatprep.subr.mxu0 0.0
        %2696 = vmatpush1.xpose.msra.mxu0 0.0
        %2697 = vmatprep.subr.mxu0 0.0
        %2698 = vmatpush1.xpose.msra.mxu0 0.0
        %2699 = vmatprep.subr.mxu0 0.0
        %2700 = vmatpush1.xpose.msra.mxu0 0.0
        %2701 = vmatprep.subr.mxu0 0.0
        %2702 = vmatpush1.xpose.msra.mxu0 0.0
        %2703 = vmatprep.subr.mxu0 0.0
        %2704 = vmatpush1.xpose.msra.mxu0 0.0
        %2705 = vmatprep.subr.mxu0 0.0
        %2706 = vmatpush1.xpose.msra.mxu0 0.0
        %2707 = vmatprep.subr.mxu0 0.0
        %2708 = vmatpush1.xpose.msra.mxu0 0.0
        %2709 = vmatprep.subr.mxu0 0.0
        %2710 = vmatpush1.xpose.msra.mxu0 0.0
        %2711 = vmatprep.subr.mxu0 0.0
        %2712 = vmatpush1.xpose.msra.mxu0 0.0
        %2713 = vmatprep.subr.mxu0 0.0
        %2714 = vmatpush1.xpose.msra.mxu0 0.0
        %2715 = vmatprep.subr.mxu0 0.0
        %2716 = vmatpush1.xpose.msra.mxu0 0.0
        %2717 = vmatprep.subr.mxu0 0.0
        %2718 = vmatpush1.xpose.msra.mxu0 0.0
        %2719 = vmatprep.subr.mxu0 0.0
        %2720 = vmatpush1.xpose.msra.mxu0 0.0
        %2721 = vmatprep.subr.mxu0 0.0
        %2722 = vmatpush1.xpose.msra.mxu0 0.0
        %2723 = vmatprep.subr.mxu0 0.0
        %2724 = vmatpush1.xpose.msra.mxu0 0.0
        %2725 = vmatprep.subr.mxu0 0.0
        %2726 = vmatpush1.xpose.msra.mxu0 0.0
        %2727 = vmatprep.subr.mxu0 0.0
        %2728 = vmatpush1.xpose.msra.mxu0 0.0
        %2729 = vmatprep.subr.mxu0 0.0
        %2730 = vmatpush1.xpose.msra.mxu0 0.0
        %2731 = vmatprep.subr.mxu0 0.0
        %2732 = vmatpush1.xpose.msra.mxu0 0.0
        %2733 = vmatprep.subr.mxu0 0.0
        %2734 = vmatpush1.xpose.msra.mxu0 0.0
        %2735 = vmatprep.subr.mxu0 0.0
        %2736 = vmatpush1.xpose.msra.mxu0 0.0
        %2737 = vmatprep.subr.mxu0 0.0
        %2738 = vmatpush1.xpose.msra.mxu0 0.0
        %2739 = vmatprep.mubr.f32.mxu0 0.0
        %2740 = vmatmul.mubr.f32.gmra.mrb[0].mxu0 %v2667
        %v2741 = vpop.f32.mrb[0].mxu0
        %v2742 = vadd.f32 %v675, %v2741
        %v2743 = vpop.f32.mrb[0].mxu0
        %2744 = vmatprep.mubr.f32.mxu0 0.0
        %2745 = vmatmul.mubr.f32.gmra.mrb[0].mxu0 %v2669
        %v2746 = vpop.f32.mrb[0].mxu0
        %v2747 = vadd.f32 %v676, %v2746
        %v2748 = vpop.f32.mrb[0].mxu0
        %2749 = vdwg.mxu0
        %v2750 = vadd.f32 %v2469, %v679
        %v2751 = vadd.f32 %v2474, %v680
        %v2752 = vadd.f32 %v2560, %v681
        %v2753 = vadd.f32 %v2565, %v682
        %v2754 = vadd.f32 %v2651, %v683
        %v2755 = vadd.f32 %v2656, %v684
        %v2756 = vadd.f32 %v2742, %v685
        %v2757 = vadd.f32 %v2747, %v686
        %v2758 = vsel %vm1068, %v2750, -inf
        %2759 = vmax.xlane.f32.xlu0 %v2758
        %v2760 = vpop.xlane.xlu0 %2759
        %v2761 = vsel %vm1068, %v2751, -inf
        %2762 = vmax.xlane.f32.xlu0 %v2761
        %v2763 = vpop.xlane.xlu0 %2762
        %v2764 = vsel %vm1068, %v2752, -inf
        %2765 = vmax.xlane.f32.xlu0 %v2764
        %v2766 = vpop.xlane.xlu0 %2765
        %v2767 = vsel %vm1068, %v2753, -inf
        %2768 = vmax.xlane.f32.xlu0 %v2767
        %v2769 = vpop.xlane.xlu0 %2768
        %v2770 = vsel %vm1068, %v2754, -inf
        %2771 = vmax.xlane.f32.xlu0 %v2770
        %v2772 = vpop.xlane.xlu0 %2771
        %v2773 = vsel %vm1068, %v2755, -inf
        %2774 = vmax.xlane.f32.xlu0 %v2773
        %v2775 = vpop.xlane.xlu0 %2774
        %v2776 = vsel %vm1068, %v2756, -inf
        %2777 = vmax.xlane.f32.xlu0 %v2776
        %v2778 = vpop.xlane.xlu0 %2777
        %v2779 = vsel %vm1068, %v2757, -inf
        %2780 = vmax.xlane.f32.xlu0 %v2779
        %v2781 = vpop.xlane.xlu0 %2780
        %v2782 = vsub.f32 %v2750, %v2760
        %v2783 = vsub.f32 %v2751, %v2763
        %v2784 = vsub.f32 %v2752, %v2766
        %v2785 = vsub.f32 %v2753, %v2769
        %v2786 = vsub.f32 %v2754, %v2772
        %v2787 = vsub.f32 %v2755, %v2775
        %v2788 = vsub.f32 %v2756, %v2778
        %v2789 = vsub.f32 %v2757, %v2781
        %v2790 = vmul.f32 %v2782, 1.442695
        %v2791 = vpow.pop %v2790
        %v2792 = vmul.f32 %v2783, 1.442695
        %v2793 = vpow.pop %v2792
        %v2794 = vmul.f32 %v2784, 1.442695
        %v2795 = vpow.pop %v2794
        %v2796 = vmul.f32 %v2785, 1.442695
        %v2797 = vpow.pop %v2796
        %v2798 = vmul.f32 %v2786, 1.442695
        %v2799 = vpow.pop %v2798
        %v2800 = vmul.f32 %v2787, 1.442695
        %v2801 = vpow.pop %v2800
        %v2802 = vmul.f32 %v2788, 1.442695
        %v2803 = vpow.pop %v2802
        %v2804 = vmul.f32 %v2789, 1.442695
        %v2805 = vpow.pop %v2804
        %v2806 = vsel %vm1068, %v2791, 0.0
        %2807 = vadd.xlane.f32.xlu0 %v2806
        %v2808 = vpop.xlane.xlu0 %2807
        %v2809 = vsel %vm1068, %v2793, 0.0
        %2810 = vadd.xlane.f32.xlu0 %v2809
        %v2811 = vpop.xlane.xlu0 %2810
        %v2812 = vsel %vm1068, %v2795, 0.0
        %2813 = vadd.xlane.f32.xlu0 %v2812
        %v2814 = vpop.xlane.xlu0 %2813
        %v2815 = vsel %vm1068, %v2797, 0.0
        %2816 = vadd.xlane.f32.xlu0 %v2815
        %v2817 = vpop.xlane.xlu0 %2816
        %v2818 = vsel %vm1068, %v2799, 0.0
        %2819 = vadd.xlane.f32.xlu0 %v2818
        %v2820 = vpop.xlane.xlu0 %2819
        %v2821 = vsel %vm1068, %v2801, 0.0
        %2822 = vadd.xlane.f32.xlu0 %v2821
        %v2823 = vpop.xlane.xlu0 %2822
        %v2824 = vsel %vm1068, %v2803, 0.0
        %2825 = vadd.xlane.f32.xlu0 %v2824
        %v2826 = vpop.xlane.xlu0 %2825
        %v2827 = vsel %vm1068, %v2805, 0.0
        %2828 = vadd.xlane.f32.xlu0 %v2827
        %v2829 = vpop.xlane.xlu0 %2828
        %v2830 = vrcp.pop %v2808
        %v2831 = vrcp.pop %v2811
        %v2832 = vrcp.pop %v2814
        %v2833 = vrcp.pop %v2817
        %v2834 = vrcp.pop %v2820
        %v2835 = vrcp.pop %v2823
        %v2836 = vrcp.pop %v2826
        %v2837 = vrcp.pop %v2829
        %v2838 = vmul.f32 %v2791, %v2830
        %v2839 = vmul.f32 %v2793, %v2831
        %v2840 = vmul.f32 %v2795, %v2832
        %v2841 = vmul.f32 %v2797, %v2833
        %v2842 = vmul.f32 %v2799, %v2834
        %v2843 = vmul.f32 %v2801, %v2835
        %v2844 = vmul.f32 %v2803, %v2836
        %v2845 = vmul.f32 %v2805, %v2837
        %s2846 = sld [smem:[#allocation3 + $0x2]]
        %v2847 = vstv %s2846
        %v2848 = vmul.f32 %v2838, %v2847
        %v2849 = vmul.f32 %v2839, %v2847
        %v2850 = vmul.f32 %v2840, %v2847
        %v2851 = vmul.f32 %v2841, %v2847
        %v2852 = vmul.f32 %v2842, %v2847
        %v2853 = vmul.f32 %v2843, %v2847
        %v2854 = vmul.f32 %v2844, %v2847
        %v2855 = vmul.f32 %v2845, %v2847
        %s2856 = sld [smem:[#allocation5 + $0x2]]
        %v2857 = vstv %s2856
        %v2858 = vsub.f32 %v2848, %v2857
        %v2859 = vsub.f32 %v2849, %v2857
        %v2860 = vsub.f32 %v2850, %v2857
        %v2861 = vsub.f32 %v2851, %v2857
        %v2862 = vsub.f32 %v2852, %v2857
        %v2863 = vsub.f32 %v2853, %v2857
        %v2864 = vsub.f32 %v2854, %v2857
        %v2865 = vsub.f32 %v2855, %v2857
        %2866 = vrot.lane.b32.xlu0 %v641, 48
        %v2867 = vpop.permute.xlu0 %2866
        %2868 = vrot.lane.b32.xlu0 %v644, 48
        %v2869 = vpop.permute.xlu0 %2868
        %v2873 = vsel %vm1068, %v2858, 0
        %v2876 = vsel %vm1068, %v2859, 0
        %2878 = vmatprep.subr.mxu0 0.0
        %2879 = vmatpush1.msra.mxu0 %v2867
        %2880 = vmatprep.subr.mxu0 0.0
        %2881 = vmatpush1.msra.mxu0 %v2869
        %2882 = vmatprep.subr.mxu0 0.0
        %2883 = vmatpush1.msra.mxu0 0.0
        %2884 = vmatprep.subr.mxu0 0.0
        %2885 = vmatpush1.msra.mxu0 0.0
        %2886 = vmatprep.subr.mxu0 0.0
        %2887 = vmatpush1.msra.mxu0 0.0
        %2888 = vmatprep.subr.mxu0 0.0
        %2889 = vmatpush1.msra.mxu0 0.0
        %2890 = vmatprep.subr.mxu0 0.0
        %2891 = vmatpush1.msra.mxu0 0.0
        %2892 = vmatprep.subr.mxu0 0.0
        %2893 = vmatpush1.msra.mxu0 0.0
        %2894 = vmatprep.subr.mxu0 0.0
        %2895 = vmatpush1.msra.mxu0 0.0
        %2896 = vmatprep.subr.mxu0 0.0
        %2897 = vmatpush1.msra.mxu0 0.0
        %2898 = vmatprep.subr.mxu0 0.0
        %2899 = vmatpush1.msra.mxu0 0.0
        %2900 = vmatprep.subr.mxu0 0.0
        %2901 = vmatpush1.msra.mxu0 0.0
        %2902 = vmatprep.subr.mxu0 0.0
        %2903 = vmatpush1.msra.mxu0 0.0
        %2904 = vmatprep.subr.mxu0 0.0
        %2905 = vmatpush1.msra.mxu0 0.0
        %2906 = vmatprep.subr.mxu0 0.0
        %2907 = vmatpush1.msra.mxu0 0.0
        %2908 = vmatprep.subr.mxu0 0.0
        %2909 = vmatpush1.msra.mxu0 0.0
        %2910 = vmatprep.subr.mxu0 0.0
        %2911 = vmatpush1.msra.mxu0 0.0
        %2912 = vmatprep.subr.mxu0 0.0
        %2913 = vmatpush1.msra.mxu0 0.0
        %2914 = vmatprep.subr.mxu0 0.0
        %2915 = vmatpush1.msra.mxu0 0.0
        %2916 = vmatprep.subr.mxu0 0.0
        %2917 = vmatpush1.msra.mxu0 0.0
        %2918 = vmatprep.subr.mxu0 0.0
        %2919 = vmatpush1.msra.mxu0 0.0
        %2920 = vmatprep.subr.mxu0 0.0
        %2921 = vmatpush1.msra.mxu0 0.0
        %2922 = vmatprep.subr.mxu0 0.0
        %2923 = vmatpush1.msra.mxu0 0.0
        %2924 = vmatprep.subr.mxu0 0.0
        %2925 = vmatpush1.msra.mxu0 0.0
        %2926 = vmatprep.subr.mxu0 0.0
        %2927 = vmatpush1.msra.mxu0 0.0
        %2928 = vmatprep.subr.mxu0 0.0
        %2929 = vmatpush1.msra.mxu0 0.0
        %2930 = vmatprep.subr.mxu0 0.0
        %2931 = vmatpush1.msra.mxu0 0.0
        %2932 = vmatprep.subr.mxu0 0.0
        %2933 = vmatpush1.msra.mxu0 0.0
        %2934 = vmatprep.subr.mxu0 0.0
        %2935 = vmatpush1.msra.mxu0 0.0
        %2936 = vmatprep.subr.mxu0 0.0
        %2937 = vmatpush1.msra.mxu0 0.0
        %2938 = vmatprep.subr.mxu0 0.0
        %2939 = vmatpush1.msra.mxu0 0.0
        %2940 = vmatprep.subr.mxu0 0.0
        %2941 = vmatpush1.msra.mxu0 0.0
        %2942 = vmatprep.mubr.f32.mxu0 0.0
        %2943 = vmatmul.mubr.f32.gmra.mrb[0].mxu0 %v2873
        %v2944 = vpop.f32.mrb[0].mxu0
        %v2945 = vadd.f32 0.0, %v2944
        %v2946 = vpop.f32.mrb[0].mxu0
        %2947 = vmatprep.mubr.f32.mxu0 0.0
        %2948 = vmatmul.mubr.f32.gmra.mrb[0].mxu0 %v2876
        %v2949 = vpop.f32.mrb[0].mxu0
        %v2950 = vadd.f32 0.0, %v2949
        %v2951 = vpop.f32.mrb[0].mxu0
        %2952 = vdwg.mxu0
        %2953 = vrot.lane.b32.xlu0 %v649, 48
        %v2954 = vpop.permute.xlu0 %2953
        %2955 = vrot.lane.b32.xlu0 %v652, 48
        %v2956 = vpop.permute.xlu0 %2955
        %v2960 = vsel %vm1068, %v2860, 0
        %v2963 = vsel %vm1068, %v2861, 0
        %2965 = vmatprep.subr.mxu0 0.0
        %2966 = vmatpush1.msra.mxu0 %v2954
        %2967 = vmatprep.subr.mxu0 0.0
        %2968 = vmatpush1.msra.mxu0 %v2956
        %2969 = vmatprep.subr.mxu0 0.0
        %2970 = vmatpush1.msra.mxu0 0.0
        %2971 = vmatprep.subr.mxu0 0.0
        %2972 = vmatpush1.msra.mxu0 0.0
        %2973 = vmatprep.subr.mxu0 0.0
        %2974 = vmatpush1.msra.mxu0 0.0
        %2975 = vmatprep.subr.mxu0 0.0
        %2976 = vmatpush1.msra.mxu0 0.0
        %2977 = vmatprep.subr.mxu0 0.0
        %2978 = vmatpush1.msra.mxu0 0.0
        %2979 = vmatprep.subr.mxu0 0.0
        %2980 = vmatpush1.msra.mxu0 0.0
        %2981 = vmatprep.subr.mxu0 0.0
        %2982 = vmatpush1.msra.mxu0 0.0
        %2983 = vmatprep.subr.mxu0 0.0
        %2984 = vmatpush1.msra.mxu0 0.0
        %2985 = vmatprep.subr.mxu0 0.0
        %2986 = vmatpush1.msra.mxu0 0.0
        %2987 = vmatprep.subr.mxu0 0.0
        %2988 = vmatpush1.msra.mxu0 0.0
        %2989 = vmatprep.subr.mxu0 0.0
        %2990 = vmatpush1.msra.mxu0 0.0
        %2991 = vmatprep.subr.mxu0 0.0
        %2992 = vmatpush1.msra.mxu0 0.0
        %2993 = vmatprep.subr.mxu0 0.0
        %2994 = vmatpush1.msra.mxu0 0.0
        %2995 = vmatprep.subr.mxu0 0.0
        %2996 = vmatpush1.msra.mxu0 0.0
        %2997 = vmatprep.subr.mxu0 0.0
        %2998 = vmatpush1.msra.mxu0 0.0
        %2999 = vmatprep.subr.mxu0 0.0
        %3000 = vmatpush1.msra.mxu0 0.0
        %3001 = vmatprep.subr.mxu0 0.0
        %3002 = vmatpush1.msra.mxu0 0.0
        %3003 = vmatprep.subr.mxu0 0.0
        %3004 = vmatpush1.msra.mxu0 0.0
        %3005 = vmatprep.subr.mxu0 0.0
        %3006 = vmatpush1.msra.mxu0 0.0
        %3007 = vmatprep.subr.mxu0 0.0
        %3008 = vmatpush1.msra.mxu0 0.0
        %3009 = vmatprep.subr.mxu0 0.0
        %3010 = vmatpush1.msra.mxu0 0.0
        %3011 = vmatprep.subr.mxu0 0.0
        %3012 = vmatpush1.msra.mxu0 0.0
        %3013 = vmatprep.subr.mxu0 0.0
        %3014 = vmatpush1.msra.mxu0 0.0
        %3015 = vmatprep.subr.mxu0 0.0
        %3016 = vmatpush1.msra.mxu0 0.0
        %3017 = vmatprep.subr.mxu0 0.0
        %3018 = vmatpush1.msra.mxu0 0.0
        %3019 = vmatprep.subr.mxu0 0.0
        %3020 = vmatpush1.msra.mxu0 0.0
        %3021 = vmatprep.subr.mxu0 0.0
        %3022 = vmatpush1.msra.mxu0 0.0
        %3023 = vmatprep.subr.mxu0 0.0
        %3024 = vmatpush1.msra.mxu0 0.0
        %3025 = vmatprep.subr.mxu0 0.0
        %3026 = vmatpush1.msra.mxu0 0.0
        %3027 = vmatprep.subr.mxu0 0.0
        %3028 = vmatpush1.msra.mxu0 0.0
        %3029 = vmatprep.mubr.f32.mxu0 0.0
        %3030 = vmatmul.mubr.f32.gmra.mrb[0].mxu0 %v2960
        %v3031 = vpop.f32.mrb[0].mxu0
        %v3032 = vadd.f32 0.0, %v3031
        %v3033 = vpop.f32.mrb[0].mxu0
        %3034 = vmatprep.mubr.f32.mxu0 0.0
        %3035 = vmatmul.mubr.f32.gmra.mrb[0].mxu0 %v2963
        %v3036 = vpop.f32.mrb[0].mxu0
        %v3037 = vadd.f32 0.0, %v3036
        %v3038 = vpop.f32.mrb[0].mxu0
        %3039 = vdwg.mxu0
        %3040 = vrot.lane.b32.xlu0 %v657, 48
        %v3041 = vpop.permute.xlu0 %3040
        %3042 = vrot.lane.b32.xlu0 %v660, 48
        %v3043 = vpop.permute.xlu0 %3042
        %v3047 = vsel %vm1068, %v2862, 0
        %v3050 = vsel %vm1068, %v2863, 0
        %3052 = vmatprep.subr.mxu0 0.0
        %3053 = vmatpush1.msra.mxu0 %v3041
        %3054 = vmatprep.subr.mxu0 0.0
        %3055 = vmatpush1.msra.mxu0 %v3043
        %3056 = vmatprep.subr.mxu0 0.0
        %3057 = vmatpush1.msra.mxu0 0.0
        %3058 = vmatprep.subr.mxu0 0.0
        %3059 = vmatpush1.msra.mxu0 0.0
        %3060 = vmatprep.subr.mxu0 0.0
        %3061 = vmatpush1.msra.mxu0 0.0
        %3062 = vmatprep.subr.mxu0 0.0
        %3063 = vmatpush1.msra.mxu0 0.0
        %3064 = vmatprep.subr.mxu0 0.0
        %3065 = vmatpush1.msra.mxu0 0.0
        %3066 = vmatprep.subr.mxu0 0.0
        %3067 = vmatpush1.msra.mxu0 0.0
        %3068 = vmatprep.subr.mxu0 0.0
        %3069 = vmatpush1.msra.mxu0 0.0
        %3070 = vmatprep.subr.mxu0 0.0
        %3071 = vmatpush1.msra.mxu0 0.0
        %3072 = vmatprep.subr.mxu0 0.0
        %3073 = vmatpush1.msra.mxu0 0.0
        %3074 = vmatprep.subr.mxu0 0.0
        %3075 = vmatpush1.msra.mxu0 0.0
        %3076 = vmatprep.subr.mxu0 0.0
        %3077 = vmatpush1.msra.mxu0 0.0
        %3078 = vmatprep.subr.mxu0 0.0
        %3079 = vmatpush1.msra.mxu0 0.0
        %3080 = vmatprep.subr.mxu0 0.0
        %3081 = vmatpush1.msra.mxu0 0.0
        %3082 = vmatprep.subr.mxu0 0.0
        %3083 = vmatpush1.msra.mxu0 0.0
        %3084 = vmatprep.subr.mxu0 0.0
        %3085 = vmatpush1.msra.mxu0 0.0
        %3086 = vmatprep.subr.mxu0 0.0
        %3087 = vmatpush1.msra.mxu0 0.0
        %3088 = vmatprep.subr.mxu0 0.0
        %3089 = vmatpush1.msra.mxu0 0.0
        %3090 = vmatprep.subr.mxu0 0.0
        %3091 = vmatpush1.msra.mxu0 0.0
        %3092 = vmatprep.subr.mxu0 0.0
        %3093 = vmatpush1.msra.mxu0 0.0
        %3094 = vmatprep.subr.mxu0 0.0
        %3095 = vmatpush1.msra.mxu0 0.0
        %3096 = vmatprep.subr.mxu0 0.0
        %3097 = vmatpush1.msra.mxu0 0.0
        %3098 = vmatprep.subr.mxu0 0.0
        %3099 = vmatpush1.msra.mxu0 0.0
        %3100 = vmatprep.subr.mxu0 0.0
        %3101 = vmatpush1.msra.mxu0 0.0
        %3102 = vmatprep.subr.mxu0 0.0
        %3103 = vmatpush1.msra.mxu0 0.0
        %3104 = vmatprep.subr.mxu0 0.0
        %3105 = vmatpush1.msra.mxu0 0.0
        %3106 = vmatprep.subr.mxu0 0.0
        %3107 = vmatpush1.msra.mxu0 0.0
        %3108 = vmatprep.subr.mxu0 0.0
        %3109 = vmatpush1.msra.mxu0 0.0
        %3110 = vmatprep.subr.mxu0 0.0
        %3111 = vmatpush1.msra.mxu0 0.0
        %3112 = vmatprep.subr.mxu0 0.0
        %3113 = vmatpush1.msra.mxu0 0.0
        %3114 = vmatprep.subr.mxu0 0.0
        %3115 = vmatpush1.msra.mxu0 0.0
        %3116 = vmatprep.mubr.f32.mxu0 0.0
        %3117 = vmatmul.mubr.f32.gmra.mrb[0].mxu0 %v3047
        %v3118 = vpop.f32.mrb[0].mxu0
        %v3119 = vadd.f32 0.0, %v3118
        %v3120 = vpop.f32.mrb[0].mxu0
        %3121 = vmatprep.mubr.f32.mxu0 0.0
        %3122 = vmatmul.mubr.f32.gmra.mrb[0].mxu0 %v3050
        %v3123 = vpop.f32.mrb[0].mxu0
        %v3124 = vadd.f32 0.0, %v3123
        %v3125 = vpop.f32.mrb[0].mxu0
        %3126 = vdwg.mxu0
        %3127 = vrot.lane.b32.xlu0 %v665, 48
        %v3128 = vpop.permute.xlu0 %3127
        %3129 = vrot.lane.b32.xlu0 %v668, 48
        %v3130 = vpop.permute.xlu0 %3129
        %v3134 = vsel %vm1068, %v2864, 0
        %v3137 = vsel %vm1068, %v2865, 0
        %3139 = vmatprep.subr.mxu0 0.0
        %3140 = vmatpush1.msra.mxu0 %v3128
        %3141 = vmatprep.subr.mxu0 0.0
        %3142 = vmatpush1.msra.mxu0 %v3130
        %3143 = vmatprep.subr.mxu0 0.0
        %3144 = vmatpush1.msra.mxu0 0.0
        %3145 = vmatprep.subr.mxu0 0.0
        %3146 = vmatpush1.msra.mxu0 0.0
        %3147 = vmatprep.subr.mxu0 0.0
        %3148 = vmatpush1.msra.mxu0 0.0
        %3149 = vmatprep.subr.mxu0 0.0
        %3150 = vmatpush1.msra.mxu0 0.0
        %3151 = vmatprep.subr.mxu0 0.0
        %3152 = vmatpush1.msra.mxu0 0.0
        %3153 = vmatprep.subr.mxu0 0.0
        %3154 = vmatpush1.msra.mxu0 0.0
        %3155 = vmatprep.subr.mxu0 0.0
        %3156 = vmatpush1.msra.mxu0 0.0
        %3157 = vmatprep.subr.mxu0 0.0
        %3158 = vmatpush1.msra.mxu0 0.0
        %3159 = vmatprep.subr.mxu0 0.0
        %3160 = vmatpush1.msra.mxu0 0.0
        %3161 = vmatprep.subr.mxu0 0.0
        %3162 = vmatpush1.msra.mxu0 0.0
        %3163 = vmatprep.subr.mxu0 0.0
        %3164 = vmatpush1.msra.mxu0 0.0
        %3165 = vmatprep.subr.mxu0 0.0
        %3166 = vmatpush1.msra.mxu0 0.0
        %3167 = vmatprep.subr.mxu0 0.0
        %3168 = vmatpush1.msra.mxu0 0.0
        %3169 = vmatprep.subr.mxu0 0.0
        %3170 = vmatpush1.msra.mxu0 0.0
        %3171 = vmatprep.subr.mxu0 0.0
        %3172 = vmatpush1.msra.mxu0 0.0
        %3173 = vmatprep.subr.mxu0 0.0
        %3174 = vmatpush1.msra.mxu0 0.0
        %3175 = vmatprep.subr.mxu0 0.0
        %3176 = vmatpush1.msra.mxu0 0.0
        %3177 = vmatprep.subr.mxu0 0.0
        %3178 = vmatpush1.msra.mxu0 0.0
        %3179 = vmatprep.subr.mxu0 0.0
        %3180 = vmatpush1.msra.mxu0 0.0
        %3181 = vmatprep.subr.mxu0 0.0
        %3182 = vmatpush1.msra.mxu0 0.0
        %3183 = vmatprep.subr.mxu0 0.0
        %3184 = vmatpush1.msra.mxu0 0.0
        %3185 = vmatprep.subr.mxu0 0.0
        %3186 = vmatpush1.msra.mxu0 0.0
        %3187 = vmatprep.subr.mxu0 0.0
        %3188 = vmatpush1.msra.mxu0 0.0
        %3189 = vmatprep.subr.mxu0 0.0
        %3190 = vmatpush1.msra.mxu0 0.0
        %3191 = vmatprep.subr.mxu0 0.0
        %3192 = vmatpush1.msra.mxu0 0.0
        %3193 = vmatprep.subr.mxu0 0.0
        %3194 = vmatpush1.msra.mxu0 0.0
        %3195 = vmatprep.subr.mxu0 0.0
        %3196 = vmatpush1.msra.mxu0 0.0
        %3197 = vmatprep.subr.mxu0 0.0
        %3198 = vmatpush1.msra.mxu0 0.0
        %3199 = vmatprep.subr.mxu0 0.0
        %3200 = vmatpush1.msra.mxu0 0.0
        %3201 = vmatprep.subr.mxu0 0.0
        %3202 = vmatpush1.msra.mxu0 0.0
        %3203 = vmatprep.mubr.f32.mxu0 0.0
        %3204 = vmatmul.mubr.f32.gmra.mrb[0].mxu0 %v3134
        %v3205 = vpop.f32.mrb[0].mxu0
        %v3206 = vadd.f32 0.0, %v3205
        %v3207 = vpop.f32.mrb[0].mxu0
        %3208 = vmatprep.mubr.f32.mxu0 0.0
        %3209 = vmatmul.mubr.f32.gmra.mrb[0].mxu0 %v3137
        %v3210 = vpop.f32.mrb[0].mxu0
        %v3211 = vadd.f32 0.0, %v3210
        %v3212 = vpop.f32.mrb[0].mxu0
        %3213 = vdwg.mxu0
        %v3214 = vpack.c.bf16 %v2950, %v2945
        %v3215 = vpack.c.bf16 %v3037, %v3032
        %v3216 = vpack.c.bf16 %v3124, %v3119
        %v3217 = vpack.c.bf16 %v3211, %v3206
        %3222 = vrot.lane.b32.xlu0 %v3214, 16
        %v3223 = vpop.permute.xlu0 %3222
        %3224 = vrot.lane.b32.xlu0 %v3215, 16
        %v3225 = vpop.permute.xlu0 %3224
        %3226 = vrot.lane.b32.xlu0 %v3216, 16
        %v3227 = vpop.permute.xlu0 %3226
        %3228 = vrot.lane.b32.xlu0 %v3217, 16
        %v3229 = vpop.permute.xlu0 %3228
        %vm3234 = vcmask 195712
        %3235 = vst.msk [vmem:[#allocation2] sm:$0xff] %vm3234, %v3223
        %3236 = vst.msk [vmem:[#allocation2 + $0x8] sm:$0xff] %vm3234, %v3225
        %3237 = vst.msk [vmem:[#allocation2 + $0x10] sm:$0xff] %vm3234, %v3227
        %3238 = vst.msk [vmem:[#allocation2 + $0x18] sm:$0xff] %vm3234, %v3229
        %3239 = vrot.lane.b32.xlu0 %v687, 104
        %v3240 = vpop.permute.xlu0 %3239
        %3241 = vrot.lane.b32.xlu0 %v688, 104
        %v3242 = vpop.permute.xlu0 %3241
        %3243 = vrot.lane.b32.xlu0 %v641, 72
        %v3244 = vpop.permute.xlu0 %3243
        %3245 = vrot.lane.b32.xlu0 %v644, 72
        %v3246 = vpop.permute.xlu0 %3245
        %v3247 = vsel %vm701, %v3240, 0
        %v3249 = vsel %vm701, %v3242, 0
        %v3251 = vsel %vm701, %v3244, 0
        %v3253 = vsel %vm701, %v3246, 0
        %3255 = vmatprep.subr.mxu0 0.0
        %3256 = vmatpush1.xpose.msra.mxu0 %v3251
        %3257 = vmatprep.subr.mxu0 0.0
        %3258 = vmatpush1.xpose.msra.mxu0 %v3253
        %3259 = vmatprep.subr.mxu0 0.0
        %3260 = vmatpush1.xpose.msra.mxu0 0.0
        %3261 = vmatprep.subr.mxu0 0.0
        %3262 = vmatpush1.xpose.msra.mxu0 0.0
        %3263 = vmatprep.subr.mxu0 0.0
        %3264 = vmatpush1.xpose.msra.mxu0 0.0
        %3265 = vmatprep.subr.mxu0 0.0
        %3266 = vmatpush1.xpose.msra.mxu0 0.0
        %3267 = vmatprep.subr.mxu0 0.0
        %3268 = vmatpush1.xpose.msra.mxu0 0.0
        %3269 = vmatprep.subr.mxu0 0.0
        %3270 = vmatpush1.xpose.msra.mxu0 0.0
        %3271 = vmatprep.subr.mxu0 0.0
        %3272 = vmatpush1.xpose.msra.mxu0 0.0
        %3273 = vmatprep.subr.mxu0 0.0
        %3274 = vmatpush1.xpose.msra.mxu0 0.0
        %3275 = vmatprep.subr.mxu0 0.0
        %3276 = vmatpush1.xpose.msra.mxu0 0.0
        %3277 = vmatprep.subr.mxu0 0.0
        %3278 = vmatpush1.xpose.msra.mxu0 0.0
        %3279 = vmatprep.subr.mxu0 0.0
        %3280 = vmatpush1.xpose.msra.mxu0 0.0
        %3281 = vmatprep.subr.mxu0 0.0
        %3282 = vmatpush1.xpose.msra.mxu0 0.0
        %3283 = vmatprep.subr.mxu0 0.0
        %3284 = vmatpush1.xpose.msra.mxu0 0.0
        %3285 = vmatprep.subr.mxu0 0.0
        %3286 = vmatpush1.xpose.msra.mxu0 0.0
        %3287 = vmatprep.subr.mxu0 0.0
        %3288 = vmatpush1.xpose.msra.mxu0 0.0
        %3289 = vmatprep.subr.mxu0 0.0
        %3290 = vmatpush1.xpose.msra.mxu0 0.0
        %3291 = vmatprep.subr.mxu0 0.0
        %3292 = vmatpush1.xpose.msra.mxu0 0.0
        %3293 = vmatprep.subr.mxu0 0.0
        %3294 = vmatpush1.xpose.msra.mxu0 0.0
        %3295 = vmatprep.subr.mxu0 0.0
        %3296 = vmatpush1.xpose.msra.mxu0 0.0
        %3297 = vmatprep.subr.mxu0 0.0
        %3298 = vmatpush1.xpose.msra.mxu0 0.0
        %3299 = vmatprep.subr.mxu0 0.0
        %3300 = vmatpush1.xpose.msra.mxu0 0.0
        %3301 = vmatprep.subr.mxu0 0.0
        %3302 = vmatpush1.xpose.msra.mxu0 0.0
        %3303 = vmatprep.subr.mxu0 0.0
        %3304 = vmatpush1.xpose.msra.mxu0 0.0
        %3305 = vmatprep.subr.mxu0 0.0
        %3306 = vmatpush1.xpose.msra.mxu0 0.0
        %3307 = vmatprep.subr.mxu0 0.0
        %3308 = vmatpush1.xpose.msra.mxu0 0.0
        %3309 = vmatprep.subr.mxu0 0.0
        %3310 = vmatpush1.xpose.msra.mxu0 0.0
        %3311 = vmatprep.subr.mxu0 0.0
        %3312 = vmatpush1.xpose.msra.mxu0 0.0
        %3313 = vmatprep.subr.mxu0 0.0
        %3314 = vmatpush1.xpose.msra.mxu0 0.0
        %3315 = vmatprep.subr.mxu0 0.0
        %3316 = vmatpush1.xpose.msra.mxu0 0.0
        %3317 = vmatprep.subr.mxu0 0.0
        %3318 = vmatpush1.xpose.msra.mxu0 0.0
        %3319 = vmatprep.mubr.f32.mxu0 0.0
        %3320 = vmatmul.mubr.f32.gmra.mrb[0].mxu0 %v3247
        %v3321 = vpop.f32.mrb[0].mxu0
        %v3322 = vadd.f32 %v677, %v3321
        %v3323 = vpop.f32.mrb[0].mxu0
        %3324 = vmatprep.mubr.f32.mxu0 0.0
        %3325 = vmatmul.mubr.f32.gmra.mrb[0].mxu0 %v3249
        %v3326 = vpop.f32.mrb[0].mxu0
        %v3327 = vadd.f32 %v678, %v3326
        %v3328 = vpop.f32.mrb[0].mxu0
        %3329 = vdwg.mxu0
        %3330 = vrot.lane.b32.xlu0 %v689, 104
        %v3331 = vpop.permute.xlu0 %3330
        %3332 = vrot.lane.b32.xlu0 %v690, 104
        %v3333 = vpop.permute.xlu0 %3332
        %3334 = vrot.lane.b32.xlu0 %v649, 72
        %v3335 = vpop.permute.xlu0 %3334
        %3336 = vrot.lane.b32.xlu0 %v652, 72
        %v3337 = vpop.permute.xlu0 %3336
        %v3338 = vsel %vm701, %v3331, 0
        %v3340 = vsel %vm701, %v3333, 0
        %v3342 = vsel %vm701, %v3335, 0
        %v3344 = vsel %vm701, %v3337, 0
        %3346 = vmatprep.subr.mxu0 0.0
        %3347 = vmatpush1.xpose.msra.mxu0 %v3342
        %3348 = vmatprep.subr.mxu0 0.0
        %3349 = vmatpush1.xpose.msra.mxu0 %v3344
        %3350 = vmatprep.subr.mxu0 0.0
        %3351 = vmatpush1.xpose.msra.mxu0 0.0
        %3352 = vmatprep.subr.mxu0 0.0
        %3353 = vmatpush1.xpose.msra.mxu0 0.0
        %3354 = vmatprep.subr.mxu0 0.0
        %3355 = vmatpush1.xpose.msra.mxu0 0.0
        %3356 = vmatprep.subr.mxu0 0.0
        %3357 = vmatpush1.xpose.msra.mxu0 0.0
        %3358 = vmatprep.subr.mxu0 0.0
        %3359 = vmatpush1.xpose.msra.mxu0 0.0
        %3360 = vmatprep.subr.mxu0 0.0
        %3361 = vmatpush1.xpose.msra.mxu0 0.0
        %3362 = vmatprep.subr.mxu0 0.0
        %3363 = vmatpush1.xpose.msra.mxu0 0.0
        %3364 = vmatprep.subr.mxu0 0.0
        %3365 = vmatpush1.xpose.msra.mxu0 0.0
        %3366 = vmatprep.subr.mxu0 0.0
        %3367 = vmatpush1.xpose.msra.mxu0 0.0
        %3368 = vmatprep.subr.mxu0 0.0
        %3369 = vmatpush1.xpose.msra.mxu0 0.0
        %3370 = vmatprep.subr.mxu0 0.0
        %3371 = vmatpush1.xpose.msra.mxu0 0.0
        %3372 = vmatprep.subr.mxu0 0.0
        %3373 = vmatpush1.xpose.msra.mxu0 0.0
        %3374 = vmatprep.subr.mxu0 0.0
        %3375 = vmatpush1.xpose.msra.mxu0 0.0
        %3376 = vmatprep.subr.mxu0 0.0
        %3377 = vmatpush1.xpose.msra.mxu0 0.0
        %3378 = vmatprep.subr.mxu0 0.0
        %3379 = vmatpush1.xpose.msra.mxu0 0.0
        %3380 = vmatprep.subr.mxu0 0.0
        %3381 = vmatpush1.xpose.msra.mxu0 0.0
        %3382 = vmatprep.subr.mxu0 0.0
        %3383 = vmatpush1.xpose.msra.mxu0 0.0
        %3384 = vmatprep.subr.mxu0 0.0
        %3385 = vmatpush1.xpose.msra.mxu0 0.0
        %3386 = vmatprep.subr.mxu0 0.0
        %3387 = vmatpush1.xpose.msra.mxu0 0.0
        %3388 = vmatprep.subr.mxu0 0.0
        %3389 = vmatpush1.xpose.msra.mxu0 0.0
        %3390 = vmatprep.subr.mxu0 0.0
        %3391 = vmatpush1.xpose.msra.mxu0 0.0
        %3392 = vmatprep.subr.mxu0 0.0
        %3393 = vmatpush1.xpose.msra.mxu0 0.0
        %3394 = vmatprep.subr.mxu0 0.0
        %3395 = vmatpush1.xpose.msra.mxu0 0.0
        %3396 = vmatprep.subr.mxu0 0.0
        %3397 = vmatpush1.xpose.msra.mxu0 0.0
        %3398 = vmatprep.subr.mxu0 0.0
        %3399 = vmatpush1.xpose.msra.mxu0 0.0
        %3400 = vmatprep.subr.mxu0 0.0
        %3401 = vmatpush1.xpose.msra.mxu0 0.0
        %3402 = vmatprep.subr.mxu0 0.0
        %3403 = vmatpush1.xpose.msra.mxu0 0.0
        %3404 = vmatprep.subr.mxu0 0.0
        %3405 = vmatpush1.xpose.msra.mxu0 0.0
        %3406 = vmatprep.subr.mxu0 0.0
        %3407 = vmatpush1.xpose.msra.mxu0 0.0
        %3408 = vmatprep.subr.mxu0 0.0
        %3409 = vmatpush1.xpose.msra.mxu0 0.0
        %3410 = vmatprep.mubr.f32.mxu0 0.0
        %3411 = vmatmul.mubr.f32.gmra.mrb[0].mxu0 %v3338
        %v3412 = vpop.f32.mrb[0].mxu0
        %v3413 = vadd.f32 %v677, %v3412
        %v3414 = vpop.f32.mrb[0].mxu0
        %3415 = vmatprep.mubr.f32.mxu0 0.0
        %3416 = vmatmul.mubr.f32.gmra.mrb[0].mxu0 %v3340
        %v3417 = vpop.f32.mrb[0].mxu0
        %v3418 = vadd.f32 %v678, %v3417
        %v3419 = vpop.f32.mrb[0].mxu0
        %3420 = vdwg.mxu0
        %3421 = vrot.lane.b32.xlu0 %v691, 104
        %v3422 = vpop.permute.xlu0 %3421
        %3423 = vrot.lane.b32.xlu0 %v692, 104
        %v3424 = vpop.permute.xlu0 %3423
        %3425 = vrot.lane.b32.xlu0 %v657, 72
        %v3426 = vpop.permute.xlu0 %3425
        %3427 = vrot.lane.b32.xlu0 %v660, 72
        %v3428 = vpop.permute.xlu0 %3427
        %v3429 = vsel %vm701, %v3422, 0
        %v3431 = vsel %vm701, %v3424, 0
        %v3433 = vsel %vm701, %v3426, 0
        %v3435 = vsel %vm701, %v3428, 0
        %3437 = vmatprep.subr.mxu0 0.0
        %3438 = vmatpush1.xpose.msra.mxu0 %v3433
        %3439 = vmatprep.subr.mxu0 0.0
        %3440 = vmatpush1.xpose.msra.mxu0 %v3435
        %3441 = vmatprep.subr.mxu0 0.0
        %3442 = vmatpush1.xpose.msra.mxu0 0.0
        %3443 = vmatprep.subr.mxu0 0.0
        %3444 = vmatpush1.xpose.msra.mxu0 0.0
        %3445 = vmatprep.subr.mxu0 0.0
        %3446 = vmatpush1.xpose.msra.mxu0 0.0
        %3447 = vmatprep.subr.mxu0 0.0
        %3448 = vmatpush1.xpose.msra.mxu0 0.0
        %3449 = vmatprep.subr.mxu0 0.0
        %3450 = vmatpush1.xpose.msra.mxu0 0.0
        %3451 = vmatprep.subr.mxu0 0.0
        %3452 = vmatpush1.xpose.msra.mxu0 0.0
        %3453 = vmatprep.subr.mxu0 0.0
        %3454 = vmatpush1.xpose.msra.mxu0 0.0
        %3455 = vmatprep.subr.mxu0 0.0
        %3456 = vmatpush1.xpose.msra.mxu0 0.0
        %3457 = vmatprep.subr.mxu0 0.0
        %3458 = vmatpush1.xpose.msra.mxu0 0.0
        %3459 = vmatprep.subr.mxu0 0.0
        %3460 = vmatpush1.xpose.msra.mxu0 0.0
        %3461 = vmatprep.subr.mxu0 0.0
        %3462 = vmatpush1.xpose.msra.mxu0 0.0
        %3463 = vmatprep.subr.mxu0 0.0
        %3464 = vmatpush1.xpose.msra.mxu0 0.0
        %3465 = vmatprep.subr.mxu0 0.0
        %3466 = vmatpush1.xpose.msra.mxu0 0.0
        %3467 = vmatprep.subr.mxu0 0.0
        %3468 = vmatpush1.xpose.msra.mxu0 0.0
        %3469 = vmatprep.subr.mxu0 0.0
        %3470 = vmatpush1.xpose.msra.mxu0 0.0
        %3471 = vmatprep.subr.mxu0 0.0
        %3472 = vmatpush1.xpose.msra.mxu0 0.0
        %3473 = vmatprep.subr.mxu0 0.0
        %3474 = vmatpush1.xpose.msra.mxu0 0.0
        %3475 = vmatprep.subr.mxu0 0.0
        %3476 = vmatpush1.xpose.msra.mxu0 0.0
        %3477 = vmatprep.subr.mxu0 0.0
        %3478 = vmatpush1.xpose.msra.mxu0 0.0
        %3479 = vmatprep.subr.mxu0 0.0
        %3480 = vmatpush1.xpose.msra.mxu0 0.0
        %3481 = vmatprep.subr.mxu0 0.0
        %3482 = vmatpush1.xpose.msra.mxu0 0.0
        %3483 = vmatprep.subr.mxu0 0.0
        %3484 = vmatpush1.xpose.msra.mxu0 0.0
        %3485 = vmatprep.subr.mxu0 0.0
        %3486 = vmatpush1.xpose.msra.mxu0 0.0
        %3487 = vmatprep.subr.mxu0 0.0
        %3488 = vmatpush1.xpose.msra.mxu0 0.0
        %3489 = vmatprep.subr.mxu0 0.0
        %3490 = vmatpush1.xpose.msra.mxu0 0.0
        %3491 = vmatprep.subr.mxu0 0.0
        %3492 = vmatpush1.xpose.msra.mxu0 0.0
        %3493 = vmatprep.subr.mxu0 0.0
        %3494 = vmatpush1.xpose.msra.mxu0 0.0
        %3495 = vmatprep.subr.mxu0 0.0
        %3496 = vmatpush1.xpose.msra.mxu0 0.0
        %3497 = vmatprep.subr.mxu0 0.0
        %3498 = vmatpush1.xpose.msra.mxu0 0.0
        %3499 = vmatprep.subr.mxu0 0.0
        %3500 = vmatpush1.xpose.msra.mxu0 0.0
        %3501 = vmatprep.mubr.f32.mxu0 0.0
        %3502 = vmatmul.mubr.f32.gmra.mrb[0].mxu0 %v3429
        %v3503 = vpop.f32.mrb[0].mxu0
        %v3504 = vadd.f32 %v677, %v3503
        %v3505 = vpop.f32.mrb[0].mxu0
        %3506 = vmatprep.mubr.f32.mxu0 0.0
        %3507 = vmatmul.mubr.f32.gmra.mrb[0].mxu0 %v3431
        %v3508 = vpop.f32.mrb[0].mxu0
        %v3509 = vadd.f32 %v678, %v3508
        %v3510 = vpop.f32.mrb[0].mxu0
        %3511 = vdwg.mxu0
        %3512 = vrot.lane.b32.xlu0 %v693, 104
        %v3513 = vpop.permute.xlu0 %3512
        %3514 = vrot.lane.b32.xlu0 %v694, 104
        %v3515 = vpop.permute.xlu0 %3514
        %3516 = vrot.lane.b32.xlu0 %v665, 72
        %v3517 = vpop.permute.xlu0 %3516
        %3518 = vrot.lane.b32.xlu0 %v668, 72
        %v3519 = vpop.permute.xlu0 %3518
        %v3520 = vsel %vm701, %v3513, 0
        %v3522 = vsel %vm701, %v3515, 0
        %v3524 = vsel %vm701, %v3517, 0
        %v3526 = vsel %vm701, %v3519, 0
        %3528 = vmatprep.subr.mxu0 0.0
        %3529 = vmatpush1.xpose.msra.mxu0 %v3524
        %3530 = vmatprep.subr.mxu0 0.0
        %3531 = vmatpush1.xpose.msra.mxu0 %v3526
        %3532 = vmatprep.subr.mxu0 0.0
        %3533 = vmatpush1.xpose.msra.mxu0 0.0
        %3534 = vmatprep.subr.mxu0 0.0
        %3535 = vmatpush1.xpose.msra.mxu0 0.0
        %3536 = vmatprep.subr.mxu0 0.0
        %3537 = vmatpush1.xpose.msra.mxu0 0.0
        %3538 = vmatprep.subr.mxu0 0.0
        %3539 = vmatpush1.xpose.msra.mxu0 0.0
        %3540 = vmatprep.subr.mxu0 0.0
        %3541 = vmatpush1.xpose.msra.mxu0 0.0
        %3542 = vmatprep.subr.mxu0 0.0
        %3543 = vmatpush1.xpose.msra.mxu0 0.0
        %3544 = vmatprep.subr.mxu0 0.0
        %3545 = vmatpush1.xpose.msra.mxu0 0.0
        %3546 = vmatprep.subr.mxu0 0.0
        %3547 = vmatpush1.xpose.msra.mxu0 0.0
        %3548 = vmatprep.subr.mxu0 0.0
        %3549 = vmatpush1.xpose.msra.mxu0 0.0
        %3550 = vmatprep.subr.mxu0 0.0
        %3551 = vmatpush1.xpose.msra.mxu0 0.0
        %3552 = vmatprep.subr.mxu0 0.0
        %3553 = vmatpush1.xpose.msra.mxu0 0.0
        %3554 = vmatprep.subr.mxu0 0.0
        %3555 = vmatpush1.xpose.msra.mxu0 0.0
        %3556 = vmatprep.subr.mxu0 0.0
        %3557 = vmatpush1.xpose.msra.mxu0 0.0
        %3558 = vmatprep.subr.mxu0 0.0
        %3559 = vmatpush1.xpose.msra.mxu0 0.0
        %3560 = vmatprep.subr.mxu0 0.0
        %3561 = vmatpush1.xpose.msra.mxu0 0.0
        %3562 = vmatprep.subr.mxu0 0.0
        %3563 = vmatpush1.xpose.msra.mxu0 0.0
        %3564 = vmatprep.subr.mxu0 0.0
        %3565 = vmatpush1.xpose.msra.mxu0 0.0
        %3566 = vmatprep.subr.mxu0 0.0
        %3567 = vmatpush1.xpose.msra.mxu0 0.0
        %3568 = vmatprep.subr.mxu0 0.0
        %3569 = vmatpush1.xpose.msra.mxu0 0.0
        %3570 = vmatprep.subr.mxu0 0.0
        %3571 = vmatpush1.xpose.msra.mxu0 0.0
        %3572 = vmatprep.subr.mxu0 0.0
        %3573 = vmatpush1.xpose.msra.mxu0 0.0
        %3574 = vmatprep.subr.mxu0 0.0
        %3575 = vmatpush1.xpose.msra.mxu0 0.0
        %3576 = vmatprep.subr.mxu0 0.0
        %3577 = vmatpush1.xpose.msra.mxu0 0.0
        %3578 = vmatprep.subr.mxu0 0.0
        %3579 = vmatpush1.xpose.msra.mxu0 0.0
        %3580 = vmatprep.subr.mxu0 0.0
        %3581 = vmatpush1.xpose.msra.mxu0 0.0
        %3582 = vmatprep.subr.mxu0 0.0
        %3583 = vmatpush1.xpose.msra.mxu0 0.0
        %3584 = vmatprep.subr.mxu0 0.0
        %3585 = vmatpush1.xpose.msra.mxu0 0.0
        %3586 = vmatprep.subr.mxu0 0.0
        %3587 = vmatpush1.xpose.msra.mxu0 0.0
        %3588 = vmatprep.subr.mxu0 0.0
        %3589 = vmatpush1.xpose.msra.mxu0 0.0
        %3590 = vmatprep.subr.mxu0 0.0
        %3591 = vmatpush1.xpose.msra.mxu0 0.0
        %3592 = vmatprep.mubr.f32.mxu0 0.0
        %3593 = vmatmul.mubr.f32.gmra.mrb[0].mxu0 %v3520
        %v3594 = vpop.f32.mrb[0].mxu0
        %v3595 = vadd.f32 %v677, %v3594
        %v3596 = vpop.f32.mrb[0].mxu0
        %3597 = vmatprep.mubr.f32.mxu0 0.0
        %3598 = vmatmul.mubr.f32.gmra.mrb[0].mxu0 %v3522
        %v3599 = vpop.f32.mrb[0].mxu0
        %v3600 = vadd.f32 %v678, %v3599
        %v3601 = vpop.f32.mrb[0].mxu0
        %3602 = vdwg.mxu0
        %v3603 = vadd.f32 %v3322, %v679
        %v3604 = vadd.f32 %v3327, %v680
        %v3605 = vadd.f32 %v3413, %v681
        %v3606 = vadd.f32 %v3418, %v682
        %v3607 = vadd.f32 %v3504, %v683
        %v3608 = vadd.f32 %v3509, %v684
        %v3609 = vadd.f32 %v3595, %v685
        %v3610 = vadd.f32 %v3600, %v686
        %v3611 = vsel %vm1068, %v3603, -inf
        %3612 = vmax.xlane.f32.xlu0 %v3611
        %v3613 = vpop.xlane.xlu0 %3612
        %v3614 = vsel %vm1068, %v3604, -inf
        %3615 = vmax.xlane.f32.xlu0 %v3614
        %v3616 = vpop.xlane.xlu0 %3615
        %v3617 = vsel %vm1068, %v3605, -inf
        %3618 = vmax.xlane.f32.xlu0 %v3617
        %v3619 = vpop.xlane.xlu0 %3618
        %v3620 = vsel %vm1068, %v3606, -inf
        %3621 = vmax.xlane.f32.xlu0 %v3620
        %v3622 = vpop.xlane.xlu0 %3621
        %v3623 = vsel %vm1068, %v3607, -inf
        %3624 = vmax.xlane.f32.xlu0 %v3623
        %v3625 = vpop.xlane.xlu0 %3624
        %v3626 = vsel %vm1068, %v3608, -inf
        %3627 = vmax.xlane.f32.xlu0 %v3626
        %v3628 = vpop.xlane.xlu0 %3627
        %v3629 = vsel %vm1068, %v3609, -inf
        %3630 = vmax.xlane.f32.xlu0 %v3629
        %v3631 = vpop.xlane.xlu0 %3630
        %v3632 = vsel %vm1068, %v3610, -inf
        %3633 = vmax.xlane.f32.xlu0 %v3632
        %v3634 = vpop.xlane.xlu0 %3633
        %v3635 = vsub.f32 %v3603, %v3613
        %v3636 = vsub.f32 %v3604, %v3616
        %v3637 = vsub.f32 %v3605, %v3619
        %v3638 = vsub.f32 %v3606, %v3622
        %v3639 = vsub.f32 %v3607, %v3625
        %v3640 = vsub.f32 %v3608, %v3628
        %v3641 = vsub.f32 %v3609, %v3631
        %v3642 = vsub.f32 %v3610, %v3634
        %v3643 = vmul.f32 %v3635, 1.442695
        %v3644 = vpow.pop %v3643
        %v3645 = vmul.f32 %v3636, 1.442695
        %v3646 = vpow.pop %v3645
        %v3647 = vmul.f32 %v3637, 1.442695
        %v3648 = vpow.pop %v3647
        %v3649 = vmul.f32 %v3638, 1.442695
        %v3650 = vpow.pop %v3649
        %v3651 = vmul.f32 %v3639, 1.442695
        %v3652 = vpow.pop %v3651
        %v3653 = vmul.f32 %v3640, 1.442695
        %v3654 = vpow.pop %v3653
        %v3655 = vmul.f32 %v3641, 1.442695
        %v3656 = vpow.pop %v3655
        %v3657 = vmul.f32 %v3642, 1.442695
        %v3658 = vpow.pop %v3657
        %v3659 = vsel %vm1068, %v3644, 0.0
        %3660 = vadd.xlane.f32.xlu0 %v3659
        %v3661 = vpop.xlane.xlu0 %3660
        %v3662 = vsel %vm1068, %v3646, 0.0
        %3663 = vadd.xlane.f32.xlu0 %v3662
        %v3664 = vpop.xlane.xlu0 %3663
        %v3665 = vsel %vm1068, %v3648, 0.0
        %3666 = vadd.xlane.f32.xlu0 %v3665
        %v3667 = vpop.xlane.xlu0 %3666
        %v3668 = vsel %vm1068, %v3650, 0.0
        %3669 = vadd.xlane.f32.xlu0 %v3668
        %v3670 = vpop.xlane.xlu0 %3669
        %v3671 = vsel %vm1068, %v3652, 0.0
        %3672 = vadd.xlane.f32.xlu0 %v3671
        %v3673 = vpop.xlane.xlu0 %3672
        %v3674 = vsel %vm1068, %v3654, 0.0
        %3675 = vadd.xlane.f32.xlu0 %v3674
        %v3676 = vpop.xlane.xlu0 %3675
        %v3677 = vsel %vm1068, %v3656, 0.0
        %3678 = vadd.xlane.f32.xlu0 %v3677
        %v3679 = vpop.xlane.xlu0 %3678
        %v3680 = vsel %vm1068, %v3658, 0.0
        %3681 = vadd.xlane.f32.xlu0 %v3680
        %v3682 = vpop.xlane.xlu0 %3681
        %v3683 = vrcp.pop %v3661
        %v3684 = vrcp.pop %v3664
        %v3685 = vrcp.pop %v3667
        %v3686 = vrcp.pop %v3670
        %v3687 = vrcp.pop %v3673
        %v3688 = vrcp.pop %v3676
        %v3689 = vrcp.pop %v3679
        %v3690 = vrcp.pop %v3682
        %v3691 = vmul.f32 %v3644, %v3683
        %v3692 = vmul.f32 %v3646, %v3684
        %v3693 = vmul.f32 %v3648, %v3685
        %v3694 = vmul.f32 %v3650, %v3686
        %v3695 = vmul.f32 %v3652, %v3687
        %v3696 = vmul.f32 %v3654, %v3688
        %v3697 = vmul.f32 %v3656, %v3689
        %v3698 = vmul.f32 %v3658, %v3690
        %s3699 = sld [smem:[#allocation3 + $0x3]]
        %v3700 = vstv %s3699
        %v3701 = vmul.f32 %v3691, %v3700
        %v3702 = vmul.f32 %v3692, %v3700
        %v3703 = vmul.f32 %v3693, %v3700
        %v3704 = vmul.f32 %v3694, %v3700
        %v3705 = vmul.f32 %v3695, %v3700
        %v3706 = vmul.f32 %v3696, %v3700
        %v3707 = vmul.f32 %v3697, %v3700
        %v3708 = vmul.f32 %v3698, %v3700
        %s3709 = sld [smem:[#allocation5 + $0x3]]
        %v3710 = vstv %s3709
        %v3711 = vsub.f32 %v3701, %v3710
        %v3712 = vsub.f32 %v3702, %v3710
        %v3713 = vsub.f32 %v3703, %v3710
        %v3714 = vsub.f32 %v3704, %v3710
        %v3715 = vsub.f32 %v3705, %v3710
        %v3716 = vsub.f32 %v3706, %v3710
        %v3717 = vsub.f32 %v3707, %v3710
        %v3718 = vsub.f32 %v3708, %v3710
        %3719 = vrot.lane.b32.xlu0 %v641, 40
        %v3720 = vpop.permute.xlu0 %3719
        %3721 = vrot.lane.b32.xlu0 %v644, 40
        %v3722 = vpop.permute.xlu0 %3721
        %v3726 = vsel %vm1068, %v3711, 0
        %v3729 = vsel %vm1068, %v3712, 0
        %3731 = vmatprep.subr.mxu0 0.0
        %3732 = vmatpush1.msra.mxu0 %v3720
        %3733 = vmatprep.subr.mxu0 0.0
        %3734 = vmatpush1.msra.mxu0 %v3722
        %3735 = vmatprep.subr.mxu0 0.0
        %3736 = vmatpush1.msra.mxu0 0.0
        %3737 = vmatprep.subr.mxu0 0.0
        %3738 = vmatpush1.msra.mxu0 0.0
        %3739 = vmatprep.subr.mxu0 0.0
        %3740 = vmatpush1.msra.mxu0 0.0
        %3741 = vmatprep.subr.mxu0 0.0
        %3742 = vmatpush1.msra.mxu0 0.0
        %3743 = vmatprep.subr.mxu0 0.0
        %3744 = vmatpush1.msra.mxu0 0.0
        %3745 = vmatprep.subr.mxu0 0.0
        %3746 = vmatpush1.msra.mxu0 0.0
        %3747 = vmatprep.subr.mxu0 0.0
        %3748 = vmatpush1.msra.mxu0 0.0
        %3749 = vmatprep.subr.mxu0 0.0
        %3750 = vmatpush1.msra.mxu0 0.0
        %3751 = vmatprep.subr.mxu0 0.0
        %3752 = vmatpush1.msra.mxu0 0.0
        %3753 = vmatprep.subr.mxu0 0.0
        %3754 = vmatpush1.msra.mxu0 0.0
        %3755 = vmatprep.subr.mxu0 0.0
        %3756 = vmatpush1.msra.mxu0 0.0
        %3757 = vmatprep.subr.mxu0 0.0
        %3758 = vmatpush1.msra.mxu0 0.0
        %3759 = vmatprep.subr.mxu0 0.0
        %3760 = vmatpush1.msra.mxu0 0.0
        %3761 = vmatprep.subr.mxu0 0.0
        %3762 = vmatpush1.msra.mxu0 0.0
        %3763 = vmatprep.subr.mxu0 0.0
        %3764 = vmatpush1.msra.mxu0 0.0
        %3765 = vmatprep.subr.mxu0 0.0
        %3766 = vmatpush1.msra.mxu0 0.0
        %3767 = vmatprep.subr.mxu0 0.0
        %3768 = vmatpush1.msra.mxu0 0.0
        %3769 = vmatprep.subr.mxu0 0.0
        %3770 = vmatpush1.msra.mxu0 0.0
        %3771 = vmatprep.subr.mxu0 0.0
        %3772 = vmatpush1.msra.mxu0 0.0
        %3773 = vmatprep.subr.mxu0 0.0
        %3774 = vmatpush1.msra.mxu0 0.0
        %3775 = vmatprep.subr.mxu0 0.0
        %3776 = vmatpush1.msra.mxu0 0.0
        %3777 = vmatprep.subr.mxu0 0.0
        %3778 = vmatpush1.msra.mxu0 0.0
        %3779 = vmatprep.subr.mxu0 0.0
        %3780 = vmatpush1.msra.mxu0 0.0
        %3781 = vmatprep.subr.mxu0 0.0
        %3782 = vmatpush1.msra.mxu0 0.0
        %3783 = vmatprep.subr.mxu0 0.0
        %3784 = vmatpush1.msra.mxu0 0.0
        %3785 = vmatprep.subr.mxu0 0.0
        %3786 = vmatpush1.msra.mxu0 0.0
        %3787 = vmatprep.subr.mxu0 0.0
        %3788 = vmatpush1.msra.mxu0 0.0
        %3789 = vmatprep.subr.mxu0 0.0
        %3790 = vmatpush1.msra.mxu0 0.0
        %3791 = vmatprep.subr.mxu0 0.0
        %3792 = vmatpush1.msra.mxu0 0.0
        %3793 = vmatprep.subr.mxu0 0.0
        %3794 = vmatpush1.msra.mxu0 0.0
        %3795 = vmatprep.mubr.f32.mxu0 0.0
        %3796 = vmatmul.mubr.f32.gmra.mrb[0].mxu0 %v3726
        %v3797 = vpop.f32.mrb[0].mxu0
        %v3798 = vadd.f32 0.0, %v3797
        %v3799 = vpop.f32.mrb[0].mxu0
        %3800 = vmatprep.mubr.f32.mxu0 0.0
        %3801 = vmatmul.mubr.f32.gmra.mrb[0].mxu0 %v3729
        %v3802 = vpop.f32.mrb[0].mxu0
        %v3803 = vadd.f32 0.0, %v3802
        %v3804 = vpop.f32.mrb[0].mxu0
        %3805 = vdwg.mxu0
        %3806 = vrot.lane.b32.xlu0 %v649, 40
        %v3807 = vpop.permute.xlu0 %3806
        %3808 = vrot.lane.b32.xlu0 %v652, 40
        %v3809 = vpop.permute.xlu0 %3808
        %v3813 = vsel %vm1068, %v3713, 0
        %v3816 = vsel %vm1068, %v3714, 0
        %3818 = vmatprep.subr.mxu0 0.0
        %3819 = vmatpush1.msra.mxu0 %v3807
        %3820 = vmatprep.subr.mxu0 0.0
        %3821 = vmatpush1.msra.mxu0 %v3809
        %3822 = vmatprep.subr.mxu0 0.0
        %3823 = vmatpush1.msra.mxu0 0.0
        %3824 = vmatprep.subr.mxu0 0.0
        %3825 = vmatpush1.msra.mxu0 0.0
        %3826 = vmatprep.subr.mxu0 0.0
        %3827 = vmatpush1.msra.mxu0 0.0
        %3828 = vmatprep.subr.mxu0 0.0
        %3829 = vmatpush1.msra.mxu0 0.0
        %3830 = vmatprep.subr.mxu0 0.0
        %3831 = vmatpush1.msra.mxu0 0.0
        %3832 = vmatprep.subr.mxu0 0.0
        %3833 = vmatpush1.msra.mxu0 0.0
        %3834 = vmatprep.subr.mxu0 0.0
        %3835 = vmatpush1.msra.mxu0 0.0
        %3836 = vmatprep.subr.mxu0 0.0
        %3837 = vmatpush1.msra.mxu0 0.0
        %3838 = vmatprep.subr.mxu0 0.0
        %3839 = vmatpush1.msra.mxu0 0.0
        %3840 = vmatprep.subr.mxu0 0.0
        %3841 = vmatpush1.msra.mxu0 0.0
        %3842 = vmatprep.subr.mxu0 0.0
        %3843 = vmatpush1.msra.mxu0 0.0
        %3844 = vmatprep.subr.mxu0 0.0
        %3845 = vmatpush1.msra.mxu0 0.0
        %3846 = vmatprep.subr.mxu0 0.0
        %3847 = vmatpush1.msra.mxu0 0.0
        %3848 = vmatprep.subr.mxu0 0.0
        %3849 = vmatpush1.msra.mxu0 0.0
        %3850 = vmatprep.subr.mxu0 0.0
        %3851 = vmatpush1.msra.mxu0 0.0
        %3852 = vmatprep.subr.mxu0 0.0
        %3853 = vmatpush1.msra.mxu0 0.0
        %3854 = vmatprep.subr.mxu0 0.0
        %3855 = vmatpush1.msra.mxu0 0.0
        %3856 = vmatprep.subr.mxu0 0.0
        %3857 = vmatpush1.msra.mxu0 0.0
        %3858 = vmatprep.subr.mxu0 0.0
        %3859 = vmatpush1.msra.mxu0 0.0
        %3860 = vmatprep.subr.mxu0 0.0
        %3861 = vmatpush1.msra.mxu0 0.0
        %3862 = vmatprep.subr.mxu0 0.0
        %3863 = vmatpush1.msra.mxu0 0.0
        %3864 = vmatprep.subr.mxu0 0.0
        %3865 = vmatpush1.msra.mxu0 0.0
        %3866 = vmatprep.subr.mxu0 0.0
        %3867 = vmatpush1.msra.mxu0 0.0
        %3868 = vmatprep.subr.mxu0 0.0
        %3869 = vmatpush1.msra.mxu0 0.0
        %3870 = vmatprep.subr.mxu0 0.0
        %3871 = vmatpush1.msra.mxu0 0.0
        %3872 = vmatprep.subr.mxu0 0.0
        %3873 = vmatpush1.msra.mxu0 0.0
        %3874 = vmatprep.subr.mxu0 0.0
        %3875 = vmatpush1.msra.mxu0 0.0
        %3876 = vmatprep.subr.mxu0 0.0
        %3877 = vmatpush1.msra.mxu0 0.0
        %3878 = vmatprep.subr.mxu0 0.0
        %3879 = vmatpush1.msra.mxu0 0.0
        %3880 = vmatprep.subr.mxu0 0.0
        %3881 = vmatpush1.msra.mxu0 0.0
        %3882 = vmatprep.mubr.f32.mxu0 0.0
        %3883 = vmatmul.mubr.f32.gmra.mrb[0].mxu0 %v3813
        %v3884 = vpop.f32.mrb[0].mxu0
        %v3885 = vadd.f32 0.0, %v3884
        %v3886 = vpop.f32.mrb[0].mxu0
        %3887 = vmatprep.mubr.f32.mxu0 0.0
        %3888 = vmatmul.mubr.f32.gmra.mrb[0].mxu0 %v3816
        %v3889 = vpop.f32.mrb[0].mxu0
        %v3890 = vadd.f32 0.0, %v3889
        %v3891 = vpop.f32.mrb[0].mxu0
        %3892 = vdwg.mxu0
        %3893 = vrot.lane.b32.xlu0 %v657, 40
        %v3894 = vpop.permute.xlu0 %3893
        %3895 = vrot.lane.b32.xlu0 %v660, 40
        %v3896 = vpop.permute.xlu0 %3895
        %v3900 = vsel %vm1068, %v3715, 0
        %v3903 = vsel %vm1068, %v3716, 0
        %3905 = vmatprep.subr.mxu0 0.0
        %3906 = vmatpush1.msra.mxu0 %v3894
        %3907 = vmatprep.subr.mxu0 0.0
        %3908 = vmatpush1.msra.mxu0 %v3896
        %3909 = vmatprep.subr.mxu0 0.0
        %3910 = vmatpush1.msra.mxu0 0.0
        %3911 = vmatprep.subr.mxu0 0.0
        %3912 = vmatpush1.msra.mxu0 0.0
        %3913 = vmatprep.subr.mxu0 0.0
        %3914 = vmatpush1.msra.mxu0 0.0
        %3915 = vmatprep.subr.mxu0 0.0
        %3916 = vmatpush1.msra.mxu0 0.0
        %3917 = vmatprep.subr.mxu0 0.0
        %3918 = vmatpush1.msra.mxu0 0.0
        %3919 = vmatprep.subr.mxu0 0.0
        %3920 = vmatpush1.msra.mxu0 0.0
        %3921 = vmatprep.subr.mxu0 0.0
        %3922 = vmatpush1.msra.mxu0 0.0
        %3923 = vmatprep.subr.mxu0 0.0
        %3924 = vmatpush1.msra.mxu0 0.0
        %3925 = vmatprep.subr.mxu0 0.0
        %3926 = vmatpush1.msra.mxu0 0.0
        %3927 = vmatprep.subr.mxu0 0.0
        %3928 = vmatpush1.msra.mxu0 0.0
        %3929 = vmatprep.subr.mxu0 0.0
        %3930 = vmatpush1.msra.mxu0 0.0
        %3931 = vmatprep.subr.mxu0 0.0
        %3932 = vmatpush1.msra.mxu0 0.0
        %3933 = vmatprep.subr.mxu0 0.0
        %3934 = vmatpush1.msra.mxu0 0.0
        %3935 = vmatprep.subr.mxu0 0.0
        %3936 = vmatpush1.msra.mxu0 0.0
        %3937 = vmatprep.subr.mxu0 0.0
        %3938 = vmatpush1.msra.mxu0 0.0
        %3939 = vmatprep.subr.mxu0 0.0
        %3940 = vmatpush1.msra.mxu0 0.0
        %3941 = vmatprep.subr.mxu0 0.0
        %3942 = vmatpush1.msra.mxu0 0.0
        %3943 = vmatprep.subr.mxu0 0.0
        %3944 = vmatpush1.msra.mxu0 0.0
        %3945 = vmatprep.subr.mxu0 0.0
        %3946 = vmatpush1.msra.mxu0 0.0
        %3947 = vmatprep.subr.mxu0 0.0
        %3948 = vmatpush1.msra.mxu0 0.0
        %3949 = vmatprep.subr.mxu0 0.0
        %3950 = vmatpush1.msra.mxu0 0.0
        %3951 = vmatprep.subr.mxu0 0.0
        %3952 = vmatpush1.msra.mxu0 0.0
        %3953 = vmatprep.subr.mxu0 0.0
        %3954 = vmatpush1.msra.mxu0 0.0
        %3955 = vmatprep.subr.mxu0 0.0
        %3956 = vmatpush1.msra.mxu0 0.0
        %3957 = vmatprep.subr.mxu0 0.0
        %3958 = vmatpush1.msra.mxu0 0.0
        %3959 = vmatprep.subr.mxu0 0.0
        %3960 = vmatpush1.msra.mxu0 0.0
        %3961 = vmatprep.subr.mxu0 0.0
        %3962 = vmatpush1.msra.mxu0 0.0
        %3963 = vmatprep.subr.mxu0 0.0
        %3964 = vmatpush1.msra.mxu0 0.0
        %3965 = vmatprep.subr.mxu0 0.0
        %3966 = vmatpush1.msra.mxu0 0.0
        %3967 = vmatprep.subr.mxu0 0.0
        %3968 = vmatpush1.msra.mxu0 0.0
        %3969 = vmatprep.mubr.f32.mxu0 0.0
        %3970 = vmatmul.mubr.f32.gmra.mrb[0].mxu0 %v3900
        %v3971 = vpop.f32.mrb[0].mxu0
        %v3972 = vadd.f32 0.0, %v3971
        %v3973 = vpop.f32.mrb[0].mxu0
        %3974 = vmatprep.mubr.f32.mxu0 0.0
        %3975 = vmatmul.mubr.f32.gmra.mrb[0].mxu0 %v3903
        %v3976 = vpop.f32.mrb[0].mxu0
        %v3977 = vadd.f32 0.0, %v3976
        %v3978 = vpop.f32.mrb[0].mxu0
        %3979 = vdwg.mxu0
        %3980 = vrot.lane.b32.xlu0 %v665, 40
        %v3981 = vpop.permute.xlu0 %3980
        %3982 = vrot.lane.b32.xlu0 %v668, 40
        %v3983 = vpop.permute.xlu0 %3982
        %v3987 = vsel %vm1068, %v3717, 0
        %v3990 = vsel %vm1068, %v3718, 0
        %3992 = vmatprep.subr.mxu0 0.0
        %3993 = vmatpush1.msra.mxu0 %v3981
        %3994 = vmatprep.subr.mxu0 0.0
        %3995 = vmatpush1.msra.mxu0 %v3983
        %3996 = vmatprep.subr.mxu0 0.0
        %3997 = vmatpush1.msra.mxu0 0.0
        %3998 = vmatprep.subr.mxu0 0.0
        %3999 = vmatpush1.msra.mxu0 0.0
        %4000 = vmatprep.subr.mxu0 0.0
        %4001 = vmatpush1.msra.mxu0 0.0
        %4002 = vmatprep.subr.mxu0 0.0
        %4003 = vmatpush1.msra.mxu0 0.0
        %4004 = vmatprep.subr.mxu0 0.0
        %4005 = vmatpush1.msra.mxu0 0.0
        %4006 = vmatprep.subr.mxu0 0.0
        %4007 = vmatpush1.msra.mxu0 0.0
        %4008 = vmatprep.subr.mxu0 0.0
        %4009 = vmatpush1.msra.mxu0 0.0
        %4010 = vmatprep.subr.mxu0 0.0
        %4011 = vmatpush1.msra.mxu0 0.0
        %4012 = vmatprep.subr.mxu0 0.0
        %4013 = vmatpush1.msra.mxu0 0.0
        %4014 = vmatprep.subr.mxu0 0.0
        %4015 = vmatpush1.msra.mxu0 0.0
        %4016 = vmatprep.subr.mxu0 0.0
        %4017 = vmatpush1.msra.mxu0 0.0
        %4018 = vmatprep.subr.mxu0 0.0
        %4019 = vmatpush1.msra.mxu0 0.0
        %4020 = vmatprep.subr.mxu0 0.0
        %4021 = vmatpush1.msra.mxu0 0.0
        %4022 = vmatprep.subr.mxu0 0.0
        %4023 = vmatpush1.msra.mxu0 0.0
        %4024 = vmatprep.subr.mxu0 0.0
        %4025 = vmatpush1.msra.mxu0 0.0
        %4026 = vmatprep.subr.mxu0 0.0
        %4027 = vmatpush1.msra.mxu0 0.0
        %4028 = vmatprep.subr.mxu0 0.0
        %4029 = vmatpush1.msra.mxu0 0.0
        %4030 = vmatprep.subr.mxu0 0.0
        %4031 = vmatpush1.msra.mxu0 0.0
        %4032 = vmatprep.subr.mxu0 0.0
        %4033 = vmatpush1.msra.mxu0 0.0
        %4034 = vmatprep.subr.mxu0 0.0
        %4035 = vmatpush1.msra.mxu0 0.0
        %4036 = vmatprep.subr.mxu0 0.0
        %4037 = vmatpush1.msra.mxu0 0.0
        %4038 = vmatprep.subr.mxu0 0.0
        %4039 = vmatpush1.msra.mxu0 0.0
        %4040 = vmatprep.subr.mxu0 0.0
        %4041 = vmatpush1.msra.mxu0 0.0
        %4042 = vmatprep.subr.mxu0 0.0
        %4043 = vmatpush1.msra.mxu0 0.0
        %4044 = vmatprep.subr.mxu0 0.0
        %4045 = vmatpush1.msra.mxu0 0.0
        %4046 = vmatprep.subr.mxu0 0.0
        %4047 = vmatpush1.msra.mxu0 0.0
        %4048 = vmatprep.subr.mxu0 0.0
        %4049 = vmatpush1.msra.mxu0 0.0
        %4050 = vmatprep.subr.mxu0 0.0
        %4051 = vmatpush1.msra.mxu0 0.0
        %4052 = vmatprep.subr.mxu0 0.0
        %4053 = vmatpush1.msra.mxu0 0.0
        %4054 = vmatprep.subr.mxu0 0.0
        %4055 = vmatpush1.msra.mxu0 0.0
        %4056 = vmatprep.mubr.f32.mxu0 0.0
        %4057 = vmatmul.mubr.f32.gmra.mrb[0].mxu0 %v3987
        %v4058 = vpop.f32.mrb[0].mxu0
        %v4059 = vadd.f32 0.0, %v4058
        %v4060 = vpop.f32.mrb[0].mxu0
        %4061 = vmatprep.mubr.f32.mxu0 0.0
        %4062 = vmatmul.mubr.f32.gmra.mrb[0].mxu0 %v3990
        %v4063 = vpop.f32.mrb[0].mxu0
        %v4064 = vadd.f32 0.0, %v4063
        %v4065 = vpop.f32.mrb[0].mxu0
        %4066 = vdwg.mxu0
        %v4067 = vpack.c.bf16 %v3803, %v3798
        %v4068 = vpack.c.bf16 %v3890, %v3885
        %v4069 = vpack.c.bf16 %v3977, %v3972
        %v4070 = vpack.c.bf16 %v4064, %v4059
        %4075 = vrot.lane.b32.xlu0 %v4067, 24
        %v4076 = vpop.permute.xlu0 %4075
        %4077 = vrot.lane.b32.xlu0 %v4068, 24
        %v4078 = vpop.permute.xlu0 %4077
        %4079 = vrot.lane.b32.xlu0 %v4069, 24
        %v4080 = vpop.permute.xlu0 %4079
        %4081 = vrot.lane.b32.xlu0 %v4070, 24
        %v4082 = vpop.permute.xlu0 %4081
        %vm4087 = vcmask 261312
        %4088 = vst.msk [vmem:[#allocation2] sm:$0xff] %vm4087, %v4076
        %4089 = vst.msk [vmem:[#allocation2 + $0x8] sm:$0xff] %vm4087, %v4078
        %4090 = vst.msk [vmem:[#allocation2 + $0x10] sm:$0xff] %vm4087, %v4080
        %4091 = vst.msk [vmem:[#allocation2 + $0x18] sm:$0xff] %vm4087, %v4082
        %v4092 = vld [vmem:[#allocation2] sm:$0xff]
        %v4093 = vld [vmem:[#allocation2 + $0x8] sm:$0xff]
        %v4094 = vld [vmem:[#allocation2 + $0x10] sm:$0xff]
        %v4095 = vld [vmem:[#allocation2 + $0x18] sm:$0xff]
        %v4096 = vld [vmem:[%s9] sm:$0xf]
        %v4097 = vld [vmem:[%s9 + $0x4] sm:$0xf]
        %v4098 = vld [vmem:[%s9 + $0x8] sm:$0xf]
        %v4099 = vld [vmem:[%s9 + $0xc] sm:$0xf]
        %v4100 = vld [vmem:[%s10] sm:$0x1]
        %v4102 = vlaneseq
        %v4103 = vshrl.u32 %v4102, 7
        %v4104 = vsub.s32 0, %v4103
        %v4105 = vrot.slane %v4100, %v4104
        %v4111 = vunpack.c.l.b16 %v4096
        %v4112 = vunpack.c.l.b16 %v4097
        %v4113 = vunpack.c.l.b16 %v4098
        %v4114 = vunpack.c.l.b16 %v4099
        %v4115 = vpack.c.b16 %v4112, %v4111
        %v4116 = vpack.c.b16 %v4114, %v4113
        %v4120 = vsel %vm431, %v4092, 0
        %v4123 = vsel %vm431, %v4093, 0
        %v4126 = vsel %vm431, %v4094, 0
        %v4129 = vsel %vm431, %v4095, 0
        %4131 = vmatprep.subr.bf16.mxu0 0
        %4132 = vmatpush1.bf16.msra.mxu0 %v4115
        %4133 = vmatprep.subr.bf16.mxu0 0
        %4134 = vmatpush1.bf16.msra.mxu0 %v4116
        %4135 = vmatprep.subr.bf16.mxu0 0
        %4136 = vmatpush1.bf16.msra.mxu0 0
        %4137 = vmatprep.subr.bf16.mxu0 0
        %4138 = vmatpush1.bf16.msra.mxu0 0
        %4139 = vmatprep.subr.bf16.mxu0 0
        %4140 = vmatpush1.bf16.msra.mxu0 0
        %4141 = vmatprep.subr.bf16.mxu0 0
        %4142 = vmatpush1.bf16.msra.mxu0 0
        %4143 = vmatprep.subr.bf16.mxu0 0
        %4144 = vmatpush1.bf16.msra.mxu0 0
        %4145 = vmatprep.subr.bf16.mxu0 0
        %4146 = vmatpush1.bf16.msra.mxu0 0
        %4147 = vmatprep.subr.bf16.mxu0 0
        %4148 = vmatpush1.bf16.msra.mxu0 0
        %4149 = vmatprep.subr.bf16.mxu0 0
        %4150 = vmatpush1.bf16.msra.mxu0 0
        %4151 = vmatprep.subr.bf16.mxu0 0
        %4152 = vmatpush1.bf16.msra.mxu0 0
        %4153 = vmatprep.subr.bf16.mxu0 0
        %4154 = vmatpush1.bf16.msra.mxu0 0
        %4155 = vmatprep.subr.bf16.mxu0 0
        %4156 = vmatpush1.bf16.msra.mxu0 0
        %4157 = vmatprep.subr.bf16.mxu0 0
        %4158 = vmatpush1.bf16.msra.mxu0 0
        %4159 = vmatprep.subr.bf16.mxu0 0
        %4160 = vmatpush1.bf16.msra.mxu0 0
        %4161 = vmatprep.subr.bf16.mxu0 0
        %4162 = vmatpush1.bf16.msra.mxu0 0
        %4163 = vmatprep.mubr.bf16.mxu0 0
        %4164 = vmatmul.mubr.bf16.gmra.mrb[0].mxu0 %v4120
        %v4165 = vpop.f32.mrb[0].mxu0
        %v4166 = vadd.f32 %v4105, %v4165
        %v4167 = vpop.f32.mrb[0].mxu0
        %v4168 = vpop.f32.mrb[0].mxu0
        %v4169 = vadd.f32 %v4105, %v4168
        %v4170 = vpop.f32.mrb[0].mxu0
        %4171 = vmatprep.mubr.bf16.mxu0 0
        %4172 = vmatmul.mubr.bf16.gmra.mrb[0].mxu0 %v4123
        %v4173 = vpop.f32.mrb[0].mxu0
        %v4174 = vadd.f32 %v4105, %v4173
        %v4175 = vpop.f32.mrb[0].mxu0
        %v4176 = vpop.f32.mrb[0].mxu0
        %v4177 = vadd.f32 %v4105, %v4176
        %v4178 = vpop.f32.mrb[0].mxu0
        %4179 = vmatprep.mubr.bf16.mxu0 0
        %4180 = vmatmul.mubr.bf16.gmra.mrb[0].mxu0 %v4126
        %v4181 = vpop.f32.mrb[0].mxu0
        %v4182 = vadd.f32 %v4105, %v4181
        %v4183 = vpop.f32.mrb[0].mxu0
        %v4184 = vpop.f32.mrb[0].mxu0
        %v4185 = vadd.f32 %v4105, %v4184
        %v4186 = vpop.f32.mrb[0].mxu0
        %4187 = vmatprep.mubr.bf16.mxu0 0
        %4188 = vmatmul.mubr.bf16.gmra.mrb[0].mxu0 %v4129
        %v4189 = vpop.f32.mrb[0].mxu0
        %v4190 = vadd.f32 %v4105, %v4189
        %v4191 = vpop.f32.mrb[0].mxu0
        %v4192 = vpop.f32.mrb[0].mxu0
        %v4193 = vadd.f32 %v4105, %v4192
        %v4194 = vpop.f32.mrb[0].mxu0
        %4195 = vdwg.mxu0
        %v4196 = vpack.c.bf16 %v4169, %v4166
        %v4197 = vpack.c.bf16 %v4177, %v4174
        %v4198 = vpack.c.bf16 %v4185, %v4182
        %v4199 = vpack.c.bf16 %v4193, %v4190
        %v4204 = vunpack.c.l.b16 %v4196
        %v4205 = vunpack.c.h.b16 %v4196
        %v4206 = vunpack.c.l.b16 %v4197
        %v4207 = vunpack.c.h.b16 %v4197
        %v4208 = vunpack.c.l.b16 %v4198
        %v4209 = vunpack.c.h.b16 %v4198
        %v4210 = vunpack.c.l.b16 %v4199
        %v4211 = vunpack.c.h.b16 %v4199
        %v4212 = vpack.c.b16 %v4204, %v4204
        %v4213 = vpack.c.b16 %v4205, %v4205
        %v4214 = vpack.c.b16 %v4206, %v4206
        %v4215 = vpack.c.b16 %v4207, %v4207
        %v4216 = vpack.c.b16 %v4208, %v4208
        %v4217 = vpack.c.b16 %v4209, %v4209
        %v4218 = vpack.c.b16 %v4210, %v4210
        %v4219 = vpack.c.b16 %v4211, %v4211
        %vm4228 = vcmask 257024
        %4229 = vst.msk [vmem:[%s420] sm:$0xf] %vm4228, %v4212
        %4230 = vst.msk [vmem:[%s420 + $0x4] sm:$0xf] %vm4228, %v4213
        %4231 = vst.msk [vmem:[%s420 + $0x8] sm:$0xf] %vm4228, %v4214
        %4232 = vst.msk [vmem:[%s420 + $0xc] sm:$0xf] %vm4228, %v4215
        %4233 = vst.msk [vmem:[%s420 + $0x10] sm:$0xf] %vm4228, %v4216
        %4234 = vst.msk [vmem:[%s420 + $0x14] sm:$0xf] %vm4228, %v4217
        %4235 = vst.msk [vmem:[%s420 + $0x18] sm:$0xf] %vm4228, %v4218
        %4236 = vst.msk [vmem:[%s420 + $0x1c] sm:$0xf] %vm4228, %v4219
        %s4237 = smul.u32 4, %s24
        %p4238 = scmp.lt.s32.totalorder %s4237, 7
        %s4239 = scalar_select %p4238, %s4237, 7
        %s4240 = smul.addr %s4239, 2
        %s4241 = smul.addr %s4240, 4
        %s4242 = scalar_lea.vmem %s11, %s4241
        // Predicated region
        $region73: #{_lambda_.6} parent=63 // pred_check
          %p4243 = pneg %p278
        $region74: #{_lambda_.6} parent=63 // pred_check_branch
          %4245 = sbr.rel (%p4243) target = $region76
        $region75: #{_lambda_.6} parent=63 // pred_region
          %s4246 = smul.u32 4, %s24
        $region76: #{_lambda_.6} parent=63 // pred_fallthru
          _
      $region64: #{_lambda_.6} parent=5 // pred_fallthru
        _
      %p4247 = scmp.le.s32.totalorder 2, %s19
      // Predicated region
      $region77: #{_lambda_.6} parent=5 // pred_check
        %p4248 = pneg %p4247
      $region78: #{_lambda_.6} parent=5 // pred_check_branch
        %4250 = sbr.rel (%p4248) target = $region80
      $region79: #{_lambda_.6} parent=5 // pred_region
        %s4251 = ssub.s32 %s19, 2
        // Predicated region
        $region81: #{_lambda_.6} parent=79 // pred_check
          %p4252 = pneg %p284
        $region82: #{_lambda_.6} parent=79 // pred_check_branch
          %4254 = sbr.rel (%p4252) target = $region84
        $region83: #{_lambda_.6} parent=79 // pred_region
          %s4255 = smul.u32 4, %s25
          %p4256 = scmp.lt.s32.totalorder %s4255, 7
          %s4257 = scalar_select %p4256, %s4255, 7
          %s4258 = smul.addr %s4257, 2
          %s4259 = smul.addr %s4258, 4
          %s4260 = scalar_lea.vmem %s11, %s4259
        $region84: #{_lambda_.6} parent=79 // pred_fallthru
          _
      $region80: #{_lambda_.6} parent=5 // pred_fallthru
        _
    $region6: #{_lambda_.6} parent=1 // loop_footer
      %s23 = sadd.s32 1, %s19
    $region7: #{_lambda_.6} parent=1 // loop_footer_branch
      %18 = sbr.rel target = $region3
    $region8: #{_lambda_.6} parent=1 // loop_exit
      _
    %4261 = vsyncpa [#allocation4], 1
    %s4262 = scalar_lea.sflag [#allocation4], 1
    %4263 = vsyncpa %s4262, 1
    %4264 = vsyncpa [#allocation6], 1

</llo_original>
